<compile_context>
chip_gen: v7x
topology: tpu7x:2x2x1
jax: 0.10.0
libtpu: 0.0.40
codegen_flags: <defaults>
</compile_context>

<pallas_src>
import functools
import math

import jax
import jax.numpy as jnp
import numpy as np
from jax.experimental import pallas as pl
from jax.experimental.pallas import tpu as pltpu

_EPS = 1e-5
_IMG = 28          # input spatial size (forced by Linear(2888, 60): 8*19*19 = 2888)
_STRIDE = 896      # per-sample lane stride (28*28 = 784 padded up to 7*128)
_K = 5             # conv kernel size


def _shift_left(v, d):
    """rolled[q] = v[q + d] along the lane axis (wrap lands only on invalid lanes)."""
    if d == 0:
        return v
    return pltpu.roll(v, v.shape[1] - d, axis=1)


def _fused_kernel(n,
                  x_ref, w1f_ref, b1c_ref, g1_ref, be1_ref,
                  w2f_ref, b2c_ref, g2_ref, be2_ref,
                  m24_ref, m19_ref,
                  w1l_ref, b1l_ref, w2l_ref, b2l_ref, w3l_ref, b3l_ref,
                  o_ref,
                  x2_ref, pt1_ref, pt2_ref, af_ref):
    f32 = jnp.float32
    bf16 = jnp.bfloat16
    S = _STRIDE
    L = n * S

    # ---- stage 0: NCHW input -> (Cin, n*S) flattened, zero-padded lane layout.
    x2_ref[...] = jnp.zeros_like(x2_ref)
    for k in range(n):
        x2_ref[:, k * S:k * S + _IMG * _IMG] = x_ref[k]
    x2 = x2_ref[...]

    m24 = m24_ref[...]      # (1, L): 1.0 on the 24x24 conv1-valid window
    m19 = m19_ref[...]      # (1, L): 1.0 on the 19x19 conv2-valid window

    # ---- conv1 (3->6, k5): build transposed im2col in VMEM, one MXU matmul.
    for kh in range(_K):
        for kw in range(_K):
            t = kh * _K + kw
            pt1_ref[t * 3:(t + 1) * 3, :] = _shift_left(x2, kh * _IMG + kw)
    y1 = jnp.dot(w1f_ref[...].astype(bf16), pt1_ref[...].astype(bf16),
                 preferred_element_type=f32)
    y1 = y1 + b1c_ref[...]

    # ---- BatchNorm2d(6), training-mode batch stats over the valid region only.
    inv_cnt1 = 1.0 / (n * 24 * 24)
    mu1 = jnp.sum(y1 * m24, axis=1, keepdims=True) * inv_cnt1
    var1 = jnp.sum(jnp.square(y1 - mu1) * m24, axis=1, keepdims=True) * inv_cnt1
    y1 = (y1 - mu1) * jax.lax.rsqrt(var1 + _EPS) * g1_ref[...] + be1_ref[...]

    # ---- MaxPool2d(kernel_size=2, stride=1) in the same flattened layout.
    y1 = jnp.maximum(jnp.maximum(y1, _shift_left(y1, 1)),
                     jnp.maximum(_shift_left(y1, _IMG), _shift_left(y1, _IMG + 1)))

    # ---- conv2 (6->8, k5).
    for kh in range(_K):
        for kw in range(_K):
            t = kh * _K + kw
            pt2_ref[t * 6:(t + 1) * 6, :] = _shift_left(y1, kh * _IMG + kw)
    y2 = jnp.dot(w2f_ref[...].astype(bf16), pt2_ref[...].astype(bf16),
                 preferred_element_type=f32)
    y2 = y2 + b2c_ref[...]

    # ---- batch norm #2.
    # TODO(synk): the module declares nn.BatchNorm2d(3) but conv2 outputs 8
    # channels (a runtime shape error in PyTorch); implemented as 8-channel BN.
    inv_cnt2 = 1.0 / (n * 19 * 19)
    mu2 = jnp.sum(y2 * m19, axis=1, keepdims=True) * inv_cnt2
    var2 = jnp.sum(jnp.square(y2 - mu2) * m19, axis=1, keepdims=True) * inv_cnt2
    y2 = (y2 - mu2) * jax.lax.rsqrt(var2 + _EPS) * g2_ref[...] + be2_ref[...]

    # ---- Softmax over dim 0 (the batch), per (c, h, w); f32 VPU/EUP math.
    parts = [y2[:, k * S:(k + 1) * S] for k in range(n)]
    mmax = parts[0]
    for k in range(1, n):
        mmax = jnp.maximum(mmax, parts[k])
    exps = [jnp.exp(p - mmax) for p in parts]
    denom = exps[0]
    for k in range(1, n):
        denom = denom + exps[k]
    inv = 1.0 / denom
    mk = m19[:, 0:S]

    # ---- Flatten(start_dim=1) in PyTorch (c, h, w) order -> lane-dense (n, 8*S).
    for k in range(n):
        a_k = exps[k] * inv * mk
        for c in range(8):
            af_ref[k:k + 1, c * S:(c + 1) * S] = a_k[c:c + 1, :]

    # ---- Linear(2888,60) -> Linear(60,10) -> Linear(10,2).
    h = jnp.dot(af_ref[...].astype(bf16), w1l_ref[...],
                preferred_element_type=f32) + b1l_ref[...]
    h = jnp.dot(h, w2l_ref[...], preferred_element_type=f32) + b2l_ref[...]
    o_ref[...] = jnp.dot(h, w3l_ref[...], preferred_element_type=f32) + b3l_ref[...]


def _block_specs(args):
    return [pl.BlockSpec(a.shape, lambda i, _nd=a.ndim: (0,) * _nd) for a in args]


@jax.jit
def my_net_forward(x, params):
    n = x.shape[0]
    S = _STRIDE
    L = n * S

    # Activation prep: a free row-major reshape only (no im2col, no transpose).
    x_r = x.reshape(n, 3, _IMG * _IMG)

    # Weight prep (tiny, parameter-only):
    #  * conv weights in (Cout, kh*kw*Cin) order matching the im2col row order,
    #  * Linear-1 weight padded onto the kernel's 28x28 / stride-896 lane grid so
    #    the PyTorch-ordered flatten becomes a plain lane-dense matmul.
    w1f = params["conv1_w"].transpose(0, 2, 3, 1).reshape(6, 75)
    w2f = params["conv2_w"].transpose(0, 2, 3, 1).reshape(8, 150)
    w1l = params["lin1_w"].reshape(8, 19, 19, 60)
    w1l = jnp.pad(w1l, ((0, 0), (0, _IMG - 19), (0, _IMG - 19), (0, 0)))
    w1l = w1l.reshape(8, _IMG * _IMG, 60)
    w1l = jnp.pad(w1l, ((0, 0), (0, S - _IMG * _IMG), (0, 0)))
    w1l = w1l.reshape(8 * S, 60).astype(jnp.bfloat16)

    # Validity masks on the flattened lane grid (trace-time constants).
    pp = np.arange(S)
    ii, jj = pp // _IMG, pp % _IMG
    m24 = jnp.asarray(np.tile(((ii < 24) & (jj < 24)).astype(np.float32), n).reshape(1, L))
    m19 = jnp.asarray(np.tile(((ii < 19) & (jj < 19)).astype(np.float32), n).reshape(1, L))

    args = (
        x_r, w1f,
        params["conv1_b"].reshape(6, 1),
        params["bn1_g"].reshape(6, 1), params["bn1_b"].reshape(6, 1),
        w2f,
        params["conv2_b"].reshape(8, 1),
        params["bn2_g"].reshape(8, 1), params["bn2_b"].reshape(8, 1),
        m24, m19,
        w1l, params["lin1_b"].reshape(1, 60),
        params["lin2_w"], params["lin2_b"].reshape(1, 10),
        params["lin3_w"], params["lin3_b"].reshape(1, 2),
    )
    out_shape = jax.ShapeDtypeStruct((n, 2), jnp.float32)
    return pl.pallas_call(
        functools.partial(_fused_kernel, n),
        out_shape=out_shape,
        grid=(1,),
        in_specs=_block_specs(args),
        out_specs=pl.BlockSpec(out_shape.shape, lambda i: (0, 0)),
        scratch_shapes=[
            pltpu.VMEM((3, L), jnp.float32),      # flattened input
            pltpu.VMEM((75, L), jnp.float32),     # conv1 im2col^T
            pltpu.VMEM((150, L), jnp.float32),    # conv2 im2col^T
            pltpu.VMEM((n, 8 * S), jnp.float32),  # flattened softmax activations
        ],
        compiler_params=pltpu.CompilerParams(dimension_semantics=("arbitrary",)),
    )(*args)


def init_params(key):
    ks = jax.random.split(key, 10)

    def uni(k, shape, fan_in):
        b = 1.0 / math.sqrt(fan_in)
        return jax.random.uniform(k, shape, jnp.float32, -b, b)

    p = {}
    p["conv1_w"] = uni(ks[0], (6, 3, 5, 5), 3 * 25)
    p["conv1_b"] = uni(ks[1], (6,), 3 * 25)
    p["conv2_w"] = uni(ks[2], (8, 6, 5, 5), 6 * 25)
    p["conv2_b"] = uni(ks[3], (8,), 6 * 25)
    # BatchNorm affine params (PyTorch default init: weight=1, bias=0).
    p["bn1_g"] = jnp.ones((6,), jnp.float32)
    p["bn1_b"] = jnp.zeros((6,), jnp.float32)
    p["bn2_g"] = jnp.ones((8,), jnp.float32)
    p["bn2_b"] = jnp.zeros((8,), jnp.float32)
    # Linear weights stored as (in, out) == W.T so kernels compute x @ W + b.
    p["lin1_w"] = uni(ks[4], (2888, 60), 2888)
    p["lin1_b"] = uni(ks[5], (60,), 2888)
    p["lin2_w"] = uni(ks[6], (60, 10), 60)
    p["lin2_b"] = uni(ks[7], (10,), 60)
    p["lin3_w"] = uni(ks[8], (10, 2), 10)
    p["lin3_b"] = uni(ks[9], (2,), 10)
    return p


if __name__ == "__main__":
    key = jax.random.PRNGKey(0)
    kx, kp = jax.random.split(key)
    # 28x28 input is required by Linear(2888, 60): 8 * 19 * 19 = 2888.
    x = jax.random.normal(kx, (2, 3, 28, 28), dtype=jnp.float32)
    params = init_params(kp)
    out = my_net_forward(x, params)
    jax.block_until_ready(out)
    assert out.shape == (2, 2) and out.dtype == jnp.float32
    assert bool(jnp.all(jnp.isfinite(out)))
    print("KERNEL_OK")
</pallas_src>

<mosaic_0001>
module attributes {stable_mosaic.version = 11 : i64} {
  func.func @_fused_kernel(%arg0: i32, %arg1: memref<2x3x784xf32, #tpu.memory_space<vmem>>, %arg2: memref<6x75xf32, #tpu.memory_space<vmem>>, %arg3: memref<6x1xf32, #tpu.memory_space<vmem>>, %arg4: memref<6x1xf32, #tpu.memory_space<vmem>>, %arg5: memref<6x1xf32, #tpu.memory_space<vmem>>, %arg6: memref<8x150xf32, #tpu.memory_space<vmem>>, %arg7: memref<8x1xf32, #tpu.memory_space<vmem>>, %arg8: memref<8x1xf32, #tpu.memory_space<vmem>>, %arg9: memref<8x1xf32, #tpu.memory_space<vmem>>, %arg10: memref<1x1792xf32, #tpu.memory_space<vmem>>, %arg11: memref<1x1792xf32, #tpu.memory_space<vmem>>, %arg12: memref<7168x60xbf16, #tpu.memory_space<vmem>>, %arg13: memref<1x60xf32, #tpu.memory_space<vmem>>, %arg14: memref<60x10xf32, #tpu.memory_space<vmem>>, %arg15: memref<1x10xf32, #tpu.memory_space<vmem>>, %arg16: memref<10x2xf32, #tpu.memory_space<vmem>>, %arg17: memref<1x2xf32, #tpu.memory_space<vmem>>, %arg18: memref<2x2xf32, #tpu.memory_space<vmem>>, %arg19: memref<3x1792xf32, #tpu.memory_space<vmem>>, %arg20: memref<75x1792xf32, #tpu.memory_space<vmem>>, %arg21: memref<150x1792xf32, #tpu.memory_space<vmem>>, %arg22: memref<2x7168xf32, #tpu.memory_space<vmem>>) attributes {dimension_semantics = [#tpu.dimension_semantics<arbitrary>], iteration_bounds = array<i64: 1>, scalar_prefetch = 0 : i64, scratch_operands = 4 : i64, tpu.core_type = #tpu.core_type<tc>, window_params = [{pipeline_mode = #tpu.pipeline_mode<synchronous>, transform_indices = @transform_0, window_bounds = array<i64: 2, 3, 784>}, {pipeline_mode = #tpu.pipeline_mode<synchronous>, transform_indices = @transform_1, window_bounds = array<i64: 6, 75>}, {pipeline_mode = #tpu.pipeline_mode<synchronous>, transform_indices = @transform_2, window_bounds = array<i64: 6, 1>}, {pipeline_mode = #tpu.pipeline_mode<synchronous>, transform_indices = @transform_3, window_bounds = array<i64: 6, 1>}, {pipeline_mode = #tpu.pipeline_mode<synchronous>, transform_indices = @transform_4, window_bounds = array<i64: 6, 1>}, {pipeline_mode = #tpu.pipeline_mode<synchronous>, transform_indices = @transform_5, window_bounds = array<i64: 8, 150>}, {pipeline_mode = #tpu.pipeline_mode<synchronous>, transform_indices = @transform_6, window_bounds = array<i64: 8, 1>}, {pipeline_mode = #tpu.pipeline_mode<synchronous>, transform_indices = @transform_7, window_bounds = array<i64: 8, 1>}, {pipeline_mode = #tpu.pipeline_mode<synchronous>, transform_indices = @transform_8, window_bounds = array<i64: 8, 1>}, {pipeline_mode = #tpu.pipeline_mode<synchronous>, transform_indices = @transform_9, window_bounds = array<i64: 1, 1792>}, {pipeline_mode = #tpu.pipeline_mode<synchronous>, transform_indices = @transform_10, window_bounds = array<i64: 1, 1792>}, {pipeline_mode = #tpu.pipeline_mode<synchronous>, transform_indices = @transform_11, window_bounds = array<i64: 7168, 60>}, {pipeline_mode = #tpu.pipeline_mode<synchronous>, transform_indices = @transform_12, window_bounds = array<i64: 1, 60>}, {pipeline_mode = #tpu.pipeline_mode<synchronous>, transform_indices = @transform_13, window_bounds = array<i64: 60, 10>}, {pipeline_mode = #tpu.pipeline_mode<synchronous>, transform_indices = @transform_14, window_bounds = array<i64: 1, 10>}, {pipeline_mode = #tpu.pipeline_mode<synchronous>, transform_indices = @transform_15, window_bounds = array<i64: 10, 2>}, {pipeline_mode = #tpu.pipeline_mode<synchronous>, transform_indices = @transform_16, window_bounds = array<i64: 1, 2>}, {pipeline_mode = #tpu.pipeline_mode<synchronous>, transform_indices = @transform_17, window_bounds = array<i64: 2, 2>}]} {
    %cst = arith.constant 0.000000e+00 : f32
    %0 = vector.broadcast %cst : f32 to vector<3x1792xf32>
    %c0 = arith.constant 0 : index
    %c0_0 = arith.constant 0 : index
    %1 = vector.load %arg19[%c0, %c0_0] : memref<3x1792xf32, #tpu.memory_space<vmem>>, vector<3x1792xf32>
    tpu.vector_store %arg19[%c0, %c0_0], %0 {strides = array<i32>} : memref<3x1792xf32, #tpu.memory_space<vmem>>, vector<3x1792xf32>,
    %c0_1 = arith.constant 0 : index
    %c0_2 = arith.constant 0 : index
    %c0_3 = arith.constant 0 : index
    %2 = vector.load %arg1[%c0_1, %c0_2, %c0_3] : memref<2x3x784xf32, #tpu.memory_space<vmem>>, vector<1x3x784xf32>
    %3 = vector.shape_cast %2 : vector<1x3x784xf32> to vector<3x784xf32>
    %c0_4 = arith.constant 0 : index
    %c0_5 = arith.constant 0 : index
    %4 = vector.load %arg19[%c0_4, %c0_5] : memref<3x1792xf32, #tpu.memory_space<vmem>>, vector<3x784xf32>
    tpu.vector_store %arg19[%c0_4, %c0_5], %3 {strides = array<i32>} : memref<3x1792xf32, #tpu.memory_space<vmem>>, vector<3x784xf32>,
    %c1 = arith.constant 1 : index
    %c0_6 = arith.constant 0 : index
    %c0_7 = arith.constant 0 : index
    %5 = vector.load %arg1[%c1, %c0_6, %c0_7] : memref<2x3x784xf32, #tpu.memory_space<vmem>>, vector<1x3x784xf32>
    %6 = vector.shape_cast %5 : vector<1x3x784xf32> to vector<3x784xf32>
    %c0_8 = arith.constant 0 : index
    %c896 = arith.constant 896 : index
    %7 = vector.load %arg19[%c0_8, %c896] : memref<3x1792xf32, #tpu.memory_space<vmem>>, vector<3x784xf32>
    tpu.vector_store %arg19[%c0_8, %c896], %6 {strides = array<i32>} : memref<3x1792xf32, #tpu.memory_space<vmem>>, vector<3x784xf32>,
    %c0_9 = arith.constant 0 : index
    %c0_10 = arith.constant 0 : index
    %8 = vector.load %arg19[%c0_9, %c0_10] : memref<3x1792xf32, #tpu.memory_space<vmem>>, vector<3x1792xf32>
    %c0_11 = arith.constant 0 : index
    %c0_12 = arith.constant 0 : index
    %9 = vector.load %arg10[%c0_11, %c0_12] : memref<1x1792xf32, #tpu.memory_space<vmem>>, vector<1x1792xf32>
    %c0_13 = arith.constant 0 : index
    %c0_14 = arith.constant 0 : index
    %10 = vector.load %arg11[%c0_13, %c0_14] : memref<1x1792xf32, #tpu.memory_space<vmem>>, vector<1x1792xf32>
    %c0_15 = arith.constant 0 : index
    %c0_16 = arith.constant 0 : index
    %11 = vector.load %arg20[%c0_15, %c0_16] : memref<75x1792xf32, #tpu.memory_space<vmem>>, vector<3x1792xf32>
    tpu.vector_store %arg20[%c0_15, %c0_16], %8 {strides = array<i32>} : memref<75x1792xf32, #tpu.memory_space<vmem>>, vector<3x1792xf32>,
    %c1791_i32 = arith.constant 1791 : i32
    %12 = tpu.dynamic_rotate %8 by %c1791_i32 dim 1 : vector<3x1792xf32>, i32 -> vector<3x1792xf32>
    %c3 = arith.constant 3 : index
    %c0_17 = arith.constant 0 : index
    %13 = vector.load %arg20[%c3, %c0_17] : memref<75x1792xf32, #tpu.memory_space<vmem>>, vector<3x1792xf32>
    tpu.vector_store %arg20[%c3, %c0_17], %12 {strides = array<i32>} : memref<75x1792xf32, #tpu.memory_space<vmem>>, vector<3x1792xf32>,
    %c1790_i32 = arith.constant 1790 : i32
    %14 = tpu.dynamic_rotate %8 by %c1790_i32 dim 1 : vector<3x1792xf32>, i32 -> vector<3x1792xf32>
    %c6 = arith.constant 6 : index
    %c0_18 = arith.constant 0 : index
    %15 = vector.load %arg20[%c6, %c0_18] : memref<75x1792xf32, #tpu.memory_space<vmem>>, vector<3x1792xf32>
    tpu.vector_store %arg20[%c6, %c0_18], %14 {strides = array<i32>} : memref<75x1792xf32, #tpu.memory_space<vmem>>, vector<3x1792xf32>,
    %c1789_i32 = arith.constant 1789 : i32
    %16 = tpu.dynamic_rotate %8 by %c1789_i32 dim 1 : vector<3x1792xf32>, i32 -> vector<3x1792xf32>
    %c9 = arith.constant 9 : index
    %c0_19 = arith.constant 0 : index
    %17 = vector.load %arg20[%c9, %c0_19] : memref<75x1792xf32, #tpu.memory_space<vmem>>, vector<3x1792xf32>
    tpu.vector_store %arg20[%c9, %c0_19], %16 {strides = array<i32>} : memref<75x1792xf32, #tpu.memory_space<vmem>>, vector<3x1792xf32>,
    %c1788_i32 = arith.constant 1788 : i32
    %18 = tpu.dynamic_rotate %8 by %c1788_i32 dim 1 : vector<3x1792xf32>, i32 -> vector<3x1792xf32>
    %c12 = arith.constant 12 : index
    %c0_20 = arith.constant 0 : index
    %19 = vector.load %arg20[%c12, %c0_20] : memref<75x1792xf32, #tpu.memory_space<vmem>>, vector<3x1792xf32>
    tpu.vector_store %arg20[%c12, %c0_20], %18 {strides = array<i32>} : memref<75x1792xf32, #tpu.memory_space<vmem>>, vector<3x1792xf32>,
    %c1764_i32 = arith.constant 1764 : i32
    %20 = tpu.dynamic_rotate %8 by %c1764_i32 dim 1 : vector<3x1792xf32>, i32 -> vector<3x1792xf32>
    %c15 = arith.constant 15 : index
    %c0_21 = arith.constant 0 : index
    %21 = vector.load %arg20[%c15, %c0_21] : memref<75x1792xf32, #tpu.memory_space<vmem>>, vector<3x1792xf32>
    tpu.vector_store %arg20[%c15, %c0_21], %20 {strides = array<i32>} : memref<75x1792xf32, #tpu.memory_space<vmem>>, vector<3x1792xf32>,
    %c1763_i32 = arith.constant 1763 : i32
    %22 = tpu.dynamic_rotate %8 by %c1763_i32 dim 1 : vector<3x1792xf32>, i32 -> vector<3x1792xf32>
    %c18 = arith.constant 18 : index
    %c0_22 = arith.constant 0 : index
    %23 = vector.load %arg20[%c18, %c0_22] : memref<75x1792xf32, #tpu.memory_space<vmem>>, vector<3x1792xf32>
    tpu.vector_store %arg20[%c18, %c0_22], %22 {strides = array<i32>} : memref<75x1792xf32, #tpu.memory_space<vmem>>, vector<3x1792xf32>,
    %c1762_i32 = arith.constant 1762 : i32
    %24 = tpu.dynamic_rotate %8 by %c1762_i32 dim 1 : vector<3x1792xf32>, i32 -> vector<3x1792xf32>
    %c21 = arith.constant 21 : index
    %c0_23 = arith.constant 0 : index
    %25 = vector.load %arg20[%c21, %c0_23] : memref<75x1792xf32, #tpu.memory_space<vmem>>, vector<3x1792xf32>
    tpu.vector_store %arg20[%c21, %c0_23], %24 {strides = array<i32>} : memref<75x1792xf32, #tpu.memory_space<vmem>>, vector<3x1792xf32>,
    %c1761_i32 = arith.constant 1761 : i32
    %26 = tpu.dynamic_rotate %8 by %c1761_i32 dim 1 : vector<3x1792xf32>, i32 -> vector<3x1792xf32>
    %c24 = arith.constant 24 : index
    %c0_24 = arith.constant 0 : index
    %27 = vector.load %arg20[%c24, %c0_24] : memref<75x1792xf32, #tpu.memory_space<vmem>>, vector<3x1792xf32>
    tpu.vector_store %arg20[%c24, %c0_24], %26 {strides = array<i32>} : memref<75x1792xf32, #tpu.memory_space<vmem>>, vector<3x1792xf32>,
    %c1760_i32 = arith.constant 1760 : i32
    %28 = tpu.dynamic_rotate %8 by %c1760_i32 dim 1 : vector<3x1792xf32>, i32 -> vector<3x1792xf32>
    %c27 = arith.constant 27 : index
    %c0_25 = arith.constant 0 : index
    %29 = vector.load %arg20[%c27, %c0_25] : memref<75x1792xf32, #tpu.memory_space<vmem>>, vector<3x1792xf32>
    tpu.vector_store %arg20[%c27, %c0_25], %28 {strides = array<i32>} : memref<75x1792xf32, #tpu.memory_space<vmem>>, vector<3x1792xf32>,
    %c1736_i32 = arith.constant 1736 : i32
    %30 = tpu.dynamic_rotate %8 by %c1736_i32 dim 1 : vector<3x1792xf32>, i32 -> vector<3x1792xf32>
    %c30 = arith.constant 30 : index
    %c0_26 = arith.constant 0 : index
    %31 = vector.load %arg20[%c30, %c0_26] : memref<75x1792xf32, #tpu.memory_space<vmem>>, vector<3x1792xf32>
    tpu.vector_store %arg20[%c30, %c0_26], %30 {strides = array<i32>} : memref<75x1792xf32, #tpu.memory_space<vmem>>, vector<3x1792xf32>,
    %c1735_i32 = arith.constant 1735 : i32
    %32 = tpu.dynamic_rotate %8 by %c1735_i32 dim 1 : vector<3x1792xf32>, i32 -> vector<3x1792xf32>
    %c33 = arith.constant 33 : index
    %c0_27 = arith.constant 0 : index
    %33 = vector.load %arg20[%c33, %c0_27] : memref<75x1792xf32, #tpu.memory_space<vmem>>, vector<3x1792xf32>
    tpu.vector_store %arg20[%c33, %c0_27], %32 {strides = array<i32>} : memref<75x1792xf32, #tpu.memory_space<vmem>>, vector<3x1792xf32>,
    %c1734_i32 = arith.constant 1734 : i32
    %34 = tpu.dynamic_rotate %8 by %c1734_i32 dim 1 : vector<3x1792xf32>, i32 -> vector<3x1792xf32>
    %c36 = arith.constant 36 : index
    %c0_28 = arith.constant 0 : index
    %35 = vector.load %arg20[%c36, %c0_28] : memref<75x1792xf32, #tpu.memory_space<vmem>>, vector<3x1792xf32>
    tpu.vector_store %arg20[%c36, %c0_28], %34 {strides = array<i32>} : memref<75x1792xf32, #tpu.memory_space<vmem>>, vector<3x1792xf32>,
    %c1733_i32 = arith.constant 1733 : i32
    %36 = tpu.dynamic_rotate %8 by %c1733_i32 dim 1 : vector<3x1792xf32>, i32 -> vector<3x1792xf32>
    %c39 = arith.constant 39 : index
    %c0_29 = arith.constant 0 : index
    %37 = vector.load %arg20[%c39, %c0_29] : memref<75x1792xf32, #tpu.memory_space<vmem>>, vector<3x1792xf32>
    tpu.vector_store %arg20[%c39, %c0_29], %36 {strides = array<i32>} : memref<75x1792xf32, #tpu.memory_space<vmem>>, vector<3x1792xf32>,
    %c1732_i32 = arith.constant 1732 : i32
    %38 = tpu.dynamic_rotate %8 by %c1732_i32 dim 1 : vector<3x1792xf32>, i32 -> vector<3x1792xf32>
    %c42 = arith.constant 42 : index
    %c0_30 = arith.constant 0 : index
    %39 = vector.load %arg20[%c42, %c0_30] : memref<75x1792xf32, #tpu.memory_space<vmem>>, vector<3x1792xf32>
    tpu.vector_store %arg20[%c42, %c0_30], %38 {strides = array<i32>} : memref<75x1792xf32, #tpu.memory_space<vmem>>, vector<3x1792xf32>,
    %c1708_i32 = arith.constant 1708 : i32
    %40 = tpu.dynamic_rotate %8 by %c1708_i32 dim 1 : vector<3x1792xf32>, i32 -> vector<3x1792xf32>
    %c45 = arith.constant 45 : index
    %c0_31 = arith.constant 0 : index
    %41 = vector.load %arg20[%c45, %c0_31] : memref<75x1792xf32, #tpu.memory_space<vmem>>, vector<3x1792xf32>
    tpu.vector_store %arg20[%c45, %c0_31], %40 {strides = array<i32>} : memref<75x1792xf32, #tpu.memory_space<vmem>>, vector<3x1792xf32>,
    %c1707_i32 = arith.constant 1707 : i32
    %42 = tpu.dynamic_rotate %8 by %c1707_i32 dim 1 : vector<3x1792xf32>, i32 -> vector<3x1792xf32>
    %c48 = arith.constant 48 : index
    %c0_32 = arith.constant 0 : index
    %43 = vector.load %arg20[%c48, %c0_32] : memref<75x1792xf32, #tpu.memory_space<vmem>>, vector<3x1792xf32>
    tpu.vector_store %arg20[%c48, %c0_32], %42 {strides = array<i32>} : memref<75x1792xf32, #tpu.memory_space<vmem>>, vector<3x1792xf32>,
    %c1706_i32 = arith.constant 1706 : i32
    %44 = tpu.dynamic_rotate %8 by %c1706_i32 dim 1 : vector<3x1792xf32>, i32 -> vector<3x1792xf32>
    %c51 = arith.constant 51 : index
    %c0_33 = arith.constant 0 : index
    %45 = vector.load %arg20[%c51, %c0_33] : memref<75x1792xf32, #tpu.memory_space<vmem>>, vector<3x1792xf32>
    tpu.vector_store %arg20[%c51, %c0_33], %44 {strides = array<i32>} : memref<75x1792xf32, #tpu.memory_space<vmem>>, vector<3x1792xf32>,
    %c1705_i32 = arith.constant 1705 : i32
    %46 = tpu.dynamic_rotate %8 by %c1705_i32 dim 1 : vector<3x1792xf32>, i32 -> vector<3x1792xf32>
    %c54 = arith.constant 54 : index
    %c0_34 = arith.constant 0 : index
    %47 = vector.load %arg20[%c54, %c0_34] : memref<75x1792xf32, #tpu.memory_space<vmem>>, vector<3x1792xf32>
    tpu.vector_store %arg20[%c54, %c0_34], %46 {strides = array<i32>} : memref<75x1792xf32, #tpu.memory_space<vmem>>, vector<3x1792xf32>,
    %c1704_i32 = arith.constant 1704 : i32
    %48 = tpu.dynamic_rotate %8 by %c1704_i32 dim 1 : vector<3x1792xf32>, i32 -> vector<3x1792xf32>
    %c57 = arith.constant 57 : index
    %c0_35 = arith.constant 0 : index
    %49 = vector.load %arg20[%c57, %c0_35] : memref<75x1792xf32, #tpu.memory_space<vmem>>, vector<3x1792xf32>
    tpu.vector_store %arg20[%c57, %c0_35], %48 {strides = array<i32>} : memref<75x1792xf32, #tpu.memory_space<vmem>>, vector<3x1792xf32>,
    %c1680_i32 = arith.constant 1680 : i32
    %50 = tpu.dynamic_rotate %8 by %c1680_i32 dim 1 : vector<3x1792xf32>, i32 -> vector<3x1792xf32>
    %c60 = arith.constant 60 : index
    %c0_36 = arith.constant 0 : index
    %51 = vector.load %arg20[%c60, %c0_36] : memref<75x1792xf32, #tpu.memory_space<vmem>>, vector<3x1792xf32>
    tpu.vector_store %arg20[%c60, %c0_36], %50 {strides = array<i32>} : memref<75x1792xf32, #tpu.memory_space<vmem>>, vector<3x1792xf32>,
    %c1679_i32 = arith.constant 1679 : i32
    %52 = tpu.dynamic_rotate %8 by %c1679_i32 dim 1 : vector<3x1792xf32>, i32 -> vector<3x1792xf32>
    %c63 = arith.constant 63 : index
    %c0_37 = arith.constant 0 : index
    %53 = vector.load %arg20[%c63, %c0_37] : memref<75x1792xf32, #tpu.memory_space<vmem>>, vector<3x1792xf32>
    tpu.vector_store %arg20[%c63, %c0_37], %52 {strides = array<i32>} : memref<75x1792xf32, #tpu.memory_space<vmem>>, vector<3x1792xf32>,
    %c1678_i32 = arith.constant 1678 : i32
    %54 = tpu.dynamic_rotate %8 by %c1678_i32 dim 1 : vector<3x1792xf32>, i32 -> vector<3x1792xf32>
    %c66 = arith.constant 66 : index
    %c0_38 = arith.constant 0 : index
    %55 = vector.load %arg20[%c66, %c0_38] : memref<75x1792xf32, #tpu.memory_space<vmem>>, vector<3x1792xf32>
    tpu.vector_store %arg20[%c66, %c0_38], %54 {strides = array<i32>} : memref<75x1792xf32, #tpu.memory_space<vmem>>, vector<3x1792xf32>,
    %c1677_i32 = arith.constant 1677 : i32
    %56 = tpu.dynamic_rotate %8 by %c1677_i32 dim 1 : vector<3x1792xf32>, i32 -> vector<3x1792xf32>
    %c69 = arith.constant 69 : index
    %c0_39 = arith.constant 0 : index
    %57 = vector.load %arg20[%c69, %c0_39] : memref<75x1792xf32, #tpu.memory_space<vmem>>, vector<3x1792xf32>
    tpu.vector_store %arg20[%c69, %c0_39], %56 {strides = array<i32>} : memref<75x1792xf32, #tpu.memory_space<vmem>>, vector<3x1792xf32>,
    %c1676_i32 = arith.constant 1676 : i32
    %58 = tpu.dynamic_rotate %8 by %c1676_i32 dim 1 : vector<3x1792xf32>, i32 -> vector<3x1792xf32>
    %c72 = arith.constant 72 : index
    %c0_40 = arith.constant 0 : index
    %59 = vector.load %arg20[%c72, %c0_40] : memref<75x1792xf32, #tpu.memory_space<vmem>>, vector<3x1792xf32>
    tpu.vector_store %arg20[%c72, %c0_40], %58 {strides = array<i32>} : memref<75x1792xf32, #tpu.memory_space<vmem>>, vector<3x1792xf32>,
    %c0_41 = arith.constant 0 : index
    %c0_42 = arith.constant 0 : index
    %60 = vector.load %arg2[%c0_41, %c0_42] : memref<6x75xf32, #tpu.memory_space<vmem>>, vector<6x75xf32>
    %61 = arith.truncf %60 : vector<6x75xf32> to vector<6x75xbf16>
    %c0_43 = arith.constant 0 : index
    %c0_44 = arith.constant 0 : index
    %62 = vector.load %arg20[%c0_43, %c0_44] : memref<75x1792xf32, #tpu.memory_space<vmem>>, vector<75x1792xf32>
    %63 = arith.truncf %62 : vector<75x1792xf32> to vector<75x1792xbf16>
    %cst_45 = arith.constant dense<0.000000e+00> : vector<6x1792xf32>
    %64 = tpu.matmul %61, %63, %cst_45 {dimension_numbers = #tpu.dot_dimension_numbers<[1], [0], [0], [1], [0, 0, 1, 1], [], []>} : vector<6x75xbf16>, vector<75x1792xbf16>, vector<6x1792xf32> -> vector<6x1792xf32>
    %c0_46 = arith.constant 0 : index
    %c0_47 = arith.constant 0 : index
    %65 = vector.load %arg3[%c0_46, %c0_47] : memref<6x1xf32, #tpu.memory_space<vmem>>, vector<6x1xf32>
    %66 = vector.broadcast %65 : vector<6x1xf32> to vector<6x1792xf32>
    %67 = arith.addf %64, %66 : vector<6x1792xf32>
    %68 = vector.broadcast %9 : vector<1x1792xf32> to vector<6x1792xf32>
    %69 = arith.mulf %67, %68 : vector<6x1792xf32>
    %cst_48 = arith.constant dense<0.000000e+00> : vector<6xf32>
    %70 = vector.multi_reduction <add>, %69, %cst_48 [1] : vector<6x1792xf32> to vector<6xf32>
    %71 = vector.shape_cast %70 : vector<6xf32> to vector<6x1xf32>
    %cst_49 = arith.constant 8.68055562E-4 : f32
    %72 = vector.broadcast %cst_49 : f32 to vector<6x1xf32>
    %73 = arith.mulf %71, %72 : vector<6x1xf32>
    %74 = vector.broadcast %73 : vector<6x1xf32> to vector<6x1792xf32>
    %75 = arith.subf %67, %74 : vector<6x1792xf32>
    %76 = arith.mulf %75, %75 : vector<6x1792xf32>
    %77 = vector.broadcast %9 : vector<1x1792xf32> to vector<6x1792xf32>
    %78 = arith.mulf %76, %77 : vector<6x1792xf32>
    %cst_50 = arith.constant dense<0.000000e+00> : vector<6xf32>
    %79 = vector.multi_reduction <add>, %78, %cst_50 [1] : vector<6x1792xf32> to vector<6xf32>
    %80 = vector.shape_cast %79 : vector<6xf32> to vector<6x1xf32>
    %cst_51 = arith.constant 8.68055562E-4 : f32
    %81 = vector.broadcast %cst_51 : f32 to vector<6x1xf32>
    %82 = arith.mulf %80, %81 : vector<6x1xf32>
    %83 = vector.broadcast %73 : vector<6x1xf32> to vector<6x1792xf32>
    %84 = arith.subf %67, %83 : vector<6x1792xf32>
    %cst_52 = arith.constant 9.99999974E-6 : f32
    %85 = vector.broadcast %cst_52 : f32 to vector<6x1xf32>
    %86 = arith.addf %82, %85 : vector<6x1xf32>
    %87 = math.rsqrt %86 : vector<6x1xf32>
    %88 = vector.broadcast %87 : vector<6x1xf32> to vector<6x1792xf32>
    %89 = arith.mulf %84, %88 : vector<6x1792xf32>
    %c0_53 = arith.constant 0 : index
    %c0_54 = arith.constant 0 : index
    %90 = vector.load %arg4[%c0_53, %c0_54] : memref<6x1xf32, #tpu.memory_space<vmem>>, vector<6x1xf32>
    %91 = vector.broadcast %90 : vector<6x1xf32> to vector<6x1792xf32>
    %92 = arith.mulf %89, %91 : vector<6x1792xf32>
    %c0_55 = arith.constant 0 : index
    %c0_56 = arith.constant 0 : index
    %93 = vector.load %arg5[%c0_55, %c0_56] : memref<6x1xf32, #tpu.memory_space<vmem>>, vector<6x1xf32>
    %94 = vector.broadcast %93 : vector<6x1xf32> to vector<6x1792xf32>
    %95 = arith.addf %92, %94 : vector<6x1792xf32>
    %c1791_i32_57 = arith.constant 1791 : i32
    %96 = tpu.dynamic_rotate %95 by %c1791_i32_57 dim 1 : vector<6x1792xf32>, i32 -> vector<6x1792xf32>
    %97 = arith.maximumf %95, %96 : vector<6x1792xf32>
    %c1764_i32_58 = arith.constant 1764 : i32
    %98 = tpu.dynamic_rotate %95 by %c1764_i32_58 dim 1 : vector<6x1792xf32>, i32 -> vector<6x1792xf32>
    %c1763_i32_59 = arith.constant 1763 : i32
    %99 = tpu.dynamic_rotate %95 by %c1763_i32_59 dim 1 : vector<6x1792xf32>, i32 -> vector<6x1792xf32>
    %100 = arith.maximumf %98, %99 : vector<6x1792xf32>
    %101 = arith.maximumf %97, %100 : vector<6x1792xf32>
    %c0_60 = arith.constant 0 : index
    %c0_61 = arith.constant 0 : index
    %102 = vector.load %arg21[%c0_60, %c0_61] : memref<150x1792xf32, #tpu.memory_space<vmem>>, vector<6x1792xf32>
    tpu.vector_store %arg21[%c0_60, %c0_61], %101 {strides = array<i32>} : memref<150x1792xf32, #tpu.memory_space<vmem>>, vector<6x1792xf32>,
    %c1791_i32_62 = arith.constant 1791 : i32
    %103 = tpu.dynamic_rotate %101 by %c1791_i32_62 dim 1 : vector<6x1792xf32>, i32 -> vector<6x1792xf32>
    %c6_63 = arith.constant 6 : index
    %c0_64 = arith.constant 0 : index
    %104 = vector.load %arg21[%c6_63, %c0_64] : memref<150x1792xf32, #tpu.memory_space<vmem>>, vector<6x1792xf32>
    tpu.vector_store %arg21[%c6_63, %c0_64], %103 {strides = array<i32>} : memref<150x1792xf32, #tpu.memory_space<vmem>>, vector<6x1792xf32>,
    %c1790_i32_65 = arith.constant 1790 : i32
    %105 = tpu.dynamic_rotate %101 by %c1790_i32_65 dim 1 : vector<6x1792xf32>, i32 -> vector<6x1792xf32>
    %c12_66 = arith.constant 12 : index
    %c0_67 = arith.constant 0 : index
    %106 = vector.load %arg21[%c12_66, %c0_67] : memref<150x1792xf32, #tpu.memory_space<vmem>>, vector<6x1792xf32>
    tpu.vector_store %arg21[%c12_66, %c0_67], %105 {strides = array<i32>} : memref<150x1792xf32, #tpu.memory_space<vmem>>, vector<6x1792xf32>,
    %c1789_i32_68 = arith.constant 1789 : i32
    %107 = tpu.dynamic_rotate %101 by %c1789_i32_68 dim 1 : vector<6x1792xf32>, i32 -> vector<6x1792xf32>
    %c18_69 = arith.constant 18 : index
    %c0_70 = arith.constant 0 : index
    %108 = vector.load %arg21[%c18_69, %c0_70] : memref<150x1792xf32, #tpu.memory_space<vmem>>, vector<6x1792xf32>
    tpu.vector_store %arg21[%c18_69, %c0_70], %107 {strides = array<i32>} : memref<150x1792xf32, #tpu.memory_space<vmem>>, vector<6x1792xf32>,
    %c1788_i32_71 = arith.constant 1788 : i32
    %109 = tpu.dynamic_rotate %101 by %c1788_i32_71 dim 1 : vector<6x1792xf32>, i32 -> vector<6x1792xf32>
    %c24_72 = arith.constant 24 : index
    %c0_73 = arith.constant 0 : index
    %110 = vector.load %arg21[%c24_72, %c0_73] : memref<150x1792xf32, #tpu.memory_space<vmem>>, vector<6x1792xf32>
    tpu.vector_store %arg21[%c24_72, %c0_73], %109 {strides = array<i32>} : memref<150x1792xf32, #tpu.memory_space<vmem>>, vector<6x1792xf32>,
    %c1764_i32_74 = arith.constant 1764 : i32
    %111 = tpu.dynamic_rotate %101 by %c1764_i32_74 dim 1 : vector<6x1792xf32>, i32 -> vector<6x1792xf32>
    %c30_75 = arith.constant 30 : index
    %c0_76 = arith.constant 0 : index
    %112 = vector.load %arg21[%c30_75, %c0_76] : memref<150x1792xf32, #tpu.memory_space<vmem>>, vector<6x1792xf32>
    tpu.vector_store %arg21[%c30_75, %c0_76], %111 {strides = array<i32>} : memref<150x1792xf32, #tpu.memory_space<vmem>>, vector<6x1792xf32>,
    %c1763_i32_77 = arith.constant 1763 : i32
    %113 = tpu.dynamic_rotate %101 by %c1763_i32_77 dim 1 : vector<6x1792xf32>, i32 -> vector<6x1792xf32>
    %c36_78 = arith.constant 36 : index
    %c0_79 = arith.constant 0 : index
    %114 = vector.load %arg21[%c36_78, %c0_79] : memref<150x1792xf32, #tpu.memory_space<vmem>>, vector<6x1792xf32>
    tpu.vector_store %arg21[%c36_78, %c0_79], %113 {strides = array<i32>} : memref<150x1792xf32, #tpu.memory_space<vmem>>, vector<6x1792xf32>,
    %c1762_i32_80 = arith.constant 1762 : i32
    %115 = tpu.dynamic_rotate %101 by %c1762_i32_80 dim 1 : vector<6x1792xf32>, i32 -> vector<6x1792xf32>
    %c42_81 = arith.constant 42 : index
    %c0_82 = arith.constant 0 : index
    %116 = vector.load %arg21[%c42_81, %c0_82] : memref<150x1792xf32, #tpu.memory_space<vmem>>, vector<6x1792xf32>
    tpu.vector_store %arg21[%c42_81, %c0_82], %115 {strides = array<i32>} : memref<150x1792xf32, #tpu.memory_space<vmem>>, vector<6x1792xf32>,
    %c1761_i32_83 = arith.constant 1761 : i32
    %117 = tpu.dynamic_rotate %101 by %c1761_i32_83 dim 1 : vector<6x1792xf32>, i32 -> vector<6x1792xf32>
    %c48_84 = arith.constant 48 : index
    %c0_85 = arith.constant 0 : index
    %118 = vector.load %arg21[%c48_84, %c0_85] : memref<150x1792xf32, #tpu.memory_space<vmem>>, vector<6x1792xf32>
    tpu.vector_store %arg21[%c48_84, %c0_85], %117 {strides = array<i32>} : memref<150x1792xf32, #tpu.memory_space<vmem>>, vector<6x1792xf32>,
    %c1760_i32_86 = arith.constant 1760 : i32
    %119 = tpu.dynamic_rotate %101 by %c1760_i32_86 dim 1 : vector<6x1792xf32>, i32 -> vector<6x1792xf32>
    %c54_87 = arith.constant 54 : index
    %c0_88 = arith.constant 0 : index
    %120 = vector.load %arg21[%c54_87, %c0_88] : memref<150x1792xf32, #tpu.memory_space<vmem>>, vector<6x1792xf32>
    tpu.vector_store %arg21[%c54_87, %c0_88], %119 {strides = array<i32>} : memref<150x1792xf32, #tpu.memory_space<vmem>>, vector<6x1792xf32>,
    %c1736_i32_89 = arith.constant 1736 : i32
    %121 = tpu.dynamic_rotate %101 by %c1736_i32_89 dim 1 : vector<6x1792xf32>, i32 -> vector<6x1792xf32>
    %c60_90 = arith.constant 60 : index
    %c0_91 = arith.constant 0 : index
    %122 = vector.load %arg21[%c60_90, %c0_91] : memref<150x1792xf32, #tpu.memory_space<vmem>>, vector<6x1792xf32>
    tpu.vector_store %arg21[%c60_90, %c0_91], %121 {strides = array<i32>} : memref<150x1792xf32, #tpu.memory_space<vmem>>, vector<6x1792xf32>,
    %c1735_i32_92 = arith.constant 1735 : i32
    %123 = tpu.dynamic_rotate %101 by %c1735_i32_92 dim 1 : vector<6x1792xf32>, i32 -> vector<6x1792xf32>
    %c66_93 = arith.constant 66 : index
    %c0_94 = arith.constant 0 : index
    %124 = vector.load %arg21[%c66_93, %c0_94] : memref<150x1792xf32, #tpu.memory_space<vmem>>, vector<6x1792xf32>
    tpu.vector_store %arg21[%c66_93, %c0_94], %123 {strides = array<i32>} : memref<150x1792xf32, #tpu.memory_space<vmem>>, vector<6x1792xf32>,
    %c1734_i32_95 = arith.constant 1734 : i32
    %125 = tpu.dynamic_rotate %101 by %c1734_i32_95 dim 1 : vector<6x1792xf32>, i32 -> vector<6x1792xf32>
    %c72_96 = arith.constant 72 : index
    %c0_97 = arith.constant 0 : index
    %126 = vector.load %arg21[%c72_96, %c0_97] : memref<150x1792xf32, #tpu.memory_space<vmem>>, vector<6x1792xf32>
    tpu.vector_store %arg21[%c72_96, %c0_97], %125 {strides = array<i32>} : memref<150x1792xf32, #tpu.memory_space<vmem>>, vector<6x1792xf32>,
    %c1733_i32_98 = arith.constant 1733 : i32
    %127 = tpu.dynamic_rotate %101 by %c1733_i32_98 dim 1 : vector<6x1792xf32>, i32 -> vector<6x1792xf32>
    %c78 = arith.constant 78 : index
    %c0_99 = arith.constant 0 : index
    %128 = vector.load %arg21[%c78, %c0_99] : memref<150x1792xf32, #tpu.memory_space<vmem>>, vector<6x1792xf32>
    tpu.vector_store %arg21[%c78, %c0_99], %127 {strides = array<i32>} : memref<150x1792xf32, #tpu.memory_space<vmem>>, vector<6x1792xf32>,
    %c1732_i32_100 = arith.constant 1732 : i32
    %129 = tpu.dynamic_rotate %101 by %c1732_i32_100 dim 1 : vector<6x1792xf32>, i32 -> vector<6x1792xf32>
    %c84 = arith.constant 84 : index
    %c0_101 = arith.constant 0 : index
    %130 = vector.load %arg21[%c84, %c0_101] : memref<150x1792xf32, #tpu.memory_space<vmem>>, vector<6x1792xf32>
    tpu.vector_store %arg21[%c84, %c0_101], %129 {strides = array<i32>} : memref<150x1792xf32, #tpu.memory_space<vmem>>, vector<6x1792xf32>,
    %c1708_i32_102 = arith.constant 1708 : i32
    %131 = tpu.dynamic_rotate %101 by %c1708_i32_102 dim 1 : vector<6x1792xf32>, i32 -> vector<6x1792xf32>
    %c90 = arith.constant 90 : index
    %c0_103 = arith.constant 0 : index
    %132 = vector.load %arg21[%c90, %c0_103] : memref<150x1792xf32, #tpu.memory_space<vmem>>, vector<6x1792xf32>
    tpu.vector_store %arg21[%c90, %c0_103], %131 {strides = array<i32>} : memref<150x1792xf32, #tpu.memory_space<vmem>>, vector<6x1792xf32>,
    %c1707_i32_104 = arith.constant 1707 : i32
    %133 = tpu.dynamic_rotate %101 by %c1707_i32_104 dim 1 : vector<6x1792xf32>, i32 -> vector<6x1792xf32>
    %c96 = arith.constant 96 : index
    %c0_105 = arith.constant 0 : index
    %134 = vector.load %arg21[%c96, %c0_105] : memref<150x1792xf32, #tpu.memory_space<vmem>>, vector<6x1792xf32>
    tpu.vector_store %arg21[%c96, %c0_105], %133 {strides = array<i32>} : memref<150x1792xf32, #tpu.memory_space<vmem>>, vector<6x1792xf32>,
    %c1706_i32_106 = arith.constant 1706 : i32
    %135 = tpu.dynamic_rotate %101 by %c1706_i32_106 dim 1 : vector<6x1792xf32>, i32 -> vector<6x1792xf32>
    %c102 = arith.constant 102 : index
    %c0_107 = arith.constant 0 : index
    %136 = vector.load %arg21[%c102, %c0_107] : memref<150x1792xf32, #tpu.memory_space<vmem>>, vector<6x1792xf32>
    tpu.vector_store %arg21[%c102, %c0_107], %135 {strides = array<i32>} : memref<150x1792xf32, #tpu.memory_space<vmem>>, vector<6x1792xf32>,
    %c1705_i32_108 = arith.constant 1705 : i32
    %137 = tpu.dynamic_rotate %101 by %c1705_i32_108 dim 1 : vector<6x1792xf32>, i32 -> vector<6x1792xf32>
    %c108 = arith.constant 108 : index
    %c0_109 = arith.constant 0 : index
    %138 = vector.load %arg21[%c108, %c0_109] : memref<150x1792xf32, #tpu.memory_space<vmem>>, vector<6x1792xf32>
    tpu.vector_store %arg21[%c108, %c0_109], %137 {strides = array<i32>} : memref<150x1792xf32, #tpu.memory_space<vmem>>, vector<6x1792xf32>,
    %c1704_i32_110 = arith.constant 1704 : i32
    %139 = tpu.dynamic_rotate %101 by %c1704_i32_110 dim 1 : vector<6x1792xf32>, i32 -> vector<6x1792xf32>
    %c114 = arith.constant 114 : index
    %c0_111 = arith.constant 0 : index
    %140 = vector.load %arg21[%c114, %c0_111] : memref<150x1792xf32, #tpu.memory_space<vmem>>, vector<6x1792xf32>
    tpu.vector_store %arg21[%c114, %c0_111], %139 {strides = array<i32>} : memref<150x1792xf32, #tpu.memory_space<vmem>>, vector<6x1792xf32>,
    %c1680_i32_112 = arith.constant 1680 : i32
    %141 = tpu.dynamic_rotate %101 by %c1680_i32_112 dim 1 : vector<6x1792xf32>, i32 -> vector<6x1792xf32>
    %c120 = arith.constant 120 : index
    %c0_113 = arith.constant 0 : index
    %142 = vector.load %arg21[%c120, %c0_113] : memref<150x1792xf32, #tpu.memory_space<vmem>>, vector<6x1792xf32>
    tpu.vector_store %arg21[%c120, %c0_113], %141 {strides = array<i32>} : memref<150x1792xf32, #tpu.memory_space<vmem>>, vector<6x1792xf32>,
    %c1679_i32_114 = arith.constant 1679 : i32
    %143 = tpu.dynamic_rotate %101 by %c1679_i32_114 dim 1 : vector<6x1792xf32>, i32 -> vector<6x1792xf32>
    %c126 = arith.constant 126 : index
    %c0_115 = arith.constant 0 : index
    %144 = vector.load %arg21[%c126, %c0_115] : memref<150x1792xf32, #tpu.memory_space<vmem>>, vector<6x1792xf32>
    tpu.vector_store %arg21[%c126, %c0_115], %143 {strides = array<i32>} : memref<150x1792xf32, #tpu.memory_space<vmem>>, vector<6x1792xf32>,
    %c1678_i32_116 = arith.constant 1678 : i32
    %145 = tpu.dynamic_rotate %101 by %c1678_i32_116 dim 1 : vector<6x1792xf32>, i32 -> vector<6x1792xf32>
    %c132 = arith.constant 132 : index
    %c0_117 = arith.constant 0 : index
    %146 = vector.load %arg21[%c132, %c0_117] : memref<150x1792xf32, #tpu.memory_space<vmem>>, vector<6x1792xf32>
    tpu.vector_store %arg21[%c132, %c0_117], %145 {strides = array<i32>} : memref<150x1792xf32, #tpu.memory_space<vmem>>, vector<6x1792xf32>,
    %c1677_i32_118 = arith.constant 1677 : i32
    %147 = tpu.dynamic_rotate %101 by %c1677_i32_118 dim 1 : vector<6x1792xf32>, i32 -> vector<6x1792xf32>
    %c138 = arith.constant 138 : index
    %c0_119 = arith.constant 0 : index
    %148 = vector.load %arg21[%c138, %c0_119] : memref<150x1792xf32, #tpu.memory_space<vmem>>, vector<6x1792xf32>
    tpu.vector_store %arg21[%c138, %c0_119], %147 {strides = array<i32>} : memref<150x1792xf32, #tpu.memory_space<vmem>>, vector<6x1792xf32>,
    %c1676_i32_120 = arith.constant 1676 : i32
    %149 = tpu.dynamic_rotate %101 by %c1676_i32_120 dim 1 : vector<6x1792xf32>, i32 -> vector<6x1792xf32>
    %c144 = arith.constant 144 : index
    %c0_121 = arith.constant 0 : index
    %150 = vector.load %arg21[%c144, %c0_121] : memref<150x1792xf32, #tpu.memory_space<vmem>>, vector<6x1792xf32>
    tpu.vector_store %arg21[%c144, %c0_121], %149 {strides = array<i32>} : memref<150x1792xf32, #tpu.memory_space<vmem>>, vector<6x1792xf32>,
    %c0_122 = arith.constant 0 : index
    %c0_123 = arith.constant 0 : index
    %151 = vector.load %arg6[%c0_122, %c0_123] : memref<8x150xf32, #tpu.memory_space<vmem>>, vector<8x150xf32>
    %152 = arith.truncf %151 : vector<8x150xf32> to vector<8x150xbf16>
    %c0_124 = arith.constant 0 : index
    %c0_125 = arith.constant 0 : index
    %153 = vector.load %arg21[%c0_124, %c0_125] : memref<150x1792xf32, #tpu.memory_space<vmem>>, vector<150x1792xf32>
    %154 = arith.truncf %153 : vector<150x1792xf32> to vector<150x1792xbf16>
    %cst_126 = arith.constant dense<0.000000e+00> : vector<8x1792xf32>
    %155 = tpu.matmul %152, %154, %cst_126 {dimension_numbers = #tpu.dot_dimension_numbers<[1], [0], [0], [1], [0, 0, 1, 1], [], []>} : vector<8x150xbf16>, vector<150x1792xbf16>, vector<8x1792xf32> -> vector<8x1792xf32>
    %c0_127 = arith.constant 0 : index
    %c0_128 = arith.constant 0 : index
    %156 = vector.load %arg7[%c0_127, %c0_128] : memref<8x1xf32, #tpu.memory_space<vmem>>, vector<8x1xf32>
    %157 = vector.broadcast %156 : vector<8x1xf32> to vector<8x1792xf32>
    %158 = arith.addf %155, %157 : vector<8x1792xf32>
    %159 = vector.broadcast %10 : vector<1x1792xf32> to vector<8x1792xf32>
    %160 = arith.mulf %158, %159 : vector<8x1792xf32>
    %cst_129 = arith.constant dense<0.000000e+00> : vector<8xf32>
    %161 = vector.multi_reduction <add>, %160, %cst_129 [1] : vector<8x1792xf32> to vector<8xf32>
    %162 = vector.shape_cast %161 : vector<8xf32> to vector<8x1xf32>
    %cst_130 = arith.constant 0.00138504151 : f32
    %163 = vector.broadcast %cst_130 : f32 to vector<8x1xf32>
    %164 = arith.mulf %162, %163 : vector<8x1xf32>
    %165 = vector.broadcast %164 : vector<8x1xf32> to vector<8x1792xf32>
    %166 = arith.subf %158, %165 : vector<8x1792xf32>
    %167 = arith.mulf %166, %166 : vector<8x1792xf32>
    %168 = vector.broadcast %10 : vector<1x1792xf32> to vector<8x1792xf32>
    %169 = arith.mulf %167, %168 : vector<8x1792xf32>
    %cst_131 = arith.constant dense<0.000000e+00> : vector<8xf32>
    %170 = vector.multi_reduction <add>, %169, %cst_131 [1] : vector<8x1792xf32> to vector<8xf32>
    %171 = vector.shape_cast %170 : vector<8xf32> to vector<8x1xf32>
    %cst_132 = arith.constant 0.00138504151 : f32
    %172 = vector.broadcast %cst_132 : f32 to vector<8x1xf32>
    %173 = arith.mulf %171, %172 : vector<8x1xf32>
    %174 = vector.broadcast %164 : vector<8x1xf32> to vector<8x1792xf32>
    %175 = arith.subf %158, %174 : vector<8x1792xf32>
    %cst_133 = arith.constant 9.99999974E-6 : f32
    %176 = vector.broadcast %cst_133 : f32 to vector<8x1xf32>
    %177 = arith.addf %173, %176 : vector<8x1xf32>
    %178 = math.rsqrt %177 : vector<8x1xf32>
    %179 = vector.broadcast %178 : vector<8x1xf32> to vector<8x1792xf32>
    %180 = arith.mulf %175, %179 : vector<8x1792xf32>
    %c0_134 = arith.constant 0 : index
    %c0_135 = arith.constant 0 : index
    %181 = vector.load %arg8[%c0_134, %c0_135] : memref<8x1xf32, #tpu.memory_space<vmem>>, vector<8x1xf32>
    %182 = vector.broadcast %181 : vector<8x1xf32> to vector<8x1792xf32>
    %183 = arith.mulf %180, %182 : vector<8x1792xf32>
    %c0_136 = arith.constant 0 : index
    %c0_137 = arith.constant 0 : index
    %184 = vector.load %arg9[%c0_136, %c0_137] : memref<8x1xf32, #tpu.memory_space<vmem>>, vector<8x1xf32>
    %185 = vector.broadcast %184 : vector<8x1xf32> to vector<8x1792xf32>
    %186 = arith.addf %183, %185 : vector<8x1792xf32>
    %187 = vector.extract_strided_slice %186 {offsets = [0, 0], sizes = [8, 896], strides = [1, 1]} : vector<8x1792xf32> to vector<8x896xf32>
    %188 = vector.extract_strided_slice %186 {offsets = [0, 896], sizes = [8, 896], strides = [1, 1]} : vector<8x1792xf32> to vector<8x896xf32>
    %189 = arith.maximumf %187, %188 : vector<8x896xf32>
    %190 = arith.subf %187, %189 : vector<8x896xf32>
    %191 = math.exp %190 : vector<8x896xf32>
    %192 = arith.subf %188, %189 : vector<8x896xf32>
    %193 = math.exp %192 : vector<8x896xf32>
    %194 = arith.addf %191, %193 : vector<8x896xf32>
    %cst_138 = arith.constant 1.000000e+00 : f32
    %195 = vector.broadcast %cst_138 : f32 to vector<8x896xf32>
    %196 = arith.divf %195, %194 : vector<8x896xf32>
    %197 = vector.extract_strided_slice %10 {offsets = [0, 0], sizes = [1, 896], strides = [1, 1]} : vector<1x1792xf32> to vector<1x896xf32>
    %198 = arith.mulf %191, %196 : vector<8x896xf32>
    %199 = vector.broadcast %197 : vector<1x896xf32> to vector<8x896xf32>
    %200 = arith.mulf %198, %199 : vector<8x896xf32>
    %201 = vector.extract_strided_slice %200 {offsets = [0, 0], sizes = [1, 896], strides = [1, 1]} : vector<8x896xf32> to vector<1x896xf32>
    %c0_139 = arith.constant 0 : index
    %c0_140 = arith.constant 0 : index
    %202 = vector.load %arg22[%c0_139, %c0_140] : memref<2x7168xf32, #tpu.memory_space<vmem>>, vector<1x896xf32>
    tpu.vector_store %arg22[%c0_139, %c0_140], %201 {strides = array<i32>} : memref<2x7168xf32, #tpu.memory_space<vmem>>, vector<1x896xf32>,
    %203 = vector.extract_strided_slice %200 {offsets = [1, 0], sizes = [1, 896], strides = [1, 1]} : vector<8x896xf32> to vector<1x896xf32>
    %c0_141 = arith.constant 0 : index
    %c896_142 = arith.constant 896 : index
    %204 = vector.load %arg22[%c0_141, %c896_142] : memref<2x7168xf32, #tpu.memory_space<vmem>>, vector<1x896xf32>
    tpu.vector_store %arg22[%c0_141, %c896_142], %203 {strides = array<i32>} : memref<2x7168xf32, #tpu.memory_space<vmem>>, vector<1x896xf32>,
    %205 = vector.extract_strided_slice %200 {offsets = [2, 0], sizes = [1, 896], strides = [1, 1]} : vector<8x896xf32> to vector<1x896xf32>
    %c0_143 = arith.constant 0 : index
    %c1792 = arith.constant 1792 : index
    %206 = vector.load %arg22[%c0_143, %c1792] : memref<2x7168xf32, #tpu.memory_space<vmem>>, vector<1x896xf32>
    tpu.vector_store %arg22[%c0_143, %c1792], %205 {strides = array<i32>} : memref<2x7168xf32, #tpu.memory_space<vmem>>, vector<1x896xf32>,
    %207 = vector.extract_strided_slice %200 {offsets = [3, 0], sizes = [1, 896], strides = [1, 1]} : vector<8x896xf32> to vector<1x896xf32>
    %c0_144 = arith.constant 0 : index
    %c2688 = arith.constant 2688 : index
    %208 = vector.load %arg22[%c0_144, %c2688] : memref<2x7168xf32, #tpu.memory_space<vmem>>, vector<1x896xf32>
    tpu.vector_store %arg22[%c0_144, %c2688], %207 {strides = array<i32>} : memref<2x7168xf32, #tpu.memory_space<vmem>>, vector<1x896xf32>,
    %209 = vector.extract_strided_slice %200 {offsets = [4, 0], sizes = [1, 896], strides = [1, 1]} : vector<8x896xf32> to vector<1x896xf32>
    %c0_145 = arith.constant 0 : index
    %c3584 = arith.constant 3584 : index
    %210 = vector.load %arg22[%c0_145, %c3584] : memref<2x7168xf32, #tpu.memory_space<vmem>>, vector<1x896xf32>
    tpu.vector_store %arg22[%c0_145, %c3584], %209 {strides = array<i32>} : memref<2x7168xf32, #tpu.memory_space<vmem>>, vector<1x896xf32>,
    %211 = vector.extract_strided_slice %200 {offsets = [5, 0], sizes = [1, 896], strides = [1, 1]} : vector<8x896xf32> to vector<1x896xf32>
    %c0_146 = arith.constant 0 : index
    %c4480 = arith.constant 4480 : index
    %212 = vector.load %arg22[%c0_146, %c4480] : memref<2x7168xf32, #tpu.memory_space<vmem>>, vector<1x896xf32>
    tpu.vector_store %arg22[%c0_146, %c4480], %211 {strides = array<i32>} : memref<2x7168xf32, #tpu.memory_space<vmem>>, vector<1x896xf32>,
    %213 = vector.extract_strided_slice %200 {offsets = [6, 0], sizes = [1, 896], strides = [1, 1]} : vector<8x896xf32> to vector<1x896xf32>
    %c0_147 = arith.constant 0 : index
    %c5376 = arith.constant 5376 : index
    %214 = vector.load %arg22[%c0_147, %c5376] : memref<2x7168xf32, #tpu.memory_space<vmem>>, vector<1x896xf32>
    tpu.vector_store %arg22[%c0_147, %c5376], %213 {strides = array<i32>} : memref<2x7168xf32, #tpu.memory_space<vmem>>, vector<1x896xf32>,
    %215 = vector.extract_strided_slice %200 {offsets = [7, 0], sizes = [1, 896], strides = [1, 1]} : vector<8x896xf32> to vector<1x896xf32>
    %c0_148 = arith.constant 0 : index
    %c6272 = arith.constant 6272 : index
    %216 = vector.load %arg22[%c0_148, %c6272] : memref<2x7168xf32, #tpu.memory_space<vmem>>, vector<1x896xf32>
    tpu.vector_store %arg22[%c0_148, %c6272], %215 {strides = array<i32>} : memref<2x7168xf32, #tpu.memory_space<vmem>>, vector<1x896xf32>,
    %217 = arith.mulf %193, %196 : vector<8x896xf32>
    %218 = vector.broadcast %197 : vector<1x896xf32> to vector<8x896xf32>
    %219 = arith.mulf %217, %218 : vector<8x896xf32>
    %220 = vector.extract_strided_slice %219 {offsets = [0, 0], sizes = [1, 896], strides = [1, 1]} : vector<8x896xf32> to vector<1x896xf32>
    %c1_149 = arith.constant 1 : index
    %c0_150 = arith.constant 0 : index
    %221 = vector.load %arg22[%c1_149, %c0_150] : memref<2x7168xf32, #tpu.memory_space<vmem>>, vector<1x896xf32>
    tpu.vector_store %arg22[%c1_149, %c0_150], %220 {strides = array<i32>} : memref<2x7168xf32, #tpu.memory_space<vmem>>, vector<1x896xf32>,
    %222 = vector.extract_strided_slice %219 {offsets = [1, 0], sizes = [1, 896], strides = [1, 1]} : vector<8x896xf32> to vector<1x896xf32>
    %c1_151 = arith.constant 1 : index
    %c896_152 = arith.constant 896 : index
    %223 = vector.load %arg22[%c1_151, %c896_152] : memref<2x7168xf32, #tpu.memory_space<vmem>>, vector<1x896xf32>
    tpu.vector_store %arg22[%c1_151, %c896_152], %222 {strides = array<i32>} : memref<2x7168xf32, #tpu.memory_space<vmem>>, vector<1x896xf32>,
    %224 = vector.extract_strided_slice %219 {offsets = [2, 0], sizes = [1, 896], strides = [1, 1]} : vector<8x896xf32> to vector<1x896xf32>
    %c1_153 = arith.constant 1 : index
    %c1792_154 = arith.constant 1792 : index
    %225 = vector.load %arg22[%c1_153, %c1792_154] : memref<2x7168xf32, #tpu.memory_space<vmem>>, vector<1x896xf32>
    tpu.vector_store %arg22[%c1_153, %c1792_154], %224 {strides = array<i32>} : memref<2x7168xf32, #tpu.memory_space<vmem>>, vector<1x896xf32>,
    %226 = vector.extract_strided_slice %219 {offsets = [3, 0], sizes = [1, 896], strides = [1, 1]} : vector<8x896xf32> to vector<1x896xf32>
    %c1_155 = arith.constant 1 : index
    %c2688_156 = arith.constant 2688 : index
    %227 = vector.load %arg22[%c1_155, %c2688_156] : memref<2x7168xf32, #tpu.memory_space<vmem>>, vector<1x896xf32>
    tpu.vector_store %arg22[%c1_155, %c2688_156], %226 {strides = array<i32>} : memref<2x7168xf32, #tpu.memory_space<vmem>>, vector<1x896xf32>,
    %228 = vector.extract_strided_slice %219 {offsets = [4, 0], sizes = [1, 896], strides = [1, 1]} : vector<8x896xf32> to vector<1x896xf32>
    %c1_157 = arith.constant 1 : index
    %c3584_158 = arith.constant 3584 : index
    %229 = vector.load %arg22[%c1_157, %c3584_158] : memref<2x7168xf32, #tpu.memory_space<vmem>>, vector<1x896xf32>
    tpu.vector_store %arg22[%c1_157, %c3584_158], %228 {strides = array<i32>} : memref<2x7168xf32, #tpu.memory_space<vmem>>, vector<1x896xf32>,
    %230 = vector.extract_strided_slice %219 {offsets = [5, 0], sizes = [1, 896], strides = [1, 1]} : vector<8x896xf32> to vector<1x896xf32>
    %c1_159 = arith.constant 1 : index
    %c4480_160 = arith.constant 4480 : index
    %231 = vector.load %arg22[%c1_159, %c4480_160] : memref<2x7168xf32, #tpu.memory_space<vmem>>, vector<1x896xf32>
    tpu.vector_store %arg22[%c1_159, %c4480_160], %230 {strides = array<i32>} : memref<2x7168xf32, #tpu.memory_space<vmem>>, vector<1x896xf32>,
    %232 = vector.extract_strided_slice %219 {offsets = [6, 0], sizes = [1, 896], strides = [1, 1]} : vector<8x896xf32> to vector<1x896xf32>
    %c1_161 = arith.constant 1 : index
    %c5376_162 = arith.constant 5376 : index
    %233 = vector.load %arg22[%c1_161, %c5376_162] : memref<2x7168xf32, #tpu.memory_space<vmem>>, vector<1x896xf32>
    tpu.vector_store %arg22[%c1_161, %c5376_162], %232 {strides = array<i32>} : memref<2x7168xf32, #tpu.memory_space<vmem>>, vector<1x896xf32>,
    %234 = vector.extract_strided_slice %219 {offsets = [7, 0], sizes = [1, 896], strides = [1, 1]} : vector<8x896xf32> to vector<1x896xf32>
    %c1_163 = arith.constant 1 : index
    %c6272_164 = arith.constant 6272 : index
    %235 = vector.load %arg22[%c1_163, %c6272_164] : memref<2x7168xf32, #tpu.memory_space<vmem>>, vector<1x896xf32>
    tpu.vector_store %arg22[%c1_163, %c6272_164], %234 {strides = array<i32>} : memref<2x7168xf32, #tpu.memory_space<vmem>>, vector<1x896xf32>,
    %c0_165 = arith.constant 0 : index
    %c0_166 = arith.constant 0 : index
    %236 = vector.load %arg22[%c0_165, %c0_166] : memref<2x7168xf32, #tpu.memory_space<vmem>>, vector<2x7168xf32>
    %237 = arith.truncf %236 : vector<2x7168xf32> to vector<2x7168xbf16>
    %c0_167 = arith.constant 0 : index
    %c0_168 = arith.constant 0 : index
    %238 = vector.load %arg12[%c0_167, %c0_168] : memref<7168x60xbf16, #tpu.memory_space<vmem>>, vector<7168x60xbf16>
    %cst_169 = arith.constant dense<0.000000e+00> : vector<2x60xf32>
    %239 = tpu.matmul %237, %238, %cst_169 {dimension_numbers = #tpu.dot_dimension_numbers<[1], [0], [0], [1], [0, 0, 1, 1], [], []>} : vector<2x7168xbf16>, vector<7168x60xbf16>, vector<2x60xf32> -> vector<2x60xf32>
    %c0_170 = arith.constant 0 : index
    %c0_171 = arith.constant 0 : index
    %240 = vector.load %arg13[%c0_170, %c0_171] : memref<1x60xf32, #tpu.memory_space<vmem>>, vector<1x60xf32>
    %241 = vector.broadcast %240 : vector<1x60xf32> to vector<2x60xf32>
    %242 = arith.addf %239, %241 : vector<2x60xf32>
    %c0_172 = arith.constant 0 : index
    %c0_173 = arith.constant 0 : index
    %243 = vector.load %arg14[%c0_172, %c0_173] : memref<60x10xf32, #tpu.memory_space<vmem>>, vector<60x10xf32>
    %cst_174 = arith.constant dense<0.000000e+00> : vector<2x10xf32>
    %244 = tpu.matmul %242, %243, %cst_174 {dimension_numbers = #tpu.dot_dimension_numbers<[1], [0], [0], [1], [0, 0, 1, 1], [], []>} : vector<2x60xf32>, vector<60x10xf32>, vector<2x10xf32> -> vector<2x10xf32>
    %c0_175 = arith.constant 0 : index
    %c0_176 = arith.constant 0 : index
    %245 = vector.load %arg15[%c0_175, %c0_176] : memref<1x10xf32, #tpu.memory_space<vmem>>, vector<1x10xf32>
    %246 = vector.broadcast %245 : vector<1x10xf32> to vector<2x10xf32>
    %247 = arith.addf %244, %246 : vector<2x10xf32>
    %c0_177 = arith.constant 0 : index
    %c0_178 = arith.constant 0 : index
    %248 = vector.load %arg16[%c0_177, %c0_178] : memref<10x2xf32, #tpu.memory_space<vmem>>, vector<10x2xf32>
    %cst_179 = arith.constant dense<0.000000e+00> : vector<2x2xf32>
    %249 = tpu.matmul %247, %248, %cst_179 {dimension_numbers = #tpu.dot_dimension_numbers<[1], [0], [0], [1], [0, 0, 1, 1], [], []>} : vector<2x10xf32>, vector<10x2xf32>, vector<2x2xf32> -> vector<2x2xf32>
    %c0_180 = arith.constant 0 : index
    %c0_181 = arith.constant 0 : index
    %250 = vector.load %arg17[%c0_180, %c0_181] : memref<1x2xf32, #tpu.memory_space<vmem>>, vector<1x2xf32>
    %251 = vector.broadcast %250 : vector<1x2xf32> to vector<2x2xf32>
    %252 = arith.addf %249, %251 : vector<2x2xf32>
    %c0_182 = arith.constant 0 : index
    %c0_183 = arith.constant 0 : index
    %253 = vector.load %arg18[%c0_182, %c0_183] : memref<2x2xf32, #tpu.memory_space<vmem>>, vector<2x2xf32>
    tpu.vector_store %arg18[%c0_182, %c0_183], %252 {strides = array<i32>} : memref<2x2xf32, #tpu.memory_space<vmem>>, vector<2x2xf32>,
    return
  }
  func.func @transform_0(%arg0: i32) -> (i32, i32, i32) {
    %c0_i32 = arith.constant 0 : i32
    %c0_i32_0 = arith.constant 0 : i32
    %c0_i32_1 = arith.constant 0 : i32
    %c0_i32_2 = arith.constant 0 : i32
    return %c0_i32, %c0_i32_0, %c0_i32_1 : i32, i32, i32
  }
  func.func @transform_1(%arg0: i32) -> (i32, i32) {
    %c0_i32 = arith.constant 0 : i32
    %c0_i32_0 = arith.constant 0 : i32
    %c0_i32_1 = arith.constant 0 : i32
    return %c0_i32, %c0_i32_0 : i32, i32
  }
  func.func @transform_2(%arg0: i32) -> (i32, i32) {
    %c0_i32 = arith.constant 0 : i32
    %c0_i32_0 = arith.constant 0 : i32
    %c0_i32_1 = arith.constant 0 : i32
    return %c0_i32, %c0_i32_0 : i32, i32
  }
  func.func @transform_3(%arg0: i32) -> (i32, i32) {
    %c0_i32 = arith.constant 0 : i32
    %c0_i32_0 = arith.constant 0 : i32
    %c0_i32_1 = arith.constant 0 : i32
    return %c0_i32, %c0_i32_0 : i32, i32
  }
  func.func @transform_4(%arg0: i32) -> (i32, i32) {
    %c0_i32 = arith.constant 0 : i32
    %c0_i32_0 = arith.constant 0 : i32
    %c0_i32_1 = arith.constant 0 : i32
    return %c0_i32, %c0_i32_0 : i32, i32
  }
  func.func @transform_5(%arg0: i32) -> (i32, i32) {
    %c0_i32 = arith.constant 0 : i32
    %c0_i32_0 = arith.constant 0 : i32
    %c0_i32_1 = arith.constant 0 : i32
    return %c0_i32, %c0_i32_0 : i32, i32
  }
  func.func @transform_6(%arg0: i32) -> (i32, i32) {
    %c0_i32 = arith.constant 0 : i32
    %c0_i32_0 = arith.constant 0 : i32
    %c0_i32_1 = arith.constant 0 : i32
    return %c0_i32, %c0_i32_0 : i32, i32
  }
  func.func @transform_7(%arg0: i32) -> (i32, i32) {
    %c0_i32 = arith.constant 0 : i32
    %c0_i32_0 = arith.constant 0 : i32
    %c0_i32_1 = arith.constant 0 : i32
    return %c0_i32, %c0_i32_0 : i32, i32
  }
  func.func @transform_8(%arg0: i32) -> (i32, i32) {
    %c0_i32 = arith.constant 0 : i32
    %c0_i32_0 = arith.constant 0 : i32
    %c0_i32_1 = arith.constant 0 : i32
    return %c0_i32, %c0_i32_0 : i32, i32
  }
  func.func @transform_9(%arg0: i32) -> (i32, i32) {
    %c0_i32 = arith.constant 0 : i32
    %c0_i32_0 = arith.constant 0 : i32
    %c0_i32_1 = arith.constant 0 : i32
    return %c0_i32, %c0_i32_0 : i32, i32
  }
  func.func @transform_10(%arg0: i32) -> (i32, i32) {
    %c0_i32 = arith.constant 0 : i32
    %c0_i32_0 = arith.constant 0 : i32
    %c0_i32_1 = arith.constant 0 : i32
    return %c0_i32, %c0_i32_0 : i32, i32
  }
  func.func @transform_11(%arg0: i32) -> (i32, i32) {
    %c0_i32 = arith.constant 0 : i32
    %c0_i32_0 = arith.constant 0 : i32
    %c0_i32_1 = arith.constant 0 : i32
    return %c0_i32, %c0_i32_0 : i32, i32
  }
  func.func @transform_12(%arg0: i32) -> (i32, i32) {
    %c0_i32 = arith.constant 0 : i32
    %c0_i32_0 = arith.constant 0 : i32
    %c0_i32_1 = arith.constant 0 : i32
    return %c0_i32, %c0_i32_0 : i32, i32
  }
  func.func @transform_13(%arg0: i32) -> (i32, i32) {
    %c0_i32 = arith.constant 0 : i32
    %c0_i32_0 = arith.constant 0 : i32
    %c0_i32_1 = arith.constant 0 : i32
    return %c0_i32, %c0_i32_0 : i32, i32
  }
  func.func @transform_14(%arg0: i32) -> (i32, i32) {
    %c0_i32 = arith.constant 0 : i32
    %c0_i32_0 = arith.constant 0 : i32
    %c0_i32_1 = arith.constant 0 : i32
    return %c0_i32, %c0_i32_0 : i32, i32
  }
  func.func @transform_15(%arg0: i32) -> (i32, i32) {
    %c0_i32 = arith.constant 0 : i32
    %c0_i32_0 = arith.constant 0 : i32
    %c0_i32_1 = arith.constant 0 : i32
    return %c0_i32, %c0_i32_0 : i32, i32
  }
  func.func @transform_16(%arg0: i32) -> (i32, i32) {
    %c0_i32 = arith.constant 0 : i32
    %c0_i32_0 = arith.constant 0 : i32
    %c0_i32_1 = arith.constant 0 : i32
    return %c0_i32, %c0_i32_0 : i32, i32
  }
  func.func @transform_17(%arg0: i32) -> (i32, i32) {
    %c0_i32 = arith.constant 0 : i32
    %c0_i32_0 = arith.constant 0 : i32
    %c0_i32_1 = arith.constant 0 : i32
    return %c0_i32, %c0_i32_0 : i32, i32
  }
}

</mosaic_0001>

<llo_original>
// kernel: my_net_forward.1
$region0: #{my_net_forward.1}
  #allocation0 [shape = 'u32[]', space=smem, size = 0x4, offset = 0x4, fixed_abs, tag = 'smem constant byte address 0x4 - core index']
  #allocation1 [shape = 'u32[144,128]{1,0:T(1,128)}', space=vmem, size = 0x12000, scoped, tag = 'internal scratch']
  #allocation2 [shape = 'f32[3,1792]{1,0:T(4,128)}', space=vmem, size = 0x7000, scoped, tag = 'scratch operand']
  #allocation3 [shape = 'f32[75,1792]{1,0:T(8,128)}', space=vmem, size = 0x8c000, scoped, tag = 'scratch operand']
  #allocation4 [shape = 'f32[150,1792]{1,0:T(8,128)}', space=vmem, size = 0x10a000, scoped, tag = 'scratch operand']
  #allocation5 [shape = 'f32[2,7168]{1,0:T(2,128)}', space=vmem, size = 0xe000, scoped, tag = 'scratch operand']
  %s0 = inlined_call_operand.vmem [shape: f32[2,3,784], index: 0, kind: input, shape index: {}]
  %s1 = inlined_call_operand.vmem [shape: f32[6,75], index: 1, kind: input, shape index: {}]
  %s2 = inlined_call_operand.vmem [shape: f32[6,1], index: 2, kind: input, shape index: {}]
  %s3 = inlined_call_operand.vmem [shape: f32[6,1], index: 3, kind: input, shape index: {}]
  %s4 = inlined_call_operand.vmem [shape: f32[6,1], index: 4, kind: input, shape index: {}]
  %s5 = inlined_call_operand.vmem [shape: f32[8,150], index: 5, kind: input, shape index: {}]
  %s6 = inlined_call_operand.vmem [shape: f32[8,1], index: 6, kind: input, shape index: {}]
  %s7 = inlined_call_operand.vmem [shape: f32[8,1], index: 7, kind: input, shape index: {}]
  %s8 = inlined_call_operand.vmem [shape: f32[8,1], index: 8, kind: input, shape index: {}]
  %s9 = inlined_call_operand.vmem [shape: f32[1,1792], index: 9, kind: input, shape index: {}]
  %s10 = inlined_call_operand.vmem [shape: f32[1,1792], index: 10, kind: input, shape index: {}]
  %s11 = inlined_call_operand.vmem [shape: bf16[7168,60], index: 11, kind: input, shape index: {}]
  %s12 = inlined_call_operand.vmem [shape: f32[1,60], index: 12, kind: input, shape index: {}]
  %s13 = inlined_call_operand.vmem [shape: f32[60,10], index: 13, kind: input, shape index: {}]
  %s14 = inlined_call_operand.vmem [shape: f32[1,10], index: 14, kind: input, shape index: {}]
  %s15 = inlined_call_operand.vmem [shape: f32[10,2], index: 15, kind: input, shape index: {}]
  %s16 = inlined_call_operand.vmem [shape: f32[1,2], index: 16, kind: input, shape index: {}]
  %s17 = inlined_call_operand.hbm [shape: f32[2,2], index: 17, kind: output, shape index: {}]
  %s18 = sld [smem:[#allocation0]]
  $region78: #{my_net_forward.1} parent=0
    _
  %s20 = ssub.s32 1, %s18
  %s21 = scalar_select 0, %s20, %s18
  $region1: #{my_net_forward.1} parent=0
    #allocation6 [shape = 'u8[1024]{0}', space=vmem, size = 0x400, scoped, tag = 'output window, operand 0, single buffered']
    #allocation7 [shape = 's32[1]{0}', space=sflag, size = 0x4, scoped, tag = 'scoped memory for my_net_forward.1']
    %22 = vsyncpa [#allocation7], 0
    // Predicated region
    $region2: #{my_net_forward.1} parent=1 // pred_check
      _
    $region3: #{my_net_forward.1} parent=1 // pred_check_branch
      %24 = sbr.rel (0) target = $region5
    $region4: #{my_net_forward.1} parent=1 // pred_region
      _
    $region5: #{my_net_forward.1} parent=1 // pred_fallthru
      _
    // Predicated region
    $region6: #{my_net_forward.1} parent=1 // pred_check
      _
    $region7: #{my_net_forward.1} parent=1 // pred_check_branch
      %26 = sbr.rel (0) target = $region9
    $region8: #{my_net_forward.1} parent=1 // pred_region
      _
    $region9: #{my_net_forward.1} parent=1 // pred_fallthru
      _
    // Predicated region
    $region10: #{my_net_forward.1} parent=1 // pred_check
      _
    $region11: #{my_net_forward.1} parent=1 // pred_check_branch
      %28 = sbr.rel (0) target = $region13
    $region12: #{my_net_forward.1} parent=1 // pred_region
      _
    $region13: #{my_net_forward.1} parent=1 // pred_fallthru
      _
    // Predicated region
    $region14: #{my_net_forward.1} parent=1 // pred_check
      _
    $region15: #{my_net_forward.1} parent=1 // pred_check_branch
      %30 = sbr.rel (0) target = $region17
    $region16: #{my_net_forward.1} parent=1 // pred_region
      _
    $region17: #{my_net_forward.1} parent=1 // pred_fallthru
      _
    // Predicated region
    $region18: #{my_net_forward.1} parent=1 // pred_check
      _
    $region19: #{my_net_forward.1} parent=1 // pred_check_branch
      %32 = sbr.rel (0) target = $region21
    $region20: #{my_net_forward.1} parent=1 // pred_region
      _
    $region21: #{my_net_forward.1} parent=1 // pred_fallthru
      _
    // Predicated region
    $region22: #{my_net_forward.1} parent=1 // pred_check
      _
    $region23: #{my_net_forward.1} parent=1 // pred_check_branch
      %34 = sbr.rel (0) target = $region25
    $region24: #{my_net_forward.1} parent=1 // pred_region
      _
    $region25: #{my_net_forward.1} parent=1 // pred_fallthru
      _
    // Predicated region
    $region26: #{my_net_forward.1} parent=1 // pred_check
      _
    $region27: #{my_net_forward.1} parent=1 // pred_check_branch
      %36 = sbr.rel (0) target = $region29
    $region28: #{my_net_forward.1} parent=1 // pred_region
      _
    $region29: #{my_net_forward.1} parent=1 // pred_fallthru
      _
    // Predicated region
    $region30: #{my_net_forward.1} parent=1 // pred_check
      _
    $region31: #{my_net_forward.1} parent=1 // pred_check_branch
      %38 = sbr.rel (0) target = $region33
    $region32: #{my_net_forward.1} parent=1 // pred_region
      _
    $region33: #{my_net_forward.1} parent=1 // pred_fallthru
      _
    // Predicated region
    $region34: #{my_net_forward.1} parent=1 // pred_check
      _
    $region35: #{my_net_forward.1} parent=1 // pred_check_branch
      %40 = sbr.rel (0) target = $region37
    $region36: #{my_net_forward.1} parent=1 // pred_region
      _
    $region37: #{my_net_forward.1} parent=1 // pred_fallthru
      _
    // Predicated region
    $region38: #{my_net_forward.1} parent=1 // pred_check
      _
    $region39: #{my_net_forward.1} parent=1 // pred_check_branch
      %42 = sbr.rel (0) target = $region41
    $region40: #{my_net_forward.1} parent=1 // pred_region
      _
    $region41: #{my_net_forward.1} parent=1 // pred_fallthru
      _
    // Predicated region
    $region42: #{my_net_forward.1} parent=1 // pred_check
      _
    $region43: #{my_net_forward.1} parent=1 // pred_check_branch
      %44 = sbr.rel (0) target = $region45
    $region44: #{my_net_forward.1} parent=1 // pred_region
      _
    $region45: #{my_net_forward.1} parent=1 // pred_fallthru
      _
    // Predicated region
    $region46: #{my_net_forward.1} parent=1 // pred_check
      _
    $region47: #{my_net_forward.1} parent=1 // pred_check_branch
      %46 = sbr.rel (0) target = $region49
    $region48: #{my_net_forward.1} parent=1 // pred_region
      _
    $region49: #{my_net_forward.1} parent=1 // pred_fallthru
      _
    // Predicated region
    $region50: #{my_net_forward.1} parent=1 // pred_check
      _
    $region51: #{my_net_forward.1} parent=1 // pred_check_branch
      %48 = sbr.rel (0) target = $region53
    $region52: #{my_net_forward.1} parent=1 // pred_region
      _
    $region53: #{my_net_forward.1} parent=1 // pred_fallthru
      _
    // Predicated region
    $region54: #{my_net_forward.1} parent=1 // pred_check
      _
    $region55: #{my_net_forward.1} parent=1 // pred_check_branch
      %50 = sbr.rel (0) target = $region57
    $region56: #{my_net_forward.1} parent=1 // pred_region
      _
    $region57: #{my_net_forward.1} parent=1 // pred_fallthru
      _
    // Predicated region
    $region58: #{my_net_forward.1} parent=1 // pred_check
      _
    $region59: #{my_net_forward.1} parent=1 // pred_check_branch
      %52 = sbr.rel (0) target = $region61
    $region60: #{my_net_forward.1} parent=1 // pred_region
      _
    $region61: #{my_net_forward.1} parent=1 // pred_fallthru
      _
    // Predicated region
    $region62: #{my_net_forward.1} parent=1 // pred_check
      _
    $region63: #{my_net_forward.1} parent=1 // pred_check_branch
      %54 = sbr.rel (0) target = $region65
    $region64: #{my_net_forward.1} parent=1 // pred_region
      _
    $region65: #{my_net_forward.1} parent=1 // pred_fallthru
      _
    // Predicated region
    $region66: #{my_net_forward.1} parent=1 // pred_check
      _
    $region67: #{my_net_forward.1} parent=1 // pred_check_branch
      %56 = sbr.rel (0) target = $region69
    $region68: #{my_net_forward.1} parent=1 // pred_region
      _
    $region69: #{my_net_forward.1} parent=1 // pred_fallthru
      _
    %58 = vst [vmem:[#allocation2] sm:$0x77] 0.0
    %59 = vst [vmem:[#allocation2 + $0x8] sm:$0x77] 0.0
    %60 = vst [vmem:[#allocation2 + $0x10] sm:$0x77] 0.0
    %61 = vst [vmem:[#allocation2 + $0x18] sm:$0x77] 0.0
    %62 = vst [vmem:[#allocation2 + $0x20] sm:$0x77] 0.0
    %63 = vst [vmem:[#allocation2 + $0x28] sm:$0x77] 0.0
    %64 = vst [vmem:[#allocation2 + $0x30] sm:$0x77] 0.0
    %v65 = vld [vmem:[%s0] sm:$0x77]
    %v66 = vld [vmem:[%s0 + $0x8] sm:$0x77]
    %v67 = vld [vmem:[%s0 + $0x10] sm:$0x77]
    %v68 = vld [vmem:[%s0 + $0x18] sm:$0x7]
    %69 = vst [vmem:[#allocation2] sm:$0x77] %v65
    %70 = vst [vmem:[#allocation2 + $0x8] sm:$0x77] %v66
    %71 = vst [vmem:[#allocation2 + $0x10] sm:$0x77] %v67
    %vm72 = vcmask 124928
    %73 = vst.msk [vmem:[#allocation2 + $0x18] sm:$0x7] %vm72, %v68
    %s74 = scalar_lea.vmem %s0, 28
    %v75 = vld [vmem:[%s74] sm:$0x77]
    %v76 = vld [vmem:[%s74 + $0x8] sm:$0x77]
    %v77 = vld [vmem:[%s74 + $0x10] sm:$0x77]
    %v78 = vld [vmem:[%s74 + $0x18] sm:$0x7]
    %79 = vst [vmem:[#allocation2 + $0x1c] sm:$0x77] %v75
    %80 = vst [vmem:[#allocation2 + $0x24] sm:$0x77] %v76
    %81 = vst [vmem:[#allocation2 + $0x2c] sm:$0x77] %v77
    %82 = vst.msk [vmem:[#allocation2 + $0x34] sm:$0x7] %vm72, %v78
    %v83 = vld [vmem:[#allocation2] sm:$0x77]
    %v84 = vld [vmem:[#allocation2 + $0x8] sm:$0x77]
    %v85 = vld [vmem:[#allocation2 + $0x10] sm:$0x77]
    %v86 = vld [vmem:[#allocation2 + $0x18] sm:$0x77]
    %v87 = vld [vmem:[#allocation2 + $0x20] sm:$0x77]
    %v88 = vld [vmem:[#allocation2 + $0x28] sm:$0x77]
    %v89 = vld [vmem:[#allocation2 + $0x30] sm:$0x77]
    %v90 = vld [vmem:[%s9] sm:$0xff]
    %v91 = vld [vmem:[%s9 + $0x8] sm:$0x3f]
    %v92 = vld [vmem:[%s10] sm:$0xff]
    %v93 = vld [vmem:[%s10 + $0x8] sm:$0x3f]
    %v101 = vcombine.high %v83, %v83
    %v102 = vcombine.high %v84, %v84
    %v103 = vcombine.high %v85, %v85
    %v104 = vcombine.high %v86, %v86
    %v105 = vcombine.high %v87, %v87
    %v106 = vcombine.high %v88, %v88
    %v107 = vcombine.high %v89, %v89
    %115 = vst [vmem:[#allocation3] sm:$0x7] %v83
    %116 = vst [vmem:[#allocation3 + $0x8] sm:$0x7] %v101
    %117 = vst [vmem:[#allocation3 + $0x10] sm:$0x7] %v84
    %118 = vst [vmem:[#allocation3 + $0x18] sm:$0x7] %v102
    %119 = vst [vmem:[#allocation3 + $0x20] sm:$0x7] %v85
    %120 = vst [vmem:[#allocation3 + $0x28] sm:$0x7] %v103
    %121 = vst [vmem:[#allocation3 + $0x30] sm:$0x7] %v86
    %122 = vst [vmem:[#allocation3 + $0x38] sm:$0x7] %v104
    %123 = vst [vmem:[#allocation3 + $0x40] sm:$0x7] %v87
    %124 = vst [vmem:[#allocation3 + $0x48] sm:$0x7] %v105
    %125 = vst [vmem:[#allocation3 + $0x50] sm:$0x7] %v88
    %126 = vst [vmem:[#allocation3 + $0x58] sm:$0x7] %v106
    %127 = vst [vmem:[#allocation3 + $0x60] sm:$0x7] %v89
    %128 = vst [vmem:[#allocation3 + $0x68] sm:$0x7] %v107
    %129 = vrot.lane.b32.xlu0 %v83, 127
    %v130 = vpop.permute.xlu0 %129
    %131 = vrot.lane.b32.xlu0 %v101, 127
    %v132 = vpop.permute.xlu0 %131
    %133 = vrot.lane.b32.xlu0 %v84, 127
    %v134 = vpop.permute.xlu0 %133
    %135 = vrot.lane.b32.xlu0 %v102, 127
    %v136 = vpop.permute.xlu0 %135
    %137 = vrot.lane.b32.xlu0 %v85, 127
    %v138 = vpop.permute.xlu0 %137
    %139 = vrot.lane.b32.xlu0 %v103, 127
    %v140 = vpop.permute.xlu0 %139
    %141 = vrot.lane.b32.xlu0 %v86, 127
    %v142 = vpop.permute.xlu0 %141
    %143 = vrot.lane.b32.xlu0 %v104, 127
    %v144 = vpop.permute.xlu0 %143
    %145 = vrot.lane.b32.xlu0 %v87, 127
    %v146 = vpop.permute.xlu0 %145
    %147 = vrot.lane.b32.xlu0 %v105, 127
    %v148 = vpop.permute.xlu0 %147
    %149 = vrot.lane.b32.xlu0 %v88, 127
    %v150 = vpop.permute.xlu0 %149
    %151 = vrot.lane.b32.xlu0 %v106, 127
    %v152 = vpop.permute.xlu0 %151
    %153 = vrot.lane.b32.xlu0 %v89, 127
    %v154 = vpop.permute.xlu0 %153
    %155 = vrot.lane.b32.xlu0 %v107, 127
    %v156 = vpop.permute.xlu0 %155
    %v157 = vlaneseq
    %v158 = vand.u32 %v157, 127
    %vm159 = vcmp.lt.s32.totalorder %v158, 127
    %v160 = vsel %vm159, %v154, %v156
    %v161 = vsel %vm159, %v152, %v154
    %v162 = vsel %vm159, %v150, %v152
    %v163 = vsel %vm159, %v148, %v150
    %v164 = vsel %vm159, %v146, %v148
    %v165 = vsel %vm159, %v144, %v146
    %v166 = vsel %vm159, %v142, %v144
    %v167 = vsel %vm159, %v140, %v142
    %v168 = vsel %vm159, %v138, %v140
    %v169 = vsel %vm159, %v136, %v138
    %v170 = vsel %vm159, %v134, %v136
    %v171 = vsel %vm159, %v132, %v134
    %v172 = vsel %vm159, %v130, %v132
    %v173 = vsel %vm159, %v156, %v130
    %v188 = vrot.slane %v172, 5
    %v189 = vrot.slane %v171, 5
    %v190 = vrot.slane %v170, 5
    %v191 = vrot.slane %v169, 5
    %v192 = vrot.slane %v168, 5
    %v193 = vrot.slane %v167, 5
    %v194 = vrot.slane %v166, 5
    %v195 = vrot.slane %v165, 5
    %v196 = vrot.slane %v164, 5
    %v197 = vrot.slane %v163, 5
    %v198 = vrot.slane %v162, 5
    %v199 = vrot.slane %v161, 5
    %v200 = vrot.slane %v160, 5
    %v201 = vrot.slane %v173, 5
    %216 = vst [vmem:[#allocation3] sm:$0x38] %v188
    %217 = vst [vmem:[#allocation3 + $0x8] sm:$0x38] %v189
    %218 = vst [vmem:[#allocation3 + $0x10] sm:$0x38] %v190
    %219 = vst [vmem:[#allocation3 + $0x18] sm:$0x38] %v191
    %220 = vst [vmem:[#allocation3 + $0x20] sm:$0x38] %v192
    %221 = vst [vmem:[#allocation3 + $0x28] sm:$0x38] %v193
    %222 = vst [vmem:[#allocation3 + $0x30] sm:$0x38] %v194
    %223 = vst [vmem:[#allocation3 + $0x38] sm:$0x38] %v195
    %224 = vst [vmem:[#allocation3 + $0x40] sm:$0x38] %v196
    %225 = vst [vmem:[#allocation3 + $0x48] sm:$0x38] %v197
    %226 = vst [vmem:[#allocation3 + $0x50] sm:$0x38] %v198
    %227 = vst [vmem:[#allocation3 + $0x58] sm:$0x38] %v199
    %228 = vst [vmem:[#allocation3 + $0x60] sm:$0x38] %v200
    %229 = vst [vmem:[#allocation3 + $0x68] sm:$0x38] %v201
    %230 = vrot.lane.b32.xlu0 %v83, 126
    %v231 = vpop.permute.xlu0 %230
    %232 = vrot.lane.b32.xlu0 %v101, 126
    %v233 = vpop.permute.xlu0 %232
    %234 = vrot.lane.b32.xlu0 %v84, 126
    %v235 = vpop.permute.xlu0 %234
    %236 = vrot.lane.b32.xlu0 %v102, 126
    %v237 = vpop.permute.xlu0 %236
    %238 = vrot.lane.b32.xlu0 %v85, 126
    %v239 = vpop.permute.xlu0 %238
    %240 = vrot.lane.b32.xlu0 %v103, 126
    %v241 = vpop.permute.xlu0 %240
    %242 = vrot.lane.b32.xlu0 %v86, 126
    %v243 = vpop.permute.xlu0 %242
    %244 = vrot.lane.b32.xlu0 %v104, 126
    %v245 = vpop.permute.xlu0 %244
    %246 = vrot.lane.b32.xlu0 %v87, 126
    %v247 = vpop.permute.xlu0 %246
    %248 = vrot.lane.b32.xlu0 %v105, 126
    %v249 = vpop.permute.xlu0 %248
    %250 = vrot.lane.b32.xlu0 %v88, 126
    %v251 = vpop.permute.xlu0 %250
    %252 = vrot.lane.b32.xlu0 %v106, 126
    %v253 = vpop.permute.xlu0 %252
    %254 = vrot.lane.b32.xlu0 %v89, 126
    %v255 = vpop.permute.xlu0 %254
    %256 = vrot.lane.b32.xlu0 %v107, 126
    %v257 = vpop.permute.xlu0 %256
    %vm258 = vcmp.lt.s32.totalorder %v158, 126
    %v259 = vsel %vm258, %v255, %v257
    %v260 = vsel %vm258, %v253, %v255
    %v261 = vsel %vm258, %v251, %v253
    %v262 = vsel %vm258, %v249, %v251
    %v263 = vsel %vm258, %v247, %v249
    %v264 = vsel %vm258, %v245, %v247
    %v265 = vsel %vm258, %v243, %v245
    %v266 = vsel %vm258, %v241, %v243
    %v267 = vsel %vm258, %v239, %v241
    %v268 = vsel %vm258, %v237, %v239
    %v269 = vsel %vm258, %v235, %v237
    %v270 = vsel %vm258, %v233, %v235
    %v271 = vsel %vm258, %v231, %v233
    %v272 = vsel %vm258, %v257, %v231
    %v287 = vrot.slane %v271, 2
    %v288 = vrot.slane %v270, 2
    %v289 = vrot.slane %v269, 2
    %v290 = vrot.slane %v268, 2
    %v291 = vrot.slane %v267, 2
    %v292 = vrot.slane %v266, 2
    %v293 = vrot.slane %v265, 2
    %v294 = vrot.slane %v264, 2
    %v295 = vrot.slane %v263, 2
    %v296 = vrot.slane %v262, 2
    %v297 = vrot.slane %v261, 2
    %v298 = vrot.slane %v260, 2
    %v299 = vrot.slane %v259, 2
    %v300 = vrot.slane %v272, 2
    %315 = vst [vmem:[#allocation3] sm:$0xc0] %v287
    %316 = vst [vmem:[#allocation3 + $0x8] sm:$0xc0] %v288
    %317 = vst [vmem:[#allocation3 + $0x10] sm:$0xc0] %v289
    %318 = vst [vmem:[#allocation3 + $0x18] sm:$0xc0] %v290
    %319 = vst [vmem:[#allocation3 + $0x20] sm:$0xc0] %v291
    %320 = vst [vmem:[#allocation3 + $0x28] sm:$0xc0] %v292
    %321 = vst [vmem:[#allocation3 + $0x30] sm:$0xc0] %v293
    %322 = vst [vmem:[#allocation3 + $0x38] sm:$0xc0] %v294
    %323 = vst [vmem:[#allocation3 + $0x40] sm:$0xc0] %v295
    %324 = vst [vmem:[#allocation3 + $0x48] sm:$0xc0] %v296
    %325 = vst [vmem:[#allocation3 + $0x50] sm:$0xc0] %v297
    %326 = vst [vmem:[#allocation3 + $0x58] sm:$0xc0] %v298
    %327 = vst [vmem:[#allocation3 + $0x60] sm:$0xc0] %v299
    %328 = vst [vmem:[#allocation3 + $0x68] sm:$0xc0] %v300
    %329 = vst [vmem:[#allocation3 + $0x70] sm:$0x1] %v287
    %330 = vst [vmem:[#allocation3 + $0x78] sm:$0x1] %v288
    %331 = vst [vmem:[#allocation3 + $0x80] sm:$0x1] %v289
    %332 = vst [vmem:[#allocation3 + $0x88] sm:$0x1] %v290
    %333 = vst [vmem:[#allocation3 + $0x90] sm:$0x1] %v291
    %334 = vst [vmem:[#allocation3 + $0x98] sm:$0x1] %v292
    %335 = vst [vmem:[#allocation3 + $0xa0] sm:$0x1] %v293
    %336 = vst [vmem:[#allocation3 + $0xa8] sm:$0x1] %v294
    %337 = vst [vmem:[#allocation3 + $0xb0] sm:$0x1] %v295
    %338 = vst [vmem:[#allocation3 + $0xb8] sm:$0x1] %v296
    %339 = vst [vmem:[#allocation3 + $0xc0] sm:$0x1] %v297
    %340 = vst [vmem:[#allocation3 + $0xc8] sm:$0x1] %v298
    %341 = vst [vmem:[#allocation3 + $0xd0] sm:$0x1] %v299
    %342 = vst [vmem:[#allocation3 + $0xd8] sm:$0x1] %v300
    %343 = vrot.lane.b32.xlu0 %v83, 125
    %v344 = vpop.permute.xlu0 %343
    %345 = vrot.lane.b32.xlu0 %v101, 125
    %v346 = vpop.permute.xlu0 %345
    %347 = vrot.lane.b32.xlu0 %v84, 125
    %v348 = vpop.permute.xlu0 %347
    %349 = vrot.lane.b32.xlu0 %v102, 125
    %v350 = vpop.permute.xlu0 %349
    %351 = vrot.lane.b32.xlu0 %v85, 125
    %v352 = vpop.permute.xlu0 %351
    %353 = vrot.lane.b32.xlu0 %v103, 125
    %v354 = vpop.permute.xlu0 %353
    %355 = vrot.lane.b32.xlu0 %v86, 125
    %v356 = vpop.permute.xlu0 %355
    %357 = vrot.lane.b32.xlu0 %v104, 125
    %v358 = vpop.permute.xlu0 %357
    %359 = vrot.lane.b32.xlu0 %v87, 125
    %v360 = vpop.permute.xlu0 %359
    %361 = vrot.lane.b32.xlu0 %v105, 125
    %v362 = vpop.permute.xlu0 %361
    %363 = vrot.lane.b32.xlu0 %v88, 125
    %v364 = vpop.permute.xlu0 %363
    %365 = vrot.lane.b32.xlu0 %v106, 125
    %v366 = vpop.permute.xlu0 %365
    %367 = vrot.lane.b32.xlu0 %v89, 125
    %v368 = vpop.permute.xlu0 %367
    %369 = vrot.lane.b32.xlu0 %v107, 125
    %v370 = vpop.permute.xlu0 %369
    %vm371 = vcmp.lt.s32.totalorder %v158, 125
    %v372 = vsel %vm371, %v368, %v370
    %v373 = vsel %vm371, %v366, %v368
    %v374 = vsel %vm371, %v364, %v366
    %v375 = vsel %vm371, %v362, %v364
    %v376 = vsel %vm371, %v360, %v362
    %v377 = vsel %vm371, %v358, %v360
    %v378 = vsel %vm371, %v356, %v358
    %v379 = vsel %vm371, %v354, %v356
    %v380 = vsel %vm371, %v352, %v354
    %v381 = vsel %vm371, %v350, %v352
    %v382 = vsel %vm371, %v348, %v350
    %v383 = vsel %vm371, %v346, %v348
    %v384 = vsel %vm371, %v344, %v346
    %v385 = vsel %vm371, %v370, %v344
    %v400 = vrot.slane %v384, 7
    %v401 = vrot.slane %v383, 7
    %v402 = vrot.slane %v382, 7
    %v403 = vrot.slane %v381, 7
    %v404 = vrot.slane %v380, 7
    %v405 = vrot.slane %v379, 7
    %v406 = vrot.slane %v378, 7
    %v407 = vrot.slane %v377, 7
    %v408 = vrot.slane %v376, 7
    %v409 = vrot.slane %v375, 7
    %v410 = vrot.slane %v374, 7
    %v411 = vrot.slane %v373, 7
    %v412 = vrot.slane %v372, 7
    %v413 = vrot.slane %v385, 7
    %428 = vst [vmem:[#allocation3 + $0x70] sm:$0xe] %v400
    %429 = vst [vmem:[#allocation3 + $0x78] sm:$0xe] %v401
    %430 = vst [vmem:[#allocation3 + $0x80] sm:$0xe] %v402
    %431 = vst [vmem:[#allocation3 + $0x88] sm:$0xe] %v403
    %432 = vst [vmem:[#allocation3 + $0x90] sm:$0xe] %v404
    %433 = vst [vmem:[#allocation3 + $0x98] sm:$0xe] %v405
    %434 = vst [vmem:[#allocation3 + $0xa0] sm:$0xe] %v406
    %435 = vst [vmem:[#allocation3 + $0xa8] sm:$0xe] %v407
    %436 = vst [vmem:[#allocation3 + $0xb0] sm:$0xe] %v408
    %437 = vst [vmem:[#allocation3 + $0xb8] sm:$0xe] %v409
    %438 = vst [vmem:[#allocation3 + $0xc0] sm:$0xe] %v410
    %439 = vst [vmem:[#allocation3 + $0xc8] sm:$0xe] %v411
    %440 = vst [vmem:[#allocation3 + $0xd0] sm:$0xe] %v412
    %441 = vst [vmem:[#allocation3 + $0xd8] sm:$0xe] %v413
    %442 = vrot.lane.b32.xlu0 %v83, 124
    %v443 = vpop.permute.xlu0 %442
    %444 = vrot.lane.b32.xlu0 %v101, 124
    %v445 = vpop.permute.xlu0 %444
    %446 = vrot.lane.b32.xlu0 %v84, 124
    %v447 = vpop.permute.xlu0 %446
    %448 = vrot.lane.b32.xlu0 %v102, 124
    %v449 = vpop.permute.xlu0 %448
    %450 = vrot.lane.b32.xlu0 %v85, 124
    %v451 = vpop.permute.xlu0 %450
    %452 = vrot.lane.b32.xlu0 %v103, 124
    %v453 = vpop.permute.xlu0 %452
    %454 = vrot.lane.b32.xlu0 %v86, 124
    %v455 = vpop.permute.xlu0 %454
    %456 = vrot.lane.b32.xlu0 %v104, 124
    %v457 = vpop.permute.xlu0 %456
    %458 = vrot.lane.b32.xlu0 %v87, 124
    %v459 = vpop.permute.xlu0 %458
    %460 = vrot.lane.b32.xlu0 %v105, 124
    %v461 = vpop.permute.xlu0 %460
    %462 = vrot.lane.b32.xlu0 %v88, 124
    %v463 = vpop.permute.xlu0 %462
    %464 = vrot.lane.b32.xlu0 %v106, 124
    %v465 = vpop.permute.xlu0 %464
    %466 = vrot.lane.b32.xlu0 %v89, 124
    %v467 = vpop.permute.xlu0 %466
    %468 = vrot.lane.b32.xlu0 %v107, 124
    %v469 = vpop.permute.xlu0 %468
    %vm470 = vcmp.lt.s32.totalorder %v158, 124
    %v471 = vsel %vm470, %v467, %v469
    %v472 = vsel %vm470, %v465, %v467
    %v473 = vsel %vm470, %v463, %v465
    %v474 = vsel %vm470, %v461, %v463
    %v475 = vsel %vm470, %v459, %v461
    %v476 = vsel %vm470, %v457, %v459
    %v477 = vsel %vm470, %v455, %v457
    %v478 = vsel %vm470, %v453, %v455
    %v479 = vsel %vm470, %v451, %v453
    %v480 = vsel %vm470, %v449, %v451
    %v481 = vsel %vm470, %v447, %v449
    %v482 = vsel %vm470, %v445, %v447
    %v483 = vsel %vm470, %v443, %v445
    %v484 = vsel %vm470, %v469, %v443
    %v499 = vrot.slane %v483, 4
    %v500 = vrot.slane %v482, 4
    %v501 = vrot.slane %v481, 4
    %v502 = vrot.slane %v480, 4
    %v503 = vrot.slane %v479, 4
    %v504 = vrot.slane %v478, 4
    %v505 = vrot.slane %v477, 4
    %v506 = vrot.slane %v476, 4
    %v507 = vrot.slane %v475, 4
    %v508 = vrot.slane %v474, 4
    %v509 = vrot.slane %v473, 4
    %v510 = vrot.slane %v472, 4
    %v511 = vrot.slane %v471, 4
    %v512 = vrot.slane %v484, 4
    %527 = vst [vmem:[#allocation3 + $0x70] sm:$0x70] %v499
    %528 = vst [vmem:[#allocation3 + $0x78] sm:$0x70] %v500
    %529 = vst [vmem:[#allocation3 + $0x80] sm:$0x70] %v501
    %530 = vst [vmem:[#allocation3 + $0x88] sm:$0x70] %v502
    %531 = vst [vmem:[#allocation3 + $0x90] sm:$0x70] %v503
    %532 = vst [vmem:[#allocation3 + $0x98] sm:$0x70] %v504
    %533 = vst [vmem:[#allocation3 + $0xa0] sm:$0x70] %v505
    %534 = vst [vmem:[#allocation3 + $0xa8] sm:$0x70] %v506
    %535 = vst [vmem:[#allocation3 + $0xb0] sm:$0x70] %v507
    %536 = vst [vmem:[#allocation3 + $0xb8] sm:$0x70] %v508
    %537 = vst [vmem:[#allocation3 + $0xc0] sm:$0x70] %v509
    %538 = vst [vmem:[#allocation3 + $0xc8] sm:$0x70] %v510
    %539 = vst [vmem:[#allocation3 + $0xd0] sm:$0x70] %v511
    %540 = vst [vmem:[#allocation3 + $0xd8] sm:$0x70] %v512
    %541 = vrot.lane.b32.xlu0 %v83, 100
    %v542 = vpop.permute.xlu0 %541
    %543 = vrot.lane.b32.xlu0 %v101, 100
    %v544 = vpop.permute.xlu0 %543
    %545 = vrot.lane.b32.xlu0 %v84, 100
    %v546 = vpop.permute.xlu0 %545
    %547 = vrot.lane.b32.xlu0 %v102, 100
    %v548 = vpop.permute.xlu0 %547
    %549 = vrot.lane.b32.xlu0 %v85, 100
    %v550 = vpop.permute.xlu0 %549
    %551 = vrot.lane.b32.xlu0 %v103, 100
    %v552 = vpop.permute.xlu0 %551
    %553 = vrot.lane.b32.xlu0 %v86, 100
    %v554 = vpop.permute.xlu0 %553
    %555 = vrot.lane.b32.xlu0 %v104, 100
    %v556 = vpop.permute.xlu0 %555
    %557 = vrot.lane.b32.xlu0 %v87, 100
    %v558 = vpop.permute.xlu0 %557
    %559 = vrot.lane.b32.xlu0 %v105, 100
    %v560 = vpop.permute.xlu0 %559
    %561 = vrot.lane.b32.xlu0 %v88, 100
    %v562 = vpop.permute.xlu0 %561
    %563 = vrot.lane.b32.xlu0 %v106, 100
    %v564 = vpop.permute.xlu0 %563
    %565 = vrot.lane.b32.xlu0 %v89, 100
    %v566 = vpop.permute.xlu0 %565
    %567 = vrot.lane.b32.xlu0 %v107, 100
    %v568 = vpop.permute.xlu0 %567
    %vm569 = vcmp.lt.s32.totalorder %v158, 100
    %v570 = vsel %vm569, %v566, %v568
    %v571 = vsel %vm569, %v564, %v566
    %v572 = vsel %vm569, %v562, %v564
    %v573 = vsel %vm569, %v560, %v562
    %v574 = vsel %vm569, %v558, %v560
    %v575 = vsel %vm569, %v556, %v558
    %v576 = vsel %vm569, %v554, %v556
    %v577 = vsel %vm569, %v552, %v554
    %v578 = vsel %vm569, %v550, %v552
    %v579 = vsel %vm569, %v548, %v550
    %v580 = vsel %vm569, %v546, %v548
    %v581 = vsel %vm569, %v544, %v546
    %v582 = vsel %vm569, %v542, %v544
    %v583 = vsel %vm569, %v568, %v542
    %v598 = vrot.slane %v582, 1
    %v599 = vrot.slane %v581, 1
    %v600 = vrot.slane %v580, 1
    %v601 = vrot.slane %v579, 1
    %v602 = vrot.slane %v578, 1
    %v603 = vrot.slane %v577, 1
    %v604 = vrot.slane %v576, 1
    %v605 = vrot.slane %v575, 1
    %v606 = vrot.slane %v574, 1
    %v607 = vrot.slane %v573, 1
    %v608 = vrot.slane %v572, 1
    %v609 = vrot.slane %v571, 1
    %v610 = vrot.slane %v570, 1
    %v611 = vrot.slane %v583, 1
    %626 = vst [vmem:[#allocation3 + $0x70] sm:$0x80] %v598
    %627 = vst [vmem:[#allocation3 + $0x78] sm:$0x80] %v599
    %628 = vst [vmem:[#allocation3 + $0x80] sm:$0x80] %v600
    %629 = vst [vmem:[#allocation3 + $0x88] sm:$0x80] %v601
    %630 = vst [vmem:[#allocation3 + $0x90] sm:$0x80] %v602
    %631 = vst [vmem:[#allocation3 + $0x98] sm:$0x80] %v603
    %632 = vst [vmem:[#allocation3 + $0xa0] sm:$0x80] %v604
    %633 = vst [vmem:[#allocation3 + $0xa8] sm:$0x80] %v605
    %634 = vst [vmem:[#allocation3 + $0xb0] sm:$0x80] %v606
    %635 = vst [vmem:[#allocation3 + $0xb8] sm:$0x80] %v607
    %636 = vst [vmem:[#allocation3 + $0xc0] sm:$0x80] %v608
    %637 = vst [vmem:[#allocation3 + $0xc8] sm:$0x80] %v609
    %638 = vst [vmem:[#allocation3 + $0xd0] sm:$0x80] %v610
    %639 = vst [vmem:[#allocation3 + $0xd8] sm:$0x80] %v611
    %640 = vst [vmem:[#allocation3 + $0xe0] sm:$0x3] %v598
    %641 = vst [vmem:[#allocation3 + $0xe8] sm:$0x3] %v599
    %642 = vst [vmem:[#allocation3 + $0xf0] sm:$0x3] %v600
    %643 = vst [vmem:[#allocation3 + $0xf8] sm:$0x3] %v601
    %644 = vst [vmem:[#allocation3 + $0x100] sm:$0x3] %v602
    %645 = vst [vmem:[#allocation3 + $0x108] sm:$0x3] %v603
    %646 = vst [vmem:[#allocation3 + $0x110] sm:$0x3] %v604
    %647 = vst [vmem:[#allocation3 + $0x118] sm:$0x3] %v605
    %648 = vst [vmem:[#allocation3 + $0x120] sm:$0x3] %v606
    %649 = vst [vmem:[#allocation3 + $0x128] sm:$0x3] %v607
    %650 = vst [vmem:[#allocation3 + $0x130] sm:$0x3] %v608
    %651 = vst [vmem:[#allocation3 + $0x138] sm:$0x3] %v609
    %652 = vst [vmem:[#allocation3 + $0x140] sm:$0x3] %v610
    %653 = vst [vmem:[#allocation3 + $0x148] sm:$0x3] %v611
    %654 = vrot.lane.b32.xlu0 %v83, 99
    %v655 = vpop.permute.xlu0 %654
    %656 = vrot.lane.b32.xlu0 %v101, 99
    %v657 = vpop.permute.xlu0 %656
    %658 = vrot.lane.b32.xlu0 %v84, 99
    %v659 = vpop.permute.xlu0 %658
    %660 = vrot.lane.b32.xlu0 %v102, 99
    %v661 = vpop.permute.xlu0 %660
    %662 = vrot.lane.b32.xlu0 %v85, 99
    %v663 = vpop.permute.xlu0 %662
    %664 = vrot.lane.b32.xlu0 %v103, 99
    %v665 = vpop.permute.xlu0 %664
    %666 = vrot.lane.b32.xlu0 %v86, 99
    %v667 = vpop.permute.xlu0 %666
    %668 = vrot.lane.b32.xlu0 %v104, 99
    %v669 = vpop.permute.xlu0 %668
    %670 = vrot.lane.b32.xlu0 %v87, 99
    %v671 = vpop.permute.xlu0 %670
    %672 = vrot.lane.b32.xlu0 %v105, 99
    %v673 = vpop.permute.xlu0 %672
    %674 = vrot.lane.b32.xlu0 %v88, 99
    %v675 = vpop.permute.xlu0 %674
    %676 = vrot.lane.b32.xlu0 %v106, 99
    %v677 = vpop.permute.xlu0 %676
    %678 = vrot.lane.b32.xlu0 %v89, 99
    %v679 = vpop.permute.xlu0 %678
    %680 = vrot.lane.b32.xlu0 %v107, 99
    %v681 = vpop.permute.xlu0 %680
    %vm682 = vcmp.lt.s32.totalorder %v158, 99
    %v683 = vsel %vm682, %v679, %v681
    %v684 = vsel %vm682, %v677, %v679
    %v685 = vsel %vm682, %v675, %v677
    %v686 = vsel %vm682, %v673, %v675
    %v687 = vsel %vm682, %v671, %v673
    %v688 = vsel %vm682, %v669, %v671
    %v689 = vsel %vm682, %v667, %v669
    %v690 = vsel %vm682, %v665, %v667
    %v691 = vsel %vm682, %v663, %v665
    %v692 = vsel %vm682, %v661, %v663
    %v693 = vsel %vm682, %v659, %v661
    %v694 = vsel %vm682, %v657, %v659
    %v695 = vsel %vm682, %v655, %v657
    %v696 = vsel %vm682, %v681, %v655
    %v711 = vrot.slane %v695, 6
    %v712 = vrot.slane %v694, 6
    %v713 = vrot.slane %v693, 6
    %v714 = vrot.slane %v692, 6
    %v715 = vrot.slane %v691, 6
    %v716 = vrot.slane %v690, 6
    %v717 = vrot.slane %v689, 6
    %v718 = vrot.slane %v688, 6
    %v719 = vrot.slane %v687, 6
    %v720 = vrot.slane %v686, 6
    %v721 = vrot.slane %v685, 6
    %v722 = vrot.slane %v684, 6
    %v723 = vrot.slane %v683, 6
    %v724 = vrot.slane %v696, 6
    %739 = vst [vmem:[#allocation3 + $0xe0] sm:$0x1c] %v711
    %740 = vst [vmem:[#allocation3 + $0xe8] sm:$0x1c] %v712
    %741 = vst [vmem:[#allocation3 + $0xf0] sm:$0x1c] %v713
    %742 = vst [vmem:[#allocation3 + $0xf8] sm:$0x1c] %v714
    %743 = vst [vmem:[#allocation3 + $0x100] sm:$0x1c] %v715
    %744 = vst [vmem:[#allocation3 + $0x108] sm:$0x1c] %v716
    %745 = vst [vmem:[#allocation3 + $0x110] sm:$0x1c] %v717
    %746 = vst [vmem:[#allocation3 + $0x118] sm:$0x1c] %v718
    %747 = vst [vmem:[#allocation3 + $0x120] sm:$0x1c] %v719
    %748 = vst [vmem:[#allocation3 + $0x128] sm:$0x1c] %v720
    %749 = vst [vmem:[#allocation3 + $0x130] sm:$0x1c] %v721
    %750 = vst [vmem:[#allocation3 + $0x138] sm:$0x1c] %v722
    %751 = vst [vmem:[#allocation3 + $0x140] sm:$0x1c] %v723
    %752 = vst [vmem:[#allocation3 + $0x148] sm:$0x1c] %v724
    %753 = vrot.lane.b32.xlu0 %v83, 98
    %v754 = vpop.permute.xlu0 %753
    %755 = vrot.lane.b32.xlu0 %v101, 98
    %v756 = vpop.permute.xlu0 %755
    %757 = vrot.lane.b32.xlu0 %v84, 98
    %v758 = vpop.permute.xlu0 %757
    %759 = vrot.lane.b32.xlu0 %v102, 98
    %v760 = vpop.permute.xlu0 %759
    %761 = vrot.lane.b32.xlu0 %v85, 98
    %v762 = vpop.permute.xlu0 %761
    %763 = vrot.lane.b32.xlu0 %v103, 98
    %v764 = vpop.permute.xlu0 %763
    %765 = vrot.lane.b32.xlu0 %v86, 98
    %v766 = vpop.permute.xlu0 %765
    %767 = vrot.lane.b32.xlu0 %v104, 98
    %v768 = vpop.permute.xlu0 %767
    %769 = vrot.lane.b32.xlu0 %v87, 98
    %v770 = vpop.permute.xlu0 %769
    %771 = vrot.lane.b32.xlu0 %v105, 98
    %v772 = vpop.permute.xlu0 %771
    %773 = vrot.lane.b32.xlu0 %v88, 98
    %v774 = vpop.permute.xlu0 %773
    %775 = vrot.lane.b32.xlu0 %v106, 98
    %v776 = vpop.permute.xlu0 %775
    %777 = vrot.lane.b32.xlu0 %v89, 98
    %v778 = vpop.permute.xlu0 %777
    %779 = vrot.lane.b32.xlu0 %v107, 98
    %v780 = vpop.permute.xlu0 %779
    %vm781 = vcmp.lt.s32.totalorder %v158, 98
    %v782 = vsel %vm781, %v778, %v780
    %v783 = vsel %vm781, %v776, %v778
    %v784 = vsel %vm781, %v774, %v776
    %v785 = vsel %vm781, %v772, %v774
    %v786 = vsel %vm781, %v770, %v772
    %v787 = vsel %vm781, %v768, %v770
    %v788 = vsel %vm781, %v766, %v768
    %v789 = vsel %vm781, %v764, %v766
    %v790 = vsel %vm781, %v762, %v764
    %v791 = vsel %vm781, %v760, %v762
    %v792 = vsel %vm781, %v758, %v760
    %v793 = vsel %vm781, %v756, %v758
    %v794 = vsel %vm781, %v754, %v756
    %v795 = vsel %vm781, %v780, %v754
    %v810 = vrot.slane %v794, 3
    %v811 = vrot.slane %v793, 3
    %v812 = vrot.slane %v792, 3
    %v813 = vrot.slane %v791, 3
    %v814 = vrot.slane %v790, 3
    %v815 = vrot.slane %v789, 3
    %v816 = vrot.slane %v788, 3
    %v817 = vrot.slane %v787, 3
    %v818 = vrot.slane %v786, 3
    %v819 = vrot.slane %v785, 3
    %v820 = vrot.slane %v784, 3
    %v821 = vrot.slane %v783, 3
    %v822 = vrot.slane %v782, 3
    %v823 = vrot.slane %v795, 3
    %838 = vst [vmem:[#allocation3 + $0xe0] sm:$0xe0] %v810
    %839 = vst [vmem:[#allocation3 + $0xe8] sm:$0xe0] %v811
    %840 = vst [vmem:[#allocation3 + $0xf0] sm:$0xe0] %v812
    %841 = vst [vmem:[#allocation3 + $0xf8] sm:$0xe0] %v813
    %842 = vst [vmem:[#allocation3 + $0x100] sm:$0xe0] %v814
    %843 = vst [vmem:[#allocation3 + $0x108] sm:$0xe0] %v815
    %844 = vst [vmem:[#allocation3 + $0x110] sm:$0xe0] %v816
    %845 = vst [vmem:[#allocation3 + $0x118] sm:$0xe0] %v817
    %846 = vst [vmem:[#allocation3 + $0x120] sm:$0xe0] %v818
    %847 = vst [vmem:[#allocation3 + $0x128] sm:$0xe0] %v819
    %848 = vst [vmem:[#allocation3 + $0x130] sm:$0xe0] %v820
    %849 = vst [vmem:[#allocation3 + $0x138] sm:$0xe0] %v821
    %850 = vst [vmem:[#allocation3 + $0x140] sm:$0xe0] %v822
    %851 = vst [vmem:[#allocation3 + $0x148] sm:$0xe0] %v823
    %852 = vrot.lane.b32.xlu0 %v83, 97
    %v853 = vpop.permute.xlu0 %852
    %854 = vrot.lane.b32.xlu0 %v101, 97
    %v855 = vpop.permute.xlu0 %854
    %856 = vrot.lane.b32.xlu0 %v84, 97
    %v857 = vpop.permute.xlu0 %856
    %858 = vrot.lane.b32.xlu0 %v102, 97
    %v859 = vpop.permute.xlu0 %858
    %860 = vrot.lane.b32.xlu0 %v85, 97
    %v861 = vpop.permute.xlu0 %860
    %862 = vrot.lane.b32.xlu0 %v103, 97
    %v863 = vpop.permute.xlu0 %862
    %864 = vrot.lane.b32.xlu0 %v86, 97
    %v865 = vpop.permute.xlu0 %864
    %866 = vrot.lane.b32.xlu0 %v104, 97
    %v867 = vpop.permute.xlu0 %866
    %868 = vrot.lane.b32.xlu0 %v87, 97
    %v869 = vpop.permute.xlu0 %868
    %870 = vrot.lane.b32.xlu0 %v105, 97
    %v871 = vpop.permute.xlu0 %870
    %872 = vrot.lane.b32.xlu0 %v88, 97
    %v873 = vpop.permute.xlu0 %872
    %874 = vrot.lane.b32.xlu0 %v106, 97
    %v875 = vpop.permute.xlu0 %874
    %876 = vrot.lane.b32.xlu0 %v89, 97
    %v877 = vpop.permute.xlu0 %876
    %878 = vrot.lane.b32.xlu0 %v107, 97
    %v879 = vpop.permute.xlu0 %878
    %vm880 = vcmp.lt.s32.totalorder %v158, 97
    %v881 = vsel %vm880, %v877, %v879
    %v882 = vsel %vm880, %v875, %v877
    %v883 = vsel %vm880, %v873, %v875
    %v884 = vsel %vm880, %v871, %v873
    %v885 = vsel %vm880, %v869, %v871
    %v886 = vsel %vm880, %v867, %v869
    %v887 = vsel %vm880, %v865, %v867
    %v888 = vsel %vm880, %v863, %v865
    %v889 = vsel %vm880, %v861, %v863
    %v890 = vsel %vm880, %v859, %v861
    %v891 = vsel %vm880, %v857, %v859
    %v892 = vsel %vm880, %v855, %v857
    %v893 = vsel %vm880, %v853, %v855
    %v894 = vsel %vm880, %v879, %v853
    %895 = vst [vmem:[#allocation3 + $0x150] sm:$0x7] %v893
    %896 = vst [vmem:[#allocation3 + $0x158] sm:$0x7] %v892
    %897 = vst [vmem:[#allocation3 + $0x160] sm:$0x7] %v891
    %898 = vst [vmem:[#allocation3 + $0x168] sm:$0x7] %v890
    %899 = vst [vmem:[#allocation3 + $0x170] sm:$0x7] %v889
    %900 = vst [vmem:[#allocation3 + $0x178] sm:$0x7] %v888
    %901 = vst [vmem:[#allocation3 + $0x180] sm:$0x7] %v887
    %902 = vst [vmem:[#allocation3 + $0x188] sm:$0x7] %v886
    %903 = vst [vmem:[#allocation3 + $0x190] sm:$0x7] %v885
    %904 = vst [vmem:[#allocation3 + $0x198] sm:$0x7] %v884
    %905 = vst [vmem:[#allocation3 + $0x1a0] sm:$0x7] %v883
    %906 = vst [vmem:[#allocation3 + $0x1a8] sm:$0x7] %v882
    %907 = vst [vmem:[#allocation3 + $0x1b0] sm:$0x7] %v881
    %908 = vst [vmem:[#allocation3 + $0x1b8] sm:$0x7] %v894
    %909 = vrot.lane.b32.xlu0 %v83, 96
    %v910 = vpop.permute.xlu0 %909
    %911 = vrot.lane.b32.xlu0 %v101, 96
    %v912 = vpop.permute.xlu0 %911
    %913 = vrot.lane.b32.xlu0 %v84, 96
    %v914 = vpop.permute.xlu0 %913
    %915 = vrot.lane.b32.xlu0 %v102, 96
    %v916 = vpop.permute.xlu0 %915
    %917 = vrot.lane.b32.xlu0 %v85, 96
    %v918 = vpop.permute.xlu0 %917
    %919 = vrot.lane.b32.xlu0 %v103, 96
    %v920 = vpop.permute.xlu0 %919
    %921 = vrot.lane.b32.xlu0 %v86, 96
    %v922 = vpop.permute.xlu0 %921
    %923 = vrot.lane.b32.xlu0 %v104, 96
    %v924 = vpop.permute.xlu0 %923
    %925 = vrot.lane.b32.xlu0 %v87, 96
    %v926 = vpop.permute.xlu0 %925
    %927 = vrot.lane.b32.xlu0 %v105, 96
    %v928 = vpop.permute.xlu0 %927
    %929 = vrot.lane.b32.xlu0 %v88, 96
    %v930 = vpop.permute.xlu0 %929
    %931 = vrot.lane.b32.xlu0 %v106, 96
    %v932 = vpop.permute.xlu0 %931
    %933 = vrot.lane.b32.xlu0 %v89, 96
    %v934 = vpop.permute.xlu0 %933
    %935 = vrot.lane.b32.xlu0 %v107, 96
    %v936 = vpop.permute.xlu0 %935
    %vm937 = vcmp.lt.s32.totalorder %v158, 96
    %v938 = vsel %vm937, %v934, %v936
    %v939 = vsel %vm937, %v932, %v934
    %v940 = vsel %vm937, %v930, %v932
    %v941 = vsel %vm937, %v928, %v930
    %v942 = vsel %vm937, %v926, %v928
    %v943 = vsel %vm937, %v924, %v926
    %v944 = vsel %vm937, %v922, %v924
    %v945 = vsel %vm937, %v920, %v922
    %v946 = vsel %vm937, %v918, %v920
    %v947 = vsel %vm937, %v916, %v918
    %v948 = vsel %vm937, %v914, %v916
    %v949 = vsel %vm937, %v912, %v914
    %v950 = vsel %vm937, %v910, %v912
    %v951 = vsel %vm937, %v936, %v910
    %v966 = vrot.slane %v950, 5
    %v967 = vrot.slane %v949, 5
    %v968 = vrot.slane %v948, 5
    %v969 = vrot.slane %v947, 5
    %v970 = vrot.slane %v946, 5
    %v971 = vrot.slane %v945, 5
    %v972 = vrot.slane %v944, 5
    %v973 = vrot.slane %v943, 5
    %v974 = vrot.slane %v942, 5
    %v975 = vrot.slane %v941, 5
    %v976 = vrot.slane %v940, 5
    %v977 = vrot.slane %v939, 5
    %v978 = vrot.slane %v938, 5
    %v979 = vrot.slane %v951, 5
    %994 = vst [vmem:[#allocation3 + $0x150] sm:$0x38] %v966
    %995 = vst [vmem:[#allocation3 + $0x158] sm:$0x38] %v967
    %996 = vst [vmem:[#allocation3 + $0x160] sm:$0x38] %v968
    %997 = vst [vmem:[#allocation3 + $0x168] sm:$0x38] %v969
    %998 = vst [vmem:[#allocation3 + $0x170] sm:$0x38] %v970
    %999 = vst [vmem:[#allocation3 + $0x178] sm:$0x38] %v971
    %1000 = vst [vmem:[#allocation3 + $0x180] sm:$0x38] %v972
    %1001 = vst [vmem:[#allocation3 + $0x188] sm:$0x38] %v973
    %1002 = vst [vmem:[#allocation3 + $0x190] sm:$0x38] %v974
    %1003 = vst [vmem:[#allocation3 + $0x198] sm:$0x38] %v975
    %1004 = vst [vmem:[#allocation3 + $0x1a0] sm:$0x38] %v976
    %1005 = vst [vmem:[#allocation3 + $0x1a8] sm:$0x38] %v977
    %1006 = vst [vmem:[#allocation3 + $0x1b0] sm:$0x38] %v978
    %1007 = vst [vmem:[#allocation3 + $0x1b8] sm:$0x38] %v979
    %1008 = vrot.lane.b32.xlu0 %v83, 72
    %v1009 = vpop.permute.xlu0 %1008
    %1010 = vrot.lane.b32.xlu0 %v101, 72
    %v1011 = vpop.permute.xlu0 %1010
    %1012 = vrot.lane.b32.xlu0 %v84, 72
    %v1013 = vpop.permute.xlu0 %1012
    %1014 = vrot.lane.b32.xlu0 %v102, 72
    %v1015 = vpop.permute.xlu0 %1014
    %1016 = vrot.lane.b32.xlu0 %v85, 72
    %v1017 = vpop.permute.xlu0 %1016
    %1018 = vrot.lane.b32.xlu0 %v103, 72
    %v1019 = vpop.permute.xlu0 %1018
    %1020 = vrot.lane.b32.xlu0 %v86, 72
    %v1021 = vpop.permute.xlu0 %1020
    %1022 = vrot.lane.b32.xlu0 %v104, 72
    %v1023 = vpop.permute.xlu0 %1022
    %1024 = vrot.lane.b32.xlu0 %v87, 72
    %v1025 = vpop.permute.xlu0 %1024
    %1026 = vrot.lane.b32.xlu0 %v105, 72
    %v1027 = vpop.permute.xlu0 %1026
    %1028 = vrot.lane.b32.xlu0 %v88, 72
    %v1029 = vpop.permute.xlu0 %1028
    %1030 = vrot.lane.b32.xlu0 %v106, 72
    %v1031 = vpop.permute.xlu0 %1030
    %1032 = vrot.lane.b32.xlu0 %v89, 72
    %v1033 = vpop.permute.xlu0 %1032
    %1034 = vrot.lane.b32.xlu0 %v107, 72
    %v1035 = vpop.permute.xlu0 %1034
    %vm1036 = vcmp.lt.s32.totalorder %v158, 72
    %v1037 = vsel %vm1036, %v1033, %v1035
    %v1038 = vsel %vm1036, %v1031, %v1033
    %v1039 = vsel %vm1036, %v1029, %v1031
    %v1040 = vsel %vm1036, %v1027, %v1029
    %v1041 = vsel %vm1036, %v1025, %v1027
    %v1042 = vsel %vm1036, %v1023, %v1025
    %v1043 = vsel %vm1036, %v1021, %v1023
    %v1044 = vsel %vm1036, %v1019, %v1021
    %v1045 = vsel %vm1036, %v1017, %v1019
    %v1046 = vsel %vm1036, %v1015, %v1017
    %v1047 = vsel %vm1036, %v1013, %v1015
    %v1048 = vsel %vm1036, %v1011, %v1013
    %v1049 = vsel %vm1036, %v1009, %v1011
    %v1050 = vsel %vm1036, %v1035, %v1009
    %v1065 = vrot.slane %v1049, 2
    %v1066 = vrot.slane %v1048, 2
    %v1067 = vrot.slane %v1047, 2
    %v1068 = vrot.slane %v1046, 2
    %v1069 = vrot.slane %v1045, 2
    %v1070 = vrot.slane %v1044, 2
    %v1071 = vrot.slane %v1043, 2
    %v1072 = vrot.slane %v1042, 2
    %v1073 = vrot.slane %v1041, 2
    %v1074 = vrot.slane %v1040, 2
    %v1075 = vrot.slane %v1039, 2
    %v1076 = vrot.slane %v1038, 2
    %v1077 = vrot.slane %v1037, 2
    %v1078 = vrot.slane %v1050, 2
    %1093 = vst [vmem:[#allocation3 + $0x150] sm:$0xc0] %v1065
    %1094 = vst [vmem:[#allocation3 + $0x158] sm:$0xc0] %v1066
    %1095 = vst [vmem:[#allocation3 + $0x160] sm:$0xc0] %v1067
    %1096 = vst [vmem:[#allocation3 + $0x168] sm:$0xc0] %v1068
    %1097 = vst [vmem:[#allocation3 + $0x170] sm:$0xc0] %v1069
    %1098 = vst [vmem:[#allocation3 + $0x178] sm:$0xc0] %v1070
    %1099 = vst [vmem:[#allocation3 + $0x180] sm:$0xc0] %v1071
    %1100 = vst [vmem:[#allocation3 + $0x188] sm:$0xc0] %v1072
    %1101 = vst [vmem:[#allocation3 + $0x190] sm:$0xc0] %v1073
    %1102 = vst [vmem:[#allocation3 + $0x198] sm:$0xc0] %v1074
    %1103 = vst [vmem:[#allocation3 + $0x1a0] sm:$0xc0] %v1075
    %1104 = vst [vmem:[#allocation3 + $0x1a8] sm:$0xc0] %v1076
    %1105 = vst [vmem:[#allocation3 + $0x1b0] sm:$0xc0] %v1077
    %1106 = vst [vmem:[#allocation3 + $0x1b8] sm:$0xc0] %v1078
    %1107 = vst [vmem:[#allocation3 + $0x1c0] sm:$0x1] %v1065
    %1108 = vst [vmem:[#allocation3 + $0x1c8] sm:$0x1] %v1066
    %1109 = vst [vmem:[#allocation3 + $0x1d0] sm:$0x1] %v1067
    %1110 = vst [vmem:[#allocation3 + $0x1d8] sm:$0x1] %v1068
    %1111 = vst [vmem:[#allocation3 + $0x1e0] sm:$0x1] %v1069
    %1112 = vst [vmem:[#allocation3 + $0x1e8] sm:$0x1] %v1070
    %1113 = vst [vmem:[#allocation3 + $0x1f0] sm:$0x1] %v1071
    %1114 = vst [vmem:[#allocation3 + $0x1f8] sm:$0x1] %v1072
    %1115 = vst [vmem:[#allocation3 + $0x200] sm:$0x1] %v1073
    %1116 = vst [vmem:[#allocation3 + $0x208] sm:$0x1] %v1074
    %1117 = vst [vmem:[#allocation3 + $0x210] sm:$0x1] %v1075
    %1118 = vst [vmem:[#allocation3 + $0x218] sm:$0x1] %v1076
    %1119 = vst [vmem:[#allocation3 + $0x220] sm:$0x1] %v1077
    %1120 = vst [vmem:[#allocation3 + $0x228] sm:$0x1] %v1078
    %1121 = vrot.lane.b32.xlu0 %v83, 71
    %v1122 = vpop.permute.xlu0 %1121
    %1123 = vrot.lane.b32.xlu0 %v101, 71
    %v1124 = vpop.permute.xlu0 %1123
    %1125 = vrot.lane.b32.xlu0 %v84, 71
    %v1126 = vpop.permute.xlu0 %1125
    %1127 = vrot.lane.b32.xlu0 %v102, 71
    %v1128 = vpop.permute.xlu0 %1127
    %1129 = vrot.lane.b32.xlu0 %v85, 71
    %v1130 = vpop.permute.xlu0 %1129
    %1131 = vrot.lane.b32.xlu0 %v103, 71
    %v1132 = vpop.permute.xlu0 %1131
    %1133 = vrot.lane.b32.xlu0 %v86, 71
    %v1134 = vpop.permute.xlu0 %1133
    %1135 = vrot.lane.b32.xlu0 %v104, 71
    %v1136 = vpop.permute.xlu0 %1135
    %1137 = vrot.lane.b32.xlu0 %v87, 71
    %v1138 = vpop.permute.xlu0 %1137
    %1139 = vrot.lane.b32.xlu0 %v105, 71
    %v1140 = vpop.permute.xlu0 %1139
    %1141 = vrot.lane.b32.xlu0 %v88, 71
    %v1142 = vpop.permute.xlu0 %1141
    %1143 = vrot.lane.b32.xlu0 %v106, 71
    %v1144 = vpop.permute.xlu0 %1143
    %1145 = vrot.lane.b32.xlu0 %v89, 71
    %v1146 = vpop.permute.xlu0 %1145
    %1147 = vrot.lane.b32.xlu0 %v107, 71
    %v1148 = vpop.permute.xlu0 %1147
    %vm1149 = vcmp.lt.s32.totalorder %v158, 71
    %v1150 = vsel %vm1149, %v1146, %v1148
    %v1151 = vsel %vm1149, %v1144, %v1146
    %v1152 = vsel %vm1149, %v1142, %v1144
    %v1153 = vsel %vm1149, %v1140, %v1142
    %v1154 = vsel %vm1149, %v1138, %v1140
    %v1155 = vsel %vm1149, %v1136, %v1138
    %v1156 = vsel %vm1149, %v1134, %v1136
    %v1157 = vsel %vm1149, %v1132, %v1134
    %v1158 = vsel %vm1149, %v1130, %v1132
    %v1159 = vsel %vm1149, %v1128, %v1130
    %v1160 = vsel %vm1149, %v1126, %v1128
    %v1161 = vsel %vm1149, %v1124, %v1126
    %v1162 = vsel %vm1149, %v1122, %v1124
    %v1163 = vsel %vm1149, %v1148, %v1122
    %v1178 = vrot.slane %v1162, 7
    %v1179 = vrot.slane %v1161, 7
    %v1180 = vrot.slane %v1160, 7
    %v1181 = vrot.slane %v1159, 7
    %v1182 = vrot.slane %v1158, 7
    %v1183 = vrot.slane %v1157, 7
    %v1184 = vrot.slane %v1156, 7
    %v1185 = vrot.slane %v1155, 7
    %v1186 = vrot.slane %v1154, 7
    %v1187 = vrot.slane %v1153, 7
    %v1188 = vrot.slane %v1152, 7
    %v1189 = vrot.slane %v1151, 7
    %v1190 = vrot.slane %v1150, 7
    %v1191 = vrot.slane %v1163, 7
    %1206 = vst [vmem:[#allocation3 + $0x1c0] sm:$0xe] %v1178
    %1207 = vst [vmem:[#allocation3 + $0x1c8] sm:$0xe] %v1179
    %1208 = vst [vmem:[#allocation3 + $0x1d0] sm:$0xe] %v1180
    %1209 = vst [vmem:[#allocation3 + $0x1d8] sm:$0xe] %v1181
    %1210 = vst [vmem:[#allocation3 + $0x1e0] sm:$0xe] %v1182
    %1211 = vst [vmem:[#allocation3 + $0x1e8] sm:$0xe] %v1183
    %1212 = vst [vmem:[#allocation3 + $0x1f0] sm:$0xe] %v1184
    %1213 = vst [vmem:[#allocation3 + $0x1f8] sm:$0xe] %v1185
    %1214 = vst [vmem:[#allocation3 + $0x200] sm:$0xe] %v1186
    %1215 = vst [vmem:[#allocation3 + $0x208] sm:$0xe] %v1187
    %1216 = vst [vmem:[#allocation3 + $0x210] sm:$0xe] %v1188
    %1217 = vst [vmem:[#allocation3 + $0x218] sm:$0xe] %v1189
    %1218 = vst [vmem:[#allocation3 + $0x220] sm:$0xe] %v1190
    %1219 = vst [vmem:[#allocation3 + $0x228] sm:$0xe] %v1191
    %1220 = vrot.lane.b32.xlu0 %v83, 70
    %v1221 = vpop.permute.xlu0 %1220
    %1222 = vrot.lane.b32.xlu0 %v101, 70
    %v1223 = vpop.permute.xlu0 %1222
    %1224 = vrot.lane.b32.xlu0 %v84, 70
    %v1225 = vpop.permute.xlu0 %1224
    %1226 = vrot.lane.b32.xlu0 %v102, 70
    %v1227 = vpop.permute.xlu0 %1226
    %1228 = vrot.lane.b32.xlu0 %v85, 70
    %v1229 = vpop.permute.xlu0 %1228
    %1230 = vrot.lane.b32.xlu0 %v103, 70
    %v1231 = vpop.permute.xlu0 %1230
    %1232 = vrot.lane.b32.xlu0 %v86, 70
    %v1233 = vpop.permute.xlu0 %1232
    %1234 = vrot.lane.b32.xlu0 %v104, 70
    %v1235 = vpop.permute.xlu0 %1234
    %1236 = vrot.lane.b32.xlu0 %v87, 70
    %v1237 = vpop.permute.xlu0 %1236
    %1238 = vrot.lane.b32.xlu0 %v105, 70
    %v1239 = vpop.permute.xlu0 %1238
    %1240 = vrot.lane.b32.xlu0 %v88, 70
    %v1241 = vpop.permute.xlu0 %1240
    %1242 = vrot.lane.b32.xlu0 %v106, 70
    %v1243 = vpop.permute.xlu0 %1242
    %1244 = vrot.lane.b32.xlu0 %v89, 70
    %v1245 = vpop.permute.xlu0 %1244
    %1246 = vrot.lane.b32.xlu0 %v107, 70
    %v1247 = vpop.permute.xlu0 %1246
    %vm1248 = vcmp.lt.s32.totalorder %v158, 70
    %v1249 = vsel %vm1248, %v1245, %v1247
    %v1250 = vsel %vm1248, %v1243, %v1245
    %v1251 = vsel %vm1248, %v1241, %v1243
    %v1252 = vsel %vm1248, %v1239, %v1241
    %v1253 = vsel %vm1248, %v1237, %v1239
    %v1254 = vsel %vm1248, %v1235, %v1237
    %v1255 = vsel %vm1248, %v1233, %v1235
    %v1256 = vsel %vm1248, %v1231, %v1233
    %v1257 = vsel %vm1248, %v1229, %v1231
    %v1258 = vsel %vm1248, %v1227, %v1229
    %v1259 = vsel %vm1248, %v1225, %v1227
    %v1260 = vsel %vm1248, %v1223, %v1225
    %v1261 = vsel %vm1248, %v1221, %v1223
    %v1262 = vsel %vm1248, %v1247, %v1221
    %v1277 = vrot.slane %v1261, 4
    %v1278 = vrot.slane %v1260, 4
    %v1279 = vrot.slane %v1259, 4
    %v1280 = vrot.slane %v1258, 4
    %v1281 = vrot.slane %v1257, 4
    %v1282 = vrot.slane %v1256, 4
    %v1283 = vrot.slane %v1255, 4
    %v1284 = vrot.slane %v1254, 4
    %v1285 = vrot.slane %v1253, 4
    %v1286 = vrot.slane %v1252, 4
    %v1287 = vrot.slane %v1251, 4
    %v1288 = vrot.slane %v1250, 4
    %v1289 = vrot.slane %v1249, 4
    %v1290 = vrot.slane %v1262, 4
    %1305 = vst [vmem:[#allocation3 + $0x1c0] sm:$0x70] %v1277
    %1306 = vst [vmem:[#allocation3 + $0x1c8] sm:$0x70] %v1278
    %1307 = vst [vmem:[#allocation3 + $0x1d0] sm:$0x70] %v1279
    %1308 = vst [vmem:[#allocation3 + $0x1d8] sm:$0x70] %v1280
    %1309 = vst [vmem:[#allocation3 + $0x1e0] sm:$0x70] %v1281
    %1310 = vst [vmem:[#allocation3 + $0x1e8] sm:$0x70] %v1282
    %1311 = vst [vmem:[#allocation3 + $0x1f0] sm:$0x70] %v1283
    %1312 = vst [vmem:[#allocation3 + $0x1f8] sm:$0x70] %v1284
    %1313 = vst [vmem:[#allocation3 + $0x200] sm:$0x70] %v1285
    %1314 = vst [vmem:[#allocation3 + $0x208] sm:$0x70] %v1286
    %1315 = vst [vmem:[#allocation3 + $0x210] sm:$0x70] %v1287
    %1316 = vst [vmem:[#allocation3 + $0x218] sm:$0x70] %v1288
    %1317 = vst [vmem:[#allocation3 + $0x220] sm:$0x70] %v1289
    %1318 = vst [vmem:[#allocation3 + $0x228] sm:$0x70] %v1290
    %1319 = vrot.lane.b32.xlu0 %v83, 69
    %v1320 = vpop.permute.xlu0 %1319
    %1321 = vrot.lane.b32.xlu0 %v101, 69
    %v1322 = vpop.permute.xlu0 %1321
    %1323 = vrot.lane.b32.xlu0 %v84, 69
    %v1324 = vpop.permute.xlu0 %1323
    %1325 = vrot.lane.b32.xlu0 %v102, 69
    %v1326 = vpop.permute.xlu0 %1325
    %1327 = vrot.lane.b32.xlu0 %v85, 69
    %v1328 = vpop.permute.xlu0 %1327
    %1329 = vrot.lane.b32.xlu0 %v103, 69
    %v1330 = vpop.permute.xlu0 %1329
    %1331 = vrot.lane.b32.xlu0 %v86, 69
    %v1332 = vpop.permute.xlu0 %1331
    %1333 = vrot.lane.b32.xlu0 %v104, 69
    %v1334 = vpop.permute.xlu0 %1333
    %1335 = vrot.lane.b32.xlu0 %v87, 69
    %v1336 = vpop.permute.xlu0 %1335
    %1337 = vrot.lane.b32.xlu0 %v105, 69
    %v1338 = vpop.permute.xlu0 %1337
    %1339 = vrot.lane.b32.xlu0 %v88, 69
    %v1340 = vpop.permute.xlu0 %1339
    %1341 = vrot.lane.b32.xlu0 %v106, 69
    %v1342 = vpop.permute.xlu0 %1341
    %1343 = vrot.lane.b32.xlu0 %v89, 69
    %v1344 = vpop.permute.xlu0 %1343
    %1345 = vrot.lane.b32.xlu0 %v107, 69
    %v1346 = vpop.permute.xlu0 %1345
    %vm1347 = vcmp.lt.s32.totalorder %v158, 69
    %v1348 = vsel %vm1347, %v1344, %v1346
    %v1349 = vsel %vm1347, %v1342, %v1344
    %v1350 = vsel %vm1347, %v1340, %v1342
    %v1351 = vsel %vm1347, %v1338, %v1340
    %v1352 = vsel %vm1347, %v1336, %v1338
    %v1353 = vsel %vm1347, %v1334, %v1336
    %v1354 = vsel %vm1347, %v1332, %v1334
    %v1355 = vsel %vm1347, %v1330, %v1332
    %v1356 = vsel %vm1347, %v1328, %v1330
    %v1357 = vsel %vm1347, %v1326, %v1328
    %v1358 = vsel %vm1347, %v1324, %v1326
    %v1359 = vsel %vm1347, %v1322, %v1324
    %v1360 = vsel %vm1347, %v1320, %v1322
    %v1361 = vsel %vm1347, %v1346, %v1320
    %v1376 = vrot.slane %v1360, 1
    %v1377 = vrot.slane %v1359, 1
    %v1378 = vrot.slane %v1358, 1
    %v1379 = vrot.slane %v1357, 1
    %v1380 = vrot.slane %v1356, 1
    %v1381 = vrot.slane %v1355, 1
    %v1382 = vrot.slane %v1354, 1
    %v1383 = vrot.slane %v1353, 1
    %v1384 = vrot.slane %v1352, 1
    %v1385 = vrot.slane %v1351, 1
    %v1386 = vrot.slane %v1350, 1
    %v1387 = vrot.slane %v1349, 1
    %v1388 = vrot.slane %v1348, 1
    %v1389 = vrot.slane %v1361, 1
    %1404 = vst [vmem:[#allocation3 + $0x1c0] sm:$0x80] %v1376
    %1405 = vst [vmem:[#allocation3 + $0x1c8] sm:$0x80] %v1377
    %1406 = vst [vmem:[#allocation3 + $0x1d0] sm:$0x80] %v1378
    %1407 = vst [vmem:[#allocation3 + $0x1d8] sm:$0x80] %v1379
    %1408 = vst [vmem:[#allocation3 + $0x1e0] sm:$0x80] %v1380
    %1409 = vst [vmem:[#allocation3 + $0x1e8] sm:$0x80] %v1381
    %1410 = vst [vmem:[#allocation3 + $0x1f0] sm:$0x80] %v1382
    %1411 = vst [vmem:[#allocation3 + $0x1f8] sm:$0x80] %v1383
    %1412 = vst [vmem:[#allocation3 + $0x200] sm:$0x80] %v1384
    %1413 = vst [vmem:[#allocation3 + $0x208] sm:$0x80] %v1385
    %1414 = vst [vmem:[#allocation3 + $0x210] sm:$0x80] %v1386
    %1415 = vst [vmem:[#allocation3 + $0x218] sm:$0x80] %v1387
    %1416 = vst [vmem:[#allocation3 + $0x220] sm:$0x80] %v1388
    %1417 = vst [vmem:[#allocation3 + $0x228] sm:$0x80] %v1389
    %1418 = vst [vmem:[#allocation3 + $0x230] sm:$0x3] %v1376
    %1419 = vst [vmem:[#allocation3 + $0x238] sm:$0x3] %v1377
    %1420 = vst [vmem:[#allocation3 + $0x240] sm:$0x3] %v1378
    %1421 = vst [vmem:[#allocation3 + $0x248] sm:$0x3] %v1379
    %1422 = vst [vmem:[#allocation3 + $0x250] sm:$0x3] %v1380
    %1423 = vst [vmem:[#allocation3 + $0x258] sm:$0x3] %v1381
    %1424 = vst [vmem:[#allocation3 + $0x260] sm:$0x3] %v1382
    %1425 = vst [vmem:[#allocation3 + $0x268] sm:$0x3] %v1383
    %1426 = vst [vmem:[#allocation3 + $0x270] sm:$0x3] %v1384
    %1427 = vst [vmem:[#allocation3 + $0x278] sm:$0x3] %v1385
    %1428 = vst [vmem:[#allocation3 + $0x280] sm:$0x3] %v1386
    %1429 = vst [vmem:[#allocation3 + $0x288] sm:$0x3] %v1387
    %1430 = vst [vmem:[#allocation3 + $0x290] sm:$0x3] %v1388
    %1431 = vst [vmem:[#allocation3 + $0x298] sm:$0x3] %v1389
    %1432 = vrot.lane.b32.xlu0 %v83, 68
    %v1433 = vpop.permute.xlu0 %1432
    %1434 = vrot.lane.b32.xlu0 %v101, 68
    %v1435 = vpop.permute.xlu0 %1434
    %1436 = vrot.lane.b32.xlu0 %v84, 68
    %v1437 = vpop.permute.xlu0 %1436
    %1438 = vrot.lane.b32.xlu0 %v102, 68
    %v1439 = vpop.permute.xlu0 %1438
    %1440 = vrot.lane.b32.xlu0 %v85, 68
    %v1441 = vpop.permute.xlu0 %1440
    %1442 = vrot.lane.b32.xlu0 %v103, 68
    %v1443 = vpop.permute.xlu0 %1442
    %1444 = vrot.lane.b32.xlu0 %v86, 68
    %v1445 = vpop.permute.xlu0 %1444
    %1446 = vrot.lane.b32.xlu0 %v104, 68
    %v1447 = vpop.permute.xlu0 %1446
    %1448 = vrot.lane.b32.xlu0 %v87, 68
    %v1449 = vpop.permute.xlu0 %1448
    %1450 = vrot.lane.b32.xlu0 %v105, 68
    %v1451 = vpop.permute.xlu0 %1450
    %1452 = vrot.lane.b32.xlu0 %v88, 68
    %v1453 = vpop.permute.xlu0 %1452
    %1454 = vrot.lane.b32.xlu0 %v106, 68
    %v1455 = vpop.permute.xlu0 %1454
    %1456 = vrot.lane.b32.xlu0 %v89, 68
    %v1457 = vpop.permute.xlu0 %1456
    %1458 = vrot.lane.b32.xlu0 %v107, 68
    %v1459 = vpop.permute.xlu0 %1458
    %vm1460 = vcmp.lt.s32.totalorder %v158, 68
    %v1461 = vsel %vm1460, %v1457, %v1459
    %v1462 = vsel %vm1460, %v1455, %v1457
    %v1463 = vsel %vm1460, %v1453, %v1455
    %v1464 = vsel %vm1460, %v1451, %v1453
    %v1465 = vsel %vm1460, %v1449, %v1451
    %v1466 = vsel %vm1460, %v1447, %v1449
    %v1467 = vsel %vm1460, %v1445, %v1447
    %v1468 = vsel %vm1460, %v1443, %v1445
    %v1469 = vsel %vm1460, %v1441, %v1443
    %v1470 = vsel %vm1460, %v1439, %v1441
    %v1471 = vsel %vm1460, %v1437, %v1439
    %v1472 = vsel %vm1460, %v1435, %v1437
    %v1473 = vsel %vm1460, %v1433, %v1435
    %v1474 = vsel %vm1460, %v1459, %v1433
    %v1489 = vrot.slane %v1473, 6
    %v1490 = vrot.slane %v1472, 6
    %v1491 = vrot.slane %v1471, 6
    %v1492 = vrot.slane %v1470, 6
    %v1493 = vrot.slane %v1469, 6
    %v1494 = vrot.slane %v1468, 6
    %v1495 = vrot.slane %v1467, 6
    %v1496 = vrot.slane %v1466, 6
    %v1497 = vrot.slane %v1465, 6
    %v1498 = vrot.slane %v1464, 6
    %v1499 = vrot.slane %v1463, 6
    %v1500 = vrot.slane %v1462, 6
    %v1501 = vrot.slane %v1461, 6
    %v1502 = vrot.slane %v1474, 6
    %1517 = vst [vmem:[#allocation3 + $0x230] sm:$0x1c] %v1489
    %1518 = vst [vmem:[#allocation3 + $0x238] sm:$0x1c] %v1490
    %1519 = vst [vmem:[#allocation3 + $0x240] sm:$0x1c] %v1491
    %1520 = vst [vmem:[#allocation3 + $0x248] sm:$0x1c] %v1492
    %1521 = vst [vmem:[#allocation3 + $0x250] sm:$0x1c] %v1493
    %1522 = vst [vmem:[#allocation3 + $0x258] sm:$0x1c] %v1494
    %1523 = vst [vmem:[#allocation3 + $0x260] sm:$0x1c] %v1495
    %1524 = vst [vmem:[#allocation3 + $0x268] sm:$0x1c] %v1496
    %1525 = vst [vmem:[#allocation3 + $0x270] sm:$0x1c] %v1497
    %1526 = vst [vmem:[#allocation3 + $0x278] sm:$0x1c] %v1498
    %1527 = vst [vmem:[#allocation3 + $0x280] sm:$0x1c] %v1499
    %1528 = vst [vmem:[#allocation3 + $0x288] sm:$0x1c] %v1500
    %1529 = vst [vmem:[#allocation3 + $0x290] sm:$0x1c] %v1501
    %1530 = vst [vmem:[#allocation3 + $0x298] sm:$0x1c] %v1502
    %1531 = vrot.lane.b32.xlu0 %v83, 44
    %v1532 = vpop.permute.xlu0 %1531
    %1533 = vrot.lane.b32.xlu0 %v101, 44
    %v1534 = vpop.permute.xlu0 %1533
    %1535 = vrot.lane.b32.xlu0 %v84, 44
    %v1536 = vpop.permute.xlu0 %1535
    %1537 = vrot.lane.b32.xlu0 %v102, 44
    %v1538 = vpop.permute.xlu0 %1537
    %1539 = vrot.lane.b32.xlu0 %v85, 44
    %v1540 = vpop.permute.xlu0 %1539
    %1541 = vrot.lane.b32.xlu0 %v103, 44
    %v1542 = vpop.permute.xlu0 %1541
    %1543 = vrot.lane.b32.xlu0 %v86, 44
    %v1544 = vpop.permute.xlu0 %1543
    %1545 = vrot.lane.b32.xlu0 %v104, 44
    %v1546 = vpop.permute.xlu0 %1545
    %1547 = vrot.lane.b32.xlu0 %v87, 44
    %v1548 = vpop.permute.xlu0 %1547
    %1549 = vrot.lane.b32.xlu0 %v105, 44
    %v1550 = vpop.permute.xlu0 %1549
    %1551 = vrot.lane.b32.xlu0 %v88, 44
    %v1552 = vpop.permute.xlu0 %1551
    %1553 = vrot.lane.b32.xlu0 %v106, 44
    %v1554 = vpop.permute.xlu0 %1553
    %1555 = vrot.lane.b32.xlu0 %v89, 44
    %v1556 = vpop.permute.xlu0 %1555
    %1557 = vrot.lane.b32.xlu0 %v107, 44
    %v1558 = vpop.permute.xlu0 %1557
    %vm1559 = vcmp.lt.s32.totalorder %v158, 44
    %v1560 = vsel %vm1559, %v1556, %v1558
    %v1561 = vsel %vm1559, %v1554, %v1556
    %v1562 = vsel %vm1559, %v1552, %v1554
    %v1563 = vsel %vm1559, %v1550, %v1552
    %v1564 = vsel %vm1559, %v1548, %v1550
    %v1565 = vsel %vm1559, %v1546, %v1548
    %v1566 = vsel %vm1559, %v1544, %v1546
    %v1567 = vsel %vm1559, %v1542, %v1544
    %v1568 = vsel %vm1559, %v1540, %v1542
    %v1569 = vsel %vm1559, %v1538, %v1540
    %v1570 = vsel %vm1559, %v1536, %v1538
    %v1571 = vsel %vm1559, %v1534, %v1536
    %v1572 = vsel %vm1559, %v1532, %v1534
    %v1573 = vsel %vm1559, %v1558, %v1532
    %v1588 = vrot.slane %v1572, 3
    %v1589 = vrot.slane %v1571, 3
    %v1590 = vrot.slane %v1570, 3
    %v1591 = vrot.slane %v1569, 3
    %v1592 = vrot.slane %v1568, 3
    %v1593 = vrot.slane %v1567, 3
    %v1594 = vrot.slane %v1566, 3
    %v1595 = vrot.slane %v1565, 3
    %v1596 = vrot.slane %v1564, 3
    %v1597 = vrot.slane %v1563, 3
    %v1598 = vrot.slane %v1562, 3
    %v1599 = vrot.slane %v1561, 3
    %v1600 = vrot.slane %v1560, 3
    %v1601 = vrot.slane %v1573, 3
    %1616 = vst [vmem:[#allocation3 + $0x230] sm:$0xe0] %v1588
    %1617 = vst [vmem:[#allocation3 + $0x238] sm:$0xe0] %v1589
    %1618 = vst [vmem:[#allocation3 + $0x240] sm:$0xe0] %v1590
    %1619 = vst [vmem:[#allocation3 + $0x248] sm:$0xe0] %v1591
    %1620 = vst [vmem:[#allocation3 + $0x250] sm:$0xe0] %v1592
    %1621 = vst [vmem:[#allocation3 + $0x258] sm:$0xe0] %v1593
    %1622 = vst [vmem:[#allocation3 + $0x260] sm:$0xe0] %v1594
    %1623 = vst [vmem:[#allocation3 + $0x268] sm:$0xe0] %v1595
    %1624 = vst [vmem:[#allocation3 + $0x270] sm:$0xe0] %v1596
    %1625 = vst [vmem:[#allocation3 + $0x278] sm:$0xe0] %v1597
    %1626 = vst [vmem:[#allocation3 + $0x280] sm:$0xe0] %v1598
    %1627 = vst [vmem:[#allocation3 + $0x288] sm:$0xe0] %v1599
    %1628 = vst [vmem:[#allocation3 + $0x290] sm:$0xe0] %v1600
    %1629 = vst [vmem:[#allocation3 + $0x298] sm:$0xe0] %v1601
    %1630 = vrot.lane.b32.xlu0 %v83, 43
    %v1631 = vpop.permute.xlu0 %1630
    %1632 = vrot.lane.b32.xlu0 %v101, 43
    %v1633 = vpop.permute.xlu0 %1632
    %1634 = vrot.lane.b32.xlu0 %v84, 43
    %v1635 = vpop.permute.xlu0 %1634
    %1636 = vrot.lane.b32.xlu0 %v102, 43
    %v1637 = vpop.permute.xlu0 %1636
    %1638 = vrot.lane.b32.xlu0 %v85, 43
    %v1639 = vpop.permute.xlu0 %1638
    %1640 = vrot.lane.b32.xlu0 %v103, 43
    %v1641 = vpop.permute.xlu0 %1640
    %1642 = vrot.lane.b32.xlu0 %v86, 43
    %v1643 = vpop.permute.xlu0 %1642
    %1644 = vrot.lane.b32.xlu0 %v104, 43
    %v1645 = vpop.permute.xlu0 %1644
    %1646 = vrot.lane.b32.xlu0 %v87, 43
    %v1647 = vpop.permute.xlu0 %1646
    %1648 = vrot.lane.b32.xlu0 %v105, 43
    %v1649 = vpop.permute.xlu0 %1648
    %1650 = vrot.lane.b32.xlu0 %v88, 43
    %v1651 = vpop.permute.xlu0 %1650
    %1652 = vrot.lane.b32.xlu0 %v106, 43
    %v1653 = vpop.permute.xlu0 %1652
    %1654 = vrot.lane.b32.xlu0 %v89, 43
    %v1655 = vpop.permute.xlu0 %1654
    %1656 = vrot.lane.b32.xlu0 %v107, 43
    %v1657 = vpop.permute.xlu0 %1656
    %vm1658 = vcmp.lt.s32.totalorder %v158, 43
    %v1659 = vsel %vm1658, %v1655, %v1657
    %v1660 = vsel %vm1658, %v1653, %v1655
    %v1661 = vsel %vm1658, %v1651, %v1653
    %v1662 = vsel %vm1658, %v1649, %v1651
    %v1663 = vsel %vm1658, %v1647, %v1649
    %v1664 = vsel %vm1658, %v1645, %v1647
    %v1665 = vsel %vm1658, %v1643, %v1645
    %v1666 = vsel %vm1658, %v1641, %v1643
    %v1667 = vsel %vm1658, %v1639, %v1641
    %v1668 = vsel %vm1658, %v1637, %v1639
    %v1669 = vsel %vm1658, %v1635, %v1637
    %v1670 = vsel %vm1658, %v1633, %v1635
    %v1671 = vsel %vm1658, %v1631, %v1633
    %v1672 = vsel %vm1658, %v1657, %v1631
    %1673 = vst [vmem:[#allocation3 + $0x2a0] sm:$0x7] %v1671
    %1674 = vst [vmem:[#allocation3 + $0x2a8] sm:$0x7] %v1670
    %1675 = vst [vmem:[#allocation3 + $0x2b0] sm:$0x7] %v1669
    %1676 = vst [vmem:[#allocation3 + $0x2b8] sm:$0x7] %v1668
    %1677 = vst [vmem:[#allocation3 + $0x2c0] sm:$0x7] %v1667
    %1678 = vst [vmem:[#allocation3 + $0x2c8] sm:$0x7] %v1666
    %1679 = vst [vmem:[#allocation3 + $0x2d0] sm:$0x7] %v1665
    %1680 = vst [vmem:[#allocation3 + $0x2d8] sm:$0x7] %v1664
    %1681 = vst [vmem:[#allocation3 + $0x2e0] sm:$0x7] %v1663
    %1682 = vst [vmem:[#allocation3 + $0x2e8] sm:$0x7] %v1662
    %1683 = vst [vmem:[#allocation3 + $0x2f0] sm:$0x7] %v1661
    %1684 = vst [vmem:[#allocation3 + $0x2f8] sm:$0x7] %v1660
    %1685 = vst [vmem:[#allocation3 + $0x300] sm:$0x7] %v1659
    %1686 = vst [vmem:[#allocation3 + $0x308] sm:$0x7] %v1672
    %1687 = vrot.lane.b32.xlu0 %v83, 42
    %v1688 = vpop.permute.xlu0 %1687
    %1689 = vrot.lane.b32.xlu0 %v101, 42
    %v1690 = vpop.permute.xlu0 %1689
    %1691 = vrot.lane.b32.xlu0 %v84, 42
    %v1692 = vpop.permute.xlu0 %1691
    %1693 = vrot.lane.b32.xlu0 %v102, 42
    %v1694 = vpop.permute.xlu0 %1693
    %1695 = vrot.lane.b32.xlu0 %v85, 42
    %v1696 = vpop.permute.xlu0 %1695
    %1697 = vrot.lane.b32.xlu0 %v103, 42
    %v1698 = vpop.permute.xlu0 %1697
    %1699 = vrot.lane.b32.xlu0 %v86, 42
    %v1700 = vpop.permute.xlu0 %1699
    %1701 = vrot.lane.b32.xlu0 %v104, 42
    %v1702 = vpop.permute.xlu0 %1701
    %1703 = vrot.lane.b32.xlu0 %v87, 42
    %v1704 = vpop.permute.xlu0 %1703
    %1705 = vrot.lane.b32.xlu0 %v105, 42
    %v1706 = vpop.permute.xlu0 %1705
    %1707 = vrot.lane.b32.xlu0 %v88, 42
    %v1708 = vpop.permute.xlu0 %1707
    %1709 = vrot.lane.b32.xlu0 %v106, 42
    %v1710 = vpop.permute.xlu0 %1709
    %1711 = vrot.lane.b32.xlu0 %v89, 42
    %v1712 = vpop.permute.xlu0 %1711
    %1713 = vrot.lane.b32.xlu0 %v107, 42
    %v1714 = vpop.permute.xlu0 %1713
    %vm1715 = vcmp.lt.s32.totalorder %v158, 42
    %v1716 = vsel %vm1715, %v1712, %v1714
    %v1717 = vsel %vm1715, %v1710, %v1712
    %v1718 = vsel %vm1715, %v1708, %v1710
    %v1719 = vsel %vm1715, %v1706, %v1708
    %v1720 = vsel %vm1715, %v1704, %v1706
    %v1721 = vsel %vm1715, %v1702, %v1704
    %v1722 = vsel %vm1715, %v1700, %v1702
    %v1723 = vsel %vm1715, %v1698, %v1700
    %v1724 = vsel %vm1715, %v1696, %v1698
    %v1725 = vsel %vm1715, %v1694, %v1696
    %v1726 = vsel %vm1715, %v1692, %v1694
    %v1727 = vsel %vm1715, %v1690, %v1692
    %v1728 = vsel %vm1715, %v1688, %v1690
    %v1729 = vsel %vm1715, %v1714, %v1688
    %v1744 = vrot.slane %v1728, 5
    %v1745 = vrot.slane %v1727, 5
    %v1746 = vrot.slane %v1726, 5
    %v1747 = vrot.slane %v1725, 5
    %v1748 = vrot.slane %v1724, 5
    %v1749 = vrot.slane %v1723, 5
    %v1750 = vrot.slane %v1722, 5
    %v1751 = vrot.slane %v1721, 5
    %v1752 = vrot.slane %v1720, 5
    %v1753 = vrot.slane %v1719, 5
    %v1754 = vrot.slane %v1718, 5
    %v1755 = vrot.slane %v1717, 5
    %v1756 = vrot.slane %v1716, 5
    %v1757 = vrot.slane %v1729, 5
    %1772 = vst [vmem:[#allocation3 + $0x2a0] sm:$0x38] %v1744
    %1773 = vst [vmem:[#allocation3 + $0x2a8] sm:$0x38] %v1745
    %1774 = vst [vmem:[#allocation3 + $0x2b0] sm:$0x38] %v1746
    %1775 = vst [vmem:[#allocation3 + $0x2b8] sm:$0x38] %v1747
    %1776 = vst [vmem:[#allocation3 + $0x2c0] sm:$0x38] %v1748
    %1777 = vst [vmem:[#allocation3 + $0x2c8] sm:$0x38] %v1749
    %1778 = vst [vmem:[#allocation3 + $0x2d0] sm:$0x38] %v1750
    %1779 = vst [vmem:[#allocation3 + $0x2d8] sm:$0x38] %v1751
    %1780 = vst [vmem:[#allocation3 + $0x2e0] sm:$0x38] %v1752
    %1781 = vst [vmem:[#allocation3 + $0x2e8] sm:$0x38] %v1753
    %1782 = vst [vmem:[#allocation3 + $0x2f0] sm:$0x38] %v1754
    %1783 = vst [vmem:[#allocation3 + $0x2f8] sm:$0x38] %v1755
    %1784 = vst [vmem:[#allocation3 + $0x300] sm:$0x38] %v1756
    %1785 = vst [vmem:[#allocation3 + $0x308] sm:$0x38] %v1757
    %1786 = vrot.lane.b32.xlu0 %v83, 41
    %v1787 = vpop.permute.xlu0 %1786
    %1788 = vrot.lane.b32.xlu0 %v101, 41
    %v1789 = vpop.permute.xlu0 %1788
    %1790 = vrot.lane.b32.xlu0 %v84, 41
    %v1791 = vpop.permute.xlu0 %1790
    %1792 = vrot.lane.b32.xlu0 %v102, 41
    %v1793 = vpop.permute.xlu0 %1792
    %1794 = vrot.lane.b32.xlu0 %v85, 41
    %v1795 = vpop.permute.xlu0 %1794
    %1796 = vrot.lane.b32.xlu0 %v103, 41
    %v1797 = vpop.permute.xlu0 %1796
    %1798 = vrot.lane.b32.xlu0 %v86, 41
    %v1799 = vpop.permute.xlu0 %1798
    %1800 = vrot.lane.b32.xlu0 %v104, 41
    %v1801 = vpop.permute.xlu0 %1800
    %1802 = vrot.lane.b32.xlu0 %v87, 41
    %v1803 = vpop.permute.xlu0 %1802
    %1804 = vrot.lane.b32.xlu0 %v105, 41
    %v1805 = vpop.permute.xlu0 %1804
    %1806 = vrot.lane.b32.xlu0 %v88, 41
    %v1807 = vpop.permute.xlu0 %1806
    %1808 = vrot.lane.b32.xlu0 %v106, 41
    %v1809 = vpop.permute.xlu0 %1808
    %1810 = vrot.lane.b32.xlu0 %v89, 41
    %v1811 = vpop.permute.xlu0 %1810
    %1812 = vrot.lane.b32.xlu0 %v107, 41
    %v1813 = vpop.permute.xlu0 %1812
    %vm1814 = vcmp.lt.s32.totalorder %v158, 41
    %v1815 = vsel %vm1814, %v1811, %v1813
    %v1816 = vsel %vm1814, %v1809, %v1811
    %v1817 = vsel %vm1814, %v1807, %v1809
    %v1818 = vsel %vm1814, %v1805, %v1807
    %v1819 = vsel %vm1814, %v1803, %v1805
    %v1820 = vsel %vm1814, %v1801, %v1803
    %v1821 = vsel %vm1814, %v1799, %v1801
    %v1822 = vsel %vm1814, %v1797, %v1799
    %v1823 = vsel %vm1814, %v1795, %v1797
    %v1824 = vsel %vm1814, %v1793, %v1795
    %v1825 = vsel %vm1814, %v1791, %v1793
    %v1826 = vsel %vm1814, %v1789, %v1791
    %v1827 = vsel %vm1814, %v1787, %v1789
    %v1828 = vsel %vm1814, %v1813, %v1787
    %v1843 = vrot.slane %v1827, 2
    %v1844 = vrot.slane %v1826, 2
    %v1845 = vrot.slane %v1825, 2
    %v1846 = vrot.slane %v1824, 2
    %v1847 = vrot.slane %v1823, 2
    %v1848 = vrot.slane %v1822, 2
    %v1849 = vrot.slane %v1821, 2
    %v1850 = vrot.slane %v1820, 2
    %v1851 = vrot.slane %v1819, 2
    %v1852 = vrot.slane %v1818, 2
    %v1853 = vrot.slane %v1817, 2
    %v1854 = vrot.slane %v1816, 2
    %v1855 = vrot.slane %v1815, 2
    %v1856 = vrot.slane %v1828, 2
    %1871 = vst [vmem:[#allocation3 + $0x2a0] sm:$0xc0] %v1843
    %1872 = vst [vmem:[#allocation3 + $0x2a8] sm:$0xc0] %v1844
    %1873 = vst [vmem:[#allocation3 + $0x2b0] sm:$0xc0] %v1845
    %1874 = vst [vmem:[#allocation3 + $0x2b8] sm:$0xc0] %v1846
    %1875 = vst [vmem:[#allocation3 + $0x2c0] sm:$0xc0] %v1847
    %1876 = vst [vmem:[#allocation3 + $0x2c8] sm:$0xc0] %v1848
    %1877 = vst [vmem:[#allocation3 + $0x2d0] sm:$0xc0] %v1849
    %1878 = vst [vmem:[#allocation3 + $0x2d8] sm:$0xc0] %v1850
    %1879 = vst [vmem:[#allocation3 + $0x2e0] sm:$0xc0] %v1851
    %1880 = vst [vmem:[#allocation3 + $0x2e8] sm:$0xc0] %v1852
    %1881 = vst [vmem:[#allocation3 + $0x2f0] sm:$0xc0] %v1853
    %1882 = vst [vmem:[#allocation3 + $0x2f8] sm:$0xc0] %v1854
    %1883 = vst [vmem:[#allocation3 + $0x300] sm:$0xc0] %v1855
    %1884 = vst [vmem:[#allocation3 + $0x308] sm:$0xc0] %v1856
    %1885 = vst [vmem:[#allocation3 + $0x310] sm:$0x1] %v1843
    %1886 = vst [vmem:[#allocation3 + $0x318] sm:$0x1] %v1844
    %1887 = vst [vmem:[#allocation3 + $0x320] sm:$0x1] %v1845
    %1888 = vst [vmem:[#allocation3 + $0x328] sm:$0x1] %v1846
    %1889 = vst [vmem:[#allocation3 + $0x330] sm:$0x1] %v1847
    %1890 = vst [vmem:[#allocation3 + $0x338] sm:$0x1] %v1848
    %1891 = vst [vmem:[#allocation3 + $0x340] sm:$0x1] %v1849
    %1892 = vst [vmem:[#allocation3 + $0x348] sm:$0x1] %v1850
    %1893 = vst [vmem:[#allocation3 + $0x350] sm:$0x1] %v1851
    %1894 = vst [vmem:[#allocation3 + $0x358] sm:$0x1] %v1852
    %1895 = vst [vmem:[#allocation3 + $0x360] sm:$0x1] %v1853
    %1896 = vst [vmem:[#allocation3 + $0x368] sm:$0x1] %v1854
    %1897 = vst [vmem:[#allocation3 + $0x370] sm:$0x1] %v1855
    %1898 = vst [vmem:[#allocation3 + $0x378] sm:$0x1] %v1856
    %1899 = vrot.lane.b32.xlu0 %v83, 40
    %v1900 = vpop.permute.xlu0 %1899
    %1901 = vrot.lane.b32.xlu0 %v101, 40
    %v1902 = vpop.permute.xlu0 %1901
    %1903 = vrot.lane.b32.xlu0 %v84, 40
    %v1904 = vpop.permute.xlu0 %1903
    %1905 = vrot.lane.b32.xlu0 %v102, 40
    %v1906 = vpop.permute.xlu0 %1905
    %1907 = vrot.lane.b32.xlu0 %v85, 40
    %v1908 = vpop.permute.xlu0 %1907
    %1909 = vrot.lane.b32.xlu0 %v103, 40
    %v1910 = vpop.permute.xlu0 %1909
    %1911 = vrot.lane.b32.xlu0 %v86, 40
    %v1912 = vpop.permute.xlu0 %1911
    %1913 = vrot.lane.b32.xlu0 %v104, 40
    %v1914 = vpop.permute.xlu0 %1913
    %1915 = vrot.lane.b32.xlu0 %v87, 40
    %v1916 = vpop.permute.xlu0 %1915
    %1917 = vrot.lane.b32.xlu0 %v105, 40
    %v1918 = vpop.permute.xlu0 %1917
    %1919 = vrot.lane.b32.xlu0 %v88, 40
    %v1920 = vpop.permute.xlu0 %1919
    %1921 = vrot.lane.b32.xlu0 %v106, 40
    %v1922 = vpop.permute.xlu0 %1921
    %1923 = vrot.lane.b32.xlu0 %v89, 40
    %v1924 = vpop.permute.xlu0 %1923
    %1925 = vrot.lane.b32.xlu0 %v107, 40
    %v1926 = vpop.permute.xlu0 %1925
    %vm1927 = vcmp.lt.s32.totalorder %v158, 40
    %v1928 = vsel %vm1927, %v1924, %v1926
    %v1929 = vsel %vm1927, %v1922, %v1924
    %v1930 = vsel %vm1927, %v1920, %v1922
    %v1931 = vsel %vm1927, %v1918, %v1920
    %v1932 = vsel %vm1927, %v1916, %v1918
    %v1933 = vsel %vm1927, %v1914, %v1916
    %v1934 = vsel %vm1927, %v1912, %v1914
    %v1935 = vsel %vm1927, %v1910, %v1912
    %v1936 = vsel %vm1927, %v1908, %v1910
    %v1937 = vsel %vm1927, %v1906, %v1908
    %v1938 = vsel %vm1927, %v1904, %v1906
    %v1939 = vsel %vm1927, %v1902, %v1904
    %v1940 = vsel %vm1927, %v1900, %v1902
    %v1941 = vsel %vm1927, %v1926, %v1900
    %v1956 = vrot.slane %v1940, 7
    %v1957 = vrot.slane %v1939, 7
    %v1958 = vrot.slane %v1938, 7
    %v1959 = vrot.slane %v1937, 7
    %v1960 = vrot.slane %v1936, 7
    %v1961 = vrot.slane %v1935, 7
    %v1962 = vrot.slane %v1934, 7
    %v1963 = vrot.slane %v1933, 7
    %v1964 = vrot.slane %v1932, 7
    %v1965 = vrot.slane %v1931, 7
    %v1966 = vrot.slane %v1930, 7
    %v1967 = vrot.slane %v1929, 7
    %v1968 = vrot.slane %v1928, 7
    %v1969 = vrot.slane %v1941, 7
    %1984 = vst [vmem:[#allocation3 + $0x310] sm:$0xe] %v1956
    %1985 = vst [vmem:[#allocation3 + $0x318] sm:$0xe] %v1957
    %1986 = vst [vmem:[#allocation3 + $0x320] sm:$0xe] %v1958
    %1987 = vst [vmem:[#allocation3 + $0x328] sm:$0xe] %v1959
    %1988 = vst [vmem:[#allocation3 + $0x330] sm:$0xe] %v1960
    %1989 = vst [vmem:[#allocation3 + $0x338] sm:$0xe] %v1961
    %1990 = vst [vmem:[#allocation3 + $0x340] sm:$0xe] %v1962
    %1991 = vst [vmem:[#allocation3 + $0x348] sm:$0xe] %v1963
    %1992 = vst [vmem:[#allocation3 + $0x350] sm:$0xe] %v1964
    %1993 = vst [vmem:[#allocation3 + $0x358] sm:$0xe] %v1965
    %1994 = vst [vmem:[#allocation3 + $0x360] sm:$0xe] %v1966
    %1995 = vst [vmem:[#allocation3 + $0x368] sm:$0xe] %v1967
    %1996 = vst [vmem:[#allocation3 + $0x370] sm:$0xe] %v1968
    %1997 = vst [vmem:[#allocation3 + $0x378] sm:$0xe] %v1969
    %1998 = vrot.lane.b32.xlu0 %v83, 16
    %v1999 = vpop.permute.xlu0 %1998
    %2000 = vrot.lane.b32.xlu0 %v101, 16
    %v2001 = vpop.permute.xlu0 %2000
    %2002 = vrot.lane.b32.xlu0 %v84, 16
    %v2003 = vpop.permute.xlu0 %2002
    %2004 = vrot.lane.b32.xlu0 %v102, 16
    %v2005 = vpop.permute.xlu0 %2004
    %2006 = vrot.lane.b32.xlu0 %v85, 16
    %v2007 = vpop.permute.xlu0 %2006
    %2008 = vrot.lane.b32.xlu0 %v103, 16
    %v2009 = vpop.permute.xlu0 %2008
    %2010 = vrot.lane.b32.xlu0 %v86, 16
    %v2011 = vpop.permute.xlu0 %2010
    %2012 = vrot.lane.b32.xlu0 %v104, 16
    %v2013 = vpop.permute.xlu0 %2012
    %2014 = vrot.lane.b32.xlu0 %v87, 16
    %v2015 = vpop.permute.xlu0 %2014
    %2016 = vrot.lane.b32.xlu0 %v105, 16
    %v2017 = vpop.permute.xlu0 %2016
    %2018 = vrot.lane.b32.xlu0 %v88, 16
    %v2019 = vpop.permute.xlu0 %2018
    %2020 = vrot.lane.b32.xlu0 %v106, 16
    %v2021 = vpop.permute.xlu0 %2020
    %2022 = vrot.lane.b32.xlu0 %v89, 16
    %v2023 = vpop.permute.xlu0 %2022
    %2024 = vrot.lane.b32.xlu0 %v107, 16
    %v2025 = vpop.permute.xlu0 %2024
    %vm2026 = vcmp.lt.s32.totalorder %v158, 16
    %v2027 = vsel %vm2026, %v2023, %v2025
    %v2028 = vsel %vm2026, %v2021, %v2023
    %v2029 = vsel %vm2026, %v2019, %v2021
    %v2030 = vsel %vm2026, %v2017, %v2019
    %v2031 = vsel %vm2026, %v2015, %v2017
    %v2032 = vsel %vm2026, %v2013, %v2015
    %v2033 = vsel %vm2026, %v2011, %v2013
    %v2034 = vsel %vm2026, %v2009, %v2011
    %v2035 = vsel %vm2026, %v2007, %v2009
    %v2036 = vsel %vm2026, %v2005, %v2007
    %v2037 = vsel %vm2026, %v2003, %v2005
    %v2038 = vsel %vm2026, %v2001, %v2003
    %v2039 = vsel %vm2026, %v1999, %v2001
    %v2040 = vsel %vm2026, %v2025, %v1999
    %v2055 = vrot.slane %v2039, 4
    %v2056 = vrot.slane %v2038, 4
    %v2057 = vrot.slane %v2037, 4
    %v2058 = vrot.slane %v2036, 4
    %v2059 = vrot.slane %v2035, 4
    %v2060 = vrot.slane %v2034, 4
    %v2061 = vrot.slane %v2033, 4
    %v2062 = vrot.slane %v2032, 4
    %v2063 = vrot.slane %v2031, 4
    %v2064 = vrot.slane %v2030, 4
    %v2065 = vrot.slane %v2029, 4
    %v2066 = vrot.slane %v2028, 4
    %v2067 = vrot.slane %v2027, 4
    %v2068 = vrot.slane %v2040, 4
    %2083 = vst [vmem:[#allocation3 + $0x310] sm:$0x70] %v2055
    %2084 = vst [vmem:[#allocation3 + $0x318] sm:$0x70] %v2056
    %2085 = vst [vmem:[#allocation3 + $0x320] sm:$0x70] %v2057
    %2086 = vst [vmem:[#allocation3 + $0x328] sm:$0x70] %v2058
    %2087 = vst [vmem:[#allocation3 + $0x330] sm:$0x70] %v2059
    %2088 = vst [vmem:[#allocation3 + $0x338] sm:$0x70] %v2060
    %2089 = vst [vmem:[#allocation3 + $0x340] sm:$0x70] %v2061
    %2090 = vst [vmem:[#allocation3 + $0x348] sm:$0x70] %v2062
    %2091 = vst [vmem:[#allocation3 + $0x350] sm:$0x70] %v2063
    %2092 = vst [vmem:[#allocation3 + $0x358] sm:$0x70] %v2064
    %2093 = vst [vmem:[#allocation3 + $0x360] sm:$0x70] %v2065
    %2094 = vst [vmem:[#allocation3 + $0x368] sm:$0x70] %v2066
    %2095 = vst [vmem:[#allocation3 + $0x370] sm:$0x70] %v2067
    %2096 = vst [vmem:[#allocation3 + $0x378] sm:$0x70] %v2068
    %2097 = vrot.lane.b32.xlu0 %v83, 15
    %v2098 = vpop.permute.xlu0 %2097
    %2099 = vrot.lane.b32.xlu0 %v101, 15
    %v2100 = vpop.permute.xlu0 %2099
    %2101 = vrot.lane.b32.xlu0 %v84, 15
    %v2102 = vpop.permute.xlu0 %2101
    %2103 = vrot.lane.b32.xlu0 %v102, 15
    %v2104 = vpop.permute.xlu0 %2103
    %2105 = vrot.lane.b32.xlu0 %v85, 15
    %v2106 = vpop.permute.xlu0 %2105
    %2107 = vrot.lane.b32.xlu0 %v103, 15
    %v2108 = vpop.permute.xlu0 %2107
    %2109 = vrot.lane.b32.xlu0 %v86, 15
    %v2110 = vpop.permute.xlu0 %2109
    %2111 = vrot.lane.b32.xlu0 %v104, 15
    %v2112 = vpop.permute.xlu0 %2111
    %2113 = vrot.lane.b32.xlu0 %v87, 15
    %v2114 = vpop.permute.xlu0 %2113
    %2115 = vrot.lane.b32.xlu0 %v105, 15
    %v2116 = vpop.permute.xlu0 %2115
    %2117 = vrot.lane.b32.xlu0 %v88, 15
    %v2118 = vpop.permute.xlu0 %2117
    %2119 = vrot.lane.b32.xlu0 %v106, 15
    %v2120 = vpop.permute.xlu0 %2119
    %2121 = vrot.lane.b32.xlu0 %v89, 15
    %v2122 = vpop.permute.xlu0 %2121
    %2123 = vrot.lane.b32.xlu0 %v107, 15
    %v2124 = vpop.permute.xlu0 %2123
    %vm2125 = vcmp.lt.s32.totalorder %v158, 15
    %v2126 = vsel %vm2125, %v2122, %v2124
    %v2127 = vsel %vm2125, %v2120, %v2122
    %v2128 = vsel %vm2125, %v2118, %v2120
    %v2129 = vsel %vm2125, %v2116, %v2118
    %v2130 = vsel %vm2125, %v2114, %v2116
    %v2131 = vsel %vm2125, %v2112, %v2114
    %v2132 = vsel %vm2125, %v2110, %v2112
    %v2133 = vsel %vm2125, %v2108, %v2110
    %v2134 = vsel %vm2125, %v2106, %v2108
    %v2135 = vsel %vm2125, %v2104, %v2106
    %v2136 = vsel %vm2125, %v2102, %v2104
    %v2137 = vsel %vm2125, %v2100, %v2102
    %v2138 = vsel %vm2125, %v2098, %v2100
    %v2139 = vsel %vm2125, %v2124, %v2098
    %v2154 = vrot.slane %v2138, 1
    %v2155 = vrot.slane %v2137, 1
    %v2156 = vrot.slane %v2136, 1
    %v2157 = vrot.slane %v2135, 1
    %v2158 = vrot.slane %v2134, 1
    %v2159 = vrot.slane %v2133, 1
    %v2160 = vrot.slane %v2132, 1
    %v2161 = vrot.slane %v2131, 1
    %v2162 = vrot.slane %v2130, 1
    %v2163 = vrot.slane %v2129, 1
    %v2164 = vrot.slane %v2128, 1
    %v2165 = vrot.slane %v2127, 1
    %v2166 = vrot.slane %v2126, 1
    %v2167 = vrot.slane %v2139, 1
    %2182 = vst [vmem:[#allocation3 + $0x310] sm:$0x80] %v2154
    %2183 = vst [vmem:[#allocation3 + $0x318] sm:$0x80] %v2155
    %2184 = vst [vmem:[#allocation3 + $0x320] sm:$0x80] %v2156
    %2185 = vst [vmem:[#allocation3 + $0x328] sm:$0x80] %v2157
    %2186 = vst [vmem:[#allocation3 + $0x330] sm:$0x80] %v2158
    %2187 = vst [vmem:[#allocation3 + $0x338] sm:$0x80] %v2159
    %2188 = vst [vmem:[#allocation3 + $0x340] sm:$0x80] %v2160
    %2189 = vst [vmem:[#allocation3 + $0x348] sm:$0x80] %v2161
    %2190 = vst [vmem:[#allocation3 + $0x350] sm:$0x80] %v2162
    %2191 = vst [vmem:[#allocation3 + $0x358] sm:$0x80] %v2163
    %2192 = vst [vmem:[#allocation3 + $0x360] sm:$0x80] %v2164
    %2193 = vst [vmem:[#allocation3 + $0x368] sm:$0x80] %v2165
    %2194 = vst [vmem:[#allocation3 + $0x370] sm:$0x80] %v2166
    %2195 = vst [vmem:[#allocation3 + $0x378] sm:$0x80] %v2167
    %2196 = vst [vmem:[#allocation3 + $0x380] sm:$0x3] %v2154
    %2197 = vst [vmem:[#allocation3 + $0x388] sm:$0x3] %v2155
    %2198 = vst [vmem:[#allocation3 + $0x390] sm:$0x3] %v2156
    %2199 = vst [vmem:[#allocation3 + $0x398] sm:$0x3] %v2157
    %2200 = vst [vmem:[#allocation3 + $0x3a0] sm:$0x3] %v2158
    %2201 = vst [vmem:[#allocation3 + $0x3a8] sm:$0x3] %v2159
    %2202 = vst [vmem:[#allocation3 + $0x3b0] sm:$0x3] %v2160
    %2203 = vst [vmem:[#allocation3 + $0x3b8] sm:$0x3] %v2161
    %2204 = vst [vmem:[#allocation3 + $0x3c0] sm:$0x3] %v2162
    %2205 = vst [vmem:[#allocation3 + $0x3c8] sm:$0x3] %v2163
    %2206 = vst [vmem:[#allocation3 + $0x3d0] sm:$0x3] %v2164
    %2207 = vst [vmem:[#allocation3 + $0x3d8] sm:$0x3] %v2165
    %2208 = vst [vmem:[#allocation3 + $0x3e0] sm:$0x3] %v2166
    %2209 = vst [vmem:[#allocation3 + $0x3e8] sm:$0x3] %v2167
    %2210 = vrot.lane.b32.xlu0 %v83, 14
    %v2211 = vpop.permute.xlu0 %2210
    %2212 = vrot.lane.b32.xlu0 %v101, 14
    %v2213 = vpop.permute.xlu0 %2212
    %2214 = vrot.lane.b32.xlu0 %v84, 14
    %v2215 = vpop.permute.xlu0 %2214
    %2216 = vrot.lane.b32.xlu0 %v102, 14
    %v2217 = vpop.permute.xlu0 %2216
    %2218 = vrot.lane.b32.xlu0 %v85, 14
    %v2219 = vpop.permute.xlu0 %2218
    %2220 = vrot.lane.b32.xlu0 %v103, 14
    %v2221 = vpop.permute.xlu0 %2220
    %2222 = vrot.lane.b32.xlu0 %v86, 14
    %v2223 = vpop.permute.xlu0 %2222
    %2224 = vrot.lane.b32.xlu0 %v104, 14
    %v2225 = vpop.permute.xlu0 %2224
    %2226 = vrot.lane.b32.xlu0 %v87, 14
    %v2227 = vpop.permute.xlu0 %2226
    %2228 = vrot.lane.b32.xlu0 %v105, 14
    %v2229 = vpop.permute.xlu0 %2228
    %2230 = vrot.lane.b32.xlu0 %v88, 14
    %v2231 = vpop.permute.xlu0 %2230
    %2232 = vrot.lane.b32.xlu0 %v106, 14
    %v2233 = vpop.permute.xlu0 %2232
    %2234 = vrot.lane.b32.xlu0 %v89, 14
    %v2235 = vpop.permute.xlu0 %2234
    %2236 = vrot.lane.b32.xlu0 %v107, 14
    %v2237 = vpop.permute.xlu0 %2236
    %vm2238 = vcmp.lt.s32.totalorder %v158, 14
    %v2239 = vsel %vm2238, %v2235, %v2237
    %v2240 = vsel %vm2238, %v2233, %v2235
    %v2241 = vsel %vm2238, %v2231, %v2233
    %v2242 = vsel %vm2238, %v2229, %v2231
    %v2243 = vsel %vm2238, %v2227, %v2229
    %v2244 = vsel %vm2238, %v2225, %v2227
    %v2245 = vsel %vm2238, %v2223, %v2225
    %v2246 = vsel %vm2238, %v2221, %v2223
    %v2247 = vsel %vm2238, %v2219, %v2221
    %v2248 = vsel %vm2238, %v2217, %v2219
    %v2249 = vsel %vm2238, %v2215, %v2217
    %v2250 = vsel %vm2238, %v2213, %v2215
    %v2251 = vsel %vm2238, %v2211, %v2213
    %v2252 = vsel %vm2238, %v2237, %v2211
    %v2267 = vrot.slane %v2251, 6
    %v2268 = vrot.slane %v2250, 6
    %v2269 = vrot.slane %v2249, 6
    %v2270 = vrot.slane %v2248, 6
    %v2271 = vrot.slane %v2247, 6
    %v2272 = vrot.slane %v2246, 6
    %v2273 = vrot.slane %v2245, 6
    %v2274 = vrot.slane %v2244, 6
    %v2275 = vrot.slane %v2243, 6
    %v2276 = vrot.slane %v2242, 6
    %v2277 = vrot.slane %v2241, 6
    %v2278 = vrot.slane %v2240, 6
    %v2279 = vrot.slane %v2239, 6
    %v2280 = vrot.slane %v2252, 6
    %2295 = vst [vmem:[#allocation3 + $0x380] sm:$0x1c] %v2267
    %2296 = vst [vmem:[#allocation3 + $0x388] sm:$0x1c] %v2268
    %2297 = vst [vmem:[#allocation3 + $0x390] sm:$0x1c] %v2269
    %2298 = vst [vmem:[#allocation3 + $0x398] sm:$0x1c] %v2270
    %2299 = vst [vmem:[#allocation3 + $0x3a0] sm:$0x1c] %v2271
    %2300 = vst [vmem:[#allocation3 + $0x3a8] sm:$0x1c] %v2272
    %2301 = vst [vmem:[#allocation3 + $0x3b0] sm:$0x1c] %v2273
    %2302 = vst [vmem:[#allocation3 + $0x3b8] sm:$0x1c] %v2274
    %2303 = vst [vmem:[#allocation3 + $0x3c0] sm:$0x1c] %v2275
    %2304 = vst [vmem:[#allocation3 + $0x3c8] sm:$0x1c] %v2276
    %2305 = vst [vmem:[#allocation3 + $0x3d0] sm:$0x1c] %v2277
    %2306 = vst [vmem:[#allocation3 + $0x3d8] sm:$0x1c] %v2278
    %2307 = vst [vmem:[#allocation3 + $0x3e0] sm:$0x1c] %v2279
    %2308 = vst [vmem:[#allocation3 + $0x3e8] sm:$0x1c] %v2280
    %2309 = vrot.lane.b32.xlu0 %v83, 13
    %v2310 = vpop.permute.xlu0 %2309
    %2311 = vrot.lane.b32.xlu0 %v101, 13
    %v2312 = vpop.permute.xlu0 %2311
    %2313 = vrot.lane.b32.xlu0 %v84, 13
    %v2314 = vpop.permute.xlu0 %2313
    %2315 = vrot.lane.b32.xlu0 %v102, 13
    %v2316 = vpop.permute.xlu0 %2315
    %2317 = vrot.lane.b32.xlu0 %v85, 13
    %v2318 = vpop.permute.xlu0 %2317
    %2319 = vrot.lane.b32.xlu0 %v103, 13
    %v2320 = vpop.permute.xlu0 %2319
    %2321 = vrot.lane.b32.xlu0 %v86, 13
    %v2322 = vpop.permute.xlu0 %2321
    %2323 = vrot.lane.b32.xlu0 %v104, 13
    %v2324 = vpop.permute.xlu0 %2323
    %2325 = vrot.lane.b32.xlu0 %v87, 13
    %v2326 = vpop.permute.xlu0 %2325
    %2327 = vrot.lane.b32.xlu0 %v105, 13
    %v2328 = vpop.permute.xlu0 %2327
    %2329 = vrot.lane.b32.xlu0 %v88, 13
    %v2330 = vpop.permute.xlu0 %2329
    %2331 = vrot.lane.b32.xlu0 %v106, 13
    %v2332 = vpop.permute.xlu0 %2331
    %2333 = vrot.lane.b32.xlu0 %v89, 13
    %v2334 = vpop.permute.xlu0 %2333
    %2335 = vrot.lane.b32.xlu0 %v107, 13
    %v2336 = vpop.permute.xlu0 %2335
    %vm2337 = vcmp.lt.s32.totalorder %v158, 13
    %v2338 = vsel %vm2337, %v2334, %v2336
    %v2339 = vsel %vm2337, %v2332, %v2334
    %v2340 = vsel %vm2337, %v2330, %v2332
    %v2341 = vsel %vm2337, %v2328, %v2330
    %v2342 = vsel %vm2337, %v2326, %v2328
    %v2343 = vsel %vm2337, %v2324, %v2326
    %v2344 = vsel %vm2337, %v2322, %v2324
    %v2345 = vsel %vm2337, %v2320, %v2322
    %v2346 = vsel %vm2337, %v2318, %v2320
    %v2347 = vsel %vm2337, %v2316, %v2318
    %v2348 = vsel %vm2337, %v2314, %v2316
    %v2349 = vsel %vm2337, %v2312, %v2314
    %v2350 = vsel %vm2337, %v2310, %v2312
    %v2351 = vsel %vm2337, %v2336, %v2310
    %v2366 = vrot.slane %v2350, 3
    %v2367 = vrot.slane %v2349, 3
    %v2368 = vrot.slane %v2348, 3
    %v2369 = vrot.slane %v2347, 3
    %v2370 = vrot.slane %v2346, 3
    %v2371 = vrot.slane %v2345, 3
    %v2372 = vrot.slane %v2344, 3
    %v2373 = vrot.slane %v2343, 3
    %v2374 = vrot.slane %v2342, 3
    %v2375 = vrot.slane %v2341, 3
    %v2376 = vrot.slane %v2340, 3
    %v2377 = vrot.slane %v2339, 3
    %v2378 = vrot.slane %v2338, 3
    %v2379 = vrot.slane %v2351, 3
    %2394 = vst [vmem:[#allocation3 + $0x380] sm:$0xe0] %v2366
    %2395 = vst [vmem:[#allocation3 + $0x388] sm:$0xe0] %v2367
    %2396 = vst [vmem:[#allocation3 + $0x390] sm:$0xe0] %v2368
    %2397 = vst [vmem:[#allocation3 + $0x398] sm:$0xe0] %v2369
    %2398 = vst [vmem:[#allocation3 + $0x3a0] sm:$0xe0] %v2370
    %2399 = vst [vmem:[#allocation3 + $0x3a8] sm:$0xe0] %v2371
    %2400 = vst [vmem:[#allocation3 + $0x3b0] sm:$0xe0] %v2372
    %2401 = vst [vmem:[#allocation3 + $0x3b8] sm:$0xe0] %v2373
    %2402 = vst [vmem:[#allocation3 + $0x3c0] sm:$0xe0] %v2374
    %2403 = vst [vmem:[#allocation3 + $0x3c8] sm:$0xe0] %v2375
    %2404 = vst [vmem:[#allocation3 + $0x3d0] sm:$0xe0] %v2376
    %2405 = vst [vmem:[#allocation3 + $0x3d8] sm:$0xe0] %v2377
    %2406 = vst [vmem:[#allocation3 + $0x3e0] sm:$0xe0] %v2378
    %2407 = vst [vmem:[#allocation3 + $0x3e8] sm:$0xe0] %v2379
    %2408 = vrot.lane.b32.xlu0 %v83, 12
    %v2409 = vpop.permute.xlu0 %2408
    %2410 = vrot.lane.b32.xlu0 %v101, 12
    %v2411 = vpop.permute.xlu0 %2410
    %2412 = vrot.lane.b32.xlu0 %v84, 12
    %v2413 = vpop.permute.xlu0 %2412
    %2414 = vrot.lane.b32.xlu0 %v102, 12
    %v2415 = vpop.permute.xlu0 %2414
    %2416 = vrot.lane.b32.xlu0 %v85, 12
    %v2417 = vpop.permute.xlu0 %2416
    %2418 = vrot.lane.b32.xlu0 %v103, 12
    %v2419 = vpop.permute.xlu0 %2418
    %2420 = vrot.lane.b32.xlu0 %v86, 12
    %v2421 = vpop.permute.xlu0 %2420
    %2422 = vrot.lane.b32.xlu0 %v104, 12
    %v2423 = vpop.permute.xlu0 %2422
    %2424 = vrot.lane.b32.xlu0 %v87, 12
    %v2425 = vpop.permute.xlu0 %2424
    %2426 = vrot.lane.b32.xlu0 %v105, 12
    %v2427 = vpop.permute.xlu0 %2426
    %2428 = vrot.lane.b32.xlu0 %v88, 12
    %v2429 = vpop.permute.xlu0 %2428
    %2430 = vrot.lane.b32.xlu0 %v106, 12
    %v2431 = vpop.permute.xlu0 %2430
    %2432 = vrot.lane.b32.xlu0 %v89, 12
    %v2433 = vpop.permute.xlu0 %2432
    %2434 = vrot.lane.b32.xlu0 %v107, 12
    %v2435 = vpop.permute.xlu0 %2434
    %vm2436 = vcmp.lt.s32.totalorder %v158, 12
    %v2437 = vsel %vm2436, %v2433, %v2435
    %v2438 = vsel %vm2436, %v2431, %v2433
    %v2439 = vsel %vm2436, %v2429, %v2431
    %v2440 = vsel %vm2436, %v2427, %v2429
    %v2441 = vsel %vm2436, %v2425, %v2427
    %v2442 = vsel %vm2436, %v2423, %v2425
    %v2443 = vsel %vm2436, %v2421, %v2423
    %v2444 = vsel %vm2436, %v2419, %v2421
    %v2445 = vsel %vm2436, %v2417, %v2419
    %v2446 = vsel %vm2436, %v2415, %v2417
    %v2447 = vsel %vm2436, %v2413, %v2415
    %v2448 = vsel %vm2436, %v2411, %v2413
    %v2449 = vsel %vm2436, %v2409, %v2411
    %v2450 = vsel %vm2436, %v2435, %v2409
    %2451 = vst [vmem:[#allocation3 + $0x3f0] sm:$0x7] %v2449
    %2452 = vst [vmem:[#allocation3 + $0x3f8] sm:$0x7] %v2448
    %2453 = vst [vmem:[#allocation3 + $0x400] sm:$0x7] %v2447
    %2454 = vst [vmem:[#allocation3 + $0x408] sm:$0x7] %v2446
    %2455 = vst [vmem:[#allocation3 + $0x410] sm:$0x7] %v2445
    %2456 = vst [vmem:[#allocation3 + $0x418] sm:$0x7] %v2444
    %2457 = vst [vmem:[#allocation3 + $0x420] sm:$0x7] %v2443
    %2458 = vst [vmem:[#allocation3 + $0x428] sm:$0x7] %v2442
    %2459 = vst [vmem:[#allocation3 + $0x430] sm:$0x7] %v2441
    %2460 = vst [vmem:[#allocation3 + $0x438] sm:$0x7] %v2440
    %2461 = vst [vmem:[#allocation3 + $0x440] sm:$0x7] %v2439
    %2462 = vst [vmem:[#allocation3 + $0x448] sm:$0x7] %v2438
    %2463 = vst [vmem:[#allocation3 + $0x450] sm:$0x7] %v2437
    %2464 = vst [vmem:[#allocation3 + $0x458] sm:$0x7] %v2450
    %v2465 = vld [vmem:[%s1] sm:$0x3f]
    %v2466 = vpack.c.bf16 %v2465, %v2465
    %v2467 = vld [vmem:[#allocation3] sm:$0xff]
    %v2468 = vld [vmem:[#allocation3 + $0x8] sm:$0xff]
    %v2469 = vld [vmem:[#allocation3 + $0x10] sm:$0xff]
    %v2470 = vld [vmem:[#allocation3 + $0x18] sm:$0xff]
    %v2471 = vld [vmem:[#allocation3 + $0x20] sm:$0xff]
    %v2472 = vld [vmem:[#allocation3 + $0x28] sm:$0xff]
    %v2473 = vld [vmem:[#allocation3 + $0x30] sm:$0xff]
    %v2474 = vld [vmem:[#allocation3 + $0x38] sm:$0xff]
    %v2475 = vld [vmem:[#allocation3 + $0x40] sm:$0xff]
    %v2476 = vld [vmem:[#allocation3 + $0x48] sm:$0xff]
    %v2477 = vld [vmem:[#allocation3 + $0x50] sm:$0xff]
    %v2478 = vld [vmem:[#allocation3 + $0x58] sm:$0xff]
    %v2479 = vld [vmem:[#allocation3 + $0x60] sm:$0xff]
    %v2480 = vld [vmem:[#allocation3 + $0x68] sm:$0xff]
    %v2481 = vld [vmem:[#allocation3 + $0x70] sm:$0xff]
    %v2482 = vld [vmem:[#allocation3 + $0x78] sm:$0xff]
    %v2483 = vld [vmem:[#allocation3 + $0x80] sm:$0xff]
    %v2484 = vld [vmem:[#allocation3 + $0x88] sm:$0xff]
    %v2485 = vld [vmem:[#allocation3 + $0x90] sm:$0xff]
    %v2486 = vld [vmem:[#allocation3 + $0x98] sm:$0xff]
    %v2487 = vld [vmem:[#allocation3 + $0xa0] sm:$0xff]
    %v2488 = vld [vmem:[#allocation3 + $0xa8] sm:$0xff]
    %v2489 = vld [vmem:[#allocation3 + $0xb0] sm:$0xff]
    %v2490 = vld [vmem:[#allocation3 + $0xb8] sm:$0xff]
    %v2491 = vld [vmem:[#allocation3 + $0xc0] sm:$0xff]
    %v2492 = vld [vmem:[#allocation3 + $0xc8] sm:$0xff]
    %v2493 = vld [vmem:[#allocation3 + $0xd0] sm:$0xff]
    %v2494 = vld [vmem:[#allocation3 + $0xd8] sm:$0xff]
    %v2495 = vld [vmem:[#allocation3 + $0xe0] sm:$0xff]
    %v2496 = vld [vmem:[#allocation3 + $0xe8] sm:$0xff]
    %v2497 = vld [vmem:[#allocation3 + $0xf0] sm:$0xff]
    %v2498 = vld [vmem:[#allocation3 + $0xf8] sm:$0xff]
    %v2499 = vld [vmem:[#allocation3 + $0x100] sm:$0xff]
    %v2500 = vld [vmem:[#allocation3 + $0x108] sm:$0xff]
    %v2501 = vld [vmem:[#allocation3 + $0x110] sm:$0xff]
    %v2502 = vld [vmem:[#allocation3 + $0x118] sm:$0xff]
    %v2503 = vld [vmem:[#allocation3 + $0x120] sm:$0xff]
    %v2504 = vld [vmem:[#allocation3 + $0x128] sm:$0xff]
    %v2505 = vld [vmem:[#allocation3 + $0x130] sm:$0xff]
    %v2506 = vld [vmem:[#allocation3 + $0x138] sm:$0xff]
    %v2507 = vld [vmem:[#allocation3 + $0x140] sm:$0xff]
    %v2508 = vld [vmem:[#allocation3 + $0x148] sm:$0xff]
    %v2509 = vld [vmem:[#allocation3 + $0x150] sm:$0xff]
    %v2510 = vld [vmem:[#allocation3 + $0x158] sm:$0xff]
    %v2511 = vld [vmem:[#allocation3 + $0x160] sm:$0xff]
    %v2512 = vld [vmem:[#allocation3 + $0x168] sm:$0xff]
    %v2513 = vld [vmem:[#allocation3 + $0x170] sm:$0xff]
    %v2514 = vld [vmem:[#allocation3 + $0x178] sm:$0xff]
    %v2515 = vld [vmem:[#allocation3 + $0x180] sm:$0xff]
    %v2516 = vld [vmem:[#allocation3 + $0x188] sm:$0xff]
    %v2517 = vld [vmem:[#allocation3 + $0x190] sm:$0xff]
    %v2518 = vld [vmem:[#allocation3 + $0x198] sm:$0xff]
    %v2519 = vld [vmem:[#allocation3 + $0x1a0] sm:$0xff]
    %v2520 = vld [vmem:[#allocation3 + $0x1a8] sm:$0xff]
    %v2521 = vld [vmem:[#allocation3 + $0x1b0] sm:$0xff]
    %v2522 = vld [vmem:[#allocation3 + $0x1b8] sm:$0xff]
    %v2523 = vld [vmem:[#allocation3 + $0x1c0] sm:$0xff]
    %v2524 = vld [vmem:[#allocation3 + $0x1c8] sm:$0xff]
    %v2525 = vld [vmem:[#allocation3 + $0x1d0] sm:$0xff]
    %v2526 = vld [vmem:[#allocation3 + $0x1d8] sm:$0xff]
    %v2527 = vld [vmem:[#allocation3 + $0x1e0] sm:$0xff]
    %v2528 = vld [vmem:[#allocation3 + $0x1e8] sm:$0xff]
    %v2529 = vld [vmem:[#allocation3 + $0x1f0] sm:$0xff]
    %v2530 = vld [vmem:[#allocation3 + $0x1f8] sm:$0xff]
    %v2531 = vld [vmem:[#allocation3 + $0x200] sm:$0xff]
    %v2532 = vld [vmem:[#allocation3 + $0x208] sm:$0xff]
    %v2533 = vld [vmem:[#allocation3 + $0x210] sm:$0xff]
    %v2534 = vld [vmem:[#allocation3 + $0x218] sm:$0xff]
    %v2535 = vld [vmem:[#allocation3 + $0x220] sm:$0xff]
    %v2536 = vld [vmem:[#allocation3 + $0x228] sm:$0xff]
    %v2537 = vld [vmem:[#allocation3 + $0x230] sm:$0xff]
    %v2538 = vld [vmem:[#allocation3 + $0x238] sm:$0xff]
    %v2539 = vld [vmem:[#allocation3 + $0x240] sm:$0xff]
    %v2540 = vld [vmem:[#allocation3 + $0x248] sm:$0xff]
    %v2541 = vld [vmem:[#allocation3 + $0x250] sm:$0xff]
    %v2542 = vld [vmem:[#allocation3 + $0x258] sm:$0xff]
    %v2543 = vld [vmem:[#allocation3 + $0x260] sm:$0xff]
    %v2544 = vld [vmem:[#allocation3 + $0x268] sm:$0xff]
    %v2545 = vld [vmem:[#allocation3 + $0x270] sm:$0xff]
    %v2546 = vld [vmem:[#allocation3 + $0x278] sm:$0xff]
    %v2547 = vld [vmem:[#allocation3 + $0x280] sm:$0xff]
    %v2548 = vld [vmem:[#allocation3 + $0x288] sm:$0xff]
    %v2549 = vld [vmem:[#allocation3 + $0x290] sm:$0xff]
    %v2550 = vld [vmem:[#allocation3 + $0x298] sm:$0xff]
    %v2551 = vld [vmem:[#allocation3 + $0x2a0] sm:$0xff]
    %v2552 = vld [vmem:[#allocation3 + $0x2a8] sm:$0xff]
    %v2553 = vld [vmem:[#allocation3 + $0x2b0] sm:$0xff]
    %v2554 = vld [vmem:[#allocation3 + $0x2b8] sm:$0xff]
    %v2555 = vld [vmem:[#allocation3 + $0x2c0] sm:$0xff]
    %v2556 = vld [vmem:[#allocation3 + $0x2c8] sm:$0xff]
    %v2557 = vld [vmem:[#allocation3 + $0x2d0] sm:$0xff]
    %v2558 = vld [vmem:[#allocation3 + $0x2d8] sm:$0xff]
    %v2559 = vld [vmem:[#allocation3 + $0x2e0] sm:$0xff]
    %v2560 = vld [vmem:[#allocation3 + $0x2e8] sm:$0xff]
    %v2561 = vld [vmem:[#allocation3 + $0x2f0] sm:$0xff]
    %v2562 = vld [vmem:[#allocation3 + $0x2f8] sm:$0xff]
    %v2563 = vld [vmem:[#allocation3 + $0x300] sm:$0xff]
    %v2564 = vld [vmem:[#allocation3 + $0x308] sm:$0xff]
    %v2565 = vld [vmem:[#allocation3 + $0x310] sm:$0xff]
    %v2566 = vld [vmem:[#allocation3 + $0x318] sm:$0xff]
    %v2567 = vld [vmem:[#allocation3 + $0x320] sm:$0xff]
    %v2568 = vld [vmem:[#allocation3 + $0x328] sm:$0xff]
    %v2569 = vld [vmem:[#allocation3 + $0x330] sm:$0xff]
    %v2570 = vld [vmem:[#allocation3 + $0x338] sm:$0xff]
    %v2571 = vld [vmem:[#allocation3 + $0x340] sm:$0xff]
    %v2572 = vld [vmem:[#allocation3 + $0x348] sm:$0xff]
    %v2573 = vld [vmem:[#allocation3 + $0x350] sm:$0xff]
    %v2574 = vld [vmem:[#allocation3 + $0x358] sm:$0xff]
    %v2575 = vld [vmem:[#allocation3 + $0x360] sm:$0xff]
    %v2576 = vld [vmem:[#allocation3 + $0x368] sm:$0xff]
    %v2577 = vld [vmem:[#allocation3 + $0x370] sm:$0xff]
    %v2578 = vld [vmem:[#allocation3 + $0x378] sm:$0xff]
    %v2579 = vld [vmem:[#allocation3 + $0x380] sm:$0xff]
    %v2580 = vld [vmem:[#allocation3 + $0x388] sm:$0xff]
    %v2581 = vld [vmem:[#allocation3 + $0x390] sm:$0xff]
    %v2582 = vld [vmem:[#allocation3 + $0x398] sm:$0xff]
    %v2583 = vld [vmem:[#allocation3 + $0x3a0] sm:$0xff]
    %v2584 = vld [vmem:[#allocation3 + $0x3a8] sm:$0xff]
    %v2585 = vld [vmem:[#allocation3 + $0x3b0] sm:$0xff]
    %v2586 = vld [vmem:[#allocation3 + $0x3b8] sm:$0xff]
    %v2587 = vld [vmem:[#allocation3 + $0x3c0] sm:$0xff]
    %v2588 = vld [vmem:[#allocation3 + $0x3c8] sm:$0xff]
    %v2589 = vld [vmem:[#allocation3 + $0x3d0] sm:$0xff]
    %v2590 = vld [vmem:[#allocation3 + $0x3d8] sm:$0xff]
    %v2591 = vld [vmem:[#allocation3 + $0x3e0] sm:$0xff]
    %v2592 = vld [vmem:[#allocation3 + $0x3e8] sm:$0xff]
    %v2593 = vld [vmem:[#allocation3 + $0x3f0] sm:$0x7]
    %v2594 = vld [vmem:[#allocation3 + $0x3f8] sm:$0x7]
    %v2595 = vld [vmem:[#allocation3 + $0x400] sm:$0x7]
    %v2596 = vld [vmem:[#allocation3 + $0x408] sm:$0x7]
    %v2597 = vld [vmem:[#allocation3 + $0x410] sm:$0x7]
    %v2598 = vld [vmem:[#allocation3 + $0x418] sm:$0x7]
    %v2599 = vld [vmem:[#allocation3 + $0x420] sm:$0x7]
    %v2600 = vld [vmem:[#allocation3 + $0x428] sm:$0x7]
    %v2601 = vld [vmem:[#allocation3 + $0x430] sm:$0x7]
    %v2602 = vld [vmem:[#allocation3 + $0x438] sm:$0x7]
    %v2603 = vld [vmem:[#allocation3 + $0x440] sm:$0x7]
    %v2604 = vld [vmem:[#allocation3 + $0x448] sm:$0x7]
    %v2605 = vld [vmem:[#allocation3 + $0x450] sm:$0x7]
    %v2606 = vld [vmem:[#allocation3 + $0x458] sm:$0x7]
    %v2607 = vpack.c.bf16 %v2481, %v2467
    %v2608 = vpack.c.bf16 %v2482, %v2468
    %v2609 = vpack.c.bf16 %v2483, %v2469
    %v2610 = vpack.c.bf16 %v2484, %v2470
    %v2611 = vpack.c.bf16 %v2485, %v2471
    %v2612 = vpack.c.bf16 %v2486, %v2472
    %v2613 = vpack.c.bf16 %v2487, %v2473
    %v2614 = vpack.c.bf16 %v2488, %v2474
    %v2615 = vpack.c.bf16 %v2489, %v2475
    %v2616 = vpack.c.bf16 %v2490, %v2476
    %v2617 = vpack.c.bf16 %v2491, %v2477
    %v2618 = vpack.c.bf16 %v2492, %v2478
    %v2619 = vpack.c.bf16 %v2493, %v2479
    %v2620 = vpack.c.bf16 %v2494, %v2480
    %v2621 = vpack.c.bf16 %v2509, %v2495
    %v2622 = vpack.c.bf16 %v2510, %v2496
    %v2623 = vpack.c.bf16 %v2511, %v2497
    %v2624 = vpack.c.bf16 %v2512, %v2498
    %v2625 = vpack.c.bf16 %v2513, %v2499
    %v2626 = vpack.c.bf16 %v2514, %v2500
    %v2627 = vpack.c.bf16 %v2515, %v2501
    %v2628 = vpack.c.bf16 %v2516, %v2502
    %v2629 = vpack.c.bf16 %v2517, %v2503
    %v2630 = vpack.c.bf16 %v2518, %v2504
    %v2631 = vpack.c.bf16 %v2519, %v2505
    %v2632 = vpack.c.bf16 %v2520, %v2506
    %v2633 = vpack.c.bf16 %v2521, %v2507
    %v2634 = vpack.c.bf16 %v2522, %v2508
    %v2635 = vpack.c.bf16 %v2537, %v2523
    %v2636 = vpack.c.bf16 %v2538, %v2524
    %v2637 = vpack.c.bf16 %v2539, %v2525
    %v2638 = vpack.c.bf16 %v2540, %v2526
    %v2639 = vpack.c.bf16 %v2541, %v2527
    %v2640 = vpack.c.bf16 %v2542, %v2528
    %v2641 = vpack.c.bf16 %v2543, %v2529
    %v2642 = vpack.c.bf16 %v2544, %v2530
    %v2643 = vpack.c.bf16 %v2545, %v2531
    %v2644 = vpack.c.bf16 %v2546, %v2532
    %v2645 = vpack.c.bf16 %v2547, %v2533
    %v2646 = vpack.c.bf16 %v2548, %v2534
    %v2647 = vpack.c.bf16 %v2549, %v2535
    %v2648 = vpack.c.bf16 %v2550, %v2536
    %v2649 = vpack.c.bf16 %v2565, %v2551
    %v2650 = vpack.c.bf16 %v2566, %v2552
    %v2651 = vpack.c.bf16 %v2567, %v2553
    %v2652 = vpack.c.bf16 %v2568, %v2554
    %v2653 = vpack.c.bf16 %v2569, %v2555
    %v2654 = vpack.c.bf16 %v2570, %v2556
    %v2655 = vpack.c.bf16 %v2571, %v2557
    %v2656 = vpack.c.bf16 %v2572, %v2558
    %v2657 = vpack.c.bf16 %v2573, %v2559
    %v2658 = vpack.c.bf16 %v2574, %v2560
    %v2659 = vpack.c.bf16 %v2575, %v2561
    %v2660 = vpack.c.bf16 %v2576, %v2562
    %v2661 = vpack.c.bf16 %v2577, %v2563
    %v2662 = vpack.c.bf16 %v2578, %v2564
    %v2663 = vpack.c.bf16 %v2593, %v2579
    %v2664 = vpack.c.bf16 %v2594, %v2580
    %v2665 = vpack.c.bf16 %v2595, %v2581
    %v2666 = vpack.c.bf16 %v2596, %v2582
    %v2667 = vpack.c.bf16 %v2597, %v2583
    %v2668 = vpack.c.bf16 %v2598, %v2584
    %v2669 = vpack.c.bf16 %v2599, %v2585
    %v2670 = vpack.c.bf16 %v2600, %v2586
    %v2671 = vpack.c.bf16 %v2601, %v2587
    %v2672 = vpack.c.bf16 %v2602, %v2588
    %v2673 = vpack.c.bf16 %v2603, %v2589
    %v2674 = vpack.c.bf16 %v2604, %v2590
    %v2675 = vpack.c.bf16 %v2605, %v2591
    %v2676 = vpack.c.bf16 %v2606, %v2592
    %v2677 = vld [vmem:[%s2] sm:$0x3f]
    %2679 = vset.pattern.permute.xlu0 0
    %2680 = vperm.xlu0 %2679, %v2677
    %v2681 = vpop.permute.xlu0 %2680
    %vm2683 = vcmask 613376
    %v2685 = vsel %vm2683, %v2466, 0
    %vm2687 = vcmask 1044480
    %vm2688 = vcmask 1045504
    %v2689 = vsel %vm2687, 4294967295, 65535
    %v2690 = vsel %vm2688, %v2689, 0
    %v2692 = vand.u32 %v2663, %v2690
    %v2695 = vand.u32 %v2664, %v2690
    %v2698 = vand.u32 %v2665, %v2690
    %v2701 = vand.u32 %v2666, %v2690
    %v2704 = vand.u32 %v2667, %v2690
    %v2707 = vand.u32 %v2668, %v2690
    %v2710 = vand.u32 %v2669, %v2690
    %v2713 = vand.u32 %v2670, %v2690
    %v2716 = vand.u32 %v2671, %v2690
    %v2719 = vand.u32 %v2672, %v2690
    %v2722 = vand.u32 %v2673, %v2690
    %v2725 = vand.u32 %v2674, %v2690
    %v2728 = vand.u32 %v2675, %v2690
    %v2731 = vand.u32 %v2676, %v2690
    %2733 = vmatprep.subr.bf16.mxu0 %v2608
    %2734 = vmatpush1.bf16.msra.mxu0 %v2607
    %2735 = vmatprep.subr.bf16.mxu0 %v2622
    %2736 = vmatpush1.bf16.msra.mxu0 %v2621
    %2737 = vmatprep.subr.bf16.mxu0 %v2636
    %2738 = vmatpush1.bf16.msra.mxu0 %v2635
    %2739 = vmatprep.subr.bf16.mxu0 %v2650
    %2740 = vmatpush1.bf16.msra.mxu0 %v2649
    %2741 = vmatprep.subr.bf16.mxu0 %v2695
    %2742 = vmatpush1.bf16.msra.mxu0 %v2692
    %2743 = vmatprep.subr.bf16.mxu0 0
    %2744 = vmatpush1.bf16.msra.mxu0 0
    %2745 = vmatprep.subr.bf16.mxu0 0
    %2746 = vmatpush1.bf16.msra.mxu0 0
    %2747 = vmatprep.subr.bf16.mxu0 0
    %2748 = vmatpush1.bf16.msra.mxu0 0
    %2749 = vmatprep.subr.bf16.mxu0 0
    %2750 = vmatpush1.bf16.msra.mxu0 0
    %2751 = vmatprep.subr.bf16.mxu0 0
    %2752 = vmatpush1.bf16.msra.mxu0 0
    %2753 = vmatprep.subr.bf16.mxu0 0
    %2754 = vmatpush1.bf16.msra.mxu0 0
    %2755 = vmatprep.subr.bf16.mxu0 0
    %2756 = vmatpush1.bf16.msra.mxu0 0
    %2757 = vmatprep.subr.bf16.mxu0 0
    %2758 = vmatpush1.bf16.msra.mxu0 0
    %2759 = vmatprep.subr.bf16.mxu0 0
    %2760 = vmatpush1.bf16.msra.mxu0 0
    %2761 = vmatprep.subr.bf16.mxu0 0
    %2762 = vmatpush1.bf16.msra.mxu0 0
    %2763 = vmatprep.subr.bf16.mxu0 0
    %2764 = vmatpush1.bf16.msra.mxu0 0
    %2765 = vmatprep.mubr.bf16.mxu0 0
    %2766 = vmatmul.mubr.bf16.gmra.mrb[0].mxu0 %v2685
    %v2767 = vpop.f32.mrb[0].mxu0
    %v2768 = vadd.f32 %v2681, %v2767
    %v2769 = vpop.f32.mrb[0].mxu0
    %v2770 = vadd.f32 %v2681, %v2769
    %v2771 = vpop.f32.mrb[0].mxu0
    %v2772 = vpop.f32.mrb[0].mxu0
    %2773 = vdwg.mxu0
    %2774 = vmatprep.subr.bf16.mxu0 %v2610
    %2775 = vmatpush1.bf16.msra.mxu0 %v2609
    %2776 = vmatprep.subr.bf16.mxu0 %v2624
    %2777 = vmatpush1.bf16.msra.mxu0 %v2623
    %2778 = vmatprep.subr.bf16.mxu0 %v2638
    %2779 = vmatpush1.bf16.msra.mxu0 %v2637
    %2780 = vmatprep.subr.bf16.mxu0 %v2652
    %2781 = vmatpush1.bf16.msra.mxu0 %v2651
    %2782 = vmatprep.subr.bf16.mxu0 %v2701
    %2783 = vmatpush1.bf16.msra.mxu0 %v2698
    %2784 = vmatprep.subr.bf16.mxu0 0
    %2785 = vmatpush1.bf16.msra.mxu0 0
    %2786 = vmatprep.subr.bf16.mxu0 0
    %2787 = vmatpush1.bf16.msra.mxu0 0
    %2788 = vmatprep.subr.bf16.mxu0 0
    %2789 = vmatpush1.bf16.msra.mxu0 0
    %2790 = vmatprep.subr.bf16.mxu0 0
    %2791 = vmatpush1.bf16.msra.mxu0 0
    %2792 = vmatprep.subr.bf16.mxu0 0
    %2793 = vmatpush1.bf16.msra.mxu0 0
    %2794 = vmatprep.subr.bf16.mxu0 0
    %2795 = vmatpush1.bf16.msra.mxu0 0
    %2796 = vmatprep.subr.bf16.mxu0 0
    %2797 = vmatpush1.bf16.msra.mxu0 0
    %2798 = vmatprep.subr.bf16.mxu0 0
    %2799 = vmatpush1.bf16.msra.mxu0 0
    %2800 = vmatprep.subr.bf16.mxu0 0
    %2801 = vmatpush1.bf16.msra.mxu0 0
    %2802 = vmatprep.subr.bf16.mxu0 0
    %2803 = vmatpush1.bf16.msra.mxu0 0
    %2804 = vmatprep.subr.bf16.mxu0 0
    %2805 = vmatpush1.bf16.msra.mxu0 0
    %2806 = vmatprep.mubr.bf16.mxu0 0
    %2807 = vmatmul.mubr.bf16.gmra.mrb[0].mxu0 %v2685
    %v2808 = vpop.f32.mrb[0].mxu0
    %v2809 = vadd.f32 %v2681, %v2808
    %v2810 = vpop.f32.mrb[0].mxu0
    %v2811 = vadd.f32 %v2681, %v2810
    %v2812 = vpop.f32.mrb[0].mxu0
    %v2813 = vpop.f32.mrb[0].mxu0
    %2814 = vdwg.mxu0
    %2815 = vmatprep.subr.bf16.mxu0 %v2612
    %2816 = vmatpush1.bf16.msra.mxu0 %v2611
    %2817 = vmatprep.subr.bf16.mxu0 %v2626
    %2818 = vmatpush1.bf16.msra.mxu0 %v2625
    %2819 = vmatprep.subr.bf16.mxu0 %v2640
    %2820 = vmatpush1.bf16.msra.mxu0 %v2639
    %2821 = vmatprep.subr.bf16.mxu0 %v2654
    %2822 = vmatpush1.bf16.msra.mxu0 %v2653
    %2823 = vmatprep.subr.bf16.mxu0 %v2707
    %2824 = vmatpush1.bf16.msra.mxu0 %v2704
    %2825 = vmatprep.subr.bf16.mxu0 0
    %2826 = vmatpush1.bf16.msra.mxu0 0
    %2827 = vmatprep.subr.bf16.mxu0 0
    %2828 = vmatpush1.bf16.msra.mxu0 0
    %2829 = vmatprep.subr.bf16.mxu0 0
    %2830 = vmatpush1.bf16.msra.mxu0 0
    %2831 = vmatprep.subr.bf16.mxu0 0
    %2832 = vmatpush1.bf16.msra.mxu0 0
    %2833 = vmatprep.subr.bf16.mxu0 0
    %2834 = vmatpush1.bf16.msra.mxu0 0
    %2835 = vmatprep.subr.bf16.mxu0 0
    %2836 = vmatpush1.bf16.msra.mxu0 0
    %2837 = vmatprep.subr.bf16.mxu0 0
    %2838 = vmatpush1.bf16.msra.mxu0 0
    %2839 = vmatprep.subr.bf16.mxu0 0
    %2840 = vmatpush1.bf16.msra.mxu0 0
    %2841 = vmatprep.subr.bf16.mxu0 0
    %2842 = vmatpush1.bf16.msra.mxu0 0
    %2843 = vmatprep.subr.bf16.mxu0 0
    %2844 = vmatpush1.bf16.msra.mxu0 0
    %2845 = vmatprep.subr.bf16.mxu0 0
    %2846 = vmatpush1.bf16.msra.mxu0 0
    %2847 = vmatprep.mubr.bf16.mxu0 0
    %2848 = vmatmul.mubr.bf16.gmra.mrb[0].mxu0 %v2685
    %v2849 = vpop.f32.mrb[0].mxu0
    %v2850 = vadd.f32 %v2681, %v2849
    %v2851 = vpop.f32.mrb[0].mxu0
    %v2852 = vadd.f32 %v2681, %v2851
    %v2853 = vpop.f32.mrb[0].mxu0
    %v2854 = vpop.f32.mrb[0].mxu0
    %2855 = vdwg.mxu0
    %2856 = vmatprep.subr.bf16.mxu0 %v2614
    %2857 = vmatpush1.bf16.msra.mxu0 %v2613
    %2858 = vmatprep.subr.bf16.mxu0 %v2628
    %2859 = vmatpush1.bf16.msra.mxu0 %v2627
    %2860 = vmatprep.subr.bf16.mxu0 %v2642
    %2861 = vmatpush1.bf16.msra.mxu0 %v2641
    %2862 = vmatprep.subr.bf16.mxu0 %v2656
    %2863 = vmatpush1.bf16.msra.mxu0 %v2655
    %2864 = vmatprep.subr.bf16.mxu0 %v2713
    %2865 = vmatpush1.bf16.msra.mxu0 %v2710
    %2866 = vmatprep.subr.bf16.mxu0 0
    %2867 = vmatpush1.bf16.msra.mxu0 0
    %2868 = vmatprep.subr.bf16.mxu0 0
    %2869 = vmatpush1.bf16.msra.mxu0 0
    %2870 = vmatprep.subr.bf16.mxu0 0
    %2871 = vmatpush1.bf16.msra.mxu0 0
    %2872 = vmatprep.subr.bf16.mxu0 0
    %2873 = vmatpush1.bf16.msra.mxu0 0
    %2874 = vmatprep.subr.bf16.mxu0 0
    %2875 = vmatpush1.bf16.msra.mxu0 0
    %2876 = vmatprep.subr.bf16.mxu0 0
    %2877 = vmatpush1.bf16.msra.mxu0 0
    %2878 = vmatprep.subr.bf16.mxu0 0
    %2879 = vmatpush1.bf16.msra.mxu0 0
    %2880 = vmatprep.subr.bf16.mxu0 0
    %2881 = vmatpush1.bf16.msra.mxu0 0
    %2882 = vmatprep.subr.bf16.mxu0 0
    %2883 = vmatpush1.bf16.msra.mxu0 0
    %2884 = vmatprep.subr.bf16.mxu0 0
    %2885 = vmatpush1.bf16.msra.mxu0 0
    %2886 = vmatprep.subr.bf16.mxu0 0
    %2887 = vmatpush1.bf16.msra.mxu0 0
    %2888 = vmatprep.mubr.bf16.mxu0 0
    %2889 = vmatmul.mubr.bf16.gmra.mrb[0].mxu0 %v2685
    %v2890 = vpop.f32.mrb[0].mxu0
    %v2891 = vadd.f32 %v2681, %v2890
    %v2892 = vpop.f32.mrb[0].mxu0
    %v2893 = vadd.f32 %v2681, %v2892
    %v2894 = vpop.f32.mrb[0].mxu0
    %v2895 = vpop.f32.mrb[0].mxu0
    %2896 = vdwg.mxu0
    %2897 = vmatprep.subr.bf16.mxu0 %v2616
    %2898 = vmatpush1.bf16.msra.mxu0 %v2615
    %2899 = vmatprep.subr.bf16.mxu0 %v2630
    %2900 = vmatpush1.bf16.msra.mxu0 %v2629
    %2901 = vmatprep.subr.bf16.mxu0 %v2644
    %2902 = vmatpush1.bf16.msra.mxu0 %v2643
    %2903 = vmatprep.subr.bf16.mxu0 %v2658
    %2904 = vmatpush1.bf16.msra.mxu0 %v2657
    %2905 = vmatprep.subr.bf16.mxu0 %v2719
    %2906 = vmatpush1.bf16.msra.mxu0 %v2716
    %2907 = vmatprep.subr.bf16.mxu0 0
    %2908 = vmatpush1.bf16.msra.mxu0 0
    %2909 = vmatprep.subr.bf16.mxu0 0
    %2910 = vmatpush1.bf16.msra.mxu0 0
    %2911 = vmatprep.subr.bf16.mxu0 0
    %2912 = vmatpush1.bf16.msra.mxu0 0
    %2913 = vmatprep.subr.bf16.mxu0 0
    %2914 = vmatpush1.bf16.msra.mxu0 0
    %2915 = vmatprep.subr.bf16.mxu0 0
    %2916 = vmatpush1.bf16.msra.mxu0 0
    %2917 = vmatprep.subr.bf16.mxu0 0
    %2918 = vmatpush1.bf16.msra.mxu0 0
    %2919 = vmatprep.subr.bf16.mxu0 0
    %2920 = vmatpush1.bf16.msra.mxu0 0
    %2921 = vmatprep.subr.bf16.mxu0 0
    %2922 = vmatpush1.bf16.msra.mxu0 0
    %2923 = vmatprep.subr.bf16.mxu0 0
    %2924 = vmatpush1.bf16.msra.mxu0 0
    %2925 = vmatprep.subr.bf16.mxu0 0
    %2926 = vmatpush1.bf16.msra.mxu0 0
    %2927 = vmatprep.subr.bf16.mxu0 0
    %2928 = vmatpush1.bf16.msra.mxu0 0
    %2929 = vmatprep.mubr.bf16.mxu0 0
    %2930 = vmatmul.mubr.bf16.gmra.mrb[0].mxu0 %v2685
    %v2931 = vpop.f32.mrb[0].mxu0
    %v2932 = vadd.f32 %v2681, %v2931
    %v2933 = vpop.f32.mrb[0].mxu0
    %v2934 = vadd.f32 %v2681, %v2933
    %v2935 = vpop.f32.mrb[0].mxu0
    %v2936 = vpop.f32.mrb[0].mxu0
    %2937 = vdwg.mxu0
    %2938 = vmatprep.subr.bf16.mxu0 %v2618
    %2939 = vmatpush1.bf16.msra.mxu0 %v2617
    %2940 = vmatprep.subr.bf16.mxu0 %v2632
    %2941 = vmatpush1.bf16.msra.mxu0 %v2631
    %2942 = vmatprep.subr.bf16.mxu0 %v2646
    %2943 = vmatpush1.bf16.msra.mxu0 %v2645
    %2944 = vmatprep.subr.bf16.mxu0 %v2660
    %2945 = vmatpush1.bf16.msra.mxu0 %v2659
    %2946 = vmatprep.subr.bf16.mxu0 %v2725
    %2947 = vmatpush1.bf16.msra.mxu0 %v2722
    %2948 = vmatprep.subr.bf16.mxu0 0
    %2949 = vmatpush1.bf16.msra.mxu0 0
    %2950 = vmatprep.subr.bf16.mxu0 0
    %2951 = vmatpush1.bf16.msra.mxu0 0
    %2952 = vmatprep.subr.bf16.mxu0 0
    %2953 = vmatpush1.bf16.msra.mxu0 0
    %2954 = vmatprep.subr.bf16.mxu0 0
    %2955 = vmatpush1.bf16.msra.mxu0 0
    %2956 = vmatprep.subr.bf16.mxu0 0
    %2957 = vmatpush1.bf16.msra.mxu0 0
    %2958 = vmatprep.subr.bf16.mxu0 0
    %2959 = vmatpush1.bf16.msra.mxu0 0
    %2960 = vmatprep.subr.bf16.mxu0 0
    %2961 = vmatpush1.bf16.msra.mxu0 0
    %2962 = vmatprep.subr.bf16.mxu0 0
    %2963 = vmatpush1.bf16.msra.mxu0 0
    %2964 = vmatprep.subr.bf16.mxu0 0
    %2965 = vmatpush1.bf16.msra.mxu0 0
    %2966 = vmatprep.subr.bf16.mxu0 0
    %2967 = vmatpush1.bf16.msra.mxu0 0
    %2968 = vmatprep.subr.bf16.mxu0 0
    %2969 = vmatpush1.bf16.msra.mxu0 0
    %2970 = vmatprep.mubr.bf16.mxu0 0
    %2971 = vmatmul.mubr.bf16.gmra.mrb[0].mxu0 %v2685
    %v2972 = vpop.f32.mrb[0].mxu0
    %v2973 = vadd.f32 %v2681, %v2972
    %v2974 = vpop.f32.mrb[0].mxu0
    %v2975 = vadd.f32 %v2681, %v2974
    %v2976 = vpop.f32.mrb[0].mxu0
    %v2977 = vpop.f32.mrb[0].mxu0
    %2978 = vdwg.mxu0
    %2979 = vmatprep.subr.bf16.mxu0 %v2620
    %2980 = vmatpush1.bf16.msra.mxu0 %v2619
    %2981 = vmatprep.subr.bf16.mxu0 %v2634
    %2982 = vmatpush1.bf16.msra.mxu0 %v2633
    %2983 = vmatprep.subr.bf16.mxu0 %v2648
    %2984 = vmatpush1.bf16.msra.mxu0 %v2647
    %2985 = vmatprep.subr.bf16.mxu0 %v2662
    %2986 = vmatpush1.bf16.msra.mxu0 %v2661
    %2987 = vmatprep.subr.bf16.mxu0 %v2731
    %2988 = vmatpush1.bf16.msra.mxu0 %v2728
    %2989 = vmatprep.subr.bf16.mxu0 0
    %2990 = vmatpush1.bf16.msra.mxu0 0
    %2991 = vmatprep.subr.bf16.mxu0 0
    %2992 = vmatpush1.bf16.msra.mxu0 0
    %2993 = vmatprep.subr.bf16.mxu0 0
    %2994 = vmatpush1.bf16.msra.mxu0 0
    %2995 = vmatprep.subr.bf16.mxu0 0
    %2996 = vmatpush1.bf16.msra.mxu0 0
    %2997 = vmatprep.subr.bf16.mxu0 0
    %2998 = vmatpush1.bf16.msra.mxu0 0
    %2999 = vmatprep.subr.bf16.mxu0 0
    %3000 = vmatpush1.bf16.msra.mxu0 0
    %3001 = vmatprep.subr.bf16.mxu0 0
    %3002 = vmatpush1.bf16.msra.mxu0 0
    %3003 = vmatprep.subr.bf16.mxu0 0
    %3004 = vmatpush1.bf16.msra.mxu0 0
    %3005 = vmatprep.subr.bf16.mxu0 0
    %3006 = vmatpush1.bf16.msra.mxu0 0
    %3007 = vmatprep.subr.bf16.mxu0 0
    %3008 = vmatpush1.bf16.msra.mxu0 0
    %3009 = vmatprep.subr.bf16.mxu0 0
    %3010 = vmatpush1.bf16.msra.mxu0 0
    %3011 = vmatprep.mubr.bf16.mxu0 0
    %3012 = vmatmul.mubr.bf16.gmra.mrb[0].mxu0 %v2685
    %v3013 = vpop.f32.mrb[0].mxu0
    %v3014 = vadd.f32 %v2681, %v3013
    %v3015 = vpop.f32.mrb[0].mxu0
    %v3016 = vadd.f32 %v2681, %v3015
    %v3017 = vpop.f32.mrb[0].mxu0
    %v3018 = vpop.f32.mrb[0].mxu0
    %3019 = vdwg.mxu0
    %v3022 = vlaneseq
    %v3023 = vshrl.u32 %v3022, 7
    %v3024 = vsub.s32 0, %v3023
    %v3025 = vrot.slane %v90, %v3024
    %v3026 = vlaneseq
    %v3027 = vshrl.u32 %v3026, 7
    %v3028 = vsub.s32 1, %v3027
    %v3029 = vrot.slane %v90, %v3028
    %v3030 = vlaneseq
    %v3031 = vshrl.u32 %v3030, 7
    %v3032 = vsub.s32 2, %v3031
    %v3033 = vrot.slane %v90, %v3032
    %v3034 = vlaneseq
    %v3035 = vshrl.u32 %v3034, 7
    %v3036 = vsub.s32 3, %v3035
    %v3037 = vrot.slane %v90, %v3036
    %v3038 = vlaneseq
    %v3039 = vshrl.u32 %v3038, 7
    %v3040 = vsub.s32 4, %v3039
    %v3041 = vrot.slane %v90, %v3040
    %v3042 = vlaneseq
    %v3043 = vshrl.u32 %v3042, 7
    %v3044 = vsub.s32 5, %v3043
    %v3045 = vrot.slane %v90, %v3044
    %v3046 = vlaneseq
    %v3047 = vshrl.u32 %v3046, 7
    %v3048 = vsub.s32 6, %v3047
    %v3049 = vrot.slane %v90, %v3048
    %v3050 = vlaneseq
    %v3051 = vshrl.u32 %v3050, 7
    %v3052 = vsub.s32 7, %v3051
    %v3053 = vrot.slane %v90, %v3052
    %v3054 = vlaneseq
    %v3055 = vshrl.u32 %v3054, 7
    %v3056 = vsub.s32 0, %v3055
    %v3057 = vrot.slane %v91, %v3056
    %v3058 = vlaneseq
    %v3059 = vshrl.u32 %v3058, 7
    %v3060 = vsub.s32 1, %v3059
    %v3061 = vrot.slane %v91, %v3060
    %v3062 = vlaneseq
    %v3063 = vshrl.u32 %v3062, 7
    %v3064 = vsub.s32 2, %v3063
    %v3065 = vrot.slane %v91, %v3064
    %v3066 = vlaneseq
    %v3067 = vshrl.u32 %v3066, 7
    %v3068 = vsub.s32 3, %v3067
    %v3069 = vrot.slane %v91, %v3068
    %v3070 = vlaneseq
    %v3071 = vshrl.u32 %v3070, 7
    %v3072 = vsub.s32 4, %v3071
    %v3073 = vrot.slane %v91, %v3072
    %v3074 = vlaneseq
    %v3075 = vshrl.u32 %v3074, 7
    %v3076 = vsub.s32 5, %v3075
    %v3077 = vrot.slane %v91, %v3076
    %v3092 = vmul.f32 %v2768, %v3025
    %v3093 = vmul.f32 %v2770, %v3029
    %v3094 = vmul.f32 %v2809, %v3033
    %v3095 = vmul.f32 %v2811, %v3037
    %v3096 = vmul.f32 %v2850, %v3041
    %v3097 = vmul.f32 %v2852, %v3045
    %v3098 = vmul.f32 %v2891, %v3049
    %v3099 = vmul.f32 %v2893, %v3053
    %v3100 = vmul.f32 %v2932, %v3057
    %v3101 = vmul.f32 %v2934, %v3061
    %v3102 = vmul.f32 %v2973, %v3065
    %v3103 = vmul.f32 %v2975, %v3069
    %v3104 = vmul.f32 %v3014, %v3073
    %v3105 = vmul.f32 %v3016, %v3077
    %v3106 = vsel %vm2688, %v3092, 0.0
    %v3107 = vsel %vm2688, %v3093, 0.0
    %v3108 = vadd.f32 %v3106, %v3107
    %v3109 = vsel %vm2688, %v3094, 0.0
    %v3110 = vadd.f32 %v3108, %v3109
    %v3111 = vsel %vm2688, %v3095, 0.0
    %v3112 = vadd.f32 %v3110, %v3111
    %v3113 = vsel %vm2688, %v3096, 0.0
    %v3114 = vadd.f32 %v3112, %v3113
    %v3115 = vsel %vm2688, %v3097, 0.0
    %v3116 = vadd.f32 %v3114, %v3115
    %v3117 = vsel %vm2688, %v3098, 0.0
    %v3118 = vadd.f32 %v3116, %v3117
    %v3119 = vsel %vm2688, %v3099, 0.0
    %v3120 = vadd.f32 %v3118, %v3119
    %v3121 = vsel %vm2688, %v3100, 0.0
    %v3122 = vadd.f32 %v3120, %v3121
    %v3123 = vsel %vm2688, %v3101, 0.0
    %v3124 = vadd.f32 %v3122, %v3123
    %v3125 = vsel %vm2688, %v3102, 0.0
    %v3126 = vadd.f32 %v3124, %v3125
    %v3127 = vsel %vm2688, %v3103, 0.0
    %v3128 = vadd.f32 %v3126, %v3127
    %v3129 = vsel %vm2688, %v3104, 0.0
    %v3130 = vadd.f32 %v3128, %v3129
    %v3131 = vsel %vm2688, %v3105, 0.0
    %v3132 = vadd.f32 %v3130, %v3131
    %3133 = vadd.xlane.f32.xlu0 %v3132
    %v3134 = vpop.xlane.xlu0 %3133
    %v3135 = vmul.f32 %v3134, 0.00086805556
    %v3136 = vsub.f32 %v2768, %v3135
    %v3137 = vsub.f32 %v2770, %v3135
    %v3138 = vsub.f32 %v2809, %v3135
    %v3139 = vsub.f32 %v2811, %v3135
    %v3140 = vsub.f32 %v2850, %v3135
    %v3141 = vsub.f32 %v2852, %v3135
    %v3142 = vsub.f32 %v2891, %v3135
    %v3143 = vsub.f32 %v2893, %v3135
    %v3144 = vsub.f32 %v2932, %v3135
    %v3145 = vsub.f32 %v2934, %v3135
    %v3146 = vsub.f32 %v2973, %v3135
    %v3147 = vsub.f32 %v2975, %v3135
    %v3148 = vsub.f32 %v3014, %v3135
    %v3149 = vsub.f32 %v3016, %v3135
    %v3150 = vmul.f32 %v3136, %v3136
    %v3151 = vmul.f32 %v3137, %v3137
    %v3152 = vmul.f32 %v3138, %v3138
    %v3153 = vmul.f32 %v3139, %v3139
    %v3154 = vmul.f32 %v3140, %v3140
    %v3155 = vmul.f32 %v3141, %v3141
    %v3156 = vmul.f32 %v3142, %v3142
    %v3157 = vmul.f32 %v3143, %v3143
    %v3158 = vmul.f32 %v3144, %v3144
    %v3159 = vmul.f32 %v3145, %v3145
    %v3160 = vmul.f32 %v3146, %v3146
    %v3161 = vmul.f32 %v3147, %v3147
    %v3162 = vmul.f32 %v3148, %v3148
    %v3163 = vmul.f32 %v3149, %v3149
    %v3164 = vmul.f32 %v3150, %v3025
    %v3165 = vmul.f32 %v3151, %v3029
    %v3166 = vmul.f32 %v3152, %v3033
    %v3167 = vmul.f32 %v3153, %v3037
    %v3168 = vmul.f32 %v3154, %v3041
    %v3169 = vmul.f32 %v3155, %v3045
    %v3170 = vmul.f32 %v3156, %v3049
    %v3171 = vmul.f32 %v3157, %v3053
    %v3172 = vmul.f32 %v3158, %v3057
    %v3173 = vmul.f32 %v3159, %v3061
    %v3174 = vmul.f32 %v3160, %v3065
    %v3175 = vmul.f32 %v3161, %v3069
    %v3176 = vmul.f32 %v3162, %v3073
    %v3177 = vmul.f32 %v3163, %v3077
    %v3178 = vsel %vm2688, %v3164, 0.0
    %v3179 = vsel %vm2688, %v3165, 0.0
    %v3180 = vadd.f32 %v3178, %v3179
    %v3181 = vsel %vm2688, %v3166, 0.0
    %v3182 = vadd.f32 %v3180, %v3181
    %v3183 = vsel %vm2688, %v3167, 0.0
    %v3184 = vadd.f32 %v3182, %v3183
    %v3185 = vsel %vm2688, %v3168, 0.0
    %v3186 = vadd.f32 %v3184, %v3185
    %v3187 = vsel %vm2688, %v3169, 0.0
    %v3188 = vadd.f32 %v3186, %v3187
    %v3189 = vsel %vm2688, %v3170, 0.0
    %v3190 = vadd.f32 %v3188, %v3189
    %v3191 = vsel %vm2688, %v3171, 0.0
    %v3192 = vadd.f32 %v3190, %v3191
    %v3193 = vsel %vm2688, %v3172, 0.0
    %v3194 = vadd.f32 %v3192, %v3193
    %v3195 = vsel %vm2688, %v3173, 0.0
    %v3196 = vadd.f32 %v3194, %v3195
    %v3197 = vsel %vm2688, %v3174, 0.0
    %v3198 = vadd.f32 %v3196, %v3197
    %v3199 = vsel %vm2688, %v3175, 0.0
    %v3200 = vadd.f32 %v3198, %v3199
    %v3201 = vsel %vm2688, %v3176, 0.0
    %v3202 = vadd.f32 %v3200, %v3201
    %v3203 = vsel %vm2688, %v3177, 0.0
    %v3204 = vadd.f32 %v3202, %v3203
    %3205 = vadd.xlane.f32.xlu0 %v3204
    %v3206 = vpop.xlane.xlu0 %3205
    %v3207 = vmul.f32 %v3206, 0.00086805556
    %v3208 = vadd.f32 %v3207, 1e-05
    %v3209 = vrsqrt.pop %v3208
    %v3210 = vmul.f32 %v3136, %v3209
    %v3211 = vmul.f32 %v3137, %v3209
    %v3212 = vmul.f32 %v3138, %v3209
    %v3213 = vmul.f32 %v3139, %v3209
    %v3214 = vmul.f32 %v3140, %v3209
    %v3215 = vmul.f32 %v3141, %v3209
    %v3216 = vmul.f32 %v3142, %v3209
    %v3217 = vmul.f32 %v3143, %v3209
    %v3218 = vmul.f32 %v3144, %v3209
    %v3219 = vmul.f32 %v3145, %v3209
    %v3220 = vmul.f32 %v3146, %v3209
    %v3221 = vmul.f32 %v3147, %v3209
    %v3222 = vmul.f32 %v3148, %v3209
    %v3223 = vmul.f32 %v3149, %v3209
    %v3224 = vld [vmem:[%s3] sm:$0x3f]
    %3226 = vset.pattern.permute.xlu0 0
    %3227 = vperm.xlu0 %3226, %v3224
    %v3228 = vpop.permute.xlu0 %3227
    %v3230 = vmul.f32 %v3210, %v3228
    %v3231 = vmul.f32 %v3211, %v3228
    %v3232 = vmul.f32 %v3212, %v3228
    %v3233 = vmul.f32 %v3213, %v3228
    %v3234 = vmul.f32 %v3214, %v3228
    %v3235 = vmul.f32 %v3215, %v3228
    %v3236 = vmul.f32 %v3216, %v3228
    %v3237 = vmul.f32 %v3217, %v3228
    %v3238 = vmul.f32 %v3218, %v3228
    %v3239 = vmul.f32 %v3219, %v3228
    %v3240 = vmul.f32 %v3220, %v3228
    %v3241 = vmul.f32 %v3221, %v3228
    %v3242 = vmul.f32 %v3222, %v3228
    %v3243 = vmul.f32 %v3223, %v3228
    %v3244 = vld [vmem:[%s4] sm:$0x3f]
    %3246 = vset.pattern.permute.xlu0 0
    %3247 = vperm.xlu0 %3246, %v3244
    %v3248 = vpop.permute.xlu0 %3247
    %v3250 = vadd.f32 %v3230, %v3248
    %v3251 = vadd.f32 %v3231, %v3248
    %v3252 = vadd.f32 %v3232, %v3248
    %v3253 = vadd.f32 %v3233, %v3248
    %v3254 = vadd.f32 %v3234, %v3248
    %v3255 = vadd.f32 %v3235, %v3248
    %v3256 = vadd.f32 %v3236, %v3248
    %v3257 = vadd.f32 %v3237, %v3248
    %v3258 = vadd.f32 %v3238, %v3248
    %v3259 = vadd.f32 %v3239, %v3248
    %v3260 = vadd.f32 %v3240, %v3248
    %v3261 = vadd.f32 %v3241, %v3248
    %v3262 = vadd.f32 %v3242, %v3248
    %v3263 = vadd.f32 %v3243, %v3248
    %3264 = vrot.lane.b32.xlu0 %v3250, 127
    %v3265 = vpop.permute.xlu0 %3264
    %3266 = vrot.lane.b32.xlu0 %v3251, 127
    %v3267 = vpop.permute.xlu0 %3266
    %3268 = vrot.lane.b32.xlu0 %v3252, 127
    %v3269 = vpop.permute.xlu0 %3268
    %3270 = vrot.lane.b32.xlu0 %v3253, 127
    %v3271 = vpop.permute.xlu0 %3270
    %3272 = vrot.lane.b32.xlu0 %v3254, 127
    %v3273 = vpop.permute.xlu0 %3272
    %3274 = vrot.lane.b32.xlu0 %v3255, 127
    %v3275 = vpop.permute.xlu0 %3274
    %3276 = vrot.lane.b32.xlu0 %v3256, 127
    %v3277 = vpop.permute.xlu0 %3276
    %3278 = vrot.lane.b32.xlu0 %v3257, 127
    %v3279 = vpop.permute.xlu0 %3278
    %3280 = vrot.lane.b32.xlu0 %v3258, 127
    %v3281 = vpop.permute.xlu0 %3280
    %3282 = vrot.lane.b32.xlu0 %v3259, 127
    %v3283 = vpop.permute.xlu0 %3282
    %3284 = vrot.lane.b32.xlu0 %v3260, 127
    %v3285 = vpop.permute.xlu0 %3284
    %3286 = vrot.lane.b32.xlu0 %v3261, 127
    %v3287 = vpop.permute.xlu0 %3286
    %3288 = vrot.lane.b32.xlu0 %v3262, 127
    %v3289 = vpop.permute.xlu0 %3288
    %3290 = vrot.lane.b32.xlu0 %v3263, 127
    %v3291 = vpop.permute.xlu0 %3290
    %v3292 = vsel %vm159, %v3289, %v3291
    %v3293 = vsel %vm159, %v3287, %v3289
    %v3294 = vsel %vm159, %v3285, %v3287
    %v3295 = vsel %vm159, %v3283, %v3285
    %v3296 = vsel %vm159, %v3281, %v3283
    %v3297 = vsel %vm159, %v3279, %v3281
    %v3298 = vsel %vm159, %v3277, %v3279
    %v3299 = vsel %vm159, %v3275, %v3277
    %v3300 = vsel %vm159, %v3273, %v3275
    %v3301 = vsel %vm159, %v3271, %v3273
    %v3302 = vsel %vm159, %v3269, %v3271
    %v3303 = vsel %vm159, %v3267, %v3269
    %v3304 = vsel %vm159, %v3265, %v3267
    %v3305 = vsel %vm159, %v3291, %v3265
    %v3306 = vmax.f32 %v3250, %v3304
    %v3307 = vmax.f32 %v3251, %v3303
    %v3308 = vmax.f32 %v3252, %v3302
    %v3309 = vmax.f32 %v3253, %v3301
    %v3310 = vmax.f32 %v3254, %v3300
    %v3311 = vmax.f32 %v3255, %v3299
    %v3312 = vmax.f32 %v3256, %v3298
    %v3313 = vmax.f32 %v3257, %v3297
    %v3314 = vmax.f32 %v3258, %v3296
    %v3315 = vmax.f32 %v3259, %v3295
    %v3316 = vmax.f32 %v3260, %v3294
    %v3317 = vmax.f32 %v3261, %v3293
    %v3318 = vmax.f32 %v3262, %v3292
    %v3319 = vmax.f32 %v3263, %v3305
    %3320 = vrot.lane.b32.xlu0 %v3250, 100
    %v3321 = vpop.permute.xlu0 %3320
    %3322 = vrot.lane.b32.xlu0 %v3251, 100
    %v3323 = vpop.permute.xlu0 %3322
    %3324 = vrot.lane.b32.xlu0 %v3252, 100
    %v3325 = vpop.permute.xlu0 %3324
    %3326 = vrot.lane.b32.xlu0 %v3253, 100
    %v3327 = vpop.permute.xlu0 %3326
    %3328 = vrot.lane.b32.xlu0 %v3254, 100
    %v3329 = vpop.permute.xlu0 %3328
    %3330 = vrot.lane.b32.xlu0 %v3255, 100
    %v3331 = vpop.permute.xlu0 %3330
    %3332 = vrot.lane.b32.xlu0 %v3256, 100
    %v3333 = vpop.permute.xlu0 %3332
    %3334 = vrot.lane.b32.xlu0 %v3257, 100
    %v3335 = vpop.permute.xlu0 %3334
    %3336 = vrot.lane.b32.xlu0 %v3258, 100
    %v3337 = vpop.permute.xlu0 %3336
    %3338 = vrot.lane.b32.xlu0 %v3259, 100
    %v3339 = vpop.permute.xlu0 %3338
    %3340 = vrot.lane.b32.xlu0 %v3260, 100
    %v3341 = vpop.permute.xlu0 %3340
    %3342 = vrot.lane.b32.xlu0 %v3261, 100
    %v3343 = vpop.permute.xlu0 %3342
    %3344 = vrot.lane.b32.xlu0 %v3262, 100
    %v3345 = vpop.permute.xlu0 %3344
    %3346 = vrot.lane.b32.xlu0 %v3263, 100
    %v3347 = vpop.permute.xlu0 %3346
    %v3348 = vsel %vm569, %v3345, %v3347
    %v3349 = vsel %vm569, %v3343, %v3345
    %v3350 = vsel %vm569, %v3341, %v3343
    %v3351 = vsel %vm569, %v3339, %v3341
    %v3352 = vsel %vm569, %v3337, %v3339
    %v3353 = vsel %vm569, %v3335, %v3337
    %v3354 = vsel %vm569, %v3333, %v3335
    %v3355 = vsel %vm569, %v3331, %v3333
    %v3356 = vsel %vm569, %v3329, %v3331
    %v3357 = vsel %vm569, %v3327, %v3329
    %v3358 = vsel %vm569, %v3325, %v3327
    %v3359 = vsel %vm569, %v3323, %v3325
    %v3360 = vsel %vm569, %v3321, %v3323
    %v3361 = vsel %vm569, %v3347, %v3321
    %3362 = vrot.lane.b32.xlu0 %v3250, 99
    %v3363 = vpop.permute.xlu0 %3362
    %3364 = vrot.lane.b32.xlu0 %v3251, 99
    %v3365 = vpop.permute.xlu0 %3364
    %3366 = vrot.lane.b32.xlu0 %v3252, 99
    %v3367 = vpop.permute.xlu0 %3366
    %3368 = vrot.lane.b32.xlu0 %v3253, 99
    %v3369 = vpop.permute.xlu0 %3368
    %3370 = vrot.lane.b32.xlu0 %v3254, 99
    %v3371 = vpop.permute.xlu0 %3370
    %3372 = vrot.lane.b32.xlu0 %v3255, 99
    %v3373 = vpop.permute.xlu0 %3372
    %3374 = vrot.lane.b32.xlu0 %v3256, 99
    %v3375 = vpop.permute.xlu0 %3374
    %3376 = vrot.lane.b32.xlu0 %v3257, 99
    %v3377 = vpop.permute.xlu0 %3376
    %3378 = vrot.lane.b32.xlu0 %v3258, 99
    %v3379 = vpop.permute.xlu0 %3378
    %3380 = vrot.lane.b32.xlu0 %v3259, 99
    %v3381 = vpop.permute.xlu0 %3380
    %3382 = vrot.lane.b32.xlu0 %v3260, 99
    %v3383 = vpop.permute.xlu0 %3382
    %3384 = vrot.lane.b32.xlu0 %v3261, 99
    %v3385 = vpop.permute.xlu0 %3384
    %3386 = vrot.lane.b32.xlu0 %v3262, 99
    %v3387 = vpop.permute.xlu0 %3386
    %3388 = vrot.lane.b32.xlu0 %v3263, 99
    %v3389 = vpop.permute.xlu0 %3388
    %v3390 = vsel %vm682, %v3387, %v3389
    %v3391 = vsel %vm682, %v3385, %v3387
    %v3392 = vsel %vm682, %v3383, %v3385
    %v3393 = vsel %vm682, %v3381, %v3383
    %v3394 = vsel %vm682, %v3379, %v3381
    %v3395 = vsel %vm682, %v3377, %v3379
    %v3396 = vsel %vm682, %v3375, %v3377
    %v3397 = vsel %vm682, %v3373, %v3375
    %v3398 = vsel %vm682, %v3371, %v3373
    %v3399 = vsel %vm682, %v3369, %v3371
    %v3400 = vsel %vm682, %v3367, %v3369
    %v3401 = vsel %vm682, %v3365, %v3367
    %v3402 = vsel %vm682, %v3363, %v3365
    %v3403 = vsel %vm682, %v3389, %v3363
    %v3404 = vmax.f32 %v3360, %v3402
    %v3405 = vmax.f32 %v3359, %v3401
    %v3406 = vmax.f32 %v3358, %v3400
    %v3407 = vmax.f32 %v3357, %v3399
    %v3408 = vmax.f32 %v3356, %v3398
    %v3409 = vmax.f32 %v3355, %v3397
    %v3410 = vmax.f32 %v3354, %v3396
    %v3411 = vmax.f32 %v3353, %v3395
    %v3412 = vmax.f32 %v3352, %v3394
    %v3413 = vmax.f32 %v3351, %v3393
    %v3414 = vmax.f32 %v3350, %v3392
    %v3415 = vmax.f32 %v3349, %v3391
    %v3416 = vmax.f32 %v3348, %v3390
    %v3417 = vmax.f32 %v3361, %v3403
    %v3418 = vmax.f32 %v3306, %v3404
    %v3419 = vmax.f32 %v3307, %v3405
    %v3420 = vmax.f32 %v3308, %v3406
    %v3421 = vmax.f32 %v3309, %v3407
    %v3422 = vmax.f32 %v3310, %v3408
    %v3423 = vmax.f32 %v3311, %v3409
    %v3424 = vmax.f32 %v3312, %v3410
    %v3425 = vmax.f32 %v3313, %v3411
    %v3426 = vmax.f32 %v3314, %v3412
    %v3427 = vmax.f32 %v3315, %v3413
    %v3428 = vmax.f32 %v3316, %v3414
    %v3429 = vmax.f32 %v3317, %v3415
    %v3430 = vmax.f32 %v3318, %v3416
    %v3431 = vmax.f32 %v3319, %v3417
    %3432 = vst [vmem:[#allocation4] sm:$0x3f] %v3418
    %3433 = vst [vmem:[#allocation4 + $0x8] sm:$0x3f] %v3419
    %3434 = vst [vmem:[#allocation4 + $0x10] sm:$0x3f] %v3420
    %3435 = vst [vmem:[#allocation4 + $0x18] sm:$0x3f] %v3421
    %3436 = vst [vmem:[#allocation4 + $0x20] sm:$0x3f] %v3422
    %3437 = vst [vmem:[#allocation4 + $0x28] sm:$0x3f] %v3423
    %3438 = vst [vmem:[#allocation4 + $0x30] sm:$0x3f] %v3424
    %3439 = vst [vmem:[#allocation4 + $0x38] sm:$0x3f] %v3425
    %3440 = vst [vmem:[#allocation4 + $0x40] sm:$0x3f] %v3426
    %3441 = vst [vmem:[#allocation4 + $0x48] sm:$0x3f] %v3427
    %3442 = vst [vmem:[#allocation4 + $0x50] sm:$0x3f] %v3428
    %3443 = vst [vmem:[#allocation4 + $0x58] sm:$0x3f] %v3429
    %3444 = vst [vmem:[#allocation4 + $0x60] sm:$0x3f] %v3430
    %3445 = vst [vmem:[#allocation4 + $0x68] sm:$0x3f] %v3431
    %3446 = vrot.lane.b32.xlu0 %v3418, 127
    %v3447 = vpop.permute.xlu0 %3446
    %3448 = vrot.lane.b32.xlu0 %v3419, 127
    %v3449 = vpop.permute.xlu0 %3448
    %3450 = vrot.lane.b32.xlu0 %v3420, 127
    %v3451 = vpop.permute.xlu0 %3450
    %3452 = vrot.lane.b32.xlu0 %v3421, 127
    %v3453 = vpop.permute.xlu0 %3452
    %3454 = vrot.lane.b32.xlu0 %v3422, 127
    %v3455 = vpop.permute.xlu0 %3454
    %3456 = vrot.lane.b32.xlu0 %v3423, 127
    %v3457 = vpop.permute.xlu0 %3456
    %3458 = vrot.lane.b32.xlu0 %v3424, 127
    %v3459 = vpop.permute.xlu0 %3458
    %3460 = vrot.lane.b32.xlu0 %v3425, 127
    %v3461 = vpop.permute.xlu0 %3460
    %3462 = vrot.lane.b32.xlu0 %v3426, 127
    %v3463 = vpop.permute.xlu0 %3462
    %3464 = vrot.lane.b32.xlu0 %v3427, 127
    %v3465 = vpop.permute.xlu0 %3464
    %3466 = vrot.lane.b32.xlu0 %v3428, 127
    %v3467 = vpop.permute.xlu0 %3466
    %3468 = vrot.lane.b32.xlu0 %v3429, 127
    %v3469 = vpop.permute.xlu0 %3468
    %3470 = vrot.lane.b32.xlu0 %v3430, 127
    %v3471 = vpop.permute.xlu0 %3470
    %3472 = vrot.lane.b32.xlu0 %v3431, 127
    %v3473 = vpop.permute.xlu0 %3472
    %v3474 = vsel %vm159, %v3471, %v3473
    %v3475 = vsel %vm159, %v3469, %v3471
    %v3476 = vsel %vm159, %v3467, %v3469
    %v3477 = vsel %vm159, %v3465, %v3467
    %v3478 = vsel %vm159, %v3463, %v3465
    %v3479 = vsel %vm159, %v3461, %v3463
    %v3480 = vsel %vm159, %v3459, %v3461
    %v3481 = vsel %vm159, %v3457, %v3459
    %v3482 = vsel %vm159, %v3455, %v3457
    %v3483 = vsel %vm159, %v3453, %v3455
    %v3484 = vsel %vm159, %v3451, %v3453
    %v3485 = vsel %vm159, %v3449, %v3451
    %v3486 = vsel %vm159, %v3447, %v3449
    %v3487 = vsel %vm159, %v3473, %v3447
    %v3502 = vrot.slane %v3486, 2
    %v3503 = vrot.slane %v3485, 2
    %v3504 = vrot.slane %v3484, 2
    %v3505 = vrot.slane %v3483, 2
    %v3506 = vrot.slane %v3482, 2
    %v3507 = vrot.slane %v3481, 2
    %v3508 = vrot.slane %v3480, 2
    %v3509 = vrot.slane %v3479, 2
    %v3510 = vrot.slane %v3478, 2
    %v3511 = vrot.slane %v3477, 2
    %v3512 = vrot.slane %v3476, 2
    %v3513 = vrot.slane %v3475, 2
    %v3514 = vrot.slane %v3474, 2
    %v3515 = vrot.slane %v3487, 2
    %3530 = vst [vmem:[#allocation4] sm:$0xc0] %v3502
    %3531 = vst [vmem:[#allocation4 + $0x8] sm:$0xc0] %v3503
    %3532 = vst [vmem:[#allocation4 + $0x10] sm:$0xc0] %v3504
    %3533 = vst [vmem:[#allocation4 + $0x18] sm:$0xc0] %v3505
    %3534 = vst [vmem:[#allocation4 + $0x20] sm:$0xc0] %v3506
    %3535 = vst [vmem:[#allocation4 + $0x28] sm:$0xc0] %v3507
    %3536 = vst [vmem:[#allocation4 + $0x30] sm:$0xc0] %v3508
    %3537 = vst [vmem:[#allocation4 + $0x38] sm:$0xc0] %v3509
    %3538 = vst [vmem:[#allocation4 + $0x40] sm:$0xc0] %v3510
    %3539 = vst [vmem:[#allocation4 + $0x48] sm:$0xc0] %v3511
    %3540 = vst [vmem:[#allocation4 + $0x50] sm:$0xc0] %v3512
    %3541 = vst [vmem:[#allocation4 + $0x58] sm:$0xc0] %v3513
    %3542 = vst [vmem:[#allocation4 + $0x60] sm:$0xc0] %v3514
    %3543 = vst [vmem:[#allocation4 + $0x68] sm:$0xc0] %v3515
    %3544 = vst [vmem:[#allocation4 + $0x70] sm:$0xf] %v3502
    %3545 = vst [vmem:[#allocation4 + $0x78] sm:$0xf] %v3503
    %3546 = vst [vmem:[#allocation4 + $0x80] sm:$0xf] %v3504
    %3547 = vst [vmem:[#allocation4 + $0x88] sm:$0xf] %v3505
    %3548 = vst [vmem:[#allocation4 + $0x90] sm:$0xf] %v3506
    %3549 = vst [vmem:[#allocation4 + $0x98] sm:$0xf] %v3507
    %3550 = vst [vmem:[#allocation4 + $0xa0] sm:$0xf] %v3508
    %3551 = vst [vmem:[#allocation4 + $0xa8] sm:$0xf] %v3509
    %3552 = vst [vmem:[#allocation4 + $0xb0] sm:$0xf] %v3510
    %3553 = vst [vmem:[#allocation4 + $0xb8] sm:$0xf] %v3511
    %3554 = vst [vmem:[#allocation4 + $0xc0] sm:$0xf] %v3512
    %3555 = vst [vmem:[#allocation4 + $0xc8] sm:$0xf] %v3513
    %3556 = vst [vmem:[#allocation4 + $0xd0] sm:$0xf] %v3514
    %3557 = vst [vmem:[#allocation4 + $0xd8] sm:$0xf] %v3515
    %3558 = vrot.lane.b32.xlu0 %v3418, 126
    %v3559 = vpop.permute.xlu0 %3558
    %3560 = vrot.lane.b32.xlu0 %v3419, 126
    %v3561 = vpop.permute.xlu0 %3560
    %3562 = vrot.lane.b32.xlu0 %v3420, 126
    %v3563 = vpop.permute.xlu0 %3562
    %3564 = vrot.lane.b32.xlu0 %v3421, 126
    %v3565 = vpop.permute.xlu0 %3564
    %3566 = vrot.lane.b32.xlu0 %v3422, 126
    %v3567 = vpop.permute.xlu0 %3566
    %3568 = vrot.lane.b32.xlu0 %v3423, 126
    %v3569 = vpop.permute.xlu0 %3568
    %3570 = vrot.lane.b32.xlu0 %v3424, 126
    %v3571 = vpop.permute.xlu0 %3570
    %3572 = vrot.lane.b32.xlu0 %v3425, 126
    %v3573 = vpop.permute.xlu0 %3572
    %3574 = vrot.lane.b32.xlu0 %v3426, 126
    %v3575 = vpop.permute.xlu0 %3574
    %3576 = vrot.lane.b32.xlu0 %v3427, 126
    %v3577 = vpop.permute.xlu0 %3576
    %3578 = vrot.lane.b32.xlu0 %v3428, 126
    %v3579 = vpop.permute.xlu0 %3578
    %3580 = vrot.lane.b32.xlu0 %v3429, 126
    %v3581 = vpop.permute.xlu0 %3580
    %3582 = vrot.lane.b32.xlu0 %v3430, 126
    %v3583 = vpop.permute.xlu0 %3582
    %3584 = vrot.lane.b32.xlu0 %v3431, 126
    %v3585 = vpop.permute.xlu0 %3584
    %v3586 = vsel %vm258, %v3583, %v3585
    %v3587 = vsel %vm258, %v3581, %v3583
    %v3588 = vsel %vm258, %v3579, %v3581
    %v3589 = vsel %vm258, %v3577, %v3579
    %v3590 = vsel %vm258, %v3575, %v3577
    %v3591 = vsel %vm258, %v3573, %v3575
    %v3592 = vsel %vm258, %v3571, %v3573
    %v3593 = vsel %vm258, %v3569, %v3571
    %v3594 = vsel %vm258, %v3567, %v3569
    %v3595 = vsel %vm258, %v3565, %v3567
    %v3596 = vsel %vm258, %v3563, %v3565
    %v3597 = vsel %vm258, %v3561, %v3563
    %v3598 = vsel %vm258, %v3559, %v3561
    %v3599 = vsel %vm258, %v3585, %v3559
    %v3614 = vrot.slane %v3598, 4
    %v3615 = vrot.slane %v3597, 4
    %v3616 = vrot.slane %v3596, 4
    %v3617 = vrot.slane %v3595, 4
    %v3618 = vrot.slane %v3594, 4
    %v3619 = vrot.slane %v3593, 4
    %v3620 = vrot.slane %v3592, 4
    %v3621 = vrot.slane %v3591, 4
    %v3622 = vrot.slane %v3590, 4
    %v3623 = vrot.slane %v3589, 4
    %v3624 = vrot.slane %v3588, 4
    %v3625 = vrot.slane %v3587, 4
    %v3626 = vrot.slane %v3586, 4
    %v3627 = vrot.slane %v3599, 4
    %3642 = vst [vmem:[#allocation4 + $0x70] sm:$0xf0] %v3614
    %3643 = vst [vmem:[#allocation4 + $0x78] sm:$0xf0] %v3615
    %3644 = vst [vmem:[#allocation4 + $0x80] sm:$0xf0] %v3616
    %3645 = vst [vmem:[#allocation4 + $0x88] sm:$0xf0] %v3617
    %3646 = vst [vmem:[#allocation4 + $0x90] sm:$0xf0] %v3618
    %3647 = vst [vmem:[#allocation4 + $0x98] sm:$0xf0] %v3619
    %3648 = vst [vmem:[#allocation4 + $0xa0] sm:$0xf0] %v3620
    %3649 = vst [vmem:[#allocation4 + $0xa8] sm:$0xf0] %v3621
    %3650 = vst [vmem:[#allocation4 + $0xb0] sm:$0xf0] %v3622
    %3651 = vst [vmem:[#allocation4 + $0xb8] sm:$0xf0] %v3623
    %3652 = vst [vmem:[#allocation4 + $0xc0] sm:$0xf0] %v3624
    %3653 = vst [vmem:[#allocation4 + $0xc8] sm:$0xf0] %v3625
    %3654 = vst [vmem:[#allocation4 + $0xd0] sm:$0xf0] %v3626
    %3655 = vst [vmem:[#allocation4 + $0xd8] sm:$0xf0] %v3627
    %3656 = vst [vmem:[#allocation4 + $0xe0] sm:$0x3] %v3614
    %3657 = vst [vmem:[#allocation4 + $0xe8] sm:$0x3] %v3615
    %3658 = vst [vmem:[#allocation4 + $0xf0] sm:$0x3] %v3616
    %3659 = vst [vmem:[#allocation4 + $0xf8] sm:$0x3] %v3617
    %3660 = vst [vmem:[#allocation4 + $0x100] sm:$0x3] %v3618
    %3661 = vst [vmem:[#allocation4 + $0x108] sm:$0x3] %v3619
    %3662 = vst [vmem:[#allocation4 + $0x110] sm:$0x3] %v3620
    %3663 = vst [vmem:[#allocation4 + $0x118] sm:$0x3] %v3621
    %3664 = vst [vmem:[#allocation4 + $0x120] sm:$0x3] %v3622
    %3665 = vst [vmem:[#allocation4 + $0x128] sm:$0x3] %v3623
    %3666 = vst [vmem:[#allocation4 + $0x130] sm:$0x3] %v3624
    %3667 = vst [vmem:[#allocation4 + $0x138] sm:$0x3] %v3625
    %3668 = vst [vmem:[#allocation4 + $0x140] sm:$0x3] %v3626
    %3669 = vst [vmem:[#allocation4 + $0x148] sm:$0x3] %v3627
    %3670 = vrot.lane.b32.xlu0 %v3418, 125
    %v3671 = vpop.permute.xlu0 %3670
    %3672 = vrot.lane.b32.xlu0 %v3419, 125
    %v3673 = vpop.permute.xlu0 %3672
    %3674 = vrot.lane.b32.xlu0 %v3420, 125
    %v3675 = vpop.permute.xlu0 %3674
    %3676 = vrot.lane.b32.xlu0 %v3421, 125
    %v3677 = vpop.permute.xlu0 %3676
    %3678 = vrot.lane.b32.xlu0 %v3422, 125
    %v3679 = vpop.permute.xlu0 %3678
    %3680 = vrot.lane.b32.xlu0 %v3423, 125
    %v3681 = vpop.permute.xlu0 %3680
    %3682 = vrot.lane.b32.xlu0 %v3424, 125
    %v3683 = vpop.permute.xlu0 %3682
    %3684 = vrot.lane.b32.xlu0 %v3425, 125
    %v3685 = vpop.permute.xlu0 %3684
    %3686 = vrot.lane.b32.xlu0 %v3426, 125
    %v3687 = vpop.permute.xlu0 %3686
    %3688 = vrot.lane.b32.xlu0 %v3427, 125
    %v3689 = vpop.permute.xlu0 %3688
    %3690 = vrot.lane.b32.xlu0 %v3428, 125
    %v3691 = vpop.permute.xlu0 %3690
    %3692 = vrot.lane.b32.xlu0 %v3429, 125
    %v3693 = vpop.permute.xlu0 %3692
    %3694 = vrot.lane.b32.xlu0 %v3430, 125
    %v3695 = vpop.permute.xlu0 %3694
    %3696 = vrot.lane.b32.xlu0 %v3431, 125
    %v3697 = vpop.permute.xlu0 %3696
    %v3698 = vsel %vm371, %v3695, %v3697
    %v3699 = vsel %vm371, %v3693, %v3695
    %v3700 = vsel %vm371, %v3691, %v3693
    %v3701 = vsel %vm371, %v3689, %v3691
    %v3702 = vsel %vm371, %v3687, %v3689
    %v3703 = vsel %vm371, %v3685, %v3687
    %v3704 = vsel %vm371, %v3683, %v3685
    %v3705 = vsel %vm371, %v3681, %v3683
    %v3706 = vsel %vm371, %v3679, %v3681
    %v3707 = vsel %vm371, %v3677, %v3679
    %v3708 = vsel %vm371, %v3675, %v3677
    %v3709 = vsel %vm371, %v3673, %v3675
    %v3710 = vsel %vm371, %v3671, %v3673
    %v3711 = vsel %vm371, %v3697, %v3671
    %v3726 = vrot.slane %v3710, 6
    %v3727 = vrot.slane %v3709, 6
    %v3728 = vrot.slane %v3708, 6
    %v3729 = vrot.slane %v3707, 6
    %v3730 = vrot.slane %v3706, 6
    %v3731 = vrot.slane %v3705, 6
    %v3732 = vrot.slane %v3704, 6
    %v3733 = vrot.slane %v3703, 6
    %v3734 = vrot.slane %v3702, 6
    %v3735 = vrot.slane %v3701, 6
    %v3736 = vrot.slane %v3700, 6
    %v3737 = vrot.slane %v3699, 6
    %v3738 = vrot.slane %v3698, 6
    %v3739 = vrot.slane %v3711, 6
    %3754 = vst [vmem:[#allocation4 + $0xe0] sm:$0xfc] %v3726
    %3755 = vst [vmem:[#allocation4 + $0xe8] sm:$0xfc] %v3727
    %3756 = vst [vmem:[#allocation4 + $0xf0] sm:$0xfc] %v3728
    %3757 = vst [vmem:[#allocation4 + $0xf8] sm:$0xfc] %v3729
    %3758 = vst [vmem:[#allocation4 + $0x100] sm:$0xfc] %v3730
    %3759 = vst [vmem:[#allocation4 + $0x108] sm:$0xfc] %v3731
    %3760 = vst [vmem:[#allocation4 + $0x110] sm:$0xfc] %v3732
    %3761 = vst [vmem:[#allocation4 + $0x118] sm:$0xfc] %v3733
    %3762 = vst [vmem:[#allocation4 + $0x120] sm:$0xfc] %v3734
    %3763 = vst [vmem:[#allocation4 + $0x128] sm:$0xfc] %v3735
    %3764 = vst [vmem:[#allocation4 + $0x130] sm:$0xfc] %v3736
    %3765 = vst [vmem:[#allocation4 + $0x138] sm:$0xfc] %v3737
    %3766 = vst [vmem:[#allocation4 + $0x140] sm:$0xfc] %v3738
    %3767 = vst [vmem:[#allocation4 + $0x148] sm:$0xfc] %v3739
    %3768 = vrot.lane.b32.xlu0 %v3418, 124
    %v3769 = vpop.permute.xlu0 %3768
    %3770 = vrot.lane.b32.xlu0 %v3419, 124
    %v3771 = vpop.permute.xlu0 %3770
    %3772 = vrot.lane.b32.xlu0 %v3420, 124
    %v3773 = vpop.permute.xlu0 %3772
    %3774 = vrot.lane.b32.xlu0 %v3421, 124
    %v3775 = vpop.permute.xlu0 %3774
    %3776 = vrot.lane.b32.xlu0 %v3422, 124
    %v3777 = vpop.permute.xlu0 %3776
    %3778 = vrot.lane.b32.xlu0 %v3423, 124
    %v3779 = vpop.permute.xlu0 %3778
    %3780 = vrot.lane.b32.xlu0 %v3424, 124
    %v3781 = vpop.permute.xlu0 %3780
    %3782 = vrot.lane.b32.xlu0 %v3425, 124
    %v3783 = vpop.permute.xlu0 %3782
    %3784 = vrot.lane.b32.xlu0 %v3426, 124
    %v3785 = vpop.permute.xlu0 %3784
    %3786 = vrot.lane.b32.xlu0 %v3427, 124
    %v3787 = vpop.permute.xlu0 %3786
    %3788 = vrot.lane.b32.xlu0 %v3428, 124
    %v3789 = vpop.permute.xlu0 %3788
    %3790 = vrot.lane.b32.xlu0 %v3429, 124
    %v3791 = vpop.permute.xlu0 %3790
    %3792 = vrot.lane.b32.xlu0 %v3430, 124
    %v3793 = vpop.permute.xlu0 %3792
    %3794 = vrot.lane.b32.xlu0 %v3431, 124
    %v3795 = vpop.permute.xlu0 %3794
    %v3796 = vsel %vm470, %v3793, %v3795
    %v3797 = vsel %vm470, %v3791, %v3793
    %v3798 = vsel %vm470, %v3789, %v3791
    %v3799 = vsel %vm470, %v3787, %v3789
    %v3800 = vsel %vm470, %v3785, %v3787
    %v3801 = vsel %vm470, %v3783, %v3785
    %v3802 = vsel %vm470, %v3781, %v3783
    %v3803 = vsel %vm470, %v3779, %v3781
    %v3804 = vsel %vm470, %v3777, %v3779
    %v3805 = vsel %vm470, %v3775, %v3777
    %v3806 = vsel %vm470, %v3773, %v3775
    %v3807 = vsel %vm470, %v3771, %v3773
    %v3808 = vsel %vm470, %v3769, %v3771
    %v3809 = vsel %vm470, %v3795, %v3769
    %3810 = vst [vmem:[#allocation4 + $0x150] sm:$0x3f] %v3808
    %3811 = vst [vmem:[#allocation4 + $0x158] sm:$0x3f] %v3807
    %3812 = vst [vmem:[#allocation4 + $0x160] sm:$0x3f] %v3806
    %3813 = vst [vmem:[#allocation4 + $0x168] sm:$0x3f] %v3805
    %3814 = vst [vmem:[#allocation4 + $0x170] sm:$0x3f] %v3804
    %3815 = vst [vmem:[#allocation4 + $0x178] sm:$0x3f] %v3803
    %3816 = vst [vmem:[#allocation4 + $0x180] sm:$0x3f] %v3802
    %3817 = vst [vmem:[#allocation4 + $0x188] sm:$0x3f] %v3801
    %3818 = vst [vmem:[#allocation4 + $0x190] sm:$0x3f] %v3800
    %3819 = vst [vmem:[#allocation4 + $0x198] sm:$0x3f] %v3799
    %3820 = vst [vmem:[#allocation4 + $0x1a0] sm:$0x3f] %v3798
    %3821 = vst [vmem:[#allocation4 + $0x1a8] sm:$0x3f] %v3797
    %3822 = vst [vmem:[#allocation4 + $0x1b0] sm:$0x3f] %v3796
    %3823 = vst [vmem:[#allocation4 + $0x1b8] sm:$0x3f] %v3809
    %3824 = vrot.lane.b32.xlu0 %v3418, 100
    %v3825 = vpop.permute.xlu0 %3824
    %3826 = vrot.lane.b32.xlu0 %v3419, 100
    %v3827 = vpop.permute.xlu0 %3826
    %3828 = vrot.lane.b32.xlu0 %v3420, 100
    %v3829 = vpop.permute.xlu0 %3828
    %3830 = vrot.lane.b32.xlu0 %v3421, 100
    %v3831 = vpop.permute.xlu0 %3830
    %3832 = vrot.lane.b32.xlu0 %v3422, 100
    %v3833 = vpop.permute.xlu0 %3832
    %3834 = vrot.lane.b32.xlu0 %v3423, 100
    %v3835 = vpop.permute.xlu0 %3834
    %3836 = vrot.lane.b32.xlu0 %v3424, 100
    %v3837 = vpop.permute.xlu0 %3836
    %3838 = vrot.lane.b32.xlu0 %v3425, 100
    %v3839 = vpop.permute.xlu0 %3838
    %3840 = vrot.lane.b32.xlu0 %v3426, 100
    %v3841 = vpop.permute.xlu0 %3840
    %3842 = vrot.lane.b32.xlu0 %v3427, 100
    %v3843 = vpop.permute.xlu0 %3842
    %3844 = vrot.lane.b32.xlu0 %v3428, 100
    %v3845 = vpop.permute.xlu0 %3844
    %3846 = vrot.lane.b32.xlu0 %v3429, 100
    %v3847 = vpop.permute.xlu0 %3846
    %3848 = vrot.lane.b32.xlu0 %v3430, 100
    %v3849 = vpop.permute.xlu0 %3848
    %3850 = vrot.lane.b32.xlu0 %v3431, 100
    %v3851 = vpop.permute.xlu0 %3850
    %v3852 = vsel %vm569, %v3849, %v3851
    %v3853 = vsel %vm569, %v3847, %v3849
    %v3854 = vsel %vm569, %v3845, %v3847
    %v3855 = vsel %vm569, %v3843, %v3845
    %v3856 = vsel %vm569, %v3841, %v3843
    %v3857 = vsel %vm569, %v3839, %v3841
    %v3858 = vsel %vm569, %v3837, %v3839
    %v3859 = vsel %vm569, %v3835, %v3837
    %v3860 = vsel %vm569, %v3833, %v3835
    %v3861 = vsel %vm569, %v3831, %v3833
    %v3862 = vsel %vm569, %v3829, %v3831
    %v3863 = vsel %vm569, %v3827, %v3829
    %v3864 = vsel %vm569, %v3825, %v3827
    %v3865 = vsel %vm569, %v3851, %v3825
    %v3880 = vrot.slane %v3864, 2
    %v3881 = vrot.slane %v3863, 2
    %v3882 = vrot.slane %v3862, 2
    %v3883 = vrot.slane %v3861, 2
    %v3884 = vrot.slane %v3860, 2
    %v3885 = vrot.slane %v3859, 2
    %v3886 = vrot.slane %v3858, 2
    %v3887 = vrot.slane %v3857, 2
    %v3888 = vrot.slane %v3856, 2
    %v3889 = vrot.slane %v3855, 2
    %v3890 = vrot.slane %v3854, 2
    %v3891 = vrot.slane %v3853, 2
    %v3892 = vrot.slane %v3852, 2
    %v3893 = vrot.slane %v3865, 2
    %3908 = vst [vmem:[#allocation4 + $0x150] sm:$0xc0] %v3880
    %3909 = vst [vmem:[#allocation4 + $0x158] sm:$0xc0] %v3881
    %3910 = vst [vmem:[#allocation4 + $0x160] sm:$0xc0] %v3882
    %3911 = vst [vmem:[#allocation4 + $0x168] sm:$0xc0] %v3883
    %3912 = vst [vmem:[#allocation4 + $0x170] sm:$0xc0] %v3884
    %3913 = vst [vmem:[#allocation4 + $0x178] sm:$0xc0] %v3885
    %3914 = vst [vmem:[#allocation4 + $0x180] sm:$0xc0] %v3886
    %3915 = vst [vmem:[#allocation4 + $0x188] sm:$0xc0] %v3887
    %3916 = vst [vmem:[#allocation4 + $0x190] sm:$0xc0] %v3888
    %3917 = vst [vmem:[#allocation4 + $0x198] sm:$0xc0] %v3889
    %3918 = vst [vmem:[#allocation4 + $0x1a0] sm:$0xc0] %v3890
    %3919 = vst [vmem:[#allocation4 + $0x1a8] sm:$0xc0] %v3891
    %3920 = vst [vmem:[#allocation4 + $0x1b0] sm:$0xc0] %v3892
    %3921 = vst [vmem:[#allocation4 + $0x1b8] sm:$0xc0] %v3893
    %3922 = vst [vmem:[#allocation4 + $0x1c0] sm:$0xf] %v3880
    %3923 = vst [vmem:[#allocation4 + $0x1c8] sm:$0xf] %v3881
    %3924 = vst [vmem:[#allocation4 + $0x1d0] sm:$0xf] %v3882
    %3925 = vst [vmem:[#allocation4 + $0x1d8] sm:$0xf] %v3883
    %3926 = vst [vmem:[#allocation4 + $0x1e0] sm:$0xf] %v3884
    %3927 = vst [vmem:[#allocation4 + $0x1e8] sm:$0xf] %v3885
    %3928 = vst [vmem:[#allocation4 + $0x1f0] sm:$0xf] %v3886
    %3929 = vst [vmem:[#allocation4 + $0x1f8] sm:$0xf] %v3887
    %3930 = vst [vmem:[#allocation4 + $0x200] sm:$0xf] %v3888
    %3931 = vst [vmem:[#allocation4 + $0x208] sm:$0xf] %v3889
    %3932 = vst [vmem:[#allocation4 + $0x210] sm:$0xf] %v3890
    %3933 = vst [vmem:[#allocation4 + $0x218] sm:$0xf] %v3891
    %3934 = vst [vmem:[#allocation4 + $0x220] sm:$0xf] %v3892
    %3935 = vst [vmem:[#allocation4 + $0x228] sm:$0xf] %v3893
    %3936 = vrot.lane.b32.xlu0 %v3418, 99
    %v3937 = vpop.permute.xlu0 %3936
    %3938 = vrot.lane.b32.xlu0 %v3419, 99
    %v3939 = vpop.permute.xlu0 %3938
    %3940 = vrot.lane.b32.xlu0 %v3420, 99
    %v3941 = vpop.permute.xlu0 %3940
    %3942 = vrot.lane.b32.xlu0 %v3421, 99
    %v3943 = vpop.permute.xlu0 %3942
    %3944 = vrot.lane.b32.xlu0 %v3422, 99
    %v3945 = vpop.permute.xlu0 %3944
    %3946 = vrot.lane.b32.xlu0 %v3423, 99
    %v3947 = vpop.permute.xlu0 %3946
    %3948 = vrot.lane.b32.xlu0 %v3424, 99
    %v3949 = vpop.permute.xlu0 %3948
    %3950 = vrot.lane.b32.xlu0 %v3425, 99
    %v3951 = vpop.permute.xlu0 %3950
    %3952 = vrot.lane.b32.xlu0 %v3426, 99
    %v3953 = vpop.permute.xlu0 %3952
    %3954 = vrot.lane.b32.xlu0 %v3427, 99
    %v3955 = vpop.permute.xlu0 %3954
    %3956 = vrot.lane.b32.xlu0 %v3428, 99
    %v3957 = vpop.permute.xlu0 %3956
    %3958 = vrot.lane.b32.xlu0 %v3429, 99
    %v3959 = vpop.permute.xlu0 %3958
    %3960 = vrot.lane.b32.xlu0 %v3430, 99
    %v3961 = vpop.permute.xlu0 %3960
    %3962 = vrot.lane.b32.xlu0 %v3431, 99
    %v3963 = vpop.permute.xlu0 %3962
    %v3964 = vsel %vm682, %v3961, %v3963
    %v3965 = vsel %vm682, %v3959, %v3961
    %v3966 = vsel %vm682, %v3957, %v3959
    %v3967 = vsel %vm682, %v3955, %v3957
    %v3968 = vsel %vm682, %v3953, %v3955
    %v3969 = vsel %vm682, %v3951, %v3953
    %v3970 = vsel %vm682, %v3949, %v3951
    %v3971 = vsel %vm682, %v3947, %v3949
    %v3972 = vsel %vm682, %v3945, %v3947
    %v3973 = vsel %vm682, %v3943, %v3945
    %v3974 = vsel %vm682, %v3941, %v3943
    %v3975 = vsel %vm682, %v3939, %v3941
    %v3976 = vsel %vm682, %v3937, %v3939
    %v3977 = vsel %vm682, %v3963, %v3937
    %v3992 = vrot.slane %v3976, 4
    %v3993 = vrot.slane %v3975, 4
    %v3994 = vrot.slane %v3974, 4
    %v3995 = vrot.slane %v3973, 4
    %v3996 = vrot.slane %v3972, 4
    %v3997 = vrot.slane %v3971, 4
    %v3998 = vrot.slane %v3970, 4
    %v3999 = vrot.slane %v3969, 4
    %v4000 = vrot.slane %v3968, 4
    %v4001 = vrot.slane %v3967, 4
    %v4002 = vrot.slane %v3966, 4
    %v4003 = vrot.slane %v3965, 4
    %v4004 = vrot.slane %v3964, 4
    %v4005 = vrot.slane %v3977, 4
    %4020 = vst [vmem:[#allocation4 + $0x1c0] sm:$0xf0] %v3992
    %4021 = vst [vmem:[#allocation4 + $0x1c8] sm:$0xf0] %v3993
    %4022 = vst [vmem:[#allocation4 + $0x1d0] sm:$0xf0] %v3994
    %4023 = vst [vmem:[#allocation4 + $0x1d8] sm:$0xf0] %v3995
    %4024 = vst [vmem:[#allocation4 + $0x1e0] sm:$0xf0] %v3996
    %4025 = vst [vmem:[#allocation4 + $0x1e8] sm:$0xf0] %v3997
    %4026 = vst [vmem:[#allocation4 + $0x1f0] sm:$0xf0] %v3998
    %4027 = vst [vmem:[#allocation4 + $0x1f8] sm:$0xf0] %v3999
    %4028 = vst [vmem:[#allocation4 + $0x200] sm:$0xf0] %v4000
    %4029 = vst [vmem:[#allocation4 + $0x208] sm:$0xf0] %v4001
    %4030 = vst [vmem:[#allocation4 + $0x210] sm:$0xf0] %v4002
    %4031 = vst [vmem:[#allocation4 + $0x218] sm:$0xf0] %v4003
    %4032 = vst [vmem:[#allocation4 + $0x220] sm:$0xf0] %v4004
    %4033 = vst [vmem:[#allocation4 + $0x228] sm:$0xf0] %v4005
    %4034 = vst [vmem:[#allocation4 + $0x230] sm:$0x3] %v3992
    %4035 = vst [vmem:[#allocation4 + $0x238] sm:$0x3] %v3993
    %4036 = vst [vmem:[#allocation4 + $0x240] sm:$0x3] %v3994
    %4037 = vst [vmem:[#allocation4 + $0x248] sm:$0x3] %v3995
    %4038 = vst [vmem:[#allocation4 + $0x250] sm:$0x3] %v3996
    %4039 = vst [vmem:[#allocation4 + $0x258] sm:$0x3] %v3997
    %4040 = vst [vmem:[#allocation4 + $0x260] sm:$0x3] %v3998
    %4041 = vst [vmem:[#allocation4 + $0x268] sm:$0x3] %v3999
    %4042 = vst [vmem:[#allocation4 + $0x270] sm:$0x3] %v4000
    %4043 = vst [vmem:[#allocation4 + $0x278] sm:$0x3] %v4001
    %4044 = vst [vmem:[#allocation4 + $0x280] sm:$0x3] %v4002
    %4045 = vst [vmem:[#allocation4 + $0x288] sm:$0x3] %v4003
    %4046 = vst [vmem:[#allocation4 + $0x290] sm:$0x3] %v4004
    %4047 = vst [vmem:[#allocation4 + $0x298] sm:$0x3] %v4005
    %4048 = vrot.lane.b32.xlu0 %v3418, 98
    %v4049 = vpop.permute.xlu0 %4048
    %4050 = vrot.lane.b32.xlu0 %v3419, 98
    %v4051 = vpop.permute.xlu0 %4050
    %4052 = vrot.lane.b32.xlu0 %v3420, 98
    %v4053 = vpop.permute.xlu0 %4052
    %4054 = vrot.lane.b32.xlu0 %v3421, 98
    %v4055 = vpop.permute.xlu0 %4054
    %4056 = vrot.lane.b32.xlu0 %v3422, 98
    %v4057 = vpop.permute.xlu0 %4056
    %4058 = vrot.lane.b32.xlu0 %v3423, 98
    %v4059 = vpop.permute.xlu0 %4058
    %4060 = vrot.lane.b32.xlu0 %v3424, 98
    %v4061 = vpop.permute.xlu0 %4060
    %4062 = vrot.lane.b32.xlu0 %v3425, 98
    %v4063 = vpop.permute.xlu0 %4062
    %4064 = vrot.lane.b32.xlu0 %v3426, 98
    %v4065 = vpop.permute.xlu0 %4064
    %4066 = vrot.lane.b32.xlu0 %v3427, 98
    %v4067 = vpop.permute.xlu0 %4066
    %4068 = vrot.lane.b32.xlu0 %v3428, 98
    %v4069 = vpop.permute.xlu0 %4068
    %4070 = vrot.lane.b32.xlu0 %v3429, 98
    %v4071 = vpop.permute.xlu0 %4070
    %4072 = vrot.lane.b32.xlu0 %v3430, 98
    %v4073 = vpop.permute.xlu0 %4072
    %4074 = vrot.lane.b32.xlu0 %v3431, 98
    %v4075 = vpop.permute.xlu0 %4074
    %v4076 = vsel %vm781, %v4073, %v4075
    %v4077 = vsel %vm781, %v4071, %v4073
    %v4078 = vsel %vm781, %v4069, %v4071
    %v4079 = vsel %vm781, %v4067, %v4069
    %v4080 = vsel %vm781, %v4065, %v4067
    %v4081 = vsel %vm781, %v4063, %v4065
    %v4082 = vsel %vm781, %v4061, %v4063
    %v4083 = vsel %vm781, %v4059, %v4061
    %v4084 = vsel %vm781, %v4057, %v4059
    %v4085 = vsel %vm781, %v4055, %v4057
    %v4086 = vsel %vm781, %v4053, %v4055
    %v4087 = vsel %vm781, %v4051, %v4053
    %v4088 = vsel %vm781, %v4049, %v4051
    %v4089 = vsel %vm781, %v4075, %v4049
    %v4104 = vrot.slane %v4088, 6
    %v4105 = vrot.slane %v4087, 6
    %v4106 = vrot.slane %v4086, 6
    %v4107 = vrot.slane %v4085, 6
    %v4108 = vrot.slane %v4084, 6
    %v4109 = vrot.slane %v4083, 6
    %v4110 = vrot.slane %v4082, 6
    %v4111 = vrot.slane %v4081, 6
    %v4112 = vrot.slane %v4080, 6
    %v4113 = vrot.slane %v4079, 6
    %v4114 = vrot.slane %v4078, 6
    %v4115 = vrot.slane %v4077, 6
    %v4116 = vrot.slane %v4076, 6
    %v4117 = vrot.slane %v4089, 6
    %4132 = vst [vmem:[#allocation4 + $0x230] sm:$0xfc] %v4104
    %4133 = vst [vmem:[#allocation4 + $0x238] sm:$0xfc] %v4105
    %4134 = vst [vmem:[#allocation4 + $0x240] sm:$0xfc] %v4106
    %4135 = vst [vmem:[#allocation4 + $0x248] sm:$0xfc] %v4107
    %4136 = vst [vmem:[#allocation4 + $0x250] sm:$0xfc] %v4108
    %4137 = vst [vmem:[#allocation4 + $0x258] sm:$0xfc] %v4109
    %4138 = vst [vmem:[#allocation4 + $0x260] sm:$0xfc] %v4110
    %4139 = vst [vmem:[#allocation4 + $0x268] sm:$0xfc] %v4111
    %4140 = vst [vmem:[#allocation4 + $0x270] sm:$0xfc] %v4112
    %4141 = vst [vmem:[#allocation4 + $0x278] sm:$0xfc] %v4113
    %4142 = vst [vmem:[#allocation4 + $0x280] sm:$0xfc] %v4114
    %4143 = vst [vmem:[#allocation4 + $0x288] sm:$0xfc] %v4115
    %4144 = vst [vmem:[#allocation4 + $0x290] sm:$0xfc] %v4116
    %4145 = vst [vmem:[#allocation4 + $0x298] sm:$0xfc] %v4117
    %4146 = vrot.lane.b32.xlu0 %v3418, 97
    %v4147 = vpop.permute.xlu0 %4146
    %4148 = vrot.lane.b32.xlu0 %v3419, 97
    %v4149 = vpop.permute.xlu0 %4148
    %4150 = vrot.lane.b32.xlu0 %v3420, 97
    %v4151 = vpop.permute.xlu0 %4150
    %4152 = vrot.lane.b32.xlu0 %v3421, 97
    %v4153 = vpop.permute.xlu0 %4152
    %4154 = vrot.lane.b32.xlu0 %v3422, 97
    %v4155 = vpop.permute.xlu0 %4154
    %4156 = vrot.lane.b32.xlu0 %v3423, 97
    %v4157 = vpop.permute.xlu0 %4156
    %4158 = vrot.lane.b32.xlu0 %v3424, 97
    %v4159 = vpop.permute.xlu0 %4158
    %4160 = vrot.lane.b32.xlu0 %v3425, 97
    %v4161 = vpop.permute.xlu0 %4160
    %4162 = vrot.lane.b32.xlu0 %v3426, 97
    %v4163 = vpop.permute.xlu0 %4162
    %4164 = vrot.lane.b32.xlu0 %v3427, 97
    %v4165 = vpop.permute.xlu0 %4164
    %4166 = vrot.lane.b32.xlu0 %v3428, 97
    %v4167 = vpop.permute.xlu0 %4166
    %4168 = vrot.lane.b32.xlu0 %v3429, 97
    %v4169 = vpop.permute.xlu0 %4168
    %4170 = vrot.lane.b32.xlu0 %v3430, 97
    %v4171 = vpop.permute.xlu0 %4170
    %4172 = vrot.lane.b32.xlu0 %v3431, 97
    %v4173 = vpop.permute.xlu0 %4172
    %v4174 = vsel %vm880, %v4171, %v4173
    %v4175 = vsel %vm880, %v4169, %v4171
    %v4176 = vsel %vm880, %v4167, %v4169
    %v4177 = vsel %vm880, %v4165, %v4167
    %v4178 = vsel %vm880, %v4163, %v4165
    %v4179 = vsel %vm880, %v4161, %v4163
    %v4180 = vsel %vm880, %v4159, %v4161
    %v4181 = vsel %vm880, %v4157, %v4159
    %v4182 = vsel %vm880, %v4155, %v4157
    %v4183 = vsel %vm880, %v4153, %v4155
    %v4184 = vsel %vm880, %v4151, %v4153
    %v4185 = vsel %vm880, %v4149, %v4151
    %v4186 = vsel %vm880, %v4147, %v4149
    %v4187 = vsel %vm880, %v4173, %v4147
    %4188 = vst [vmem:[#allocation4 + $0x2a0] sm:$0x3f] %v4186
    %4189 = vst [vmem:[#allocation4 + $0x2a8] sm:$0x3f] %v4185
    %4190 = vst [vmem:[#allocation4 + $0x2b0] sm:$0x3f] %v4184
    %4191 = vst [vmem:[#allocation4 + $0x2b8] sm:$0x3f] %v4183
    %4192 = vst [vmem:[#allocation4 + $0x2c0] sm:$0x3f] %v4182
    %4193 = vst [vmem:[#allocation4 + $0x2c8] sm:$0x3f] %v4181
    %4194 = vst [vmem:[#allocation4 + $0x2d0] sm:$0x3f] %v4180
    %4195 = vst [vmem:[#allocation4 + $0x2d8] sm:$0x3f] %v4179
    %4196 = vst [vmem:[#allocation4 + $0x2e0] sm:$0x3f] %v4178
    %4197 = vst [vmem:[#allocation4 + $0x2e8] sm:$0x3f] %v4177
    %4198 = vst [vmem:[#allocation4 + $0x2f0] sm:$0x3f] %v4176
    %4199 = vst [vmem:[#allocation4 + $0x2f8] sm:$0x3f] %v4175
    %4200 = vst [vmem:[#allocation4 + $0x300] sm:$0x3f] %v4174
    %4201 = vst [vmem:[#allocation4 + $0x308] sm:$0x3f] %v4187
    %4202 = vrot.lane.b32.xlu0 %v3418, 96
    %v4203 = vpop.permute.xlu0 %4202
    %4204 = vrot.lane.b32.xlu0 %v3419, 96
    %v4205 = vpop.permute.xlu0 %4204
    %4206 = vrot.lane.b32.xlu0 %v3420, 96
    %v4207 = vpop.permute.xlu0 %4206
    %4208 = vrot.lane.b32.xlu0 %v3421, 96
    %v4209 = vpop.permute.xlu0 %4208
    %4210 = vrot.lane.b32.xlu0 %v3422, 96
    %v4211 = vpop.permute.xlu0 %4210
    %4212 = vrot.lane.b32.xlu0 %v3423, 96
    %v4213 = vpop.permute.xlu0 %4212
    %4214 = vrot.lane.b32.xlu0 %v3424, 96
    %v4215 = vpop.permute.xlu0 %4214
    %4216 = vrot.lane.b32.xlu0 %v3425, 96
    %v4217 = vpop.permute.xlu0 %4216
    %4218 = vrot.lane.b32.xlu0 %v3426, 96
    %v4219 = vpop.permute.xlu0 %4218
    %4220 = vrot.lane.b32.xlu0 %v3427, 96
    %v4221 = vpop.permute.xlu0 %4220
    %4222 = vrot.lane.b32.xlu0 %v3428, 96
    %v4223 = vpop.permute.xlu0 %4222
    %4224 = vrot.lane.b32.xlu0 %v3429, 96
    %v4225 = vpop.permute.xlu0 %4224
    %4226 = vrot.lane.b32.xlu0 %v3430, 96
    %v4227 = vpop.permute.xlu0 %4226
    %4228 = vrot.lane.b32.xlu0 %v3431, 96
    %v4229 = vpop.permute.xlu0 %4228
    %v4230 = vsel %vm937, %v4227, %v4229
    %v4231 = vsel %vm937, %v4225, %v4227
    %v4232 = vsel %vm937, %v4223, %v4225
    %v4233 = vsel %vm937, %v4221, %v4223
    %v4234 = vsel %vm937, %v4219, %v4221
    %v4235 = vsel %vm937, %v4217, %v4219
    %v4236 = vsel %vm937, %v4215, %v4217
    %v4237 = vsel %vm937, %v4213, %v4215
    %v4238 = vsel %vm937, %v4211, %v4213
    %v4239 = vsel %vm937, %v4209, %v4211
    %v4240 = vsel %vm937, %v4207, %v4209
    %v4241 = vsel %vm937, %v4205, %v4207
    %v4242 = vsel %vm937, %v4203, %v4205
    %v4243 = vsel %vm937, %v4229, %v4203
    %v4258 = vrot.slane %v4242, 2
    %v4259 = vrot.slane %v4241, 2
    %v4260 = vrot.slane %v4240, 2
    %v4261 = vrot.slane %v4239, 2
    %v4262 = vrot.slane %v4238, 2
    %v4263 = vrot.slane %v4237, 2
    %v4264 = vrot.slane %v4236, 2
    %v4265 = vrot.slane %v4235, 2
    %v4266 = vrot.slane %v4234, 2
    %v4267 = vrot.slane %v4233, 2
    %v4268 = vrot.slane %v4232, 2
    %v4269 = vrot.slane %v4231, 2
    %v4270 = vrot.slane %v4230, 2
    %v4271 = vrot.slane %v4243, 2
    %4286 = vst [vmem:[#allocation4 + $0x2a0] sm:$0xc0] %v4258
    %4287 = vst [vmem:[#allocation4 + $0x2a8] sm:$0xc0] %v4259
    %4288 = vst [vmem:[#allocation4 + $0x2b0] sm:$0xc0] %v4260
    %4289 = vst [vmem:[#allocation4 + $0x2b8] sm:$0xc0] %v4261
    %4290 = vst [vmem:[#allocation4 + $0x2c0] sm:$0xc0] %v4262
    %4291 = vst [vmem:[#allocation4 + $0x2c8] sm:$0xc0] %v4263
    %4292 = vst [vmem:[#allocation4 + $0x2d0] sm:$0xc0] %v4264
    %4293 = vst [vmem:[#allocation4 + $0x2d8] sm:$0xc0] %v4265
    %4294 = vst [vmem:[#allocation4 + $0x2e0] sm:$0xc0] %v4266
    %4295 = vst [vmem:[#allocation4 + $0x2e8] sm:$0xc0] %v4267
    %4296 = vst [vmem:[#allocation4 + $0x2f0] sm:$0xc0] %v4268
    %4297 = vst [vmem:[#allocation4 + $0x2f8] sm:$0xc0] %v4269
    %4298 = vst [vmem:[#allocation4 + $0x300] sm:$0xc0] %v4270
    %4299 = vst [vmem:[#allocation4 + $0x308] sm:$0xc0] %v4271
    %4300 = vst [vmem:[#allocation4 + $0x310] sm:$0xf] %v4258
    %4301 = vst [vmem:[#allocation4 + $0x318] sm:$0xf] %v4259
    %4302 = vst [vmem:[#allocation4 + $0x320] sm:$0xf] %v4260
    %4303 = vst [vmem:[#allocation4 + $0x328] sm:$0xf] %v4261
    %4304 = vst [vmem:[#allocation4 + $0x330] sm:$0xf] %v4262
    %4305 = vst [vmem:[#allocation4 + $0x338] sm:$0xf] %v4263
    %4306 = vst [vmem:[#allocation4 + $0x340] sm:$0xf] %v4264
    %4307 = vst [vmem:[#allocation4 + $0x348] sm:$0xf] %v4265
    %4308 = vst [vmem:[#allocation4 + $0x350] sm:$0xf] %v4266
    %4309 = vst [vmem:[#allocation4 + $0x358] sm:$0xf] %v4267
    %4310 = vst [vmem:[#allocation4 + $0x360] sm:$0xf] %v4268
    %4311 = vst [vmem:[#allocation4 + $0x368] sm:$0xf] %v4269
    %4312 = vst [vmem:[#allocation4 + $0x370] sm:$0xf] %v4270
    %4313 = vst [vmem:[#allocation4 + $0x378] sm:$0xf] %v4271
    %4314 = vrot.lane.b32.xlu0 %v3418, 72
    %v4315 = vpop.permute.xlu0 %4314
    %4316 = vrot.lane.b32.xlu0 %v3419, 72
    %v4317 = vpop.permute.xlu0 %4316
    %4318 = vrot.lane.b32.xlu0 %v3420, 72
    %v4319 = vpop.permute.xlu0 %4318
    %4320 = vrot.lane.b32.xlu0 %v3421, 72
    %v4321 = vpop.permute.xlu0 %4320
    %4322 = vrot.lane.b32.xlu0 %v3422, 72
    %v4323 = vpop.permute.xlu0 %4322
    %4324 = vrot.lane.b32.xlu0 %v3423, 72
    %v4325 = vpop.permute.xlu0 %4324
    %4326 = vrot.lane.b32.xlu0 %v3424, 72
    %v4327 = vpop.permute.xlu0 %4326
    %4328 = vrot.lane.b32.xlu0 %v3425, 72
    %v4329 = vpop.permute.xlu0 %4328
    %4330 = vrot.lane.b32.xlu0 %v3426, 72
    %v4331 = vpop.permute.xlu0 %4330
    %4332 = vrot.lane.b32.xlu0 %v3427, 72
    %v4333 = vpop.permute.xlu0 %4332
    %4334 = vrot.lane.b32.xlu0 %v3428, 72
    %v4335 = vpop.permute.xlu0 %4334
    %4336 = vrot.lane.b32.xlu0 %v3429, 72
    %v4337 = vpop.permute.xlu0 %4336
    %4338 = vrot.lane.b32.xlu0 %v3430, 72
    %v4339 = vpop.permute.xlu0 %4338
    %4340 = vrot.lane.b32.xlu0 %v3431, 72
    %v4341 = vpop.permute.xlu0 %4340
    %v4342 = vsel %vm1036, %v4339, %v4341
    %v4343 = vsel %vm1036, %v4337, %v4339
    %v4344 = vsel %vm1036, %v4335, %v4337
    %v4345 = vsel %vm1036, %v4333, %v4335
    %v4346 = vsel %vm1036, %v4331, %v4333
    %v4347 = vsel %vm1036, %v4329, %v4331
    %v4348 = vsel %vm1036, %v4327, %v4329
    %v4349 = vsel %vm1036, %v4325, %v4327
    %v4350 = vsel %vm1036, %v4323, %v4325
    %v4351 = vsel %vm1036, %v4321, %v4323
    %v4352 = vsel %vm1036, %v4319, %v4321
    %v4353 = vsel %vm1036, %v4317, %v4319
    %v4354 = vsel %vm1036, %v4315, %v4317
    %v4355 = vsel %vm1036, %v4341, %v4315
    %v4370 = vrot.slane %v4354, 4
    %v4371 = vrot.slane %v4353, 4
    %v4372 = vrot.slane %v4352, 4
    %v4373 = vrot.slane %v4351, 4
    %v4374 = vrot.slane %v4350, 4
    %v4375 = vrot.slane %v4349, 4
    %v4376 = vrot.slane %v4348, 4
    %v4377 = vrot.slane %v4347, 4
    %v4378 = vrot.slane %v4346, 4
    %v4379 = vrot.slane %v4345, 4
    %v4380 = vrot.slane %v4344, 4
    %v4381 = vrot.slane %v4343, 4
    %v4382 = vrot.slane %v4342, 4
    %v4383 = vrot.slane %v4355, 4
    %4398 = vst [vmem:[#allocation4 + $0x310] sm:$0xf0] %v4370
    %4399 = vst [vmem:[#allocation4 + $0x318] sm:$0xf0] %v4371
    %4400 = vst [vmem:[#allocation4 + $0x320] sm:$0xf0] %v4372
    %4401 = vst [vmem:[#allocation4 + $0x328] sm:$0xf0] %v4373
    %4402 = vst [vmem:[#allocation4 + $0x330] sm:$0xf0] %v4374
    %4403 = vst [vmem:[#allocation4 + $0x338] sm:$0xf0] %v4375
    %4404 = vst [vmem:[#allocation4 + $0x340] sm:$0xf0] %v4376
    %4405 = vst [vmem:[#allocation4 + $0x348] sm:$0xf0] %v4377
    %4406 = vst [vmem:[#allocation4 + $0x350] sm:$0xf0] %v4378
    %4407 = vst [vmem:[#allocation4 + $0x358] sm:$0xf0] %v4379
    %4408 = vst [vmem:[#allocation4 + $0x360] sm:$0xf0] %v4380
    %4409 = vst [vmem:[#allocation4 + $0x368] sm:$0xf0] %v4381
    %4410 = vst [vmem:[#allocation4 + $0x370] sm:$0xf0] %v4382
    %4411 = vst [vmem:[#allocation4 + $0x378] sm:$0xf0] %v4383
    %4412 = vst [vmem:[#allocation4 + $0x380] sm:$0x3] %v4370
    %4413 = vst [vmem:[#allocation4 + $0x388] sm:$0x3] %v4371
    %4414 = vst [vmem:[#allocation4 + $0x390] sm:$0x3] %v4372
    %4415 = vst [vmem:[#allocation4 + $0x398] sm:$0x3] %v4373
    %4416 = vst [vmem:[#allocation4 + $0x3a0] sm:$0x3] %v4374
    %4417 = vst [vmem:[#allocation4 + $0x3a8] sm:$0x3] %v4375
    %4418 = vst [vmem:[#allocation4 + $0x3b0] sm:$0x3] %v4376
    %4419 = vst [vmem:[#allocation4 + $0x3b8] sm:$0x3] %v4377
    %4420 = vst [vmem:[#allocation4 + $0x3c0] sm:$0x3] %v4378
    %4421 = vst [vmem:[#allocation4 + $0x3c8] sm:$0x3] %v4379
    %4422 = vst [vmem:[#allocation4 + $0x3d0] sm:$0x3] %v4380
    %4423 = vst [vmem:[#allocation4 + $0x3d8] sm:$0x3] %v4381
    %4424 = vst [vmem:[#allocation4 + $0x3e0] sm:$0x3] %v4382
    %4425 = vst [vmem:[#allocation4 + $0x3e8] sm:$0x3] %v4383
    %4426 = vrot.lane.b32.xlu0 %v3418, 71
    %v4427 = vpop.permute.xlu0 %4426
    %4428 = vrot.lane.b32.xlu0 %v3419, 71
    %v4429 = vpop.permute.xlu0 %4428
    %4430 = vrot.lane.b32.xlu0 %v3420, 71
    %v4431 = vpop.permute.xlu0 %4430
    %4432 = vrot.lane.b32.xlu0 %v3421, 71
    %v4433 = vpop.permute.xlu0 %4432
    %4434 = vrot.lane.b32.xlu0 %v3422, 71
    %v4435 = vpop.permute.xlu0 %4434
    %4436 = vrot.lane.b32.xlu0 %v3423, 71
    %v4437 = vpop.permute.xlu0 %4436
    %4438 = vrot.lane.b32.xlu0 %v3424, 71
    %v4439 = vpop.permute.xlu0 %4438
    %4440 = vrot.lane.b32.xlu0 %v3425, 71
    %v4441 = vpop.permute.xlu0 %4440
    %4442 = vrot.lane.b32.xlu0 %v3426, 71
    %v4443 = vpop.permute.xlu0 %4442
    %4444 = vrot.lane.b32.xlu0 %v3427, 71
    %v4445 = vpop.permute.xlu0 %4444
    %4446 = vrot.lane.b32.xlu0 %v3428, 71
    %v4447 = vpop.permute.xlu0 %4446
    %4448 = vrot.lane.b32.xlu0 %v3429, 71
    %v4449 = vpop.permute.xlu0 %4448
    %4450 = vrot.lane.b32.xlu0 %v3430, 71
    %v4451 = vpop.permute.xlu0 %4450
    %4452 = vrot.lane.b32.xlu0 %v3431, 71
    %v4453 = vpop.permute.xlu0 %4452
    %v4454 = vsel %vm1149, %v4451, %v4453
    %v4455 = vsel %vm1149, %v4449, %v4451
    %v4456 = vsel %vm1149, %v4447, %v4449
    %v4457 = vsel %vm1149, %v4445, %v4447
    %v4458 = vsel %vm1149, %v4443, %v4445
    %v4459 = vsel %vm1149, %v4441, %v4443
    %v4460 = vsel %vm1149, %v4439, %v4441
    %v4461 = vsel %vm1149, %v4437, %v4439
    %v4462 = vsel %vm1149, %v4435, %v4437
    %v4463 = vsel %vm1149, %v4433, %v4435
    %v4464 = vsel %vm1149, %v4431, %v4433
    %v4465 = vsel %vm1149, %v4429, %v4431
    %v4466 = vsel %vm1149, %v4427, %v4429
    %v4467 = vsel %vm1149, %v4453, %v4427
    %v4482 = vrot.slane %v4466, 6
    %v4483 = vrot.slane %v4465, 6
    %v4484 = vrot.slane %v4464, 6
    %v4485 = vrot.slane %v4463, 6
    %v4486 = vrot.slane %v4462, 6
    %v4487 = vrot.slane %v4461, 6
    %v4488 = vrot.slane %v4460, 6
    %v4489 = vrot.slane %v4459, 6
    %v4490 = vrot.slane %v4458, 6
    %v4491 = vrot.slane %v4457, 6
    %v4492 = vrot.slane %v4456, 6
    %v4493 = vrot.slane %v4455, 6
    %v4494 = vrot.slane %v4454, 6
    %v4495 = vrot.slane %v4467, 6
    %4510 = vst [vmem:[#allocation4 + $0x380] sm:$0xfc] %v4482
    %4511 = vst [vmem:[#allocation4 + $0x388] sm:$0xfc] %v4483
    %4512 = vst [vmem:[#allocation4 + $0x390] sm:$0xfc] %v4484
    %4513 = vst [vmem:[#allocation4 + $0x398] sm:$0xfc] %v4485
    %4514 = vst [vmem:[#allocation4 + $0x3a0] sm:$0xfc] %v4486
    %4515 = vst [vmem:[#allocation4 + $0x3a8] sm:$0xfc] %v4487
    %4516 = vst [vmem:[#allocation4 + $0x3b0] sm:$0xfc] %v4488
    %4517 = vst [vmem:[#allocation4 + $0x3b8] sm:$0xfc] %v4489
    %4518 = vst [vmem:[#allocation4 + $0x3c0] sm:$0xfc] %v4490
    %4519 = vst [vmem:[#allocation4 + $0x3c8] sm:$0xfc] %v4491
    %4520 = vst [vmem:[#allocation4 + $0x3d0] sm:$0xfc] %v4492
    %4521 = vst [vmem:[#allocation4 + $0x3d8] sm:$0xfc] %v4493
    %4522 = vst [vmem:[#allocation4 + $0x3e0] sm:$0xfc] %v4494
    %4523 = vst [vmem:[#allocation4 + $0x3e8] sm:$0xfc] %v4495
    %4524 = vrot.lane.b32.xlu0 %v3418, 70
    %v4525 = vpop.permute.xlu0 %4524
    %4526 = vrot.lane.b32.xlu0 %v3419, 70
    %v4527 = vpop.permute.xlu0 %4526
    %4528 = vrot.lane.b32.xlu0 %v3420, 70
    %v4529 = vpop.permute.xlu0 %4528
    %4530 = vrot.lane.b32.xlu0 %v3421, 70
    %v4531 = vpop.permute.xlu0 %4530
    %4532 = vrot.lane.b32.xlu0 %v3422, 70
    %v4533 = vpop.permute.xlu0 %4532
    %4534 = vrot.lane.b32.xlu0 %v3423, 70
    %v4535 = vpop.permute.xlu0 %4534
    %4536 = vrot.lane.b32.xlu0 %v3424, 70
    %v4537 = vpop.permute.xlu0 %4536
    %4538 = vrot.lane.b32.xlu0 %v3425, 70
    %v4539 = vpop.permute.xlu0 %4538
    %4540 = vrot.lane.b32.xlu0 %v3426, 70
    %v4541 = vpop.permute.xlu0 %4540
    %4542 = vrot.lane.b32.xlu0 %v3427, 70
    %v4543 = vpop.permute.xlu0 %4542
    %4544 = vrot.lane.b32.xlu0 %v3428, 70
    %v4545 = vpop.permute.xlu0 %4544
    %4546 = vrot.lane.b32.xlu0 %v3429, 70
    %v4547 = vpop.permute.xlu0 %4546
    %4548 = vrot.lane.b32.xlu0 %v3430, 70
    %v4549 = vpop.permute.xlu0 %4548
    %4550 = vrot.lane.b32.xlu0 %v3431, 70
    %v4551 = vpop.permute.xlu0 %4550
    %v4552 = vsel %vm1248, %v4549, %v4551
    %v4553 = vsel %vm1248, %v4547, %v4549
    %v4554 = vsel %vm1248, %v4545, %v4547
    %v4555 = vsel %vm1248, %v4543, %v4545
    %v4556 = vsel %vm1248, %v4541, %v4543
    %v4557 = vsel %vm1248, %v4539, %v4541
    %v4558 = vsel %vm1248, %v4537, %v4539
    %v4559 = vsel %vm1248, %v4535, %v4537
    %v4560 = vsel %vm1248, %v4533, %v4535
    %v4561 = vsel %vm1248, %v4531, %v4533
    %v4562 = vsel %vm1248, %v4529, %v4531
    %v4563 = vsel %vm1248, %v4527, %v4529
    %v4564 = vsel %vm1248, %v4525, %v4527
    %v4565 = vsel %vm1248, %v4551, %v4525
    %4566 = vst [vmem:[#allocation4 + $0x3f0] sm:$0x3f] %v4564
    %4567 = vst [vmem:[#allocation4 + $0x3f8] sm:$0x3f] %v4563
    %4568 = vst [vmem:[#allocation4 + $0x400] sm:$0x3f] %v4562
    %4569 = vst [vmem:[#allocation4 + $0x408] sm:$0x3f] %v4561
    %4570 = vst [vmem:[#allocation4 + $0x410] sm:$0x3f] %v4560
    %4571 = vst [vmem:[#allocation4 + $0x418] sm:$0x3f] %v4559
    %4572 = vst [vmem:[#allocation4 + $0x420] sm:$0x3f] %v4558
    %4573 = vst [vmem:[#allocation4 + $0x428] sm:$0x3f] %v4557
    %4574 = vst [vmem:[#allocation4 + $0x430] sm:$0x3f] %v4556
    %4575 = vst [vmem:[#allocation4 + $0x438] sm:$0x3f] %v4555
    %4576 = vst [vmem:[#allocation4 + $0x440] sm:$0x3f] %v4554
    %4577 = vst [vmem:[#allocation4 + $0x448] sm:$0x3f] %v4553
    %4578 = vst [vmem:[#allocation4 + $0x450] sm:$0x3f] %v4552
    %4579 = vst [vmem:[#allocation4 + $0x458] sm:$0x3f] %v4565
    %4580 = vrot.lane.b32.xlu0 %v3418, 69
    %v4581 = vpop.permute.xlu0 %4580
    %4582 = vrot.lane.b32.xlu0 %v3419, 69
    %v4583 = vpop.permute.xlu0 %4582
    %4584 = vrot.lane.b32.xlu0 %v3420, 69
    %v4585 = vpop.permute.xlu0 %4584
    %4586 = vrot.lane.b32.xlu0 %v3421, 69
    %v4587 = vpop.permute.xlu0 %4586
    %4588 = vrot.lane.b32.xlu0 %v3422, 69
    %v4589 = vpop.permute.xlu0 %4588
    %4590 = vrot.lane.b32.xlu0 %v3423, 69
    %v4591 = vpop.permute.xlu0 %4590
    %4592 = vrot.lane.b32.xlu0 %v3424, 69
    %v4593 = vpop.permute.xlu0 %4592
    %4594 = vrot.lane.b32.xlu0 %v3425, 69
    %v4595 = vpop.permute.xlu0 %4594
    %4596 = vrot.lane.b32.xlu0 %v3426, 69
    %v4597 = vpop.permute.xlu0 %4596
    %4598 = vrot.lane.b32.xlu0 %v3427, 69
    %v4599 = vpop.permute.xlu0 %4598
    %4600 = vrot.lane.b32.xlu0 %v3428, 69
    %v4601 = vpop.permute.xlu0 %4600
    %4602 = vrot.lane.b32.xlu0 %v3429, 69
    %v4603 = vpop.permute.xlu0 %4602
    %4604 = vrot.lane.b32.xlu0 %v3430, 69
    %v4605 = vpop.permute.xlu0 %4604
    %4606 = vrot.lane.b32.xlu0 %v3431, 69
    %v4607 = vpop.permute.xlu0 %4606
    %v4608 = vsel %vm1347, %v4605, %v4607
    %v4609 = vsel %vm1347, %v4603, %v4605
    %v4610 = vsel %vm1347, %v4601, %v4603
    %v4611 = vsel %vm1347, %v4599, %v4601
    %v4612 = vsel %vm1347, %v4597, %v4599
    %v4613 = vsel %vm1347, %v4595, %v4597
    %v4614 = vsel %vm1347, %v4593, %v4595
    %v4615 = vsel %vm1347, %v4591, %v4593
    %v4616 = vsel %vm1347, %v4589, %v4591
    %v4617 = vsel %vm1347, %v4587, %v4589
    %v4618 = vsel %vm1347, %v4585, %v4587
    %v4619 = vsel %vm1347, %v4583, %v4585
    %v4620 = vsel %vm1347, %v4581, %v4583
    %v4621 = vsel %vm1347, %v4607, %v4581
    %v4636 = vrot.slane %v4620, 2
    %v4637 = vrot.slane %v4619, 2
    %v4638 = vrot.slane %v4618, 2
    %v4639 = vrot.slane %v4617, 2
    %v4640 = vrot.slane %v4616, 2
    %v4641 = vrot.slane %v4615, 2
    %v4642 = vrot.slane %v4614, 2
    %v4643 = vrot.slane %v4613, 2
    %v4644 = vrot.slane %v4612, 2
    %v4645 = vrot.slane %v4611, 2
    %v4646 = vrot.slane %v4610, 2
    %v4647 = vrot.slane %v4609, 2
    %v4648 = vrot.slane %v4608, 2
    %v4649 = vrot.slane %v4621, 2
    %4664 = vst [vmem:[#allocation4 + $0x3f0] sm:$0xc0] %v4636
    %4665 = vst [vmem:[#allocation4 + $0x3f8] sm:$0xc0] %v4637
    %4666 = vst [vmem:[#allocation4 + $0x400] sm:$0xc0] %v4638
    %4667 = vst [vmem:[#allocation4 + $0x408] sm:$0xc0] %v4639
    %4668 = vst [vmem:[#allocation4 + $0x410] sm:$0xc0] %v4640
    %4669 = vst [vmem:[#allocation4 + $0x418] sm:$0xc0] %v4641
    %4670 = vst [vmem:[#allocation4 + $0x420] sm:$0xc0] %v4642
    %4671 = vst [vmem:[#allocation4 + $0x428] sm:$0xc0] %v4643
    %4672 = vst [vmem:[#allocation4 + $0x430] sm:$0xc0] %v4644
    %4673 = vst [vmem:[#allocation4 + $0x438] sm:$0xc0] %v4645
    %4674 = vst [vmem:[#allocation4 + $0x440] sm:$0xc0] %v4646
    %4675 = vst [vmem:[#allocation4 + $0x448] sm:$0xc0] %v4647
    %4676 = vst [vmem:[#allocation4 + $0x450] sm:$0xc0] %v4648
    %4677 = vst [vmem:[#allocation4 + $0x458] sm:$0xc0] %v4649
    %4678 = vst [vmem:[#allocation4 + $0x460] sm:$0xf] %v4636
    %4679 = vst [vmem:[#allocation4 + $0x468] sm:$0xf] %v4637
    %4680 = vst [vmem:[#allocation4 + $0x470] sm:$0xf] %v4638
    %4681 = vst [vmem:[#allocation4 + $0x478] sm:$0xf] %v4639
    %4682 = vst [vmem:[#allocation4 + $0x480] sm:$0xf] %v4640
    %4683 = vst [vmem:[#allocation4 + $0x488] sm:$0xf] %v4641
    %4684 = vst [vmem:[#allocation4 + $0x490] sm:$0xf] %v4642
    %4685 = vst [vmem:[#allocation4 + $0x498] sm:$0xf] %v4643
    %4686 = vst [vmem:[#allocation4 + $0x4a0] sm:$0xf] %v4644
    %4687 = vst [vmem:[#allocation4 + $0x4a8] sm:$0xf] %v4645
    %4688 = vst [vmem:[#allocation4 + $0x4b0] sm:$0xf] %v4646
    %4689 = vst [vmem:[#allocation4 + $0x4b8] sm:$0xf] %v4647
    %4690 = vst [vmem:[#allocation4 + $0x4c0] sm:$0xf] %v4648
    %4691 = vst [vmem:[#allocation4 + $0x4c8] sm:$0xf] %v4649
    %4692 = vrot.lane.b32.xlu0 %v3418, 68
    %v4693 = vpop.permute.xlu0 %4692
    %4694 = vrot.lane.b32.xlu0 %v3419, 68
    %v4695 = vpop.permute.xlu0 %4694
    %4696 = vrot.lane.b32.xlu0 %v3420, 68
    %v4697 = vpop.permute.xlu0 %4696
    %4698 = vrot.lane.b32.xlu0 %v3421, 68
    %v4699 = vpop.permute.xlu0 %4698
    %4700 = vrot.lane.b32.xlu0 %v3422, 68
    %v4701 = vpop.permute.xlu0 %4700
    %4702 = vrot.lane.b32.xlu0 %v3423, 68
    %v4703 = vpop.permute.xlu0 %4702
    %4704 = vrot.lane.b32.xlu0 %v3424, 68
    %v4705 = vpop.permute.xlu0 %4704
    %4706 = vrot.lane.b32.xlu0 %v3425, 68
    %v4707 = vpop.permute.xlu0 %4706
    %4708 = vrot.lane.b32.xlu0 %v3426, 68
    %v4709 = vpop.permute.xlu0 %4708
    %4710 = vrot.lane.b32.xlu0 %v3427, 68
    %v4711 = vpop.permute.xlu0 %4710
    %4712 = vrot.lane.b32.xlu0 %v3428, 68
    %v4713 = vpop.permute.xlu0 %4712
    %4714 = vrot.lane.b32.xlu0 %v3429, 68
    %v4715 = vpop.permute.xlu0 %4714
    %4716 = vrot.lane.b32.xlu0 %v3430, 68
    %v4717 = vpop.permute.xlu0 %4716
    %4718 = vrot.lane.b32.xlu0 %v3431, 68
    %v4719 = vpop.permute.xlu0 %4718
    %v4720 = vsel %vm1460, %v4717, %v4719
    %v4721 = vsel %vm1460, %v4715, %v4717
    %v4722 = vsel %vm1460, %v4713, %v4715
    %v4723 = vsel %vm1460, %v4711, %v4713
    %v4724 = vsel %vm1460, %v4709, %v4711
    %v4725 = vsel %vm1460, %v4707, %v4709
    %v4726 = vsel %vm1460, %v4705, %v4707
    %v4727 = vsel %vm1460, %v4703, %v4705
    %v4728 = vsel %vm1460, %v4701, %v4703
    %v4729 = vsel %vm1460, %v4699, %v4701
    %v4730 = vsel %vm1460, %v4697, %v4699
    %v4731 = vsel %vm1460, %v4695, %v4697
    %v4732 = vsel %vm1460, %v4693, %v4695
    %v4733 = vsel %vm1460, %v4719, %v4693
    %v4748 = vrot.slane %v4732, 4
    %v4749 = vrot.slane %v4731, 4
    %v4750 = vrot.slane %v4730, 4
    %v4751 = vrot.slane %v4729, 4
    %v4752 = vrot.slane %v4728, 4
    %v4753 = vrot.slane %v4727, 4
    %v4754 = vrot.slane %v4726, 4
    %v4755 = vrot.slane %v4725, 4
    %v4756 = vrot.slane %v4724, 4
    %v4757 = vrot.slane %v4723, 4
    %v4758 = vrot.slane %v4722, 4
    %v4759 = vrot.slane %v4721, 4
    %v4760 = vrot.slane %v4720, 4
    %v4761 = vrot.slane %v4733, 4
    %4776 = vst [vmem:[#allocation4 + $0x460] sm:$0xf0] %v4748
    %4777 = vst [vmem:[#allocation4 + $0x468] sm:$0xf0] %v4749
    %4778 = vst [vmem:[#allocation4 + $0x470] sm:$0xf0] %v4750
    %4779 = vst [vmem:[#allocation4 + $0x478] sm:$0xf0] %v4751
    %4780 = vst [vmem:[#allocation4 + $0x480] sm:$0xf0] %v4752
    %4781 = vst [vmem:[#allocation4 + $0x488] sm:$0xf0] %v4753
    %4782 = vst [vmem:[#allocation4 + $0x490] sm:$0xf0] %v4754
    %4783 = vst [vmem:[#allocation4 + $0x498] sm:$0xf0] %v4755
    %4784 = vst [vmem:[#allocation4 + $0x4a0] sm:$0xf0] %v4756
    %4785 = vst [vmem:[#allocation4 + $0x4a8] sm:$0xf0] %v4757
    %4786 = vst [vmem:[#allocation4 + $0x4b0] sm:$0xf0] %v4758
    %4787 = vst [vmem:[#allocation4 + $0x4b8] sm:$0xf0] %v4759
    %4788 = vst [vmem:[#allocation4 + $0x4c0] sm:$0xf0] %v4760
    %4789 = vst [vmem:[#allocation4 + $0x4c8] sm:$0xf0] %v4761
    %4790 = vst [vmem:[#allocation4 + $0x4d0] sm:$0x3] %v4748
    %4791 = vst [vmem:[#allocation4 + $0x4d8] sm:$0x3] %v4749
    %4792 = vst [vmem:[#allocation4 + $0x4e0] sm:$0x3] %v4750
    %4793 = vst [vmem:[#allocation4 + $0x4e8] sm:$0x3] %v4751
    %4794 = vst [vmem:[#allocation4 + $0x4f0] sm:$0x3] %v4752
    %4795 = vst [vmem:[#allocation4 + $0x4f8] sm:$0x3] %v4753
    %4796 = vst [vmem:[#allocation4 + $0x500] sm:$0x3] %v4754
    %4797 = vst [vmem:[#allocation4 + $0x508] sm:$0x3] %v4755
    %4798 = vst [vmem:[#allocation4 + $0x510] sm:$0x3] %v4756
    %4799 = vst [vmem:[#allocation4 + $0x518] sm:$0x3] %v4757
    %4800 = vst [vmem:[#allocation4 + $0x520] sm:$0x3] %v4758
    %4801 = vst [vmem:[#allocation4 + $0x528] sm:$0x3] %v4759
    %4802 = vst [vmem:[#allocation4 + $0x530] sm:$0x3] %v4760
    %4803 = vst [vmem:[#allocation4 + $0x538] sm:$0x3] %v4761
    %4804 = vrot.lane.b32.xlu0 %v3418, 44
    %v4805 = vpop.permute.xlu0 %4804
    %4806 = vrot.lane.b32.xlu0 %v3419, 44
    %v4807 = vpop.permute.xlu0 %4806
    %4808 = vrot.lane.b32.xlu0 %v3420, 44
    %v4809 = vpop.permute.xlu0 %4808
    %4810 = vrot.lane.b32.xlu0 %v3421, 44
    %v4811 = vpop.permute.xlu0 %4810
    %4812 = vrot.lane.b32.xlu0 %v3422, 44
    %v4813 = vpop.permute.xlu0 %4812
    %4814 = vrot.lane.b32.xlu0 %v3423, 44
    %v4815 = vpop.permute.xlu0 %4814
    %4816 = vrot.lane.b32.xlu0 %v3424, 44
    %v4817 = vpop.permute.xlu0 %4816
    %4818 = vrot.lane.b32.xlu0 %v3425, 44
    %v4819 = vpop.permute.xlu0 %4818
    %4820 = vrot.lane.b32.xlu0 %v3426, 44
    %v4821 = vpop.permute.xlu0 %4820
    %4822 = vrot.lane.b32.xlu0 %v3427, 44
    %v4823 = vpop.permute.xlu0 %4822
    %4824 = vrot.lane.b32.xlu0 %v3428, 44
    %v4825 = vpop.permute.xlu0 %4824
    %4826 = vrot.lane.b32.xlu0 %v3429, 44
    %v4827 = vpop.permute.xlu0 %4826
    %4828 = vrot.lane.b32.xlu0 %v3430, 44
    %v4829 = vpop.permute.xlu0 %4828
    %4830 = vrot.lane.b32.xlu0 %v3431, 44
    %v4831 = vpop.permute.xlu0 %4830
    %v4832 = vsel %vm1559, %v4829, %v4831
    %v4833 = vsel %vm1559, %v4827, %v4829
    %v4834 = vsel %vm1559, %v4825, %v4827
    %v4835 = vsel %vm1559, %v4823, %v4825
    %v4836 = vsel %vm1559, %v4821, %v4823
    %v4837 = vsel %vm1559, %v4819, %v4821
    %v4838 = vsel %vm1559, %v4817, %v4819
    %v4839 = vsel %vm1559, %v4815, %v4817
    %v4840 = vsel %vm1559, %v4813, %v4815
    %v4841 = vsel %vm1559, %v4811, %v4813
    %v4842 = vsel %vm1559, %v4809, %v4811
    %v4843 = vsel %vm1559, %v4807, %v4809
    %v4844 = vsel %vm1559, %v4805, %v4807
    %v4845 = vsel %vm1559, %v4831, %v4805
    %v4860 = vrot.slane %v4844, 6
    %v4861 = vrot.slane %v4843, 6
    %v4862 = vrot.slane %v4842, 6
    %v4863 = vrot.slane %v4841, 6
    %v4864 = vrot.slane %v4840, 6
    %v4865 = vrot.slane %v4839, 6
    %v4866 = vrot.slane %v4838, 6
    %v4867 = vrot.slane %v4837, 6
    %v4868 = vrot.slane %v4836, 6
    %v4869 = vrot.slane %v4835, 6
    %v4870 = vrot.slane %v4834, 6
    %v4871 = vrot.slane %v4833, 6
    %v4872 = vrot.slane %v4832, 6
    %v4873 = vrot.slane %v4845, 6
    %4888 = vst [vmem:[#allocation4 + $0x4d0] sm:$0xfc] %v4860
    %4889 = vst [vmem:[#allocation4 + $0x4d8] sm:$0xfc] %v4861
    %4890 = vst [vmem:[#allocation4 + $0x4e0] sm:$0xfc] %v4862
    %4891 = vst [vmem:[#allocation4 + $0x4e8] sm:$0xfc] %v4863
    %4892 = vst [vmem:[#allocation4 + $0x4f0] sm:$0xfc] %v4864
    %4893 = vst [vmem:[#allocation4 + $0x4f8] sm:$0xfc] %v4865
    %4894 = vst [vmem:[#allocation4 + $0x500] sm:$0xfc] %v4866
    %4895 = vst [vmem:[#allocation4 + $0x508] sm:$0xfc] %v4867
    %4896 = vst [vmem:[#allocation4 + $0x510] sm:$0xfc] %v4868
    %4897 = vst [vmem:[#allocation4 + $0x518] sm:$0xfc] %v4869
    %4898 = vst [vmem:[#allocation4 + $0x520] sm:$0xfc] %v4870
    %4899 = vst [vmem:[#allocation4 + $0x528] sm:$0xfc] %v4871
    %4900 = vst [vmem:[#allocation4 + $0x530] sm:$0xfc] %v4872
    %4901 = vst [vmem:[#allocation4 + $0x538] sm:$0xfc] %v4873
    %4902 = vrot.lane.b32.xlu0 %v3418, 43
    %v4903 = vpop.permute.xlu0 %4902
    %4904 = vrot.lane.b32.xlu0 %v3419, 43
    %v4905 = vpop.permute.xlu0 %4904
    %4906 = vrot.lane.b32.xlu0 %v3420, 43
    %v4907 = vpop.permute.xlu0 %4906
    %4908 = vrot.lane.b32.xlu0 %v3421, 43
    %v4909 = vpop.permute.xlu0 %4908
    %4910 = vrot.lane.b32.xlu0 %v3422, 43
    %v4911 = vpop.permute.xlu0 %4910
    %4912 = vrot.lane.b32.xlu0 %v3423, 43
    %v4913 = vpop.permute.xlu0 %4912
    %4914 = vrot.lane.b32.xlu0 %v3424, 43
    %v4915 = vpop.permute.xlu0 %4914
    %4916 = vrot.lane.b32.xlu0 %v3425, 43
    %v4917 = vpop.permute.xlu0 %4916
    %4918 = vrot.lane.b32.xlu0 %v3426, 43
    %v4919 = vpop.permute.xlu0 %4918
    %4920 = vrot.lane.b32.xlu0 %v3427, 43
    %v4921 = vpop.permute.xlu0 %4920
    %4922 = vrot.lane.b32.xlu0 %v3428, 43
    %v4923 = vpop.permute.xlu0 %4922
    %4924 = vrot.lane.b32.xlu0 %v3429, 43
    %v4925 = vpop.permute.xlu0 %4924
    %4926 = vrot.lane.b32.xlu0 %v3430, 43
    %v4927 = vpop.permute.xlu0 %4926
    %4928 = vrot.lane.b32.xlu0 %v3431, 43
    %v4929 = vpop.permute.xlu0 %4928
    %v4930 = vsel %vm1658, %v4927, %v4929
    %v4931 = vsel %vm1658, %v4925, %v4927
    %v4932 = vsel %vm1658, %v4923, %v4925
    %v4933 = vsel %vm1658, %v4921, %v4923
    %v4934 = vsel %vm1658, %v4919, %v4921
    %v4935 = vsel %vm1658, %v4917, %v4919
    %v4936 = vsel %vm1658, %v4915, %v4917
    %v4937 = vsel %vm1658, %v4913, %v4915
    %v4938 = vsel %vm1658, %v4911, %v4913
    %v4939 = vsel %vm1658, %v4909, %v4911
    %v4940 = vsel %vm1658, %v4907, %v4909
    %v4941 = vsel %vm1658, %v4905, %v4907
    %v4942 = vsel %vm1658, %v4903, %v4905
    %v4943 = vsel %vm1658, %v4929, %v4903
    %4944 = vst [vmem:[#allocation4 + $0x540] sm:$0x3f] %v4942
    %4945 = vst [vmem:[#allocation4 + $0x548] sm:$0x3f] %v4941
    %4946 = vst [vmem:[#allocation4 + $0x550] sm:$0x3f] %v4940
    %4947 = vst [vmem:[#allocation4 + $0x558] sm:$0x3f] %v4939
    %4948 = vst [vmem:[#allocation4 + $0x560] sm:$0x3f] %v4938
    %4949 = vst [vmem:[#allocation4 + $0x568] sm:$0x3f] %v4937
    %4950 = vst [vmem:[#allocation4 + $0x570] sm:$0x3f] %v4936
    %4951 = vst [vmem:[#allocation4 + $0x578] sm:$0x3f] %v4935
    %4952 = vst [vmem:[#allocation4 + $0x580] sm:$0x3f] %v4934
    %4953 = vst [vmem:[#allocation4 + $0x588] sm:$0x3f] %v4933
    %4954 = vst [vmem:[#allocation4 + $0x590] sm:$0x3f] %v4932
    %4955 = vst [vmem:[#allocation4 + $0x598] sm:$0x3f] %v4931
    %4956 = vst [vmem:[#allocation4 + $0x5a0] sm:$0x3f] %v4930
    %4957 = vst [vmem:[#allocation4 + $0x5a8] sm:$0x3f] %v4943
    %4958 = vrot.lane.b32.xlu0 %v3418, 42
    %v4959 = vpop.permute.xlu0 %4958
    %4960 = vrot.lane.b32.xlu0 %v3419, 42
    %v4961 = vpop.permute.xlu0 %4960
    %4962 = vrot.lane.b32.xlu0 %v3420, 42
    %v4963 = vpop.permute.xlu0 %4962
    %4964 = vrot.lane.b32.xlu0 %v3421, 42
    %v4965 = vpop.permute.xlu0 %4964
    %4966 = vrot.lane.b32.xlu0 %v3422, 42
    %v4967 = vpop.permute.xlu0 %4966
    %4968 = vrot.lane.b32.xlu0 %v3423, 42
    %v4969 = vpop.permute.xlu0 %4968
    %4970 = vrot.lane.b32.xlu0 %v3424, 42
    %v4971 = vpop.permute.xlu0 %4970
    %4972 = vrot.lane.b32.xlu0 %v3425, 42
    %v4973 = vpop.permute.xlu0 %4972
    %4974 = vrot.lane.b32.xlu0 %v3426, 42
    %v4975 = vpop.permute.xlu0 %4974
    %4976 = vrot.lane.b32.xlu0 %v3427, 42
    %v4977 = vpop.permute.xlu0 %4976
    %4978 = vrot.lane.b32.xlu0 %v3428, 42
    %v4979 = vpop.permute.xlu0 %4978
    %4980 = vrot.lane.b32.xlu0 %v3429, 42
    %v4981 = vpop.permute.xlu0 %4980
    %4982 = vrot.lane.b32.xlu0 %v3430, 42
    %v4983 = vpop.permute.xlu0 %4982
    %4984 = vrot.lane.b32.xlu0 %v3431, 42
    %v4985 = vpop.permute.xlu0 %4984
    %v4986 = vsel %vm1715, %v4983, %v4985
    %v4987 = vsel %vm1715, %v4981, %v4983
    %v4988 = vsel %vm1715, %v4979, %v4981
    %v4989 = vsel %vm1715, %v4977, %v4979
    %v4990 = vsel %vm1715, %v4975, %v4977
    %v4991 = vsel %vm1715, %v4973, %v4975
    %v4992 = vsel %vm1715, %v4971, %v4973
    %v4993 = vsel %vm1715, %v4969, %v4971
    %v4994 = vsel %vm1715, %v4967, %v4969
    %v4995 = vsel %vm1715, %v4965, %v4967
    %v4996 = vsel %vm1715, %v4963, %v4965
    %v4997 = vsel %vm1715, %v4961, %v4963
    %v4998 = vsel %vm1715, %v4959, %v4961
    %v4999 = vsel %vm1715, %v4985, %v4959
    %v5014 = vrot.slane %v4998, 2
    %v5015 = vrot.slane %v4997, 2
    %v5016 = vrot.slane %v4996, 2
    %v5017 = vrot.slane %v4995, 2
    %v5018 = vrot.slane %v4994, 2
    %v5019 = vrot.slane %v4993, 2
    %v5020 = vrot.slane %v4992, 2
    %v5021 = vrot.slane %v4991, 2
    %v5022 = vrot.slane %v4990, 2
    %v5023 = vrot.slane %v4989, 2
    %v5024 = vrot.slane %v4988, 2
    %v5025 = vrot.slane %v4987, 2
    %v5026 = vrot.slane %v4986, 2
    %v5027 = vrot.slane %v4999, 2
    %5042 = vst [vmem:[#allocation4 + $0x540] sm:$0xc0] %v5014
    %5043 = vst [vmem:[#allocation4 + $0x548] sm:$0xc0] %v5015
    %5044 = vst [vmem:[#allocation4 + $0x550] sm:$0xc0] %v5016
    %5045 = vst [vmem:[#allocation4 + $0x558] sm:$0xc0] %v5017
    %5046 = vst [vmem:[#allocation4 + $0x560] sm:$0xc0] %v5018
    %5047 = vst [vmem:[#allocation4 + $0x568] sm:$0xc0] %v5019
    %5048 = vst [vmem:[#allocation4 + $0x570] sm:$0xc0] %v5020
    %5049 = vst [vmem:[#allocation4 + $0x578] sm:$0xc0] %v5021
    %5050 = vst [vmem:[#allocation4 + $0x580] sm:$0xc0] %v5022
    %5051 = vst [vmem:[#allocation4 + $0x588] sm:$0xc0] %v5023
    %5052 = vst [vmem:[#allocation4 + $0x590] sm:$0xc0] %v5024
    %5053 = vst [vmem:[#allocation4 + $0x598] sm:$0xc0] %v5025
    %5054 = vst [vmem:[#allocation4 + $0x5a0] sm:$0xc0] %v5026
    %5055 = vst [vmem:[#allocation4 + $0x5a8] sm:$0xc0] %v5027
    %5056 = vst [vmem:[#allocation4 + $0x5b0] sm:$0xf] %v5014
    %5057 = vst [vmem:[#allocation4 + $0x5b8] sm:$0xf] %v5015
    %5058 = vst [vmem:[#allocation4 + $0x5c0] sm:$0xf] %v5016
    %5059 = vst [vmem:[#allocation4 + $0x5c8] sm:$0xf] %v5017
    %5060 = vst [vmem:[#allocation4 + $0x5d0] sm:$0xf] %v5018
    %5061 = vst [vmem:[#allocation4 + $0x5d8] sm:$0xf] %v5019
    %5062 = vst [vmem:[#allocation4 + $0x5e0] sm:$0xf] %v5020
    %5063 = vst [vmem:[#allocation4 + $0x5e8] sm:$0xf] %v5021
    %5064 = vst [vmem:[#allocation4 + $0x5f0] sm:$0xf] %v5022
    %5065 = vst [vmem:[#allocation4 + $0x5f8] sm:$0xf] %v5023
    %5066 = vst [vmem:[#allocation4 + $0x600] sm:$0xf] %v5024
    %5067 = vst [vmem:[#allocation4 + $0x608] sm:$0xf] %v5025
    %5068 = vst [vmem:[#allocation4 + $0x610] sm:$0xf] %v5026
    %5069 = vst [vmem:[#allocation4 + $0x618] sm:$0xf] %v5027
    %5070 = vrot.lane.b32.xlu0 %v3418, 41
    %v5071 = vpop.permute.xlu0 %5070
    %5072 = vrot.lane.b32.xlu0 %v3419, 41
    %v5073 = vpop.permute.xlu0 %5072
    %5074 = vrot.lane.b32.xlu0 %v3420, 41
    %v5075 = vpop.permute.xlu0 %5074
    %5076 = vrot.lane.b32.xlu0 %v3421, 41
    %v5077 = vpop.permute.xlu0 %5076
    %5078 = vrot.lane.b32.xlu0 %v3422, 41
    %v5079 = vpop.permute.xlu0 %5078
    %5080 = vrot.lane.b32.xlu0 %v3423, 41
    %v5081 = vpop.permute.xlu0 %5080
    %5082 = vrot.lane.b32.xlu0 %v3424, 41
    %v5083 = vpop.permute.xlu0 %5082
    %5084 = vrot.lane.b32.xlu0 %v3425, 41
    %v5085 = vpop.permute.xlu0 %5084
    %5086 = vrot.lane.b32.xlu0 %v3426, 41
    %v5087 = vpop.permute.xlu0 %5086
    %5088 = vrot.lane.b32.xlu0 %v3427, 41
    %v5089 = vpop.permute.xlu0 %5088
    %5090 = vrot.lane.b32.xlu0 %v3428, 41
    %v5091 = vpop.permute.xlu0 %5090
    %5092 = vrot.lane.b32.xlu0 %v3429, 41
    %v5093 = vpop.permute.xlu0 %5092
    %5094 = vrot.lane.b32.xlu0 %v3430, 41
    %v5095 = vpop.permute.xlu0 %5094
    %5096 = vrot.lane.b32.xlu0 %v3431, 41
    %v5097 = vpop.permute.xlu0 %5096
    %v5098 = vsel %vm1814, %v5095, %v5097
    %v5099 = vsel %vm1814, %v5093, %v5095
    %v5100 = vsel %vm1814, %v5091, %v5093
    %v5101 = vsel %vm1814, %v5089, %v5091
    %v5102 = vsel %vm1814, %v5087, %v5089
    %v5103 = vsel %vm1814, %v5085, %v5087
    %v5104 = vsel %vm1814, %v5083, %v5085
    %v5105 = vsel %vm1814, %v5081, %v5083
    %v5106 = vsel %vm1814, %v5079, %v5081
    %v5107 = vsel %vm1814, %v5077, %v5079
    %v5108 = vsel %vm1814, %v5075, %v5077
    %v5109 = vsel %vm1814, %v5073, %v5075
    %v5110 = vsel %vm1814, %v5071, %v5073
    %v5111 = vsel %vm1814, %v5097, %v5071
    %v5126 = vrot.slane %v5110, 4
    %v5127 = vrot.slane %v5109, 4
    %v5128 = vrot.slane %v5108, 4
    %v5129 = vrot.slane %v5107, 4
    %v5130 = vrot.slane %v5106, 4
    %v5131 = vrot.slane %v5105, 4
    %v5132 = vrot.slane %v5104, 4
    %v5133 = vrot.slane %v5103, 4
    %v5134 = vrot.slane %v5102, 4
    %v5135 = vrot.slane %v5101, 4
    %v5136 = vrot.slane %v5100, 4
    %v5137 = vrot.slane %v5099, 4
    %v5138 = vrot.slane %v5098, 4
    %v5139 = vrot.slane %v5111, 4
    %5154 = vst [vmem:[#allocation4 + $0x5b0] sm:$0xf0] %v5126
    %5155 = vst [vmem:[#allocation4 + $0x5b8] sm:$0xf0] %v5127
    %5156 = vst [vmem:[#allocation4 + $0x5c0] sm:$0xf0] %v5128
    %5157 = vst [vmem:[#allocation4 + $0x5c8] sm:$0xf0] %v5129
    %5158 = vst [vmem:[#allocation4 + $0x5d0] sm:$0xf0] %v5130
    %5159 = vst [vmem:[#allocation4 + $0x5d8] sm:$0xf0] %v5131
    %5160 = vst [vmem:[#allocation4 + $0x5e0] sm:$0xf0] %v5132
    %5161 = vst [vmem:[#allocation4 + $0x5e8] sm:$0xf0] %v5133
    %5162 = vst [vmem:[#allocation4 + $0x5f0] sm:$0xf0] %v5134
    %5163 = vst [vmem:[#allocation4 + $0x5f8] sm:$0xf0] %v5135
    %5164 = vst [vmem:[#allocation4 + $0x600] sm:$0xf0] %v5136
    %5165 = vst [vmem:[#allocation4 + $0x608] sm:$0xf0] %v5137
    %5166 = vst [vmem:[#allocation4 + $0x610] sm:$0xf0] %v5138
    %5167 = vst [vmem:[#allocation4 + $0x618] sm:$0xf0] %v5139
    %5168 = vst [vmem:[#allocation4 + $0x620] sm:$0x3] %v5126
    %5169 = vst [vmem:[#allocation4 + $0x628] sm:$0x3] %v5127
    %5170 = vst [vmem:[#allocation4 + $0x630] sm:$0x3] %v5128
    %5171 = vst [vmem:[#allocation4 + $0x638] sm:$0x3] %v5129
    %5172 = vst [vmem:[#allocation4 + $0x640] sm:$0x3] %v5130
    %5173 = vst [vmem:[#allocation4 + $0x648] sm:$0x3] %v5131
    %5174 = vst [vmem:[#allocation4 + $0x650] sm:$0x3] %v5132
    %5175 = vst [vmem:[#allocation4 + $0x658] sm:$0x3] %v5133
    %5176 = vst [vmem:[#allocation4 + $0x660] sm:$0x3] %v5134
    %5177 = vst [vmem:[#allocation4 + $0x668] sm:$0x3] %v5135
    %5178 = vst [vmem:[#allocation4 + $0x670] sm:$0x3] %v5136
    %5179 = vst [vmem:[#allocation4 + $0x678] sm:$0x3] %v5137
    %5180 = vst [vmem:[#allocation4 + $0x680] sm:$0x3] %v5138
    %5181 = vst [vmem:[#allocation4 + $0x688] sm:$0x3] %v5139
    %5182 = vrot.lane.b32.xlu0 %v3418, 40
    %v5183 = vpop.permute.xlu0 %5182
    %5184 = vrot.lane.b32.xlu0 %v3419, 40
    %v5185 = vpop.permute.xlu0 %5184
    %5186 = vrot.lane.b32.xlu0 %v3420, 40
    %v5187 = vpop.permute.xlu0 %5186
    %5188 = vrot.lane.b32.xlu0 %v3421, 40
    %v5189 = vpop.permute.xlu0 %5188
    %5190 = vrot.lane.b32.xlu0 %v3422, 40
    %v5191 = vpop.permute.xlu0 %5190
    %5192 = vrot.lane.b32.xlu0 %v3423, 40
    %v5193 = vpop.permute.xlu0 %5192
    %5194 = vrot.lane.b32.xlu0 %v3424, 40
    %v5195 = vpop.permute.xlu0 %5194
    %5196 = vrot.lane.b32.xlu0 %v3425, 40
    %v5197 = vpop.permute.xlu0 %5196
    %5198 = vrot.lane.b32.xlu0 %v3426, 40
    %v5199 = vpop.permute.xlu0 %5198
    %5200 = vrot.lane.b32.xlu0 %v3427, 40
    %v5201 = vpop.permute.xlu0 %5200
    %5202 = vrot.lane.b32.xlu0 %v3428, 40
    %v5203 = vpop.permute.xlu0 %5202
    %5204 = vrot.lane.b32.xlu0 %v3429, 40
    %v5205 = vpop.permute.xlu0 %5204
    %5206 = vrot.lane.b32.xlu0 %v3430, 40
    %v5207 = vpop.permute.xlu0 %5206
    %5208 = vrot.lane.b32.xlu0 %v3431, 40
    %v5209 = vpop.permute.xlu0 %5208
    %v5210 = vsel %vm1927, %v5207, %v5209
    %v5211 = vsel %vm1927, %v5205, %v5207
    %v5212 = vsel %vm1927, %v5203, %v5205
    %v5213 = vsel %vm1927, %v5201, %v5203
    %v5214 = vsel %vm1927, %v5199, %v5201
    %v5215 = vsel %vm1927, %v5197, %v5199
    %v5216 = vsel %vm1927, %v5195, %v5197
    %v5217 = vsel %vm1927, %v5193, %v5195
    %v5218 = vsel %vm1927, %v5191, %v5193
    %v5219 = vsel %vm1927, %v5189, %v5191
    %v5220 = vsel %vm1927, %v5187, %v5189
    %v5221 = vsel %vm1927, %v5185, %v5187
    %v5222 = vsel %vm1927, %v5183, %v5185
    %v5223 = vsel %vm1927, %v5209, %v5183
    %v5238 = vrot.slane %v5222, 6
    %v5239 = vrot.slane %v5221, 6
    %v5240 = vrot.slane %v5220, 6
    %v5241 = vrot.slane %v5219, 6
    %v5242 = vrot.slane %v5218, 6
    %v5243 = vrot.slane %v5217, 6
    %v5244 = vrot.slane %v5216, 6
    %v5245 = vrot.slane %v5215, 6
    %v5246 = vrot.slane %v5214, 6
    %v5247 = vrot.slane %v5213, 6
    %v5248 = vrot.slane %v5212, 6
    %v5249 = vrot.slane %v5211, 6
    %v5250 = vrot.slane %v5210, 6
    %v5251 = vrot.slane %v5223, 6
    %5266 = vst [vmem:[#allocation4 + $0x620] sm:$0xfc] %v5238
    %5267 = vst [vmem:[#allocation4 + $0x628] sm:$0xfc] %v5239
    %5268 = vst [vmem:[#allocation4 + $0x630] sm:$0xfc] %v5240
    %5269 = vst [vmem:[#allocation4 + $0x638] sm:$0xfc] %v5241
    %5270 = vst [vmem:[#allocation4 + $0x640] sm:$0xfc] %v5242
    %5271 = vst [vmem:[#allocation4 + $0x648] sm:$0xfc] %v5243
    %5272 = vst [vmem:[#allocation4 + $0x650] sm:$0xfc] %v5244
    %5273 = vst [vmem:[#allocation4 + $0x658] sm:$0xfc] %v5245
    %5274 = vst [vmem:[#allocation4 + $0x660] sm:$0xfc] %v5246
    %5275 = vst [vmem:[#allocation4 + $0x668] sm:$0xfc] %v5247
    %5276 = vst [vmem:[#allocation4 + $0x670] sm:$0xfc] %v5248
    %5277 = vst [vmem:[#allocation4 + $0x678] sm:$0xfc] %v5249
    %5278 = vst [vmem:[#allocation4 + $0x680] sm:$0xfc] %v5250
    %5279 = vst [vmem:[#allocation4 + $0x688] sm:$0xfc] %v5251
    %5280 = vrot.lane.b32.xlu0 %v3418, 16
    %v5281 = vpop.permute.xlu0 %5280
    %5282 = vrot.lane.b32.xlu0 %v3419, 16
    %v5283 = vpop.permute.xlu0 %5282
    %5284 = vrot.lane.b32.xlu0 %v3420, 16
    %v5285 = vpop.permute.xlu0 %5284
    %5286 = vrot.lane.b32.xlu0 %v3421, 16
    %v5287 = vpop.permute.xlu0 %5286
    %5288 = vrot.lane.b32.xlu0 %v3422, 16
    %v5289 = vpop.permute.xlu0 %5288
    %5290 = vrot.lane.b32.xlu0 %v3423, 16
    %v5291 = vpop.permute.xlu0 %5290
    %5292 = vrot.lane.b32.xlu0 %v3424, 16
    %v5293 = vpop.permute.xlu0 %5292
    %5294 = vrot.lane.b32.xlu0 %v3425, 16
    %v5295 = vpop.permute.xlu0 %5294
    %5296 = vrot.lane.b32.xlu0 %v3426, 16
    %v5297 = vpop.permute.xlu0 %5296
    %5298 = vrot.lane.b32.xlu0 %v3427, 16
    %v5299 = vpop.permute.xlu0 %5298
    %5300 = vrot.lane.b32.xlu0 %v3428, 16
    %v5301 = vpop.permute.xlu0 %5300
    %5302 = vrot.lane.b32.xlu0 %v3429, 16
    %v5303 = vpop.permute.xlu0 %5302
    %5304 = vrot.lane.b32.xlu0 %v3430, 16
    %v5305 = vpop.permute.xlu0 %5304
    %5306 = vrot.lane.b32.xlu0 %v3431, 16
    %v5307 = vpop.permute.xlu0 %5306
    %v5308 = vsel %vm2026, %v5305, %v5307
    %v5309 = vsel %vm2026, %v5303, %v5305
    %v5310 = vsel %vm2026, %v5301, %v5303
    %v5311 = vsel %vm2026, %v5299, %v5301
    %v5312 = vsel %vm2026, %v5297, %v5299
    %v5313 = vsel %vm2026, %v5295, %v5297
    %v5314 = vsel %vm2026, %v5293, %v5295
    %v5315 = vsel %vm2026, %v5291, %v5293
    %v5316 = vsel %vm2026, %v5289, %v5291
    %v5317 = vsel %vm2026, %v5287, %v5289
    %v5318 = vsel %vm2026, %v5285, %v5287
    %v5319 = vsel %vm2026, %v5283, %v5285
    %v5320 = vsel %vm2026, %v5281, %v5283
    %v5321 = vsel %vm2026, %v5307, %v5281
    %5322 = vst [vmem:[#allocation4 + $0x690] sm:$0x3f] %v5320
    %5323 = vst [vmem:[#allocation4 + $0x698] sm:$0x3f] %v5319
    %5324 = vst [vmem:[#allocation4 + $0x6a0] sm:$0x3f] %v5318
    %5325 = vst [vmem:[#allocation4 + $0x6a8] sm:$0x3f] %v5317
    %5326 = vst [vmem:[#allocation4 + $0x6b0] sm:$0x3f] %v5316
    %5327 = vst [vmem:[#allocation4 + $0x6b8] sm:$0x3f] %v5315
    %5328 = vst [vmem:[#allocation4 + $0x6c0] sm:$0x3f] %v5314
    %5329 = vst [vmem:[#allocation4 + $0x6c8] sm:$0x3f] %v5313
    %5330 = vst [vmem:[#allocation4 + $0x6d0] sm:$0x3f] %v5312
    %5331 = vst [vmem:[#allocation4 + $0x6d8] sm:$0x3f] %v5311
    %5332 = vst [vmem:[#allocation4 + $0x6e0] sm:$0x3f] %v5310
    %5333 = vst [vmem:[#allocation4 + $0x6e8] sm:$0x3f] %v5309
    %5334 = vst [vmem:[#allocation4 + $0x6f0] sm:$0x3f] %v5308
    %5335 = vst [vmem:[#allocation4 + $0x6f8] sm:$0x3f] %v5321
    %5336 = vrot.lane.b32.xlu0 %v3418, 15
    %v5337 = vpop.permute.xlu0 %5336
    %5338 = vrot.lane.b32.xlu0 %v3419, 15
    %v5339 = vpop.permute.xlu0 %5338
    %5340 = vrot.lane.b32.xlu0 %v3420, 15
    %v5341 = vpop.permute.xlu0 %5340
    %5342 = vrot.lane.b32.xlu0 %v3421, 15
    %v5343 = vpop.permute.xlu0 %5342
    %5344 = vrot.lane.b32.xlu0 %v3422, 15
    %v5345 = vpop.permute.xlu0 %5344
    %5346 = vrot.lane.b32.xlu0 %v3423, 15
    %v5347 = vpop.permute.xlu0 %5346
    %5348 = vrot.lane.b32.xlu0 %v3424, 15
    %v5349 = vpop.permute.xlu0 %5348
    %5350 = vrot.lane.b32.xlu0 %v3425, 15
    %v5351 = vpop.permute.xlu0 %5350
    %5352 = vrot.lane.b32.xlu0 %v3426, 15
    %v5353 = vpop.permute.xlu0 %5352
    %5354 = vrot.lane.b32.xlu0 %v3427, 15
    %v5355 = vpop.permute.xlu0 %5354
    %5356 = vrot.lane.b32.xlu0 %v3428, 15
    %v5357 = vpop.permute.xlu0 %5356
    %5358 = vrot.lane.b32.xlu0 %v3429, 15
    %v5359 = vpop.permute.xlu0 %5358
    %5360 = vrot.lane.b32.xlu0 %v3430, 15
    %v5361 = vpop.permute.xlu0 %5360
    %5362 = vrot.lane.b32.xlu0 %v3431, 15
    %v5363 = vpop.permute.xlu0 %5362
    %v5364 = vsel %vm2125, %v5361, %v5363
    %v5365 = vsel %vm2125, %v5359, %v5361
    %v5366 = vsel %vm2125, %v5357, %v5359
    %v5367 = vsel %vm2125, %v5355, %v5357
    %v5368 = vsel %vm2125, %v5353, %v5355
    %v5369 = vsel %vm2125, %v5351, %v5353
    %v5370 = vsel %vm2125, %v5349, %v5351
    %v5371 = vsel %vm2125, %v5347, %v5349
    %v5372 = vsel %vm2125, %v5345, %v5347
    %v5373 = vsel %vm2125, %v5343, %v5345
    %v5374 = vsel %vm2125, %v5341, %v5343
    %v5375 = vsel %vm2125, %v5339, %v5341
    %v5376 = vsel %vm2125, %v5337, %v5339
    %v5377 = vsel %vm2125, %v5363, %v5337
    %v5392 = vrot.slane %v5376, 2
    %v5393 = vrot.slane %v5375, 2
    %v5394 = vrot.slane %v5374, 2
    %v5395 = vrot.slane %v5373, 2
    %v5396 = vrot.slane %v5372, 2
    %v5397 = vrot.slane %v5371, 2
    %v5398 = vrot.slane %v5370, 2
    %v5399 = vrot.slane %v5369, 2
    %v5400 = vrot.slane %v5368, 2
    %v5401 = vrot.slane %v5367, 2
    %v5402 = vrot.slane %v5366, 2
    %v5403 = vrot.slane %v5365, 2
    %v5404 = vrot.slane %v5364, 2
    %v5405 = vrot.slane %v5377, 2
    %5420 = vst [vmem:[#allocation4 + $0x690] sm:$0xc0] %v5392
    %5421 = vst [vmem:[#allocation4 + $0x698] sm:$0xc0] %v5393
    %5422 = vst [vmem:[#allocation4 + $0x6a0] sm:$0xc0] %v5394
    %5423 = vst [vmem:[#allocation4 + $0x6a8] sm:$0xc0] %v5395
    %5424 = vst [vmem:[#allocation4 + $0x6b0] sm:$0xc0] %v5396
    %5425 = vst [vmem:[#allocation4 + $0x6b8] sm:$0xc0] %v5397
    %5426 = vst [vmem:[#allocation4 + $0x6c0] sm:$0xc0] %v5398
    %5427 = vst [vmem:[#allocation4 + $0x6c8] sm:$0xc0] %v5399
    %5428 = vst [vmem:[#allocation4 + $0x6d0] sm:$0xc0] %v5400
    %5429 = vst [vmem:[#allocation4 + $0x6d8] sm:$0xc0] %v5401
    %5430 = vst [vmem:[#allocation4 + $0x6e0] sm:$0xc0] %v5402
    %5431 = vst [vmem:[#allocation4 + $0x6e8] sm:$0xc0] %v5403
    %5432 = vst [vmem:[#allocation4 + $0x6f0] sm:$0xc0] %v5404
    %5433 = vst [vmem:[#allocation4 + $0x6f8] sm:$0xc0] %v5405
    %5434 = vst [vmem:[#allocation4 + $0x700] sm:$0xf] %v5392
    %5435 = vst [vmem:[#allocation4 + $0x708] sm:$0xf] %v5393
    %5436 = vst [vmem:[#allocation4 + $0x710] sm:$0xf] %v5394
    %5437 = vst [vmem:[#allocation4 + $0x718] sm:$0xf] %v5395
    %5438 = vst [vmem:[#allocation4 + $0x720] sm:$0xf] %v5396
    %5439 = vst [vmem:[#allocation4 + $0x728] sm:$0xf] %v5397
    %5440 = vst [vmem:[#allocation4 + $0x730] sm:$0xf] %v5398
    %5441 = vst [vmem:[#allocation4 + $0x738] sm:$0xf] %v5399
    %5442 = vst [vmem:[#allocation4 + $0x740] sm:$0xf] %v5400
    %5443 = vst [vmem:[#allocation4 + $0x748] sm:$0xf] %v5401
    %5444 = vst [vmem:[#allocation4 + $0x750] sm:$0xf] %v5402
    %5445 = vst [vmem:[#allocation4 + $0x758] sm:$0xf] %v5403
    %5446 = vst [vmem:[#allocation4 + $0x760] sm:$0xf] %v5404
    %5447 = vst [vmem:[#allocation4 + $0x768] sm:$0xf] %v5405
    %5448 = vrot.lane.b32.xlu0 %v3418, 14
    %v5449 = vpop.permute.xlu0 %5448
    %5450 = vrot.lane.b32.xlu0 %v3419, 14
    %v5451 = vpop.permute.xlu0 %5450
    %5452 = vrot.lane.b32.xlu0 %v3420, 14
    %v5453 = vpop.permute.xlu0 %5452
    %5454 = vrot.lane.b32.xlu0 %v3421, 14
    %v5455 = vpop.permute.xlu0 %5454
    %5456 = vrot.lane.b32.xlu0 %v3422, 14
    %v5457 = vpop.permute.xlu0 %5456
    %5458 = vrot.lane.b32.xlu0 %v3423, 14
    %v5459 = vpop.permute.xlu0 %5458
    %5460 = vrot.lane.b32.xlu0 %v3424, 14
    %v5461 = vpop.permute.xlu0 %5460
    %5462 = vrot.lane.b32.xlu0 %v3425, 14
    %v5463 = vpop.permute.xlu0 %5462
    %5464 = vrot.lane.b32.xlu0 %v3426, 14
    %v5465 = vpop.permute.xlu0 %5464
    %5466 = vrot.lane.b32.xlu0 %v3427, 14
    %v5467 = vpop.permute.xlu0 %5466
    %5468 = vrot.lane.b32.xlu0 %v3428, 14
    %v5469 = vpop.permute.xlu0 %5468
    %5470 = vrot.lane.b32.xlu0 %v3429, 14
    %v5471 = vpop.permute.xlu0 %5470
    %5472 = vrot.lane.b32.xlu0 %v3430, 14
    %v5473 = vpop.permute.xlu0 %5472
    %5474 = vrot.lane.b32.xlu0 %v3431, 14
    %v5475 = vpop.permute.xlu0 %5474
    %v5476 = vsel %vm2238, %v5473, %v5475
    %v5477 = vsel %vm2238, %v5471, %v5473
    %v5478 = vsel %vm2238, %v5469, %v5471
    %v5479 = vsel %vm2238, %v5467, %v5469
    %v5480 = vsel %vm2238, %v5465, %v5467
    %v5481 = vsel %vm2238, %v5463, %v5465
    %v5482 = vsel %vm2238, %v5461, %v5463
    %v5483 = vsel %vm2238, %v5459, %v5461
    %v5484 = vsel %vm2238, %v5457, %v5459
    %v5485 = vsel %vm2238, %v5455, %v5457
    %v5486 = vsel %vm2238, %v5453, %v5455
    %v5487 = vsel %vm2238, %v5451, %v5453
    %v5488 = vsel %vm2238, %v5449, %v5451
    %v5489 = vsel %vm2238, %v5475, %v5449
    %v5504 = vrot.slane %v5488, 4
    %v5505 = vrot.slane %v5487, 4
    %v5506 = vrot.slane %v5486, 4
    %v5507 = vrot.slane %v5485, 4
    %v5508 = vrot.slane %v5484, 4
    %v5509 = vrot.slane %v5483, 4
    %v5510 = vrot.slane %v5482, 4
    %v5511 = vrot.slane %v5481, 4
    %v5512 = vrot.slane %v5480, 4
    %v5513 = vrot.slane %v5479, 4
    %v5514 = vrot.slane %v5478, 4
    %v5515 = vrot.slane %v5477, 4
    %v5516 = vrot.slane %v5476, 4
    %v5517 = vrot.slane %v5489, 4
    %5532 = vst [vmem:[#allocation4 + $0x700] sm:$0xf0] %v5504
    %5533 = vst [vmem:[#allocation4 + $0x708] sm:$0xf0] %v5505
    %5534 = vst [vmem:[#allocation4 + $0x710] sm:$0xf0] %v5506
    %5535 = vst [vmem:[#allocation4 + $0x718] sm:$0xf0] %v5507
    %5536 = vst [vmem:[#allocation4 + $0x720] sm:$0xf0] %v5508
    %5537 = vst [vmem:[#allocation4 + $0x728] sm:$0xf0] %v5509
    %5538 = vst [vmem:[#allocation4 + $0x730] sm:$0xf0] %v5510
    %5539 = vst [vmem:[#allocation4 + $0x738] sm:$0xf0] %v5511
    %5540 = vst [vmem:[#allocation4 + $0x740] sm:$0xf0] %v5512
    %5541 = vst [vmem:[#allocation4 + $0x748] sm:$0xf0] %v5513
    %5542 = vst [vmem:[#allocation4 + $0x750] sm:$0xf0] %v5514
    %5543 = vst [vmem:[#allocation4 + $0x758] sm:$0xf0] %v5515
    %5544 = vst [vmem:[#allocation4 + $0x760] sm:$0xf0] %v5516
    %5545 = vst [vmem:[#allocation4 + $0x768] sm:$0xf0] %v5517
    %5546 = vst [vmem:[#allocation4 + $0x770] sm:$0x3] %v5504
    %5547 = vst [vmem:[#allocation4 + $0x778] sm:$0x3] %v5505
    %5548 = vst [vmem:[#allocation4 + $0x780] sm:$0x3] %v5506
    %5549 = vst [vmem:[#allocation4 + $0x788] sm:$0x3] %v5507
    %5550 = vst [vmem:[#allocation4 + $0x790] sm:$0x3] %v5508
    %5551 = vst [vmem:[#allocation4 + $0x798] sm:$0x3] %v5509
    %5552 = vst [vmem:[#allocation4 + $0x7a0] sm:$0x3] %v5510
    %5553 = vst [vmem:[#allocation4 + $0x7a8] sm:$0x3] %v5511
    %5554 = vst [vmem:[#allocation4 + $0x7b0] sm:$0x3] %v5512
    %5555 = vst [vmem:[#allocation4 + $0x7b8] sm:$0x3] %v5513
    %5556 = vst [vmem:[#allocation4 + $0x7c0] sm:$0x3] %v5514
    %5557 = vst [vmem:[#allocation4 + $0x7c8] sm:$0x3] %v5515
    %5558 = vst [vmem:[#allocation4 + $0x7d0] sm:$0x3] %v5516
    %5559 = vst [vmem:[#allocation4 + $0x7d8] sm:$0x3] %v5517
    %5560 = vrot.lane.b32.xlu0 %v3418, 13
    %v5561 = vpop.permute.xlu0 %5560
    %5562 = vrot.lane.b32.xlu0 %v3419, 13
    %v5563 = vpop.permute.xlu0 %5562
    %5564 = vrot.lane.b32.xlu0 %v3420, 13
    %v5565 = vpop.permute.xlu0 %5564
    %5566 = vrot.lane.b32.xlu0 %v3421, 13
    %v5567 = vpop.permute.xlu0 %5566
    %5568 = vrot.lane.b32.xlu0 %v3422, 13
    %v5569 = vpop.permute.xlu0 %5568
    %5570 = vrot.lane.b32.xlu0 %v3423, 13
    %v5571 = vpop.permute.xlu0 %5570
    %5572 = vrot.lane.b32.xlu0 %v3424, 13
    %v5573 = vpop.permute.xlu0 %5572
    %5574 = vrot.lane.b32.xlu0 %v3425, 13
    %v5575 = vpop.permute.xlu0 %5574
    %5576 = vrot.lane.b32.xlu0 %v3426, 13
    %v5577 = vpop.permute.xlu0 %5576
    %5578 = vrot.lane.b32.xlu0 %v3427, 13
    %v5579 = vpop.permute.xlu0 %5578
    %5580 = vrot.lane.b32.xlu0 %v3428, 13
    %v5581 = vpop.permute.xlu0 %5580
    %5582 = vrot.lane.b32.xlu0 %v3429, 13
    %v5583 = vpop.permute.xlu0 %5582
    %5584 = vrot.lane.b32.xlu0 %v3430, 13
    %v5585 = vpop.permute.xlu0 %5584
    %5586 = vrot.lane.b32.xlu0 %v3431, 13
    %v5587 = vpop.permute.xlu0 %5586
    %v5588 = vsel %vm2337, %v5585, %v5587
    %v5589 = vsel %vm2337, %v5583, %v5585
    %v5590 = vsel %vm2337, %v5581, %v5583
    %v5591 = vsel %vm2337, %v5579, %v5581
    %v5592 = vsel %vm2337, %v5577, %v5579
    %v5593 = vsel %vm2337, %v5575, %v5577
    %v5594 = vsel %vm2337, %v5573, %v5575
    %v5595 = vsel %vm2337, %v5571, %v5573
    %v5596 = vsel %vm2337, %v5569, %v5571
    %v5597 = vsel %vm2337, %v5567, %v5569
    %v5598 = vsel %vm2337, %v5565, %v5567
    %v5599 = vsel %vm2337, %v5563, %v5565
    %v5600 = vsel %vm2337, %v5561, %v5563
    %v5601 = vsel %vm2337, %v5587, %v5561
    %v5616 = vrot.slane %v5600, 6
    %v5617 = vrot.slane %v5599, 6
    %v5618 = vrot.slane %v5598, 6
    %v5619 = vrot.slane %v5597, 6
    %v5620 = vrot.slane %v5596, 6
    %v5621 = vrot.slane %v5595, 6
    %v5622 = vrot.slane %v5594, 6
    %v5623 = vrot.slane %v5593, 6
    %v5624 = vrot.slane %v5592, 6
    %v5625 = vrot.slane %v5591, 6
    %v5626 = vrot.slane %v5590, 6
    %v5627 = vrot.slane %v5589, 6
    %v5628 = vrot.slane %v5588, 6
    %v5629 = vrot.slane %v5601, 6
    %5644 = vst [vmem:[#allocation4 + $0x770] sm:$0xfc] %v5616
    %5645 = vst [vmem:[#allocation4 + $0x778] sm:$0xfc] %v5617
    %5646 = vst [vmem:[#allocation4 + $0x780] sm:$0xfc] %v5618
    %5647 = vst [vmem:[#allocation4 + $0x788] sm:$0xfc] %v5619
    %5648 = vst [vmem:[#allocation4 + $0x790] sm:$0xfc] %v5620
    %5649 = vst [vmem:[#allocation4 + $0x798] sm:$0xfc] %v5621
    %5650 = vst [vmem:[#allocation4 + $0x7a0] sm:$0xfc] %v5622
    %5651 = vst [vmem:[#allocation4 + $0x7a8] sm:$0xfc] %v5623
    %5652 = vst [vmem:[#allocation4 + $0x7b0] sm:$0xfc] %v5624
    %5653 = vst [vmem:[#allocation4 + $0x7b8] sm:$0xfc] %v5625
    %5654 = vst [vmem:[#allocation4 + $0x7c0] sm:$0xfc] %v5626
    %5655 = vst [vmem:[#allocation4 + $0x7c8] sm:$0xfc] %v5627
    %5656 = vst [vmem:[#allocation4 + $0x7d0] sm:$0xfc] %v5628
    %5657 = vst [vmem:[#allocation4 + $0x7d8] sm:$0xfc] %v5629
    %5658 = vrot.lane.b32.xlu0 %v3418, 12
    %v5659 = vpop.permute.xlu0 %5658
    %5660 = vrot.lane.b32.xlu0 %v3419, 12
    %v5661 = vpop.permute.xlu0 %5660
    %5662 = vrot.lane.b32.xlu0 %v3420, 12
    %v5663 = vpop.permute.xlu0 %5662
    %5664 = vrot.lane.b32.xlu0 %v3421, 12
    %v5665 = vpop.permute.xlu0 %5664
    %5666 = vrot.lane.b32.xlu0 %v3422, 12
    %v5667 = vpop.permute.xlu0 %5666
    %5668 = vrot.lane.b32.xlu0 %v3423, 12
    %v5669 = vpop.permute.xlu0 %5668
    %5670 = vrot.lane.b32.xlu0 %v3424, 12
    %v5671 = vpop.permute.xlu0 %5670
    %5672 = vrot.lane.b32.xlu0 %v3425, 12
    %v5673 = vpop.permute.xlu0 %5672
    %5674 = vrot.lane.b32.xlu0 %v3426, 12
    %v5675 = vpop.permute.xlu0 %5674
    %5676 = vrot.lane.b32.xlu0 %v3427, 12
    %v5677 = vpop.permute.xlu0 %5676
    %5678 = vrot.lane.b32.xlu0 %v3428, 12
    %v5679 = vpop.permute.xlu0 %5678
    %5680 = vrot.lane.b32.xlu0 %v3429, 12
    %v5681 = vpop.permute.xlu0 %5680
    %5682 = vrot.lane.b32.xlu0 %v3430, 12
    %v5683 = vpop.permute.xlu0 %5682
    %5684 = vrot.lane.b32.xlu0 %v3431, 12
    %v5685 = vpop.permute.xlu0 %5684
    %v5686 = vsel %vm2436, %v5683, %v5685
    %v5687 = vsel %vm2436, %v5681, %v5683
    %v5688 = vsel %vm2436, %v5679, %v5681
    %v5689 = vsel %vm2436, %v5677, %v5679
    %v5690 = vsel %vm2436, %v5675, %v5677
    %v5691 = vsel %vm2436, %v5673, %v5675
    %v5692 = vsel %vm2436, %v5671, %v5673
    %v5693 = vsel %vm2436, %v5669, %v5671
    %v5694 = vsel %vm2436, %v5667, %v5669
    %v5695 = vsel %vm2436, %v5665, %v5667
    %v5696 = vsel %vm2436, %v5663, %v5665
    %v5697 = vsel %vm2436, %v5661, %v5663
    %v5698 = vsel %vm2436, %v5659, %v5661
    %v5699 = vsel %vm2436, %v5685, %v5659
    %5700 = vst [vmem:[#allocation4 + $0x7e0] sm:$0x3f] %v5698
    %5701 = vst [vmem:[#allocation4 + $0x7e8] sm:$0x3f] %v5697
    %5702 = vst [vmem:[#allocation4 + $0x7f0] sm:$0x3f] %v5696
    %5703 = vst [vmem:[#allocation4 + $0x7f8] sm:$0x3f] %v5695
    %5704 = vst [vmem:[#allocation4 + $0x800] sm:$0x3f] %v5694
    %5705 = vst [vmem:[#allocation4 + $0x808] sm:$0x3f] %v5693
    %5706 = vst [vmem:[#allocation4 + $0x810] sm:$0x3f] %v5692
    %5707 = vst [vmem:[#allocation4 + $0x818] sm:$0x3f] %v5691
    %5708 = vst [vmem:[#allocation4 + $0x820] sm:$0x3f] %v5690
    %5709 = vst [vmem:[#allocation4 + $0x828] sm:$0x3f] %v5689
    %5710 = vst [vmem:[#allocation4 + $0x830] sm:$0x3f] %v5688
    %5711 = vst [vmem:[#allocation4 + $0x838] sm:$0x3f] %v5687
    %5712 = vst [vmem:[#allocation4 + $0x840] sm:$0x3f] %v5686
    %5713 = vst [vmem:[#allocation4 + $0x848] sm:$0x3f] %v5699
    %v5714 = vld [vmem:[%s5] sm:$0xff]
    %v5715 = vld [vmem:[%s5 + $0x8] sm:$0xff]
    %v5716 = vpack.c.bf16 %v5714, %v5714
    %v5717 = vpack.c.bf16 %v5715, %v5715
    %v5718 = vld [vmem:[#allocation4] sm:$0xff]
    %v5719 = vld [vmem:[#allocation4 + $0x8] sm:$0xff]
    %v5720 = vld [vmem:[#allocation4 + $0x10] sm:$0xff]
    %v5721 = vld [vmem:[#allocation4 + $0x18] sm:$0xff]
    %v5722 = vld [vmem:[#allocation4 + $0x20] sm:$0xff]
    %v5723 = vld [vmem:[#allocation4 + $0x28] sm:$0xff]
    %v5724 = vld [vmem:[#allocation4 + $0x30] sm:$0xff]
    %v5725 = vld [vmem:[#allocation4 + $0x38] sm:$0xff]
    %v5726 = vld [vmem:[#allocation4 + $0x40] sm:$0xff]
    %v5727 = vld [vmem:[#allocation4 + $0x48] sm:$0xff]
    %v5728 = vld [vmem:[#allocation4 + $0x50] sm:$0xff]
    %v5729 = vld [vmem:[#allocation4 + $0x58] sm:$0xff]
    %v5730 = vld [vmem:[#allocation4 + $0x60] sm:$0xff]
    %v5731 = vld [vmem:[#allocation4 + $0x68] sm:$0xff]
    %v5732 = vld [vmem:[#allocation4 + $0x70] sm:$0xff]
    %v5733 = vld [vmem:[#allocation4 + $0x78] sm:$0xff]
    %v5734 = vld [vmem:[#allocation4 + $0x80] sm:$0xff]
    %v5735 = vld [vmem:[#allocation4 + $0x88] sm:$0xff]
    %v5736 = vld [vmem:[#allocation4 + $0x90] sm:$0xff]
    %v5737 = vld [vmem:[#allocation4 + $0x98] sm:$0xff]
    %v5738 = vld [vmem:[#allocation4 + $0xa0] sm:$0xff]
    %v5739 = vld [vmem:[#allocation4 + $0xa8] sm:$0xff]
    %v5740 = vld [vmem:[#allocation4 + $0xb0] sm:$0xff]
    %v5741 = vld [vmem:[#allocation4 + $0xb8] sm:$0xff]
    %v5742 = vld [vmem:[#allocation4 + $0xc0] sm:$0xff]
    %v5743 = vld [vmem:[#allocation4 + $0xc8] sm:$0xff]
    %v5744 = vld [vmem:[#allocation4 + $0xd0] sm:$0xff]
    %v5745 = vld [vmem:[#allocation4 + $0xd8] sm:$0xff]
    %v5746 = vld [vmem:[#allocation4 + $0xe0] sm:$0xff]
    %v5747 = vld [vmem:[#allocation4 + $0xe8] sm:$0xff]
    %v5748 = vld [vmem:[#allocation4 + $0xf0] sm:$0xff]
    %v5749 = vld [vmem:[#allocation4 + $0xf8] sm:$0xff]
    %v5750 = vld [vmem:[#allocation4 + $0x100] sm:$0xff]
    %v5751 = vld [vmem:[#allocation4 + $0x108] sm:$0xff]
    %v5752 = vld [vmem:[#allocation4 + $0x110] sm:$0xff]
    %v5753 = vld [vmem:[#allocation4 + $0x118] sm:$0xff]
    %v5754 = vld [vmem:[#allocation4 + $0x120] sm:$0xff]
    %v5755 = vld [vmem:[#allocation4 + $0x128] sm:$0xff]
    %v5756 = vld [vmem:[#allocation4 + $0x130] sm:$0xff]
    %v5757 = vld [vmem:[#allocation4 + $0x138] sm:$0xff]
    %v5758 = vld [vmem:[#allocation4 + $0x140] sm:$0xff]
    %v5759 = vld [vmem:[#allocation4 + $0x148] sm:$0xff]
    %v5760 = vld [vmem:[#allocation4 + $0x150] sm:$0xff]
    %v5761 = vld [vmem:[#allocation4 + $0x158] sm:$0xff]
    %v5762 = vld [vmem:[#allocation4 + $0x160] sm:$0xff]
    %v5763 = vld [vmem:[#allocation4 + $0x168] sm:$0xff]
    %v5764 = vld [vmem:[#allocation4 + $0x170] sm:$0xff]
    %v5765 = vld [vmem:[#allocation4 + $0x178] sm:$0xff]
    %v5766 = vld [vmem:[#allocation4 + $0x180] sm:$0xff]
    %v5767 = vld [vmem:[#allocation4 + $0x188] sm:$0xff]
    %v5768 = vld [vmem:[#allocation4 + $0x190] sm:$0xff]
    %v5769 = vld [vmem:[#allocation4 + $0x198] sm:$0xff]
    %v5770 = vld [vmem:[#allocation4 + $0x1a0] sm:$0xff]
    %v5771 = vld [vmem:[#allocation4 + $0x1a8] sm:$0xff]
    %v5772 = vld [vmem:[#allocation4 + $0x1b0] sm:$0xff]
    %v5773 = vld [vmem:[#allocation4 + $0x1b8] sm:$0xff]
    %v5774 = vld [vmem:[#allocation4 + $0x1c0] sm:$0xff]
    %v5775 = vld [vmem:[#allocation4 + $0x1c8] sm:$0xff]
    %v5776 = vld [vmem:[#allocation4 + $0x1d0] sm:$0xff]
    %v5777 = vld [vmem:[#allocation4 + $0x1d8] sm:$0xff]
    %v5778 = vld [vmem:[#allocation4 + $0x1e0] sm:$0xff]
    %v5779 = vld [vmem:[#allocation4 + $0x1e8] sm:$0xff]
    %v5780 = vld [vmem:[#allocation4 + $0x1f0] sm:$0xff]
    %v5781 = vld [vmem:[#allocation4 + $0x1f8] sm:$0xff]
    %v5782 = vld [vmem:[#allocation4 + $0x200] sm:$0xff]
    %v5783 = vld [vmem:[#allocation4 + $0x208] sm:$0xff]
    %v5784 = vld [vmem:[#allocation4 + $0x210] sm:$0xff]
    %v5785 = vld [vmem:[#allocation4 + $0x218] sm:$0xff]
    %v5786 = vld [vmem:[#allocation4 + $0x220] sm:$0xff]
    %v5787 = vld [vmem:[#allocation4 + $0x228] sm:$0xff]
    %v5788 = vld [vmem:[#allocation4 + $0x230] sm:$0xff]
    %v5789 = vld [vmem:[#allocation4 + $0x238] sm:$0xff]
    %v5790 = vld [vmem:[#allocation4 + $0x240] sm:$0xff]
    %v5791 = vld [vmem:[#allocation4 + $0x248] sm:$0xff]
    %v5792 = vld [vmem:[#allocation4 + $0x250] sm:$0xff]
    %v5793 = vld [vmem:[#allocation4 + $0x258] sm:$0xff]
    %v5794 = vld [vmem:[#allocation4 + $0x260] sm:$0xff]
    %v5795 = vld [vmem:[#allocation4 + $0x268] sm:$0xff]
    %v5796 = vld [vmem:[#allocation4 + $0x270] sm:$0xff]
    %v5797 = vld [vmem:[#allocation4 + $0x278] sm:$0xff]
    %v5798 = vld [vmem:[#allocation4 + $0x280] sm:$0xff]
    %v5799 = vld [vmem:[#allocation4 + $0x288] sm:$0xff]
    %v5800 = vld [vmem:[#allocation4 + $0x290] sm:$0xff]
    %v5801 = vld [vmem:[#allocation4 + $0x298] sm:$0xff]
    %v5802 = vld [vmem:[#allocation4 + $0x2a0] sm:$0xff]
    %v5803 = vld [vmem:[#allocation4 + $0x2a8] sm:$0xff]
    %v5804 = vld [vmem:[#allocation4 + $0x2b0] sm:$0xff]
    %v5805 = vld [vmem:[#allocation4 + $0x2b8] sm:$0xff]
    %v5806 = vld [vmem:[#allocation4 + $0x2c0] sm:$0xff]
    %v5807 = vld [vmem:[#allocation4 + $0x2c8] sm:$0xff]
    %v5808 = vld [vmem:[#allocation4 + $0x2d0] sm:$0xff]
    %v5809 = vld [vmem:[#allocation4 + $0x2d8] sm:$0xff]
    %v5810 = vld [vmem:[#allocation4 + $0x2e0] sm:$0xff]
    %v5811 = vld [vmem:[#allocation4 + $0x2e8] sm:$0xff]
    %v5812 = vld [vmem:[#allocation4 + $0x2f0] sm:$0xff]
    %v5813 = vld [vmem:[#allocation4 + $0x2f8] sm:$0xff]
    %v5814 = vld [vmem:[#allocation4 + $0x300] sm:$0xff]
    %v5815 = vld [vmem:[#allocation4 + $0x308] sm:$0xff]
    %v5816 = vld [vmem:[#allocation4 + $0x310] sm:$0xff]
    %v5817 = vld [vmem:[#allocation4 + $0x318] sm:$0xff]
    %v5818 = vld [vmem:[#allocation4 + $0x320] sm:$0xff]
    %v5819 = vld [vmem:[#allocation4 + $0x328] sm:$0xff]
    %v5820 = vld [vmem:[#allocation4 + $0x330] sm:$0xff]
    %v5821 = vld [vmem:[#allocation4 + $0x338] sm:$0xff]
    %v5822 = vld [vmem:[#allocation4 + $0x340] sm:$0xff]
    %v5823 = vld [vmem:[#allocation4 + $0x348] sm:$0xff]
    %v5824 = vld [vmem:[#allocation4 + $0x350] sm:$0xff]
    %v5825 = vld [vmem:[#allocation4 + $0x358] sm:$0xff]
    %v5826 = vld [vmem:[#allocation4 + $0x360] sm:$0xff]
    %v5827 = vld [vmem:[#allocation4 + $0x368] sm:$0xff]
    %v5828 = vld [vmem:[#allocation4 + $0x370] sm:$0xff]
    %v5829 = vld [vmem:[#allocation4 + $0x378] sm:$0xff]
    %v5830 = vld [vmem:[#allocation4 + $0x380] sm:$0xff]
    %v5831 = vld [vmem:[#allocation4 + $0x388] sm:$0xff]
    %v5832 = vld [vmem:[#allocation4 + $0x390] sm:$0xff]
    %v5833 = vld [vmem:[#allocation4 + $0x398] sm:$0xff]
    %v5834 = vld [vmem:[#allocation4 + $0x3a0] sm:$0xff]
    %v5835 = vld [vmem:[#allocation4 + $0x3a8] sm:$0xff]
    %v5836 = vld [vmem:[#allocation4 + $0x3b0] sm:$0xff]
    %v5837 = vld [vmem:[#allocation4 + $0x3b8] sm:$0xff]
    %v5838 = vld [vmem:[#allocation4 + $0x3c0] sm:$0xff]
    %v5839 = vld [vmem:[#allocation4 + $0x3c8] sm:$0xff]
    %v5840 = vld [vmem:[#allocation4 + $0x3d0] sm:$0xff]
    %v5841 = vld [vmem:[#allocation4 + $0x3d8] sm:$0xff]
    %v5842 = vld [vmem:[#allocation4 + $0x3e0] sm:$0xff]
    %v5843 = vld [vmem:[#allocation4 + $0x3e8] sm:$0xff]
    %v5844 = vld [vmem:[#allocation4 + $0x3f0] sm:$0xff]
    %v5845 = vld [vmem:[#allocation4 + $0x3f8] sm:$0xff]
    %v5846 = vld [vmem:[#allocation4 + $0x400] sm:$0xff]
    %v5847 = vld [vmem:[#allocation4 + $0x408] sm:$0xff]
    %v5848 = vld [vmem:[#allocation4 + $0x410] sm:$0xff]
    %v5849 = vld [vmem:[#allocation4 + $0x418] sm:$0xff]
    %v5850 = vld [vmem:[#allocation4 + $0x420] sm:$0xff]
    %v5851 = vld [vmem:[#allocation4 + $0x428] sm:$0xff]
    %v5852 = vld [vmem:[#allocation4 + $0x430] sm:$0xff]
    %v5853 = vld [vmem:[#allocation4 + $0x438] sm:$0xff]
    %v5854 = vld [vmem:[#allocation4 + $0x440] sm:$0xff]
    %v5855 = vld [vmem:[#allocation4 + $0x448] sm:$0xff]
    %v5856 = vld [vmem:[#allocation4 + $0x450] sm:$0xff]
    %v5857 = vld [vmem:[#allocation4 + $0x458] sm:$0xff]
    %v5858 = vld [vmem:[#allocation4 + $0x460] sm:$0xff]
    %v5859 = vld [vmem:[#allocation4 + $0x468] sm:$0xff]
    %v5860 = vld [vmem:[#allocation4 + $0x470] sm:$0xff]
    %v5861 = vld [vmem:[#allocation4 + $0x478] sm:$0xff]
    %v5862 = vld [vmem:[#allocation4 + $0x480] sm:$0xff]
    %v5863 = vld [vmem:[#allocation4 + $0x488] sm:$0xff]
    %v5864 = vld [vmem:[#allocation4 + $0x490] sm:$0xff]
    %v5865 = vld [vmem:[#allocation4 + $0x498] sm:$0xff]
    %v5866 = vld [vmem:[#allocation4 + $0x4a0] sm:$0xff]
    %v5867 = vld [vmem:[#allocation4 + $0x4a8] sm:$0xff]
    %v5868 = vld [vmem:[#allocation4 + $0x4b0] sm:$0xff]
    %v5869 = vld [vmem:[#allocation4 + $0x4b8] sm:$0xff]
    %v5870 = vld [vmem:[#allocation4 + $0x4c0] sm:$0xff]
    %v5871 = vld [vmem:[#allocation4 + $0x4c8] sm:$0xff]
    %v5872 = vld [vmem:[#allocation4 + $0x4d0] sm:$0xff]
    %v5873 = vld [vmem:[#allocation4 + $0x4d8] sm:$0xff]
    %v5874 = vld [vmem:[#allocation4 + $0x4e0] sm:$0xff]
    %v5875 = vld [vmem:[#allocation4 + $0x4e8] sm:$0xff]
    %v5876 = vld [vmem:[#allocation4 + $0x4f0] sm:$0xff]
    %v5877 = vld [vmem:[#allocation4 + $0x4f8] sm:$0xff]
    %v5878 = vld [vmem:[#allocation4 + $0x500] sm:$0xff]
    %v5879 = vld [vmem:[#allocation4 + $0x508] sm:$0xff]
    %v5880 = vld [vmem:[#allocation4 + $0x510] sm:$0xff]
    %v5881 = vld [vmem:[#allocation4 + $0x518] sm:$0xff]
    %v5882 = vld [vmem:[#allocation4 + $0x520] sm:$0xff]
    %v5883 = vld [vmem:[#allocation4 + $0x528] sm:$0xff]
    %v5884 = vld [vmem:[#allocation4 + $0x530] sm:$0xff]
    %v5885 = vld [vmem:[#allocation4 + $0x538] sm:$0xff]
    %v5886 = vld [vmem:[#allocation4 + $0x540] sm:$0xff]
    %v5887 = vld [vmem:[#allocation4 + $0x548] sm:$0xff]
    %v5888 = vld [vmem:[#allocation4 + $0x550] sm:$0xff]
    %v5889 = vld [vmem:[#allocation4 + $0x558] sm:$0xff]
    %v5890 = vld [vmem:[#allocation4 + $0x560] sm:$0xff]
    %v5891 = vld [vmem:[#allocation4 + $0x568] sm:$0xff]
    %v5892 = vld [vmem:[#allocation4 + $0x570] sm:$0xff]
    %v5893 = vld [vmem:[#allocation4 + $0x578] sm:$0xff]
    %v5894 = vld [vmem:[#allocation4 + $0x580] sm:$0xff]
    %v5895 = vld [vmem:[#allocation4 + $0x588] sm:$0xff]
    %v5896 = vld [vmem:[#allocation4 + $0x590] sm:$0xff]
    %v5897 = vld [vmem:[#allocation4 + $0x598] sm:$0xff]
    %v5898 = vld [vmem:[#allocation4 + $0x5a0] sm:$0xff]
    %v5899 = vld [vmem:[#allocation4 + $0x5a8] sm:$0xff]
    %v5900 = vld [vmem:[#allocation4 + $0x5b0] sm:$0xff]
    %v5901 = vld [vmem:[#allocation4 + $0x5b8] sm:$0xff]
    %v5902 = vld [vmem:[#allocation4 + $0x5c0] sm:$0xff]
    %v5903 = vld [vmem:[#allocation4 + $0x5c8] sm:$0xff]
    %v5904 = vld [vmem:[#allocation4 + $0x5d0] sm:$0xff]
    %v5905 = vld [vmem:[#allocation4 + $0x5d8] sm:$0xff]
    %v5906 = vld [vmem:[#allocation4 + $0x5e0] sm:$0xff]
    %v5907 = vld [vmem:[#allocation4 + $0x5e8] sm:$0xff]
    %v5908 = vld [vmem:[#allocation4 + $0x5f0] sm:$0xff]
    %v5909 = vld [vmem:[#allocation4 + $0x5f8] sm:$0xff]
    %v5910 = vld [vmem:[#allocation4 + $0x600] sm:$0xff]
    %v5911 = vld [vmem:[#allocation4 + $0x608] sm:$0xff]
    %v5912 = vld [vmem:[#allocation4 + $0x610] sm:$0xff]
    %v5913 = vld [vmem:[#allocation4 + $0x618] sm:$0xff]
    %v5914 = vld [vmem:[#allocation4 + $0x620] sm:$0xff]
    %v5915 = vld [vmem:[#allocation4 + $0x628] sm:$0xff]
    %v5916 = vld [vmem:[#allocation4 + $0x630] sm:$0xff]
    %v5917 = vld [vmem:[#allocation4 + $0x638] sm:$0xff]
    %v5918 = vld [vmem:[#allocation4 + $0x640] sm:$0xff]
    %v5919 = vld [vmem:[#allocation4 + $0x648] sm:$0xff]
    %v5920 = vld [vmem:[#allocation4 + $0x650] sm:$0xff]
    %v5921 = vld [vmem:[#allocation4 + $0x658] sm:$0xff]
    %v5922 = vld [vmem:[#allocation4 + $0x660] sm:$0xff]
    %v5923 = vld [vmem:[#allocation4 + $0x668] sm:$0xff]
    %v5924 = vld [vmem:[#allocation4 + $0x670] sm:$0xff]
    %v5925 = vld [vmem:[#allocation4 + $0x678] sm:$0xff]
    %v5926 = vld [vmem:[#allocation4 + $0x680] sm:$0xff]
    %v5927 = vld [vmem:[#allocation4 + $0x688] sm:$0xff]
    %v5928 = vld [vmem:[#allocation4 + $0x690] sm:$0xff]
    %v5929 = vld [vmem:[#allocation4 + $0x698] sm:$0xff]
    %v5930 = vld [vmem:[#allocation4 + $0x6a0] sm:$0xff]
    %v5931 = vld [vmem:[#allocation4 + $0x6a8] sm:$0xff]
    %v5932 = vld [vmem:[#allocation4 + $0x6b0] sm:$0xff]
    %v5933 = vld [vmem:[#allocation4 + $0x6b8] sm:$0xff]
    %v5934 = vld [vmem:[#allocation4 + $0x6c0] sm:$0xff]
    %v5935 = vld [vmem:[#allocation4 + $0x6c8] sm:$0xff]
    %v5936 = vld [vmem:[#allocation4 + $0x6d0] sm:$0xff]
    %v5937 = vld [vmem:[#allocation4 + $0x6d8] sm:$0xff]
    %v5938 = vld [vmem:[#allocation4 + $0x6e0] sm:$0xff]
    %v5939 = vld [vmem:[#allocation4 + $0x6e8] sm:$0xff]
    %v5940 = vld [vmem:[#allocation4 + $0x6f0] sm:$0xff]
    %v5941 = vld [vmem:[#allocation4 + $0x6f8] sm:$0xff]
    %v5942 = vld [vmem:[#allocation4 + $0x700] sm:$0xff]
    %v5943 = vld [vmem:[#allocation4 + $0x708] sm:$0xff]
    %v5944 = vld [vmem:[#allocation4 + $0x710] sm:$0xff]
    %v5945 = vld [vmem:[#allocation4 + $0x718] sm:$0xff]
    %v5946 = vld [vmem:[#allocation4 + $0x720] sm:$0xff]
    %v5947 = vld [vmem:[#allocation4 + $0x728] sm:$0xff]
    %v5948 = vld [vmem:[#allocation4 + $0x730] sm:$0xff]
    %v5949 = vld [vmem:[#allocation4 + $0x738] sm:$0xff]
    %v5950 = vld [vmem:[#allocation4 + $0x740] sm:$0xff]
    %v5951 = vld [vmem:[#allocation4 + $0x748] sm:$0xff]
    %v5952 = vld [vmem:[#allocation4 + $0x750] sm:$0xff]
    %v5953 = vld [vmem:[#allocation4 + $0x758] sm:$0xff]
    %v5954 = vld [vmem:[#allocation4 + $0x760] sm:$0xff]
    %v5955 = vld [vmem:[#allocation4 + $0x768] sm:$0xff]
    %v5956 = vld [vmem:[#allocation4 + $0x770] sm:$0xff]
    %v5957 = vld [vmem:[#allocation4 + $0x778] sm:$0xff]
    %v5958 = vld [vmem:[#allocation4 + $0x780] sm:$0xff]
    %v5959 = vld [vmem:[#allocation4 + $0x788] sm:$0xff]
    %v5960 = vld [vmem:[#allocation4 + $0x790] sm:$0xff]
    %v5961 = vld [vmem:[#allocation4 + $0x798] sm:$0xff]
    %v5962 = vld [vmem:[#allocation4 + $0x7a0] sm:$0xff]
    %v5963 = vld [vmem:[#allocation4 + $0x7a8] sm:$0xff]
    %v5964 = vld [vmem:[#allocation4 + $0x7b0] sm:$0xff]
    %v5965 = vld [vmem:[#allocation4 + $0x7b8] sm:$0xff]
    %v5966 = vld [vmem:[#allocation4 + $0x7c0] sm:$0xff]
    %v5967 = vld [vmem:[#allocation4 + $0x7c8] sm:$0xff]
    %v5968 = vld [vmem:[#allocation4 + $0x7d0] sm:$0xff]
    %v5969 = vld [vmem:[#allocation4 + $0x7d8] sm:$0xff]
    %v5970 = vld [vmem:[#allocation4 + $0x7e0] sm:$0x3f]
    %v5971 = vld [vmem:[#allocation4 + $0x7e8] sm:$0x3f]
    %v5972 = vld [vmem:[#allocation4 + $0x7f0] sm:$0x3f]
    %v5973 = vld [vmem:[#allocation4 + $0x7f8] sm:$0x3f]
    %v5974 = vld [vmem:[#allocation4 + $0x800] sm:$0x3f]
    %v5975 = vld [vmem:[#allocation4 + $0x808] sm:$0x3f]
    %v5976 = vld [vmem:[#allocation4 + $0x810] sm:$0x3f]
    %v5977 = vld [vmem:[#allocation4 + $0x818] sm:$0x3f]
    %v5978 = vld [vmem:[#allocation4 + $0x820] sm:$0x3f]
    %v5979 = vld [vmem:[#allocation4 + $0x828] sm:$0x3f]
    %v5980 = vld [vmem:[#allocation4 + $0x830] sm:$0x3f]
    %v5981 = vld [vmem:[#allocation4 + $0x838] sm:$0x3f]
    %v5982 = vld [vmem:[#allocation4 + $0x840] sm:$0x3f]
    %v5983 = vld [vmem:[#allocation4 + $0x848] sm:$0x3f]
    %v5984 = vpack.c.bf16 %v5732, %v5718
    %v5985 = vpack.c.bf16 %v5733, %v5719
    %v5986 = vpack.c.bf16 %v5734, %v5720
    %v5987 = vpack.c.bf16 %v5735, %v5721
    %v5988 = vpack.c.bf16 %v5736, %v5722
    %v5989 = vpack.c.bf16 %v5737, %v5723
    %v5990 = vpack.c.bf16 %v5738, %v5724
    %v5991 = vpack.c.bf16 %v5739, %v5725
    %v5992 = vpack.c.bf16 %v5740, %v5726
    %v5993 = vpack.c.bf16 %v5741, %v5727
    %v5994 = vpack.c.bf16 %v5742, %v5728
    %v5995 = vpack.c.bf16 %v5743, %v5729
    %v5996 = vpack.c.bf16 %v5744, %v5730
    %v5997 = vpack.c.bf16 %v5745, %v5731
    %v5998 = vpack.c.bf16 %v5760, %v5746
    %v5999 = vpack.c.bf16 %v5761, %v5747
    %v6000 = vpack.c.bf16 %v5762, %v5748
    %v6001 = vpack.c.bf16 %v5763, %v5749
    %v6002 = vpack.c.bf16 %v5764, %v5750
    %v6003 = vpack.c.bf16 %v5765, %v5751
    %v6004 = vpack.c.bf16 %v5766, %v5752
    %v6005 = vpack.c.bf16 %v5767, %v5753
    %v6006 = vpack.c.bf16 %v5768, %v5754
    %v6007 = vpack.c.bf16 %v5769, %v5755
    %v6008 = vpack.c.bf16 %v5770, %v5756
    %v6009 = vpack.c.bf16 %v5771, %v5757
    %v6010 = vpack.c.bf16 %v5772, %v5758
    %v6011 = vpack.c.bf16 %v5773, %v5759
    %v6012 = vpack.c.bf16 %v5788, %v5774
    %v6013 = vpack.c.bf16 %v5789, %v5775
    %v6014 = vpack.c.bf16 %v5790, %v5776
    %v6015 = vpack.c.bf16 %v5791, %v5777
    %v6016 = vpack.c.bf16 %v5792, %v5778
    %v6017 = vpack.c.bf16 %v5793, %v5779
    %v6018 = vpack.c.bf16 %v5794, %v5780
    %v6019 = vpack.c.bf16 %v5795, %v5781
    %v6020 = vpack.c.bf16 %v5796, %v5782
    %v6021 = vpack.c.bf16 %v5797, %v5783
    %v6022 = vpack.c.bf16 %v5798, %v5784
    %v6023 = vpack.c.bf16 %v5799, %v5785
    %v6024 = vpack.c.bf16 %v5800, %v5786
    %v6025 = vpack.c.bf16 %v5801, %v5787
    %v6026 = vpack.c.bf16 %v5816, %v5802
    %v6027 = vpack.c.bf16 %v5817, %v5803
    %v6028 = vpack.c.bf16 %v5818, %v5804
    %v6029 = vpack.c.bf16 %v5819, %v5805
    %v6030 = vpack.c.bf16 %v5820, %v5806
    %v6031 = vpack.c.bf16 %v5821, %v5807
    %v6032 = vpack.c.bf16 %v5822, %v5808
    %v6033 = vpack.c.bf16 %v5823, %v5809
    %v6034 = vpack.c.bf16 %v5824, %v5810
    %v6035 = vpack.c.bf16 %v5825, %v5811
    %v6036 = vpack.c.bf16 %v5826, %v5812
    %v6037 = vpack.c.bf16 %v5827, %v5813
    %v6038 = vpack.c.bf16 %v5828, %v5814
    %v6039 = vpack.c.bf16 %v5829, %v5815
    %v6040 = vpack.c.bf16 %v5844, %v5830
    %v6041 = vpack.c.bf16 %v5845, %v5831
    %v6042 = vpack.c.bf16 %v5846, %v5832
    %v6043 = vpack.c.bf16 %v5847, %v5833
    %v6044 = vpack.c.bf16 %v5848, %v5834
    %v6045 = vpack.c.bf16 %v5849, %v5835
    %v6046 = vpack.c.bf16 %v5850, %v5836
    %v6047 = vpack.c.bf16 %v5851, %v5837
    %v6048 = vpack.c.bf16 %v5852, %v5838
    %v6049 = vpack.c.bf16 %v5853, %v5839
    %v6050 = vpack.c.bf16 %v5854, %v5840
    %v6051 = vpack.c.bf16 %v5855, %v5841
    %v6052 = vpack.c.bf16 %v5856, %v5842
    %v6053 = vpack.c.bf16 %v5857, %v5843
    %v6054 = vpack.c.bf16 %v5872, %v5858
    %v6055 = vpack.c.bf16 %v5873, %v5859
    %v6056 = vpack.c.bf16 %v5874, %v5860
    %v6057 = vpack.c.bf16 %v5875, %v5861
    %v6058 = vpack.c.bf16 %v5876, %v5862
    %v6059 = vpack.c.bf16 %v5877, %v5863
    %v6060 = vpack.c.bf16 %v5878, %v5864
    %v6061 = vpack.c.bf16 %v5879, %v5865
    %v6062 = vpack.c.bf16 %v5880, %v5866
    %v6063 = vpack.c.bf16 %v5881, %v5867
    %v6064 = vpack.c.bf16 %v5882, %v5868
    %v6065 = vpack.c.bf16 %v5883, %v5869
    %v6066 = vpack.c.bf16 %v5884, %v5870
    %v6067 = vpack.c.bf16 %v5885, %v5871
    %v6068 = vpack.c.bf16 %v5900, %v5886
    %v6069 = vpack.c.bf16 %v5901, %v5887
    %v6070 = vpack.c.bf16 %v5902, %v5888
    %v6071 = vpack.c.bf16 %v5903, %v5889
    %v6072 = vpack.c.bf16 %v5904, %v5890
    %v6073 = vpack.c.bf16 %v5905, %v5891
    %v6074 = vpack.c.bf16 %v5906, %v5892
    %v6075 = vpack.c.bf16 %v5907, %v5893
    %v6076 = vpack.c.bf16 %v5908, %v5894
    %v6077 = vpack.c.bf16 %v5909, %v5895
    %v6078 = vpack.c.bf16 %v5910, %v5896
    %v6079 = vpack.c.bf16 %v5911, %v5897
    %v6080 = vpack.c.bf16 %v5912, %v5898
    %v6081 = vpack.c.bf16 %v5913, %v5899
    %v6082 = vpack.c.bf16 %v5928, %v5914
    %v6083 = vpack.c.bf16 %v5929, %v5915
    %v6084 = vpack.c.bf16 %v5930, %v5916
    %v6085 = vpack.c.bf16 %v5931, %v5917
    %v6086 = vpack.c.bf16 %v5932, %v5918
    %v6087 = vpack.c.bf16 %v5933, %v5919
    %v6088 = vpack.c.bf16 %v5934, %v5920
    %v6089 = vpack.c.bf16 %v5935, %v5921
    %v6090 = vpack.c.bf16 %v5936, %v5922
    %v6091 = vpack.c.bf16 %v5937, %v5923
    %v6092 = vpack.c.bf16 %v5938, %v5924
    %v6093 = vpack.c.bf16 %v5939, %v5925
    %v6094 = vpack.c.bf16 %v5940, %v5926
    %v6095 = vpack.c.bf16 %v5941, %v5927
    %v6096 = vpack.c.bf16 %v5956, %v5942
    %v6097 = vpack.c.bf16 %v5957, %v5943
    %v6098 = vpack.c.bf16 %v5958, %v5944
    %v6099 = vpack.c.bf16 %v5959, %v5945
    %v6100 = vpack.c.bf16 %v5960, %v5946
    %v6101 = vpack.c.bf16 %v5961, %v5947
    %v6102 = vpack.c.bf16 %v5962, %v5948
    %v6103 = vpack.c.bf16 %v5963, %v5949
    %v6104 = vpack.c.bf16 %v5964, %v5950
    %v6105 = vpack.c.bf16 %v5965, %v5951
    %v6106 = vpack.c.bf16 %v5966, %v5952
    %v6107 = vpack.c.bf16 %v5967, %v5953
    %v6108 = vpack.c.bf16 %v5968, %v5954
    %v6109 = vpack.c.bf16 %v5969, %v5955
    %v6110 = vpack.c.bf16 %v5970, %v5970
    %v6111 = vpack.c.bf16 %v5971, %v5971
    %v6112 = vpack.c.bf16 %v5972, %v5972
    %v6113 = vpack.c.bf16 %v5973, %v5973
    %v6114 = vpack.c.bf16 %v5974, %v5974
    %v6115 = vpack.c.bf16 %v5975, %v5975
    %v6116 = vpack.c.bf16 %v5976, %v5976
    %v6117 = vpack.c.bf16 %v5977, %v5977
    %v6118 = vpack.c.bf16 %v5978, %v5978
    %v6119 = vpack.c.bf16 %v5979, %v5979
    %v6120 = vpack.c.bf16 %v5980, %v5980
    %v6121 = vpack.c.bf16 %v5981, %v5981
    %v6122 = vpack.c.bf16 %v5982, %v5982
    %v6123 = vpack.c.bf16 %v5983, %v5983
    %v6124 = vld [vmem:[%s6] sm:$0xff]
    %6126 = vset.pattern.permute.xlu0 0
    %6127 = vperm.xlu0 %6126, %v6124
    %v6128 = vpop.permute.xlu0 %6127
    %vm6130 = vcmask 179200
    %v6132 = vsel %vm6130, %v5717, 0
    %vm6134 = vcmask 1042432
    %v6136 = vsel %vm6134, %v6110, 0
    %v6139 = vsel %vm6134, %v6111, 0
    %v6142 = vsel %vm6134, %v6112, 0
    %v6145 = vsel %vm6134, %v6113, 0
    %v6148 = vsel %vm6134, %v6114, 0
    %v6151 = vsel %vm6134, %v6115, 0
    %v6154 = vsel %vm6134, %v6116, 0
    %v6157 = vsel %vm6134, %v6117, 0
    %v6160 = vsel %vm6134, %v6118, 0
    %v6163 = vsel %vm6134, %v6119, 0
    %v6166 = vsel %vm6134, %v6120, 0
    %v6169 = vsel %vm6134, %v6121, 0
    %v6172 = vsel %vm6134, %v6122, 0
    %v6175 = vsel %vm6134, %v6123, 0
    %6177 = vmatprep.subr.bf16.mxu0 %v5985
    %6178 = vmatpush1.bf16.msra.mxu0 %v5984
    %6179 = vmatprep.subr.bf16.mxu0 %v5999
    %6180 = vmatpush1.bf16.msra.mxu0 %v5998
    %6181 = vmatprep.subr.bf16.mxu0 %v6013
    %6182 = vmatpush1.bf16.msra.mxu0 %v6012
    %6183 = vmatprep.subr.bf16.mxu0 %v6027
    %6184 = vmatpush1.bf16.msra.mxu0 %v6026
    %6185 = vmatprep.subr.bf16.mxu0 %v6041
    %6186 = vmatpush1.bf16.msra.mxu0 %v6040
    %6187 = vmatprep.subr.bf16.mxu0 %v6055
    %6188 = vmatpush1.bf16.msra.mxu0 %v6054
    %6189 = vmatprep.subr.bf16.mxu0 %v6069
    %6190 = vmatpush1.bf16.msra.mxu0 %v6068
    %6191 = vmatprep.subr.bf16.mxu0 %v6083
    %6192 = vmatpush1.bf16.msra.mxu0 %v6082
    %6193 = vmatprep.subr.bf16.mxu0 %v6097
    %6194 = vmatpush1.bf16.msra.mxu0 %v6096
    %6195 = vmatprep.subr.bf16.mxu0 %v6139
    %6196 = vmatpush1.bf16.msra.mxu0 %v6136
    %6197 = vmatprep.subr.bf16.mxu0 0
    %6198 = vmatpush1.bf16.msra.mxu0 0
    %6199 = vmatprep.subr.bf16.mxu0 0
    %6200 = vmatpush1.bf16.msra.mxu0 0
    %6201 = vmatprep.subr.bf16.mxu0 0
    %6202 = vmatpush1.bf16.msra.mxu0 0
    %6203 = vmatprep.subr.bf16.mxu0 0
    %6204 = vmatpush1.bf16.msra.mxu0 0
    %6205 = vmatprep.subr.bf16.mxu0 0
    %6206 = vmatpush1.bf16.msra.mxu0 0
    %6207 = vmatprep.subr.bf16.mxu0 0
    %6208 = vmatpush1.bf16.msra.mxu0 0
    %6209 = vmatprep.mubr.bf16.mxu0 %v6132
    %6210 = vmatmul.mubr.bf16.gmra.mrb[0].mxu0 %v5716
    %v6211 = vpop.f32.mrb[0].mxu0
    %v6212 = vadd.f32 %v6128, %v6211
    %v6213 = vpop.f32.mrb[0].mxu0
    %v6214 = vadd.f32 %v6128, %v6213
    %v6215 = vpop.f32.mrb[0].mxu0
    %v6216 = vpop.f32.mrb[0].mxu0
    %6217 = vdwg.mxu0
    %6218 = vmatprep.subr.bf16.mxu0 %v5987
    %6219 = vmatpush1.bf16.msra.mxu0 %v5986
    %6220 = vmatprep.subr.bf16.mxu0 %v6001
    %6221 = vmatpush1.bf16.msra.mxu0 %v6000
    %6222 = vmatprep.subr.bf16.mxu0 %v6015
    %6223 = vmatpush1.bf16.msra.mxu0 %v6014
    %6224 = vmatprep.subr.bf16.mxu0 %v6029
    %6225 = vmatpush1.bf16.msra.mxu0 %v6028
    %6226 = vmatprep.subr.bf16.mxu0 %v6043
    %6227 = vmatpush1.bf16.msra.mxu0 %v6042
    %6228 = vmatprep.subr.bf16.mxu0 %v6057
    %6229 = vmatpush1.bf16.msra.mxu0 %v6056
    %6230 = vmatprep.subr.bf16.mxu0 %v6071
    %6231 = vmatpush1.bf16.msra.mxu0 %v6070
    %6232 = vmatprep.subr.bf16.mxu0 %v6085
    %6233 = vmatpush1.bf16.msra.mxu0 %v6084
    %6234 = vmatprep.subr.bf16.mxu0 %v6099
    %6235 = vmatpush1.bf16.msra.mxu0 %v6098
    %6236 = vmatprep.subr.bf16.mxu0 %v6145
    %6237 = vmatpush1.bf16.msra.mxu0 %v6142
    %6238 = vmatprep.subr.bf16.mxu0 0
    %6239 = vmatpush1.bf16.msra.mxu0 0
    %6240 = vmatprep.subr.bf16.mxu0 0
    %6241 = vmatpush1.bf16.msra.mxu0 0
    %6242 = vmatprep.subr.bf16.mxu0 0
    %6243 = vmatpush1.bf16.msra.mxu0 0
    %6244 = vmatprep.subr.bf16.mxu0 0
    %6245 = vmatpush1.bf16.msra.mxu0 0
    %6246 = vmatprep.subr.bf16.mxu0 0
    %6247 = vmatpush1.bf16.msra.mxu0 0
    %6248 = vmatprep.subr.bf16.mxu0 0
    %6249 = vmatpush1.bf16.msra.mxu0 0
    %6250 = vmatprep.mubr.bf16.mxu0 %v6132
    %6251 = vmatmul.mubr.bf16.gmra.mrb[0].mxu0 %v5716
    %v6252 = vpop.f32.mrb[0].mxu0
    %v6253 = vadd.f32 %v6128, %v6252
    %v6254 = vpop.f32.mrb[0].mxu0
    %v6255 = vadd.f32 %v6128, %v6254
    %v6256 = vpop.f32.mrb[0].mxu0
    %v6257 = vpop.f32.mrb[0].mxu0
    %6258 = vdwg.mxu0
    %6259 = vmatprep.subr.bf16.mxu0 %v5989
    %6260 = vmatpush1.bf16.msra.mxu0 %v5988
    %6261 = vmatprep.subr.bf16.mxu0 %v6003
    %6262 = vmatpush1.bf16.msra.mxu0 %v6002
    %6263 = vmatprep.subr.bf16.mxu0 %v6017
    %6264 = vmatpush1.bf16.msra.mxu0 %v6016
    %6265 = vmatprep.subr.bf16.mxu0 %v6031
    %6266 = vmatpush1.bf16.msra.mxu0 %v6030
    %6267 = vmatprep.subr.bf16.mxu0 %v6045
    %6268 = vmatpush1.bf16.msra.mxu0 %v6044
    %6269 = vmatprep.subr.bf16.mxu0 %v6059
    %6270 = vmatpush1.bf16.msra.mxu0 %v6058
    %6271 = vmatprep.subr.bf16.mxu0 %v6073
    %6272 = vmatpush1.bf16.msra.mxu0 %v6072
    %6273 = vmatprep.subr.bf16.mxu0 %v6087
    %6274 = vmatpush1.bf16.msra.mxu0 %v6086
    %6275 = vmatprep.subr.bf16.mxu0 %v6101
    %6276 = vmatpush1.bf16.msra.mxu0 %v6100
    %6277 = vmatprep.subr.bf16.mxu0 %v6151
    %6278 = vmatpush1.bf16.msra.mxu0 %v6148
    %6279 = vmatprep.subr.bf16.mxu0 0
    %6280 = vmatpush1.bf16.msra.mxu0 0
    %6281 = vmatprep.subr.bf16.mxu0 0
    %6282 = vmatpush1.bf16.msra.mxu0 0
    %6283 = vmatprep.subr.bf16.mxu0 0
    %6284 = vmatpush1.bf16.msra.mxu0 0
    %6285 = vmatprep.subr.bf16.mxu0 0
    %6286 = vmatpush1.bf16.msra.mxu0 0
    %6287 = vmatprep.subr.bf16.mxu0 0
    %6288 = vmatpush1.bf16.msra.mxu0 0
    %6289 = vmatprep.subr.bf16.mxu0 0
    %6290 = vmatpush1.bf16.msra.mxu0 0
    %6291 = vmatprep.mubr.bf16.mxu0 %v6132
    %6292 = vmatmul.mubr.bf16.gmra.mrb[0].mxu0 %v5716
    %v6293 = vpop.f32.mrb[0].mxu0
    %v6294 = vadd.f32 %v6128, %v6293
    %v6295 = vpop.f32.mrb[0].mxu0
    %v6296 = vadd.f32 %v6128, %v6295
    %v6297 = vpop.f32.mrb[0].mxu0
    %v6298 = vpop.f32.mrb[0].mxu0
    %6299 = vdwg.mxu0
    %6300 = vmatprep.subr.bf16.mxu0 %v5991
    %6301 = vmatpush1.bf16.msra.mxu0 %v5990
    %6302 = vmatprep.subr.bf16.mxu0 %v6005
    %6303 = vmatpush1.bf16.msra.mxu0 %v6004
    %6304 = vmatprep.subr.bf16.mxu0 %v6019
    %6305 = vmatpush1.bf16.msra.mxu0 %v6018
    %6306 = vmatprep.subr.bf16.mxu0 %v6033
    %6307 = vmatpush1.bf16.msra.mxu0 %v6032
    %6308 = vmatprep.subr.bf16.mxu0 %v6047
    %6309 = vmatpush1.bf16.msra.mxu0 %v6046
    %6310 = vmatprep.subr.bf16.mxu0 %v6061
    %6311 = vmatpush1.bf16.msra.mxu0 %v6060
    %6312 = vmatprep.subr.bf16.mxu0 %v6075
    %6313 = vmatpush1.bf16.msra.mxu0 %v6074
    %6314 = vmatprep.subr.bf16.mxu0 %v6089
    %6315 = vmatpush1.bf16.msra.mxu0 %v6088
    %6316 = vmatprep.subr.bf16.mxu0 %v6103
    %6317 = vmatpush1.bf16.msra.mxu0 %v6102
    %6318 = vmatprep.subr.bf16.mxu0 %v6157
    %6319 = vmatpush1.bf16.msra.mxu0 %v6154
    %6320 = vmatprep.subr.bf16.mxu0 0
    %6321 = vmatpush1.bf16.msra.mxu0 0
    %6322 = vmatprep.subr.bf16.mxu0 0
    %6323 = vmatpush1.bf16.msra.mxu0 0
    %6324 = vmatprep.subr.bf16.mxu0 0
    %6325 = vmatpush1.bf16.msra.mxu0 0
    %6326 = vmatprep.subr.bf16.mxu0 0
    %6327 = vmatpush1.bf16.msra.mxu0 0
    %6328 = vmatprep.subr.bf16.mxu0 0
    %6329 = vmatpush1.bf16.msra.mxu0 0
    %6330 = vmatprep.subr.bf16.mxu0 0
    %6331 = vmatpush1.bf16.msra.mxu0 0
    %6332 = vmatprep.mubr.bf16.mxu0 %v6132
    %6333 = vmatmul.mubr.bf16.gmra.mrb[0].mxu0 %v5716
    %v6334 = vpop.f32.mrb[0].mxu0
    %v6335 = vadd.f32 %v6128, %v6334
    %v6336 = vpop.f32.mrb[0].mxu0
    %v6337 = vadd.f32 %v6128, %v6336
    %v6338 = vpop.f32.mrb[0].mxu0
    %v6339 = vpop.f32.mrb[0].mxu0
    %6340 = vdwg.mxu0
    %6341 = vmatprep.subr.bf16.mxu0 %v5993
    %6342 = vmatpush1.bf16.msra.mxu0 %v5992
    %6343 = vmatprep.subr.bf16.mxu0 %v6007
    %6344 = vmatpush1.bf16.msra.mxu0 %v6006
    %6345 = vmatprep.subr.bf16.mxu0 %v6021
    %6346 = vmatpush1.bf16.msra.mxu0 %v6020
    %6347 = vmatprep.subr.bf16.mxu0 %v6035
    %6348 = vmatpush1.bf16.msra.mxu0 %v6034
    %6349 = vmatprep.subr.bf16.mxu0 %v6049
    %6350 = vmatpush1.bf16.msra.mxu0 %v6048
    %6351 = vmatprep.subr.bf16.mxu0 %v6063
    %6352 = vmatpush1.bf16.msra.mxu0 %v6062
    %6353 = vmatprep.subr.bf16.mxu0 %v6077
    %6354 = vmatpush1.bf16.msra.mxu0 %v6076
    %6355 = vmatprep.subr.bf16.mxu0 %v6091
    %6356 = vmatpush1.bf16.msra.mxu0 %v6090
    %6357 = vmatprep.subr.bf16.mxu0 %v6105
    %6358 = vmatpush1.bf16.msra.mxu0 %v6104
    %6359 = vmatprep.subr.bf16.mxu0 %v6163
    %6360 = vmatpush1.bf16.msra.mxu0 %v6160
    %6361 = vmatprep.subr.bf16.mxu0 0
    %6362 = vmatpush1.bf16.msra.mxu0 0
    %6363 = vmatprep.subr.bf16.mxu0 0
    %6364 = vmatpush1.bf16.msra.mxu0 0
    %6365 = vmatprep.subr.bf16.mxu0 0
    %6366 = vmatpush1.bf16.msra.mxu0 0
    %6367 = vmatprep.subr.bf16.mxu0 0
    %6368 = vmatpush1.bf16.msra.mxu0 0
    %6369 = vmatprep.subr.bf16.mxu0 0
    %6370 = vmatpush1.bf16.msra.mxu0 0
    %6371 = vmatprep.subr.bf16.mxu0 0
    %6372 = vmatpush1.bf16.msra.mxu0 0
    %6373 = vmatprep.mubr.bf16.mxu0 %v6132
    %6374 = vmatmul.mubr.bf16.gmra.mrb[0].mxu0 %v5716
    %v6375 = vpop.f32.mrb[0].mxu0
    %v6376 = vadd.f32 %v6128, %v6375
    %v6377 = vpop.f32.mrb[0].mxu0
    %v6378 = vadd.f32 %v6128, %v6377
    %v6379 = vpop.f32.mrb[0].mxu0
    %v6380 = vpop.f32.mrb[0].mxu0
    %6381 = vdwg.mxu0
    %6382 = vmatprep.subr.bf16.mxu0 %v5995
    %6383 = vmatpush1.bf16.msra.mxu0 %v5994
    %6384 = vmatprep.subr.bf16.mxu0 %v6009
    %6385 = vmatpush1.bf16.msra.mxu0 %v6008
    %6386 = vmatprep.subr.bf16.mxu0 %v6023
    %6387 = vmatpush1.bf16.msra.mxu0 %v6022
    %6388 = vmatprep.subr.bf16.mxu0 %v6037
    %6389 = vmatpush1.bf16.msra.mxu0 %v6036
    %6390 = vmatprep.subr.bf16.mxu0 %v6051
    %6391 = vmatpush1.bf16.msra.mxu0 %v6050
    %6392 = vmatprep.subr.bf16.mxu0 %v6065
    %6393 = vmatpush1.bf16.msra.mxu0 %v6064
    %6394 = vmatprep.subr.bf16.mxu0 %v6079
    %6395 = vmatpush1.bf16.msra.mxu0 %v6078
    %6396 = vmatprep.subr.bf16.mxu0 %v6093
    %6397 = vmatpush1.bf16.msra.mxu0 %v6092
    %6398 = vmatprep.subr.bf16.mxu0 %v6107
    %6399 = vmatpush1.bf16.msra.mxu0 %v6106
    %6400 = vmatprep.subr.bf16.mxu0 %v6169
    %6401 = vmatpush1.bf16.msra.mxu0 %v6166
    %6402 = vmatprep.subr.bf16.mxu0 0
    %6403 = vmatpush1.bf16.msra.mxu0 0
    %6404 = vmatprep.subr.bf16.mxu0 0
    %6405 = vmatpush1.bf16.msra.mxu0 0
    %6406 = vmatprep.subr.bf16.mxu0 0
    %6407 = vmatpush1.bf16.msra.mxu0 0
    %6408 = vmatprep.subr.bf16.mxu0 0
    %6409 = vmatpush1.bf16.msra.mxu0 0
    %6410 = vmatprep.subr.bf16.mxu0 0
    %6411 = vmatpush1.bf16.msra.mxu0 0
    %6412 = vmatprep.subr.bf16.mxu0 0
    %6413 = vmatpush1.bf16.msra.mxu0 0
    %6414 = vmatprep.mubr.bf16.mxu0 %v6132
    %6415 = vmatmul.mubr.bf16.gmra.mrb[0].mxu0 %v5716
    %v6416 = vpop.f32.mrb[0].mxu0
    %v6417 = vadd.f32 %v6128, %v6416
    %v6418 = vpop.f32.mrb[0].mxu0
    %v6419 = vadd.f32 %v6128, %v6418
    %v6420 = vpop.f32.mrb[0].mxu0
    %v6421 = vpop.f32.mrb[0].mxu0
    %6422 = vdwg.mxu0
    %6423 = vmatprep.subr.bf16.mxu0 %v5997
    %6424 = vmatpush1.bf16.msra.mxu0 %v5996
    %6425 = vmatprep.subr.bf16.mxu0 %v6011
    %6426 = vmatpush1.bf16.msra.mxu0 %v6010
    %6427 = vmatprep.subr.bf16.mxu0 %v6025
    %6428 = vmatpush1.bf16.msra.mxu0 %v6024
    %6429 = vmatprep.subr.bf16.mxu0 %v6039
    %6430 = vmatpush1.bf16.msra.mxu0 %v6038
    %6431 = vmatprep.subr.bf16.mxu0 %v6053
    %6432 = vmatpush1.bf16.msra.mxu0 %v6052
    %6433 = vmatprep.subr.bf16.mxu0 %v6067
    %6434 = vmatpush1.bf16.msra.mxu0 %v6066
    %6435 = vmatprep.subr.bf16.mxu0 %v6081
    %6436 = vmatpush1.bf16.msra.mxu0 %v6080
    %6437 = vmatprep.subr.bf16.mxu0 %v6095
    %6438 = vmatpush1.bf16.msra.mxu0 %v6094
    %6439 = vmatprep.subr.bf16.mxu0 %v6109
    %6440 = vmatpush1.bf16.msra.mxu0 %v6108
    %6441 = vmatprep.subr.bf16.mxu0 %v6175
    %6442 = vmatpush1.bf16.msra.mxu0 %v6172
    %6443 = vmatprep.subr.bf16.mxu0 0
    %6444 = vmatpush1.bf16.msra.mxu0 0
    %6445 = vmatprep.subr.bf16.mxu0 0
    %6446 = vmatpush1.bf16.msra.mxu0 0
    %6447 = vmatprep.subr.bf16.mxu0 0
    %6448 = vmatpush1.bf16.msra.mxu0 0
    %6449 = vmatprep.subr.bf16.mxu0 0
    %6450 = vmatpush1.bf16.msra.mxu0 0
    %6451 = vmatprep.subr.bf16.mxu0 0
    %6452 = vmatpush1.bf16.msra.mxu0 0
    %6453 = vmatprep.subr.bf16.mxu0 0
    %6454 = vmatpush1.bf16.msra.mxu0 0
    %6455 = vmatprep.mubr.bf16.mxu0 %v6132
    %6456 = vmatmul.mubr.bf16.gmra.mrb[0].mxu0 %v5716
    %v6457 = vpop.f32.mrb[0].mxu0
    %v6458 = vadd.f32 %v6128, %v6457
    %v6459 = vpop.f32.mrb[0].mxu0
    %v6460 = vadd.f32 %v6128, %v6459
    %v6461 = vpop.f32.mrb[0].mxu0
    %v6462 = vpop.f32.mrb[0].mxu0
    %6463 = vdwg.mxu0
    %v6466 = vlaneseq
    %v6467 = vshrl.u32 %v6466, 7
    %v6468 = vsub.s32 0, %v6467
    %v6469 = vrot.slane %v92, %v6468
    %v6470 = vlaneseq
    %v6471 = vshrl.u32 %v6470, 7
    %v6472 = vsub.s32 1, %v6471
    %v6473 = vrot.slane %v92, %v6472
    %v6474 = vlaneseq
    %v6475 = vshrl.u32 %v6474, 7
    %v6476 = vsub.s32 2, %v6475
    %v6477 = vrot.slane %v92, %v6476
    %v6478 = vlaneseq
    %v6479 = vshrl.u32 %v6478, 7
    %v6480 = vsub.s32 3, %v6479
    %v6481 = vrot.slane %v92, %v6480
    %v6482 = vlaneseq
    %v6483 = vshrl.u32 %v6482, 7
    %v6484 = vsub.s32 4, %v6483
    %v6485 = vrot.slane %v92, %v6484
    %v6486 = vlaneseq
    %v6487 = vshrl.u32 %v6486, 7
    %v6488 = vsub.s32 5, %v6487
    %v6489 = vrot.slane %v92, %v6488
    %v6490 = vlaneseq
    %v6491 = vshrl.u32 %v6490, 7
    %v6492 = vsub.s32 6, %v6491
    %v6493 = vrot.slane %v92, %v6492
    %v6494 = vlaneseq
    %v6495 = vshrl.u32 %v6494, 7
    %v6496 = vsub.s32 7, %v6495
    %v6497 = vrot.slane %v92, %v6496
    %v6498 = vlaneseq
    %v6499 = vshrl.u32 %v6498, 7
    %v6500 = vsub.s32 0, %v6499
    %v6501 = vrot.slane %v93, %v6500
    %v6502 = vlaneseq
    %v6503 = vshrl.u32 %v6502, 7
    %v6504 = vsub.s32 1, %v6503
    %v6505 = vrot.slane %v93, %v6504
    %v6506 = vlaneseq
    %v6507 = vshrl.u32 %v6506, 7
    %v6508 = vsub.s32 2, %v6507
    %v6509 = vrot.slane %v93, %v6508
    %v6510 = vlaneseq
    %v6511 = vshrl.u32 %v6510, 7
    %v6512 = vsub.s32 3, %v6511
    %v6513 = vrot.slane %v93, %v6512
    %v6514 = vlaneseq
    %v6515 = vshrl.u32 %v6514, 7
    %v6516 = vsub.s32 4, %v6515
    %v6517 = vrot.slane %v93, %v6516
    %v6518 = vlaneseq
    %v6519 = vshrl.u32 %v6518, 7
    %v6520 = vsub.s32 5, %v6519
    %v6521 = vrot.slane %v93, %v6520
    %v6536 = vmul.f32 %v6212, %v6469
    %v6537 = vmul.f32 %v6214, %v6473
    %v6538 = vmul.f32 %v6253, %v6477
    %v6539 = vmul.f32 %v6255, %v6481
    %v6540 = vmul.f32 %v6294, %v6485
    %v6541 = vmul.f32 %v6296, %v6489
    %v6542 = vmul.f32 %v6335, %v6493
    %v6543 = vmul.f32 %v6337, %v6497
    %v6544 = vmul.f32 %v6376, %v6501
    %v6545 = vmul.f32 %v6378, %v6505
    %v6546 = vmul.f32 %v6417, %v6509
    %v6547 = vmul.f32 %v6419, %v6513
    %v6548 = vmul.f32 %v6458, %v6517
    %v6549 = vmul.f32 %v6460, %v6521
    %v6550 = vadd.f32 %v6536, %v6537
    %v6551 = vadd.f32 %v6550, %v6538
    %v6552 = vadd.f32 %v6551, %v6539
    %v6553 = vadd.f32 %v6552, %v6540
    %v6554 = vadd.f32 %v6553, %v6541
    %v6555 = vadd.f32 %v6554, %v6542
    %v6556 = vadd.f32 %v6555, %v6543
    %v6557 = vadd.f32 %v6556, %v6544
    %v6558 = vadd.f32 %v6557, %v6545
    %v6559 = vadd.f32 %v6558, %v6546
    %v6560 = vadd.f32 %v6559, %v6547
    %v6561 = vadd.f32 %v6560, %v6548
    %v6562 = vadd.f32 %v6561, %v6549
    %6563 = vadd.xlane.f32.xlu0 %v6562
    %v6564 = vpop.xlane.xlu0 %6563
    %v6565 = vmul.f32 %v6564, 0.0013850415
    %v6566 = vsub.f32 %v6212, %v6565
    %v6567 = vsub.f32 %v6214, %v6565
    %v6568 = vsub.f32 %v6253, %v6565
    %v6569 = vsub.f32 %v6255, %v6565
    %v6570 = vsub.f32 %v6294, %v6565
    %v6571 = vsub.f32 %v6296, %v6565
    %v6572 = vsub.f32 %v6335, %v6565
    %v6573 = vsub.f32 %v6337, %v6565
    %v6574 = vsub.f32 %v6376, %v6565
    %v6575 = vsub.f32 %v6378, %v6565
    %v6576 = vsub.f32 %v6417, %v6565
    %v6577 = vsub.f32 %v6419, %v6565
    %v6578 = vsub.f32 %v6458, %v6565
    %v6579 = vsub.f32 %v6460, %v6565
    %v6580 = vmul.f32 %v6566, %v6566
    %v6581 = vmul.f32 %v6567, %v6567
    %v6582 = vmul.f32 %v6568, %v6568
    %v6583 = vmul.f32 %v6569, %v6569
    %v6584 = vmul.f32 %v6570, %v6570
    %v6585 = vmul.f32 %v6571, %v6571
    %v6586 = vmul.f32 %v6572, %v6572
    %v6587 = vmul.f32 %v6573, %v6573
    %v6588 = vmul.f32 %v6574, %v6574
    %v6589 = vmul.f32 %v6575, %v6575
    %v6590 = vmul.f32 %v6576, %v6576
    %v6591 = vmul.f32 %v6577, %v6577
    %v6592 = vmul.f32 %v6578, %v6578
    %v6593 = vmul.f32 %v6579, %v6579
    %v6594 = vmul.f32 %v6580, %v6469
    %v6595 = vmul.f32 %v6581, %v6473
    %v6596 = vmul.f32 %v6582, %v6477
    %v6597 = vmul.f32 %v6583, %v6481
    %v6598 = vmul.f32 %v6584, %v6485
    %v6599 = vmul.f32 %v6585, %v6489
    %v6600 = vmul.f32 %v6586, %v6493
    %v6601 = vmul.f32 %v6587, %v6497
    %v6602 = vmul.f32 %v6588, %v6501
    %v6603 = vmul.f32 %v6589, %v6505
    %v6604 = vmul.f32 %v6590, %v6509
    %v6605 = vmul.f32 %v6591, %v6513
    %v6606 = vmul.f32 %v6592, %v6517
    %v6607 = vmul.f32 %v6593, %v6521
    %v6608 = vadd.f32 %v6594, %v6595
    %v6609 = vadd.f32 %v6608, %v6596
    %v6610 = vadd.f32 %v6609, %v6597
    %v6611 = vadd.f32 %v6610, %v6598
    %v6612 = vadd.f32 %v6611, %v6599
    %v6613 = vadd.f32 %v6612, %v6600
    %v6614 = vadd.f32 %v6613, %v6601
    %v6615 = vadd.f32 %v6614, %v6602
    %v6616 = vadd.f32 %v6615, %v6603
    %v6617 = vadd.f32 %v6616, %v6604
    %v6618 = vadd.f32 %v6617, %v6605
    %v6619 = vadd.f32 %v6618, %v6606
    %v6620 = vadd.f32 %v6619, %v6607
    %6621 = vadd.xlane.f32.xlu0 %v6620
    %v6622 = vpop.xlane.xlu0 %6621
    %v6623 = vmul.f32 %v6622, 0.0013850415
    %v6624 = vadd.f32 %v6623, 1e-05
    %v6625 = vrsqrt.pop %v6624
    %v6626 = vmul.f32 %v6566, %v6625
    %v6627 = vmul.f32 %v6567, %v6625
    %v6628 = vmul.f32 %v6568, %v6625
    %v6629 = vmul.f32 %v6569, %v6625
    %v6630 = vmul.f32 %v6570, %v6625
    %v6631 = vmul.f32 %v6571, %v6625
    %v6632 = vmul.f32 %v6572, %v6625
    %v6633 = vmul.f32 %v6573, %v6625
    %v6634 = vmul.f32 %v6574, %v6625
    %v6635 = vmul.f32 %v6575, %v6625
    %v6636 = vmul.f32 %v6576, %v6625
    %v6637 = vmul.f32 %v6577, %v6625
    %v6638 = vmul.f32 %v6578, %v6625
    %v6639 = vmul.f32 %v6579, %v6625
    %v6640 = vld [vmem:[%s7] sm:$0xff]
    %6642 = vset.pattern.permute.xlu0 0
    %6643 = vperm.xlu0 %6642, %v6640
    %v6644 = vpop.permute.xlu0 %6643
    %v6646 = vmul.f32 %v6626, %v6644
    %v6647 = vmul.f32 %v6627, %v6644
    %v6648 = vmul.f32 %v6628, %v6644
    %v6649 = vmul.f32 %v6629, %v6644
    %v6650 = vmul.f32 %v6630, %v6644
    %v6651 = vmul.f32 %v6631, %v6644
    %v6652 = vmul.f32 %v6632, %v6644
    %v6653 = vmul.f32 %v6633, %v6644
    %v6654 = vmul.f32 %v6634, %v6644
    %v6655 = vmul.f32 %v6635, %v6644
    %v6656 = vmul.f32 %v6636, %v6644
    %v6657 = vmul.f32 %v6637, %v6644
    %v6658 = vmul.f32 %v6638, %v6644
    %v6659 = vmul.f32 %v6639, %v6644
    %v6660 = vld [vmem:[%s8] sm:$0xff]
    %6662 = vset.pattern.permute.xlu0 0
    %6663 = vperm.xlu0 %6662, %v6660
    %v6664 = vpop.permute.xlu0 %6663
    %v6666 = vadd.f32 %v6646, %v6664
    %v6667 = vadd.f32 %v6647, %v6664
    %v6668 = vadd.f32 %v6648, %v6664
    %v6669 = vadd.f32 %v6649, %v6664
    %v6670 = vadd.f32 %v6650, %v6664
    %v6671 = vadd.f32 %v6651, %v6664
    %v6672 = vadd.f32 %v6652, %v6664
    %v6673 = vadd.f32 %v6653, %v6664
    %v6674 = vadd.f32 %v6654, %v6664
    %v6675 = vadd.f32 %v6655, %v6664
    %v6676 = vadd.f32 %v6656, %v6664
    %v6677 = vadd.f32 %v6657, %v6664
    %v6678 = vadd.f32 %v6658, %v6664
    %v6679 = vadd.f32 %v6659, %v6664
    %v6680 = vmax.f32 %v6666, %v6673
    %v6681 = vmax.f32 %v6667, %v6674
    %v6682 = vmax.f32 %v6668, %v6675
    %v6683 = vmax.f32 %v6669, %v6676
    %v6684 = vmax.f32 %v6670, %v6677
    %v6685 = vmax.f32 %v6671, %v6678
    %v6686 = vmax.f32 %v6672, %v6679
    %v6687 = vsub.f32 %v6666, %v6680
    %v6688 = vsub.f32 %v6667, %v6681
    %v6689 = vsub.f32 %v6668, %v6682
    %v6690 = vsub.f32 %v6669, %v6683
    %v6691 = vsub.f32 %v6670, %v6684
    %v6692 = vsub.f32 %v6671, %v6685
    %v6693 = vsub.f32 %v6672, %v6686
    %v6694 = vmul.f32 %v6687, 1.442695
    %v6695 = vpow.pop %v6694
    %v6696 = vmul.f32 %v6688, 1.442695
    %v6697 = vpow.pop %v6696
    %v6698 = vmul.f32 %v6689, 1.442695
    %v6699 = vpow.pop %v6698
    %v6700 = vmul.f32 %v6690, 1.442695
    %v6701 = vpow.pop %v6700
    %v6702 = vmul.f32 %v6691, 1.442695
    %v6703 = vpow.pop %v6702
    %v6704 = vmul.f32 %v6692, 1.442695
    %v6705 = vpow.pop %v6704
    %v6706 = vmul.f32 %v6693, 1.442695
    %v6707 = vpow.pop %v6706
    %v6708 = vsub.f32 %v6673, %v6680
    %v6709 = vsub.f32 %v6674, %v6681
    %v6710 = vsub.f32 %v6675, %v6682
    %v6711 = vsub.f32 %v6676, %v6683
    %v6712 = vsub.f32 %v6677, %v6684
    %v6713 = vsub.f32 %v6678, %v6685
    %v6714 = vsub.f32 %v6679, %v6686
    %v6715 = vmul.f32 %v6708, 1.442695
    %v6716 = vpow.pop %v6715
    %v6717 = vmul.f32 %v6709, 1.442695
    %v6718 = vpow.pop %v6717
    %v6719 = vmul.f32 %v6710, 1.442695
    %v6720 = vpow.pop %v6719
    %v6721 = vmul.f32 %v6711, 1.442695
    %v6722 = vpow.pop %v6721
    %v6723 = vmul.f32 %v6712, 1.442695
    %v6724 = vpow.pop %v6723
    %v6725 = vmul.f32 %v6713, 1.442695
    %v6726 = vpow.pop %v6725
    %v6727 = vmul.f32 %v6714, 1.442695
    %v6728 = vpow.pop %v6727
    %v6729 = vadd.f32 %v6695, %v6716
    %v6730 = vadd.f32 %v6697, %v6718
    %v6731 = vadd.f32 %v6699, %v6720
    %v6732 = vadd.f32 %v6701, %v6722
    %v6733 = vadd.f32 %v6703, %v6724
    %v6734 = vadd.f32 %v6705, %v6726
    %v6735 = vadd.f32 %v6707, %v6728
    %v6736 = vrcp.pop %v6729
    %v6737 = vmul.f32 1.0, %v6736
    %v6738 = vrcp.pop %v6730
    %v6739 = vmul.f32 1.0, %v6738
    %v6740 = vrcp.pop %v6731
    %v6741 = vmul.f32 1.0, %v6740
    %v6742 = vrcp.pop %v6732
    %v6743 = vmul.f32 1.0, %v6742
    %v6744 = vrcp.pop %v6733
    %v6745 = vmul.f32 1.0, %v6744
    %v6746 = vrcp.pop %v6734
    %v6747 = vmul.f32 1.0, %v6746
    %v6748 = vrcp.pop %v6735
    %v6749 = vmul.f32 1.0, %v6748
    %v6750 = vmul.f32 %v6695, %v6737
    %v6751 = vmul.f32 %v6697, %v6739
    %v6752 = vmul.f32 %v6699, %v6741
    %v6753 = vmul.f32 %v6701, %v6743
    %v6754 = vmul.f32 %v6703, %v6745
    %v6755 = vmul.f32 %v6705, %v6747
    %v6756 = vmul.f32 %v6707, %v6749
    %v6757 = vmul.f32 %v6750, %v6469
    %v6758 = vmul.f32 %v6751, %v6473
    %v6759 = vmul.f32 %v6752, %v6477
    %v6760 = vmul.f32 %v6753, %v6481
    %v6761 = vmul.f32 %v6754, %v6485
    %v6762 = vmul.f32 %v6755, %v6489
    %v6763 = vmul.f32 %v6756, %v6493
    %v6771 = vcombine.low %v6757, %v6758
    %v6772 = vcombine.low %v6759, %v6760
    %v6773 = vcombine.low %v6761, %v6762
    %v6775 = vunpack.c.l.s4 1966171168
    %v6776 = vunpack.c.0.s8 %v6775
    %v6777 = vlaneseq
    %v6778 = vshrl.u32 %v6777, 7
    %v6779 = vsub.s32 %v6776, %v6778
    %v6780 = vrot.slane %v6771, %v6779
    %v6782 = vunpack.c.l.s4 1966171168
    %v6783 = vunpack.c.0.s8 %v6782
    %v6784 = vlaneseq
    %v6785 = vshrl.u32 %v6784, 7
    %v6786 = vsub.s32 %v6783, %v6785
    %v6787 = vrot.slane %v6772, %v6786
    %v6789 = vunpack.c.l.s4 1966171168
    %v6790 = vunpack.c.0.s8 %v6789
    %v6791 = vlaneseq
    %v6792 = vshrl.u32 %v6791, 7
    %v6793 = vsub.s32 %v6790, %v6792
    %v6794 = vrot.slane %v6773, %v6793
    %v6796 = vunpack.c.l.s4 1966171168
    %v6797 = vunpack.c.0.s8 %v6796
    %v6798 = vlaneseq
    %v6799 = vshrl.u32 %v6798, 7
    %v6800 = vsub.s32 %v6797, %v6799
    %v6801 = vrot.slane %v6763, %v6800
    %v6802 = vcombine.low %v6780, %v6787
    %v6803 = vcombine.low %v6794, %v6801
    %v6805 = vunpack.c.l.s4 1966171168
    %v6806 = vunpack.c.0.s8 %v6805
    %v6807 = vlaneseq
    %v6808 = vshrl.u32 %v6807, 7
    %v6809 = vsub.s32 %v6806, %v6808
    %v6810 = vrot.slane %v6802, %v6809
    %v6812 = vunpack.c.l.s4 1966171168
    %v6813 = vunpack.c.0.s8 %v6812
    %v6814 = vlaneseq
    %v6815 = vshrl.u32 %v6814, 7
    %v6816 = vsub.s32 %v6813, %v6815
    %v6817 = vrot.slane %v6803, %v6816
    %v6818 = vcombine.low %v6810, %v6817
    %v6820 = vlaneseq
    %vm6821 = vcmp.ge.s32.totalorder %v6820, 0
    %vm6822 = vcmp.lt.s32.totalorder %v6820, 896
    %vm6823 = vmand %vm6821, %vm6822
    %6824 = vst.msk [vmem:[#allocation5] ss:$2 sm:$0x7f] %vm6823, %v6818
    %v6825 = vcombine.high %v6780, %v6787
    %v6826 = vcombine.high %v6794, %v6801
    %v6828 = vunpack.c.l.s4 1966171168
    %v6829 = vunpack.c.0.s8 %v6828
    %v6830 = vlaneseq
    %v6831 = vshrl.u32 %v6830, 7
    %v6832 = vsub.s32 %v6829, %v6831
    %v6833 = vrot.slane %v6825, %v6832
    %v6835 = vunpack.c.l.s4 1966171168
    %v6836 = vunpack.c.0.s8 %v6835
    %v6837 = vlaneseq
    %v6838 = vshrl.u32 %v6837, 7
    %v6839 = vsub.s32 %v6836, %v6838
    %v6840 = vrot.slane %v6826, %v6839
    %v6841 = vcombine.low %v6833, %v6840
    %s6843 = scalar_lea.vmem [#allocation5], 14
    %6844 = vst.msk [vmem:[%s6843] ss:$2 sm:$0x7f] %vm6823, %v6841
    %v6845 = vcombine.high %v6810, %v6817
    %s6847 = scalar_lea.vmem [#allocation5], 28
    %6848 = vst.msk [vmem:[%s6847] ss:$2 sm:$0x7f] %vm6823, %v6845
    %v6849 = vcombine.high %v6833, %v6840
    %s6851 = scalar_lea.vmem [#allocation5], 42
    %6852 = vst.msk [vmem:[%s6851] ss:$2 sm:$0x7f] %vm6823, %v6849
    %v6853 = vcombine.high %v6757, %v6758
    %v6854 = vcombine.high %v6759, %v6760
    %v6855 = vcombine.high %v6761, %v6762
    %v6856 = vcombine.high %v6763, %v6763
    %v6858 = vunpack.c.l.s4 1966171168
    %v6859 = vunpack.c.0.s8 %v6858
    %v6860 = vlaneseq
    %v6861 = vshrl.u32 %v6860, 7
    %v6862 = vsub.s32 %v6859, %v6861
    %v6863 = vrot.slane %v6853, %v6862
    %v6865 = vunpack.c.l.s4 1966171168
    %v6866 = vunpack.c.0.s8 %v6865
    %v6867 = vlaneseq
    %v6868 = vshrl.u32 %v6867, 7
    %v6869 = vsub.s32 %v6866, %v6868
    %v6870 = vrot.slane %v6854, %v6869
    %v6872 = vunpack.c.l.s4 1966171168
    %v6873 = vunpack.c.0.s8 %v6872
    %v6874 = vlaneseq
    %v6875 = vshrl.u32 %v6874, 7
    %v6876 = vsub.s32 %v6873, %v6875
    %v6877 = vrot.slane %v6855, %v6876
    %v6879 = vunpack.c.l.s4 1966171168
    %v6880 = vunpack.c.0.s8 %v6879
    %v6881 = vlaneseq
    %v6882 = vshrl.u32 %v6881, 7
    %v6883 = vsub.s32 %v6880, %v6882
    %v6884 = vrot.slane %v6856, %v6883
    %v6885 = vcombine.low %v6863, %v6870
    %v6886 = vcombine.low %v6877, %v6884
    %v6888 = vunpack.c.l.s4 1966171168
    %v6889 = vunpack.c.0.s8 %v6888
    %v6890 = vlaneseq
    %v6891 = vshrl.u32 %v6890, 7
    %v6892 = vsub.s32 %v6889, %v6891
    %v6893 = vrot.slane %v6885, %v6892
    %v6895 = vunpack.c.l.s4 1966171168
    %v6896 = vunpack.c.0.s8 %v6895
    %v6897 = vlaneseq
    %v6898 = vshrl.u32 %v6897, 7
    %v6899 = vsub.s32 %v6896, %v6898
    %v6900 = vrot.slane %v6886, %v6899
    %v6901 = vcombine.low %v6893, %v6900
    %s6903 = scalar_lea.vmem [#allocation5], 56
    %6904 = vst.msk [vmem:[%s6903] ss:$2 sm:$0x7f] %vm6823, %v6901
    %v6905 = vcombine.high %v6863, %v6870
    %v6906 = vcombine.high %v6877, %v6884
    %v6908 = vunpack.c.l.s4 1966171168
    %v6909 = vunpack.c.0.s8 %v6908
    %v6910 = vlaneseq
    %v6911 = vshrl.u32 %v6910, 7
    %v6912 = vsub.s32 %v6909, %v6911
    %v6913 = vrot.slane %v6905, %v6912
    %v6915 = vunpack.c.l.s4 1966171168
    %v6916 = vunpack.c.0.s8 %v6915
    %v6917 = vlaneseq
    %v6918 = vshrl.u32 %v6917, 7
    %v6919 = vsub.s32 %v6916, %v6918
    %v6920 = vrot.slane %v6906, %v6919
    %v6921 = vcombine.low %v6913, %v6920
    %s6923 = scalar_lea.vmem [#allocation5], 70
    %6924 = vst.msk [vmem:[%s6923] ss:$2 sm:$0x7f] %vm6823, %v6921
    %v6925 = vcombine.high %v6893, %v6900
    %s6927 = scalar_lea.vmem [#allocation5], 84
    %6928 = vst.msk [vmem:[%s6927] ss:$2 sm:$0x7f] %vm6823, %v6925
    %v6929 = vcombine.high %v6913, %v6920
    %s6931 = scalar_lea.vmem [#allocation5], 98
    %6932 = vst.msk [vmem:[%s6931] ss:$2 sm:$0x7f] %vm6823, %v6929
    %v6933 = vmul.f32 %v6716, %v6737
    %v6934 = vmul.f32 %v6718, %v6739
    %v6935 = vmul.f32 %v6720, %v6741
    %v6936 = vmul.f32 %v6722, %v6743
    %v6937 = vmul.f32 %v6724, %v6745
    %v6938 = vmul.f32 %v6726, %v6747
    %v6939 = vmul.f32 %v6728, %v6749
    %v6940 = vmul.f32 %v6933, %v6469
    %v6941 = vmul.f32 %v6934, %v6473
    %v6942 = vmul.f32 %v6935, %v6477
    %v6943 = vmul.f32 %v6936, %v6481
    %v6944 = vmul.f32 %v6937, %v6485
    %v6945 = vmul.f32 %v6938, %v6489
    %v6946 = vmul.f32 %v6939, %v6493
    %v6954 = vcombine.low %v6940, %v6941
    %v6955 = vcombine.low %v6942, %v6943
    %v6956 = vcombine.low %v6944, %v6945
    %v6958 = vunpack.c.l.s4 1966171168
    %v6959 = vunpack.c.0.s8 %v6958
    %v6960 = vlaneseq
    %v6961 = vshrl.u32 %v6960, 7
    %v6962 = vsub.s32 %v6959, %v6961
    %v6963 = vrot.slane %v6954, %v6962
    %v6965 = vunpack.c.l.s4 1966171168
    %v6966 = vunpack.c.0.s8 %v6965
    %v6967 = vlaneseq
    %v6968 = vshrl.u32 %v6967, 7
    %v6969 = vsub.s32 %v6966, %v6968
    %v6970 = vrot.slane %v6955, %v6969
    %v6972 = vunpack.c.l.s4 1966171168
    %v6973 = vunpack.c.0.s8 %v6972
    %v6974 = vlaneseq
    %v6975 = vshrl.u32 %v6974, 7
    %v6976 = vsub.s32 %v6973, %v6975
    %v6977 = vrot.slane %v6956, %v6976
    %v6979 = vunpack.c.l.s4 1966171168
    %v6980 = vunpack.c.0.s8 %v6979
    %v6981 = vlaneseq
    %v6982 = vshrl.u32 %v6981, 7
    %v6983 = vsub.s32 %v6980, %v6982
    %v6984 = vrot.slane %v6946, %v6983
    %v6985 = vcombine.low %v6963, %v6970
    %v6986 = vcombine.low %v6977, %v6984
    %v6988 = vunpack.c.l.s4 1966171168
    %v6989 = vunpack.c.0.s8 %v6988
    %v6990 = vlaneseq
    %v6991 = vshrl.u32 %v6990, 7
    %v6992 = vsub.s32 %v6989, %v6991
    %v6993 = vrot.slane %v6985, %v6992
    %v6995 = vunpack.c.l.s4 1966171168
    %v6996 = vunpack.c.0.s8 %v6995
    %v6997 = vlaneseq
    %v6998 = vshrl.u32 %v6997, 7
    %v6999 = vsub.s32 %v6996, %v6998
    %v7000 = vrot.slane %v6986, %v6999
    %v7001 = vcombine.low %v6993, %v7000
    %s7003 = scalar_lea.vmem [#allocation5], 1
    %7004 = vst.msk [vmem:[%s7003] ss:$2 sm:$0x7f] %vm6823, %v7001
    %v7005 = vcombine.high %v6963, %v6970
    %v7006 = vcombine.high %v6977, %v6984
    %v7008 = vunpack.c.l.s4 1966171168
    %v7009 = vunpack.c.0.s8 %v7008
    %v7010 = vlaneseq
    %v7011 = vshrl.u32 %v7010, 7
    %v7012 = vsub.s32 %v7009, %v7011
    %v7013 = vrot.slane %v7005, %v7012
    %v7015 = vunpack.c.l.s4 1966171168
    %v7016 = vunpack.c.0.s8 %v7015
    %v7017 = vlaneseq
    %v7018 = vshrl.u32 %v7017, 7
    %v7019 = vsub.s32 %v7016, %v7018
    %v7020 = vrot.slane %v7006, %v7019
    %v7021 = vcombine.low %v7013, %v7020
    %s7023 = scalar_lea.vmem [#allocation5], 15
    %7024 = vst.msk [vmem:[%s7023] ss:$2 sm:$0x7f] %vm6823, %v7021
    %v7025 = vcombine.high %v6993, %v7000
    %s7027 = scalar_lea.vmem [#allocation5], 29
    %7028 = vst.msk [vmem:[%s7027] ss:$2 sm:$0x7f] %vm6823, %v7025
    %v7029 = vcombine.high %v7013, %v7020
    %s7031 = scalar_lea.vmem [#allocation5], 43
    %7032 = vst.msk [vmem:[%s7031] ss:$2 sm:$0x7f] %vm6823, %v7029
    %v7033 = vcombine.high %v6940, %v6941
    %v7034 = vcombine.high %v6942, %v6943
    %v7035 = vcombine.high %v6944, %v6945
    %v7036 = vcombine.high %v6946, %v6946
    %v7038 = vunpack.c.l.s4 1966171168
    %v7039 = vunpack.c.0.s8 %v7038
    %v7040 = vlaneseq
    %v7041 = vshrl.u32 %v7040, 7
    %v7042 = vsub.s32 %v7039, %v7041
    %v7043 = vrot.slane %v7033, %v7042
    %v7045 = vunpack.c.l.s4 1966171168
    %v7046 = vunpack.c.0.s8 %v7045
    %v7047 = vlaneseq
    %v7048 = vshrl.u32 %v7047, 7
    %v7049 = vsub.s32 %v7046, %v7048
    %v7050 = vrot.slane %v7034, %v7049
    %v7052 = vunpack.c.l.s4 1966171168
    %v7053 = vunpack.c.0.s8 %v7052
    %v7054 = vlaneseq
    %v7055 = vshrl.u32 %v7054, 7
    %v7056 = vsub.s32 %v7053, %v7055
    %v7057 = vrot.slane %v7035, %v7056
    %v7059 = vunpack.c.l.s4 1966171168
    %v7060 = vunpack.c.0.s8 %v7059
    %v7061 = vlaneseq
    %v7062 = vshrl.u32 %v7061, 7
    %v7063 = vsub.s32 %v7060, %v7062
    %v7064 = vrot.slane %v7036, %v7063
    %v7065 = vcombine.low %v7043, %v7050
    %v7066 = vcombine.low %v7057, %v7064
    %v7068 = vunpack.c.l.s4 1966171168
    %v7069 = vunpack.c.0.s8 %v7068
    %v7070 = vlaneseq
    %v7071 = vshrl.u32 %v7070, 7
    %v7072 = vsub.s32 %v7069, %v7071
    %v7073 = vrot.slane %v7065, %v7072
    %v7075 = vunpack.c.l.s4 1966171168
    %v7076 = vunpack.c.0.s8 %v7075
    %v7077 = vlaneseq
    %v7078 = vshrl.u32 %v7077, 7
    %v7079 = vsub.s32 %v7076, %v7078
    %v7080 = vrot.slane %v7066, %v7079
    %v7081 = vcombine.low %v7073, %v7080
    %s7083 = scalar_lea.vmem [#allocation5], 57
    %7084 = vst.msk [vmem:[%s7083] ss:$2 sm:$0x7f] %vm6823, %v7081
    %v7085 = vcombine.high %v7043, %v7050
    %v7086 = vcombine.high %v7057, %v7064
    %v7088 = vunpack.c.l.s4 1966171168
    %v7089 = vunpack.c.0.s8 %v7088
    %v7090 = vlaneseq
    %v7091 = vshrl.u32 %v7090, 7
    %v7092 = vsub.s32 %v7089, %v7091
    %v7093 = vrot.slane %v7085, %v7092
    %v7095 = vunpack.c.l.s4 1966171168
    %v7096 = vunpack.c.0.s8 %v7095
    %v7097 = vlaneseq
    %v7098 = vshrl.u32 %v7097, 7
    %v7099 = vsub.s32 %v7096, %v7098
    %v7100 = vrot.slane %v7086, %v7099
    %v7101 = vcombine.low %v7093, %v7100
    %s7103 = scalar_lea.vmem [#allocation5], 71
    %7104 = vst.msk [vmem:[%s7103] ss:$2 sm:$0x7f] %vm6823, %v7101
    %v7105 = vcombine.high %v7073, %v7080
    %s7107 = scalar_lea.vmem [#allocation5], 85
    %7108 = vst.msk [vmem:[%s7107] ss:$2 sm:$0x7f] %vm6823, %v7105
    %v7109 = vcombine.high %v7093, %v7100
    %s7111 = scalar_lea.vmem [#allocation5], 99
    %7112 = vst.msk [vmem:[%s7111] ss:$2 sm:$0x7f] %vm6823, %v7109
    %v7113 = vld [vmem:[#allocation5] sm:$0xff]
    %v7114 = vld [vmem:[#allocation5 + $0x8] sm:$0xff]
    %v7115 = vld [vmem:[#allocation5 + $0x10] sm:$0xff]
    %v7116 = vld [vmem:[#allocation5 + $0x18] sm:$0xff]
    %v7117 = vld [vmem:[#allocation5 + $0x20] sm:$0xff]
    %v7118 = vld [vmem:[#allocation5 + $0x28] sm:$0xff]
    %v7119 = vld [vmem:[#allocation5 + $0x30] sm:$0xff]
    %v7120 = vld [vmem:[#allocation5 + $0x38] sm:$0xff]
    %v7121 = vld [vmem:[#allocation5 + $0x40] sm:$0xff]
    %v7122 = vld [vmem:[#allocation5 + $0x48] sm:$0xff]
    %v7123 = vld [vmem:[#allocation5 + $0x50] sm:$0xff]
    %v7124 = vld [vmem:[#allocation5 + $0x58] sm:$0xff]
    %v7125 = vld [vmem:[#allocation5 + $0x60] sm:$0xff]
    %v7126 = vld [vmem:[#allocation5 + $0x68] sm:$0xff]
    %v7141 = vcombine.high %v7113, %v7113
    %v7143 = vunpack.c.l.s4 1983009808
    %v7144 = vunpack.c.0.s8 %v7143
    %v7145 = vlaneseq
    %v7146 = vshrl.u32 %v7145, 7
    %v7147 = vsub.s32 %v7144, %v7146
    %v7148 = vrot.slane %v7113, %v7147
    %v7150 = vunpack.c.l.s4 1983009808
    %v7151 = vunpack.c.0.s8 %v7150
    %v7152 = vlaneseq
    %v7153 = vshrl.u32 %v7152, 7
    %v7154 = vsub.s32 %v7151, %v7153
    %v7155 = vrot.slane %v7141, %v7154
    %v7156 = vcombine.high %v7148, %v7148
    %v7157 = vcombine.high %v7155, %v7155
    %v7158 = vcombine.high %v7114, %v7114
    %v7160 = vunpack.c.l.s4 1983009808
    %v7161 = vunpack.c.0.s8 %v7160
    %v7162 = vlaneseq
    %v7163 = vshrl.u32 %v7162, 7
    %v7164 = vsub.s32 %v7161, %v7163
    %v7165 = vrot.slane %v7114, %v7164
    %v7167 = vunpack.c.l.s4 1983009808
    %v7168 = vunpack.c.0.s8 %v7167
    %v7169 = vlaneseq
    %v7170 = vshrl.u32 %v7169, 7
    %v7171 = vsub.s32 %v7168, %v7170
    %v7172 = vrot.slane %v7158, %v7171
    %v7173 = vcombine.high %v7165, %v7165
    %v7174 = vcombine.high %v7172, %v7172
    %v7175 = vcombine.high %v7115, %v7115
    %v7177 = vunpack.c.l.s4 1983009808
    %v7178 = vunpack.c.0.s8 %v7177
    %v7179 = vlaneseq
    %v7180 = vshrl.u32 %v7179, 7
    %v7181 = vsub.s32 %v7178, %v7180
    %v7182 = vrot.slane %v7115, %v7181
    %v7184 = vunpack.c.l.s4 1983009808
    %v7185 = vunpack.c.0.s8 %v7184
    %v7186 = vlaneseq
    %v7187 = vshrl.u32 %v7186, 7
    %v7188 = vsub.s32 %v7185, %v7187
    %v7189 = vrot.slane %v7175, %v7188
    %v7190 = vcombine.high %v7182, %v7182
    %v7191 = vcombine.high %v7189, %v7189
    %v7192 = vcombine.high %v7116, %v7116
    %v7194 = vunpack.c.l.s4 1983009808
    %v7195 = vunpack.c.0.s8 %v7194
    %v7196 = vlaneseq
    %v7197 = vshrl.u32 %v7196, 7
    %v7198 = vsub.s32 %v7195, %v7197
    %v7199 = vrot.slane %v7116, %v7198
    %v7201 = vunpack.c.l.s4 1983009808
    %v7202 = vunpack.c.0.s8 %v7201
    %v7203 = vlaneseq
    %v7204 = vshrl.u32 %v7203, 7
    %v7205 = vsub.s32 %v7202, %v7204
    %v7206 = vrot.slane %v7192, %v7205
    %v7207 = vcombine.high %v7199, %v7199
    %v7208 = vcombine.high %v7206, %v7206
    %v7209 = vcombine.high %v7117, %v7117
    %v7211 = vunpack.c.l.s4 1983009808
    %v7212 = vunpack.c.0.s8 %v7211
    %v7213 = vlaneseq
    %v7214 = vshrl.u32 %v7213, 7
    %v7215 = vsub.s32 %v7212, %v7214
    %v7216 = vrot.slane %v7117, %v7215
    %v7218 = vunpack.c.l.s4 1983009808
    %v7219 = vunpack.c.0.s8 %v7218
    %v7220 = vlaneseq
    %v7221 = vshrl.u32 %v7220, 7
    %v7222 = vsub.s32 %v7219, %v7221
    %v7223 = vrot.slane %v7209, %v7222
    %v7224 = vcombine.high %v7216, %v7216
    %v7225 = vcombine.high %v7223, %v7223
    %v7226 = vcombine.high %v7118, %v7118
    %v7228 = vunpack.c.l.s4 1983009808
    %v7229 = vunpack.c.0.s8 %v7228
    %v7230 = vlaneseq
    %v7231 = vshrl.u32 %v7230, 7
    %v7232 = vsub.s32 %v7229, %v7231
    %v7233 = vrot.slane %v7118, %v7232
    %v7235 = vunpack.c.l.s4 1983009808
    %v7236 = vunpack.c.0.s8 %v7235
    %v7237 = vlaneseq
    %v7238 = vshrl.u32 %v7237, 7
    %v7239 = vsub.s32 %v7236, %v7238
    %v7240 = vrot.slane %v7226, %v7239
    %v7241 = vcombine.high %v7233, %v7233
    %v7242 = vcombine.high %v7240, %v7240
    %v7243 = vcombine.high %v7119, %v7119
    %v7245 = vunpack.c.l.s4 1983009808
    %v7246 = vunpack.c.0.s8 %v7245
    %v7247 = vlaneseq
    %v7248 = vshrl.u32 %v7247, 7
    %v7249 = vsub.s32 %v7246, %v7248
    %v7250 = vrot.slane %v7119, %v7249
    %v7252 = vunpack.c.l.s4 1983009808
    %v7253 = vunpack.c.0.s8 %v7252
    %v7254 = vlaneseq
    %v7255 = vshrl.u32 %v7254, 7
    %v7256 = vsub.s32 %v7253, %v7255
    %v7257 = vrot.slane %v7243, %v7256
    %v7258 = vcombine.high %v7250, %v7250
    %v7259 = vcombine.high %v7257, %v7257
    %v7260 = vcombine.high %v7120, %v7120
    %v7262 = vunpack.c.l.s4 1983009808
    %v7263 = vunpack.c.0.s8 %v7262
    %v7264 = vlaneseq
    %v7265 = vshrl.u32 %v7264, 7
    %v7266 = vsub.s32 %v7263, %v7265
    %v7267 = vrot.slane %v7120, %v7266
    %v7269 = vunpack.c.l.s4 1983009808
    %v7270 = vunpack.c.0.s8 %v7269
    %v7271 = vlaneseq
    %v7272 = vshrl.u32 %v7271, 7
    %v7273 = vsub.s32 %v7270, %v7272
    %v7274 = vrot.slane %v7260, %v7273
    %v7275 = vcombine.high %v7267, %v7267
    %v7276 = vcombine.high %v7274, %v7274
    %v7277 = vcombine.high %v7121, %v7121
    %v7279 = vunpack.c.l.s4 1983009808
    %v7280 = vunpack.c.0.s8 %v7279
    %v7281 = vlaneseq
    %v7282 = vshrl.u32 %v7281, 7
    %v7283 = vsub.s32 %v7280, %v7282
    %v7284 = vrot.slane %v7121, %v7283
    %v7286 = vunpack.c.l.s4 1983009808
    %v7287 = vunpack.c.0.s8 %v7286
    %v7288 = vlaneseq
    %v7289 = vshrl.u32 %v7288, 7
    %v7290 = vsub.s32 %v7287, %v7289
    %v7291 = vrot.slane %v7277, %v7290
    %v7292 = vcombine.high %v7284, %v7284
    %v7293 = vcombine.high %v7291, %v7291
    %v7294 = vcombine.high %v7122, %v7122
    %v7296 = vunpack.c.l.s4 1983009808
    %v7297 = vunpack.c.0.s8 %v7296
    %v7298 = vlaneseq
    %v7299 = vshrl.u32 %v7298, 7
    %v7300 = vsub.s32 %v7297, %v7299
    %v7301 = vrot.slane %v7122, %v7300
    %v7303 = vunpack.c.l.s4 1983009808
    %v7304 = vunpack.c.0.s8 %v7303
    %v7305 = vlaneseq
    %v7306 = vshrl.u32 %v7305, 7
    %v7307 = vsub.s32 %v7304, %v7306
    %v7308 = vrot.slane %v7294, %v7307
    %v7309 = vcombine.high %v7301, %v7301
    %v7310 = vcombine.high %v7308, %v7308
    %v7311 = vcombine.high %v7123, %v7123
    %v7313 = vunpack.c.l.s4 1983009808
    %v7314 = vunpack.c.0.s8 %v7313
    %v7315 = vlaneseq
    %v7316 = vshrl.u32 %v7315, 7
    %v7317 = vsub.s32 %v7314, %v7316
    %v7318 = vrot.slane %v7123, %v7317
    %v7320 = vunpack.c.l.s4 1983009808
    %v7321 = vunpack.c.0.s8 %v7320
    %v7322 = vlaneseq
    %v7323 = vshrl.u32 %v7322, 7
    %v7324 = vsub.s32 %v7321, %v7323
    %v7325 = vrot.slane %v7311, %v7324
    %v7326 = vcombine.high %v7318, %v7318
    %v7327 = vcombine.high %v7325, %v7325
    %v7328 = vcombine.high %v7124, %v7124
    %v7330 = vunpack.c.l.s4 1983009808
    %v7331 = vunpack.c.0.s8 %v7330
    %v7332 = vlaneseq
    %v7333 = vshrl.u32 %v7332, 7
    %v7334 = vsub.s32 %v7331, %v7333
    %v7335 = vrot.slane %v7124, %v7334
    %v7337 = vunpack.c.l.s4 1983009808
    %v7338 = vunpack.c.0.s8 %v7337
    %v7339 = vlaneseq
    %v7340 = vshrl.u32 %v7339, 7
    %v7341 = vsub.s32 %v7338, %v7340
    %v7342 = vrot.slane %v7328, %v7341
    %v7343 = vcombine.high %v7335, %v7335
    %v7344 = vcombine.high %v7342, %v7342
    %v7345 = vcombine.high %v7125, %v7125
    %v7347 = vunpack.c.l.s4 1983009808
    %v7348 = vunpack.c.0.s8 %v7347
    %v7349 = vlaneseq
    %v7350 = vshrl.u32 %v7349, 7
    %v7351 = vsub.s32 %v7348, %v7350
    %v7352 = vrot.slane %v7125, %v7351
    %v7354 = vunpack.c.l.s4 1983009808
    %v7355 = vunpack.c.0.s8 %v7354
    %v7356 = vlaneseq
    %v7357 = vshrl.u32 %v7356, 7
    %v7358 = vsub.s32 %v7355, %v7357
    %v7359 = vrot.slane %v7345, %v7358
    %v7360 = vcombine.high %v7352, %v7352
    %v7361 = vcombine.high %v7359, %v7359
    %v7362 = vcombine.high %v7126, %v7126
    %v7364 = vunpack.c.l.s4 1983009808
    %v7365 = vunpack.c.0.s8 %v7364
    %v7366 = vlaneseq
    %v7367 = vshrl.u32 %v7366, 7
    %v7368 = vsub.s32 %v7365, %v7367
    %v7369 = vrot.slane %v7126, %v7368
    %v7371 = vunpack.c.l.s4 1983009808
    %v7372 = vunpack.c.0.s8 %v7371
    %v7373 = vlaneseq
    %v7374 = vshrl.u32 %v7373, 7
    %v7375 = vsub.s32 %v7372, %v7374
    %v7376 = vrot.slane %v7362, %v7375
    %v7377 = vcombine.high %v7369, %v7369
    %v7378 = vcombine.high %v7376, %v7376
    %v7435 = vpack.c.bf16 %v7148, %v7148
    %v7436 = vpack.c.bf16 %v7156, %v7156
    %v7437 = vpack.c.bf16 %v7155, %v7155
    %v7438 = vpack.c.bf16 %v7157, %v7157
    %v7439 = vpack.c.bf16 %v7165, %v7165
    %v7440 = vpack.c.bf16 %v7173, %v7173
    %v7441 = vpack.c.bf16 %v7172, %v7172
    %v7442 = vpack.c.bf16 %v7174, %v7174
    %v7443 = vpack.c.bf16 %v7182, %v7182
    %v7444 = vpack.c.bf16 %v7190, %v7190
    %v7445 = vpack.c.bf16 %v7189, %v7189
    %v7446 = vpack.c.bf16 %v7191, %v7191
    %v7447 = vpack.c.bf16 %v7199, %v7199
    %v7448 = vpack.c.bf16 %v7207, %v7207
    %v7449 = vpack.c.bf16 %v7206, %v7206
    %v7450 = vpack.c.bf16 %v7208, %v7208
    %v7451 = vpack.c.bf16 %v7216, %v7216
    %v7452 = vpack.c.bf16 %v7224, %v7224
    %v7453 = vpack.c.bf16 %v7223, %v7223
    %v7454 = vpack.c.bf16 %v7225, %v7225
    %v7455 = vpack.c.bf16 %v7233, %v7233
    %v7456 = vpack.c.bf16 %v7241, %v7241
    %v7457 = vpack.c.bf16 %v7240, %v7240
    %v7458 = vpack.c.bf16 %v7242, %v7242
    %v7459 = vpack.c.bf16 %v7250, %v7250
    %v7460 = vpack.c.bf16 %v7258, %v7258
    %v7461 = vpack.c.bf16 %v7257, %v7257
    %v7462 = vpack.c.bf16 %v7259, %v7259
    %v7463 = vpack.c.bf16 %v7267, %v7267
    %v7464 = vpack.c.bf16 %v7275, %v7275
    %v7465 = vpack.c.bf16 %v7274, %v7274
    %v7466 = vpack.c.bf16 %v7276, %v7276
    %v7467 = vpack.c.bf16 %v7284, %v7284
    %v7468 = vpack.c.bf16 %v7292, %v7292
    %v7469 = vpack.c.bf16 %v7291, %v7291
    %v7470 = vpack.c.bf16 %v7293, %v7293
    %v7471 = vpack.c.bf16 %v7301, %v7301
    %v7472 = vpack.c.bf16 %v7309, %v7309
    %v7473 = vpack.c.bf16 %v7308, %v7308
    %v7474 = vpack.c.bf16 %v7310, %v7310
    %v7475 = vpack.c.bf16 %v7318, %v7318
    %v7476 = vpack.c.bf16 %v7326, %v7326
    %v7477 = vpack.c.bf16 %v7325, %v7325
    %v7478 = vpack.c.bf16 %v7327, %v7327
    %v7479 = vpack.c.bf16 %v7335, %v7335
    %v7480 = vpack.c.bf16 %v7343, %v7343
    %v7481 = vpack.c.bf16 %v7342, %v7342
    %v7482 = vpack.c.bf16 %v7344, %v7344
    %v7483 = vpack.c.bf16 %v7352, %v7352
    %v7484 = vpack.c.bf16 %v7360, %v7360
    %v7485 = vpack.c.bf16 %v7359, %v7359
    %v7486 = vpack.c.bf16 %v7361, %v7361
    %v7487 = vpack.c.bf16 %v7369, %v7369
    %v7488 = vpack.c.bf16 %v7377, %v7377
    %v7489 = vpack.c.bf16 %v7376, %v7376
    %v7490 = vpack.c.bf16 %v7378, %v7378
    %v7491 = vld [vmem:[%s11] sm:$0xf]
    %v7492 = vld [vmem:[%s11 + $0x4] sm:$0xf]
    %v7493 = vld [vmem:[%s11 + $0x8] sm:$0xf]
    %v7494 = vld [vmem:[%s11 + $0xc] sm:$0xf]
    %v7495 = vld [vmem:[%s11 + $0x10] sm:$0xf]
    %v7496 = vld [vmem:[%s11 + $0x14] sm:$0xf]
    %v7497 = vld [vmem:[%s11 + $0x18] sm:$0xf]
    %v7498 = vld [vmem:[%s11 + $0x1c] sm:$0xf]
    %v7499 = vld [vmem:[%s11 + $0x20] sm:$0xf]
    %v7500 = vld [vmem:[%s11 + $0x24] sm:$0xf]
    %v7501 = vld [vmem:[%s11 + $0x28] sm:$0xf]
    %v7502 = vld [vmem:[%s11 + $0x2c] sm:$0xf]
    %v7503 = vld [vmem:[%s11 + $0x30] sm:$0xf]
    %v7504 = vld [vmem:[%s11 + $0x34] sm:$0xf]
    %v7505 = vld [vmem:[%s11 + $0x38] sm:$0xf]
    %v7506 = vld [vmem:[%s11 + $0x3c] sm:$0xf]
    %v7507 = vld [vmem:[%s11 + $0x40] sm:$0xf]
    %v7508 = vld [vmem:[%s11 + $0x44] sm:$0xf]
    %v7509 = vld [vmem:[%s11 + $0x48] sm:$0xf]
    %v7510 = vld [vmem:[%s11 + $0x4c] sm:$0xf]
    %v7511 = vld [vmem:[%s11 + $0x50] sm:$0xf]
    %v7512 = vld [vmem:[%s11 + $0x54] sm:$0xf]
    %v7513 = vld [vmem:[%s11 + $0x58] sm:$0xf]
    %v7514 = vld [vmem:[%s11 + $0x5c] sm:$0xf]
    %v7515 = vld [vmem:[%s11 + $0x60] sm:$0xf]
    %v7516 = vld [vmem:[%s11 + $0x64] sm:$0xf]
    %v7517 = vld [vmem:[%s11 + $0x68] sm:$0xf]
    %v7518 = vld [vmem:[%s11 + $0x6c] sm:$0xf]
    %v7519 = vld [vmem:[%s11 + $0x70] sm:$0xf]
    %v7520 = vld [vmem:[%s11 + $0x74] sm:$0xf]
    %v7521 = vld [vmem:[%s11 + $0x78] sm:$0xf]
    %v7522 = vld [vmem:[%s11 + $0x7c] sm:$0xf]
    %v7523 = vld [vmem:[%s11 + $0x80] sm:$0xf]
    %v7524 = vld [vmem:[%s11 + $0x84] sm:$0xf]
    %v7525 = vld [vmem:[%s11 + $0x88] sm:$0xf]
    %v7526 = vld [vmem:[%s11 + $0x8c] sm:$0xf]
    %v7527 = vld [vmem:[%s11 + $0x90] sm:$0xf]
    %v7528 = vld [vmem:[%s11 + $0x94] sm:$0xf]
    %v7529 = vld [vmem:[%s11 + $0x98] sm:$0xf]
    %v7530 = vld [vmem:[%s11 + $0x9c] sm:$0xf]
    %v7531 = vld [vmem:[%s11 + $0xa0] sm:$0xf]
    %v7532 = vld [vmem:[%s11 + $0xa4] sm:$0xf]
    %v7533 = vld [vmem:[%s11 + $0xa8] sm:$0xf]
    %v7534 = vld [vmem:[%s11 + $0xac] sm:$0xf]
    %v7535 = vld [vmem:[%s11 + $0xb0] sm:$0xf]
    %v7536 = vld [vmem:[%s11 + $0xb4] sm:$0xf]
    %v7537 = vld [vmem:[%s11 + $0xb8] sm:$0xf]
    %v7538 = vld [vmem:[%s11 + $0xbc] sm:$0xf]
    %v7539 = vld [vmem:[%s11 + $0xc0] sm:$0xf]
    %v7540 = vld [vmem:[%s11 + $0xc4] sm:$0xf]
    %v7541 = vld [vmem:[%s11 + $0xc8] sm:$0xf]
    %v7542 = vld [vmem:[%s11 + $0xcc] sm:$0xf]
    %v7543 = vld [vmem:[%s11 + $0xd0] sm:$0xf]
    %v7544 = vld [vmem:[%s11 + $0xd4] sm:$0xf]
    %v7545 = vld [vmem:[%s11 + $0xd8] sm:$0xf]
    %v7546 = vld [vmem:[%s11 + $0xdc] sm:$0xf]
    %v7547 = vld [vmem:[%s11 + $0xe0] sm:$0xf]
    %v7548 = vld [vmem:[%s11 + $0xe4] sm:$0xf]
    %v7549 = vld [vmem:[%s11 + $0xe8] sm:$0xf]
    %v7550 = vld [vmem:[%s11 + $0xec] sm:$0xf]
    %v7551 = vld [vmem:[%s11 + $0xf0] sm:$0xf]
    %v7552 = vld [vmem:[%s11 + $0xf4] sm:$0xf]
    %v7553 = vld [vmem:[%s11 + $0xf8] sm:$0xf]
    %v7554 = vld [vmem:[%s11 + $0xfc] sm:$0xf]
    %v7555 = vld [vmem:[%s11 + $0x100] sm:$0xf]
    %v7556 = vld [vmem:[%s11 + $0x104] sm:$0xf]
    %v7557 = vld [vmem:[%s11 + $0x108] sm:$0xf]
    %v7558 = vld [vmem:[%s11 + $0x10c] sm:$0xf]
    %v7559 = vld [vmem:[%s11 + $0x110] sm:$0xf]
    %v7560 = vld [vmem:[%s11 + $0x114] sm:$0xf]
    %v7561 = vld [vmem:[%s11 + $0x118] sm:$0xf]
    %v7562 = vld [vmem:[%s11 + $0x11c] sm:$0xf]
    %v7563 = vld [vmem:[%s11 + $0x120] sm:$0xf]
    %v7564 = vld [vmem:[%s11 + $0x124] sm:$0xf]
    %v7565 = vld [vmem:[%s11 + $0x128] sm:$0xf]
    %v7566 = vld [vmem:[%s11 + $0x12c] sm:$0xf]
    %v7567 = vld [vmem:[%s11 + $0x130] sm:$0xf]
    %v7568 = vld [vmem:[%s11 + $0x134] sm:$0xf]
    %v7569 = vld [vmem:[%s11 + $0x138] sm:$0xf]
    %v7570 = vld [vmem:[%s11 + $0x13c] sm:$0xf]
    %v7571 = vld [vmem:[%s11 + $0x140] sm:$0xf]
    %v7572 = vld [vmem:[%s11 + $0x144] sm:$0xf]
    %v7573 = vld [vmem:[%s11 + $0x148] sm:$0xf]
    %v7574 = vld [vmem:[%s11 + $0x14c] sm:$0xf]
    %v7575 = vld [vmem:[%s11 + $0x150] sm:$0xf]
    %v7576 = vld [vmem:[%s11 + $0x154] sm:$0xf]
    %v7577 = vld [vmem:[%s11 + $0x158] sm:$0xf]
    %v7578 = vld [vmem:[%s11 + $0x15c] sm:$0xf]
    %v7579 = vld [vmem:[%s11 + $0x160] sm:$0xf]
    %v7580 = vld [vmem:[%s11 + $0x164] sm:$0xf]
    %v7581 = vld [vmem:[%s11 + $0x168] sm:$0xf]
    %v7582 = vld [vmem:[%s11 + $0x16c] sm:$0xf]
    %v7583 = vld [vmem:[%s11 + $0x170] sm:$0xf]
    %v7584 = vld [vmem:[%s11 + $0x174] sm:$0xf]
    %v7585 = vld [vmem:[%s11 + $0x178] sm:$0xf]
    %v7586 = vld [vmem:[%s11 + $0x17c] sm:$0xf]
    %v7587 = vld [vmem:[%s11 + $0x180] sm:$0xf]
    %v7588 = vld [vmem:[%s11 + $0x184] sm:$0xf]
    %v7589 = vld [vmem:[%s11 + $0x188] sm:$0xf]
    %v7590 = vld [vmem:[%s11 + $0x18c] sm:$0xf]
    %v7591 = vld [vmem:[%s11 + $0x190] sm:$0xf]
    %v7592 = vld [vmem:[%s11 + $0x194] sm:$0xf]
    %v7593 = vld [vmem:[%s11 + $0x198] sm:$0xf]
    %v7594 = vld [vmem:[%s11 + $0x19c] sm:$0xf]
    %v7595 = vld [vmem:[%s11 + $0x1a0] sm:$0xf]
    %v7596 = vld [vmem:[%s11 + $0x1a4] sm:$0xf]
    %v7597 = vld [vmem:[%s11 + $0x1a8] sm:$0xf]
    %v7598 = vld [vmem:[%s11 + $0x1ac] sm:$0xf]
    %v7599 = vld [vmem:[%s11 + $0x1b0] sm:$0xf]
    %v7600 = vld [vmem:[%s11 + $0x1b4] sm:$0xf]
    %v7601 = vld [vmem:[%s11 + $0x1b8] sm:$0xf]
    %v7602 = vld [vmem:[%s11 + $0x1bc] sm:$0xf]
    %v7603 = vld [vmem:[%s11 + $0x1c0] sm:$0xf]
    %v7604 = vld [vmem:[%s11 + $0x1c4] sm:$0xf]
    %v7605 = vld [vmem:[%s11 + $0x1c8] sm:$0xf]
    %v7606 = vld [vmem:[%s11 + $0x1cc] sm:$0xf]
    %v7607 = vld [vmem:[%s11 + $0x1d0] sm:$0xf]
    %v7608 = vld [vmem:[%s11 + $0x1d4] sm:$0xf]
    %v7609 = vld [vmem:[%s11 + $0x1d8] sm:$0xf]
    %v7610 = vld [vmem:[%s11 + $0x1dc] sm:$0xf]
    %v7611 = vld [vmem:[%s11 + $0x1e0] sm:$0xf]
    %v7612 = vld [vmem:[%s11 + $0x1e4] sm:$0xf]
    %v7613 = vld [vmem:[%s11 + $0x1e8] sm:$0xf]
    %v7614 = vld [vmem:[%s11 + $0x1ec] sm:$0xf]
    %v7615 = vld [vmem:[%s11 + $0x1f0] sm:$0xf]
    %v7616 = vld [vmem:[%s11 + $0x1f4] sm:$0xf]
    %v7617 = vld [vmem:[%s11 + $0x1f8] sm:$0xf]
    %v7618 = vld [vmem:[%s11 + $0x1fc] sm:$0xf]
    %v7619 = vld [vmem:[%s11 + $0x200] sm:$0xf]
    %v7620 = vld [vmem:[%s11 + $0x204] sm:$0xf]
    %v7621 = vld [vmem:[%s11 + $0x208] sm:$0xf]
    %v7622 = vld [vmem:[%s11 + $0x20c] sm:$0xf]
    %v7623 = vld [vmem:[%s11 + $0x210] sm:$0xf]
    %v7624 = vld [vmem:[%s11 + $0x214] sm:$0xf]
    %v7625 = vld [vmem:[%s11 + $0x218] sm:$0xf]
    %v7626 = vld [vmem:[%s11 + $0x21c] sm:$0xf]
    %v7627 = vld [vmem:[%s11 + $0x220] sm:$0xf]
    %v7628 = vld [vmem:[%s11 + $0x224] sm:$0xf]
    %v7629 = vld [vmem:[%s11 + $0x228] sm:$0xf]
    %v7630 = vld [vmem:[%s11 + $0x22c] sm:$0xf]
    %v7631 = vld [vmem:[%s11 + $0x230] sm:$0xf]
    %v7632 = vld [vmem:[%s11 + $0x234] sm:$0xf]
    %v7633 = vld [vmem:[%s11 + $0x238] sm:$0xf]
    %v7634 = vld [vmem:[%s11 + $0x23c] sm:$0xf]
    %v7635 = vld [vmem:[%s11 + $0x240] sm:$0xf]
    %v7636 = vld [vmem:[%s11 + $0x244] sm:$0xf]
    %v7637 = vld [vmem:[%s11 + $0x248] sm:$0xf]
    %v7638 = vld [vmem:[%s11 + $0x24c] sm:$0xf]
    %v7639 = vld [vmem:[%s11 + $0x250] sm:$0xf]
    %v7640 = vld [vmem:[%s11 + $0x254] sm:$0xf]
    %v7641 = vld [vmem:[%s11 + $0x258] sm:$0xf]
    %v7642 = vld [vmem:[%s11 + $0x25c] sm:$0xf]
    %v7643 = vld [vmem:[%s11 + $0x260] sm:$0xf]
    %v7644 = vld [vmem:[%s11 + $0x264] sm:$0xf]
    %v7645 = vld [vmem:[%s11 + $0x268] sm:$0xf]
    %v7646 = vld [vmem:[%s11 + $0x26c] sm:$0xf]
    %v7647 = vld [vmem:[%s11 + $0x270] sm:$0xf]
    %v7648 = vld [vmem:[%s11 + $0x274] sm:$0xf]
    %v7649 = vld [vmem:[%s11 + $0x278] sm:$0xf]
    %v7650 = vld [vmem:[%s11 + $0x27c] sm:$0xf]
    %v7651 = vld [vmem:[%s11 + $0x280] sm:$0xf]
    %v7652 = vld [vmem:[%s11 + $0x284] sm:$0xf]
    %v7653 = vld [vmem:[%s11 + $0x288] sm:$0xf]
    %v7654 = vld [vmem:[%s11 + $0x28c] sm:$0xf]
    %v7655 = vld [vmem:[%s11 + $0x290] sm:$0xf]
    %v7656 = vld [vmem:[%s11 + $0x294] sm:$0xf]
    %v7657 = vld [vmem:[%s11 + $0x298] sm:$0xf]
    %v7658 = vld [vmem:[%s11 + $0x29c] sm:$0xf]
    %v7659 = vld [vmem:[%s11 + $0x2a0] sm:$0xf]
    %v7660 = vld [vmem:[%s11 + $0x2a4] sm:$0xf]
    %v7661 = vld [vmem:[%s11 + $0x2a8] sm:$0xf]
    %v7662 = vld [vmem:[%s11 + $0x2ac] sm:$0xf]
    %v7663 = vld [vmem:[%s11 + $0x2b0] sm:$0xf]
    %v7664 = vld [vmem:[%s11 + $0x2b4] sm:$0xf]
    %v7665 = vld [vmem:[%s11 + $0x2b8] sm:$0xf]
    %v7666 = vld [vmem:[%s11 + $0x2bc] sm:$0xf]
    %v7667 = vld [vmem:[%s11 + $0x2c0] sm:$0xf]
    %v7668 = vld [vmem:[%s11 + $0x2c4] sm:$0xf]
    %v7669 = vld [vmem:[%s11 + $0x2c8] sm:$0xf]
    %v7670 = vld [vmem:[%s11 + $0x2cc] sm:$0xf]
    %v7671 = vld [vmem:[%s11 + $0x2d0] sm:$0xf]
    %v7672 = vld [vmem:[%s11 + $0x2d4] sm:$0xf]
    %v7673 = vld [vmem:[%s11 + $0x2d8] sm:$0xf]
    %v7674 = vld [vmem:[%s11 + $0x2dc] sm:$0xf]
    %v7675 = vld [vmem:[%s11 + $0x2e0] sm:$0xf]
    %v7676 = vld [vmem:[%s11 + $0x2e4] sm:$0xf]
    %v7677 = vld [vmem:[%s11 + $0x2e8] sm:$0xf]
    %v7678 = vld [vmem:[%s11 + $0x2ec] sm:$0xf]
    %v7679 = vld [vmem:[%s11 + $0x2f0] sm:$0xf]
    %v7680 = vld [vmem:[%s11 + $0x2f4] sm:$0xf]
    %v7681 = vld [vmem:[%s11 + $0x2f8] sm:$0xf]
    %v7682 = vld [vmem:[%s11 + $0x2fc] sm:$0xf]
    %v7683 = vld [vmem:[%s11 + $0x300] sm:$0xf]
    %v7684 = vld [vmem:[%s11 + $0x304] sm:$0xf]
    %v7685 = vld [vmem:[%s11 + $0x308] sm:$0xf]
    %v7686 = vld [vmem:[%s11 + $0x30c] sm:$0xf]
    %v7687 = vld [vmem:[%s11 + $0x310] sm:$0xf]
    %v7688 = vld [vmem:[%s11 + $0x314] sm:$0xf]
    %v7689 = vld [vmem:[%s11 + $0x318] sm:$0xf]
    %v7690 = vld [vmem:[%s11 + $0x31c] sm:$0xf]
    %v7691 = vld [vmem:[%s11 + $0x320] sm:$0xf]
    %v7692 = vld [vmem:[%s11 + $0x324] sm:$0xf]
    %v7693 = vld [vmem:[%s11 + $0x328] sm:$0xf]
    %v7694 = vld [vmem:[%s11 + $0x32c] sm:$0xf]
    %v7695 = vld [vmem:[%s11 + $0x330] sm:$0xf]
    %v7696 = vld [vmem:[%s11 + $0x334] sm:$0xf]
    %v7697 = vld [vmem:[%s11 + $0x338] sm:$0xf]
    %v7698 = vld [vmem:[%s11 + $0x33c] sm:$0xf]
    %v7699 = vld [vmem:[%s11 + $0x340] sm:$0xf]
    %v7700 = vld [vmem:[%s11 + $0x344] sm:$0xf]
    %v7701 = vld [vmem:[%s11 + $0x348] sm:$0xf]
    %v7702 = vld [vmem:[%s11 + $0x34c] sm:$0xf]
    %v7703 = vld [vmem:[%s11 + $0x350] sm:$0xf]
    %v7704 = vld [vmem:[%s11 + $0x354] sm:$0xf]
    %v7705 = vld [vmem:[%s11 + $0x358] sm:$0xf]
    %v7706 = vld [vmem:[%s11 + $0x35c] sm:$0xf]
    %v7707 = vld [vmem:[%s11 + $0x360] sm:$0xf]
    %v7708 = vld [vmem:[%s11 + $0x364] sm:$0xf]
    %v7709 = vld [vmem:[%s11 + $0x368] sm:$0xf]
    %v7710 = vld [vmem:[%s11 + $0x36c] sm:$0xf]
    %v7711 = vld [vmem:[%s11 + $0x370] sm:$0xf]
    %v7712 = vld [vmem:[%s11 + $0x374] sm:$0xf]
    %v7713 = vld [vmem:[%s11 + $0x378] sm:$0xf]
    %v7714 = vld [vmem:[%s11 + $0x37c] sm:$0xf]
    %v7715 = vld [vmem:[%s11 + $0x380] sm:$0xf]
    %v7716 = vld [vmem:[%s11 + $0x384] sm:$0xf]
    %v7717 = vld [vmem:[%s11 + $0x388] sm:$0xf]
    %v7718 = vld [vmem:[%s11 + $0x38c] sm:$0xf]
    %v7719 = vld [vmem:[%s11 + $0x390] sm:$0xf]
    %v7720 = vld [vmem:[%s11 + $0x394] sm:$0xf]
    %v7721 = vld [vmem:[%s11 + $0x398] sm:$0xf]
    %v7722 = vld [vmem:[%s11 + $0x39c] sm:$0xf]
    %v7723 = vld [vmem:[%s11 + $0x3a0] sm:$0xf]
    %v7724 = vld [vmem:[%s11 + $0x3a4] sm:$0xf]
    %v7725 = vld [vmem:[%s11 + $0x3a8] sm:$0xf]
    %v7726 = vld [vmem:[%s11 + $0x3ac] sm:$0xf]
    %v7727 = vld [vmem:[%s11 + $0x3b0] sm:$0xf]
    %v7728 = vld [vmem:[%s11 + $0x3b4] sm:$0xf]
    %v7729 = vld [vmem:[%s11 + $0x3b8] sm:$0xf]
    %v7730 = vld [vmem:[%s11 + $0x3bc] sm:$0xf]
    %v7731 = vld [vmem:[%s11 + $0x3c0] sm:$0xf]
    %v7732 = vld [vmem:[%s11 + $0x3c4] sm:$0xf]
    %v7733 = vld [vmem:[%s11 + $0x3c8] sm:$0xf]
    %v7734 = vld [vmem:[%s11 + $0x3cc] sm:$0xf]
    %v7735 = vld [vmem:[%s11 + $0x3d0] sm:$0xf]
    %v7736 = vld [vmem:[%s11 + $0x3d4] sm:$0xf]
    %v7737 = vld [vmem:[%s11 + $0x3d8] sm:$0xf]
    %v7738 = vld [vmem:[%s11 + $0x3dc] sm:$0xf]
    %v7739 = vld [vmem:[%s11 + $0x3e0] sm:$0xf]
    %v7740 = vld [vmem:[%s11 + $0x3e4] sm:$0xf]
    %v7741 = vld [vmem:[%s11 + $0x3e8] sm:$0xf]
    %v7742 = vld [vmem:[%s11 + $0x3ec] sm:$0xf]
    %v7743 = vld [vmem:[%s11 + $0x3f0] sm:$0xf]
    %v7744 = vld [vmem:[%s11 + $0x3f4] sm:$0xf]
    %v7745 = vld [vmem:[%s11 + $0x3f8] sm:$0xf]
    %v7746 = vld [vmem:[%s11 + $0x3fc] sm:$0xf]
    %v7747 = vld [vmem:[%s11 + $0x400] sm:$0xf]
    %v7748 = vld [vmem:[%s11 + $0x404] sm:$0xf]
    %v7749 = vld [vmem:[%s11 + $0x408] sm:$0xf]
    %v7750 = vld [vmem:[%s11 + $0x40c] sm:$0xf]
    %v7751 = vld [vmem:[%s11 + $0x410] sm:$0xf]
    %v7752 = vld [vmem:[%s11 + $0x414] sm:$0xf]
    %v7753 = vld [vmem:[%s11 + $0x418] sm:$0xf]
    %v7754 = vld [vmem:[%s11 + $0x41c] sm:$0xf]
    %v7755 = vld [vmem:[%s11 + $0x420] sm:$0xf]
    %v7756 = vld [vmem:[%s11 + $0x424] sm:$0xf]
    %v7757 = vld [vmem:[%s11 + $0x428] sm:$0xf]
    %v7758 = vld [vmem:[%s11 + $0x42c] sm:$0xf]
    %v7759 = vld [vmem:[%s11 + $0x430] sm:$0xf]
    %v7760 = vld [vmem:[%s11 + $0x434] sm:$0xf]
    %v7761 = vld [vmem:[%s11 + $0x438] sm:$0xf]
    %v7762 = vld [vmem:[%s11 + $0x43c] sm:$0xf]
    %v7763 = vld [vmem:[%s11 + $0x440] sm:$0xf]
    %v7764 = vld [vmem:[%s11 + $0x444] sm:$0xf]
    %v7765 = vld [vmem:[%s11 + $0x448] sm:$0xf]
    %v7766 = vld [vmem:[%s11 + $0x44c] sm:$0xf]
    %v7767 = vld [vmem:[%s11 + $0x450] sm:$0xf]
    %v7768 = vld [vmem:[%s11 + $0x454] sm:$0xf]
    %v7769 = vld [vmem:[%s11 + $0x458] sm:$0xf]
    %v7770 = vld [vmem:[%s11 + $0x45c] sm:$0xf]
    %v7771 = vld [vmem:[%s11 + $0x460] sm:$0xf]
    %v7772 = vld [vmem:[%s11 + $0x464] sm:$0xf]
    %v7773 = vld [vmem:[%s11 + $0x468] sm:$0xf]
    %v7774 = vld [vmem:[%s11 + $0x46c] sm:$0xf]
    %v7775 = vld [vmem:[%s11 + $0x470] sm:$0xf]
    %v7776 = vld [vmem:[%s11 + $0x474] sm:$0xf]
    %v7777 = vld [vmem:[%s11 + $0x478] sm:$0xf]
    %v7778 = vld [vmem:[%s11 + $0x47c] sm:$0xf]
    %v7779 = vld [vmem:[%s11 + $0x480] sm:$0xf]
    %v7780 = vld [vmem:[%s11 + $0x484] sm:$0xf]
    %v7781 = vld [vmem:[%s11 + $0x488] sm:$0xf]
    %v7782 = vld [vmem:[%s11 + $0x48c] sm:$0xf]
    %v7783 = vld [vmem:[%s11 + $0x490] sm:$0xf]
    %v7784 = vld [vmem:[%s11 + $0x494] sm:$0xf]
    %v7785 = vld [vmem:[%s11 + $0x498] sm:$0xf]
    %v7786 = vld [vmem:[%s11 + $0x49c] sm:$0xf]
    %v7787 = vld [vmem:[%s11 + $0x4a0] sm:$0xf]
    %v7788 = vld [vmem:[%s11 + $0x4a4] sm:$0xf]
    %v7789 = vld [vmem:[%s11 + $0x4a8] sm:$0xf]
    %v7790 = vld [vmem:[%s11 + $0x4ac] sm:$0xf]
    %v7791 = vld [vmem:[%s11 + $0x4b0] sm:$0xf]
    %v7792 = vld [vmem:[%s11 + $0x4b4] sm:$0xf]
    %v7793 = vld [vmem:[%s11 + $0x4b8] sm:$0xf]
    %v7794 = vld [vmem:[%s11 + $0x4bc] sm:$0xf]
    %v7795 = vld [vmem:[%s11 + $0x4c0] sm:$0xf]
    %v7796 = vld [vmem:[%s11 + $0x4c4] sm:$0xf]
    %v7797 = vld [vmem:[%s11 + $0x4c8] sm:$0xf]
    %v7798 = vld [vmem:[%s11 + $0x4cc] sm:$0xf]
    %v7799 = vld [vmem:[%s11 + $0x4d0] sm:$0xf]
    %v7800 = vld [vmem:[%s11 + $0x4d4] sm:$0xf]
    %v7801 = vld [vmem:[%s11 + $0x4d8] sm:$0xf]
    %v7802 = vld [vmem:[%s11 + $0x4dc] sm:$0xf]
    %v7803 = vld [vmem:[%s11 + $0x4e0] sm:$0xf]
    %v7804 = vld [vmem:[%s11 + $0x4e4] sm:$0xf]
    %v7805 = vld [vmem:[%s11 + $0x4e8] sm:$0xf]
    %v7806 = vld [vmem:[%s11 + $0x4ec] sm:$0xf]
    %v7807 = vld [vmem:[%s11 + $0x4f0] sm:$0xf]
    %v7808 = vld [vmem:[%s11 + $0x4f4] sm:$0xf]
    %v7809 = vld [vmem:[%s11 + $0x4f8] sm:$0xf]
    %v7810 = vld [vmem:[%s11 + $0x4fc] sm:$0xf]
    %v7811 = vld [vmem:[%s11 + $0x500] sm:$0xf]
    %v7812 = vld [vmem:[%s11 + $0x504] sm:$0xf]
    %v7813 = vld [vmem:[%s11 + $0x508] sm:$0xf]
    %v7814 = vld [vmem:[%s11 + $0x50c] sm:$0xf]
    %v7815 = vld [vmem:[%s11 + $0x510] sm:$0xf]
    %v7816 = vld [vmem:[%s11 + $0x514] sm:$0xf]
    %v7817 = vld [vmem:[%s11 + $0x518] sm:$0xf]
    %v7818 = vld [vmem:[%s11 + $0x51c] sm:$0xf]
    %v7819 = vld [vmem:[%s11 + $0x520] sm:$0xf]
    %v7820 = vld [vmem:[%s11 + $0x524] sm:$0xf]
    %v7821 = vld [vmem:[%s11 + $0x528] sm:$0xf]
    %v7822 = vld [vmem:[%s11 + $0x52c] sm:$0xf]
    %v7823 = vld [vmem:[%s11 + $0x530] sm:$0xf]
    %v7824 = vld [vmem:[%s11 + $0x534] sm:$0xf]
    %v7825 = vld [vmem:[%s11 + $0x538] sm:$0xf]
    %v7826 = vld [vmem:[%s11 + $0x53c] sm:$0xf]
    %v7827 = vld [vmem:[%s11 + $0x540] sm:$0xf]
    %v7828 = vld [vmem:[%s11 + $0x544] sm:$0xf]
    %v7829 = vld [vmem:[%s11 + $0x548] sm:$0xf]
    %v7830 = vld [vmem:[%s11 + $0x54c] sm:$0xf]
    %v7831 = vld [vmem:[%s11 + $0x550] sm:$0xf]
    %v7832 = vld [vmem:[%s11 + $0x554] sm:$0xf]
    %v7833 = vld [vmem:[%s11 + $0x558] sm:$0xf]
    %v7834 = vld [vmem:[%s11 + $0x55c] sm:$0xf]
    %v7835 = vld [vmem:[%s11 + $0x560] sm:$0xf]
    %v7836 = vld [vmem:[%s11 + $0x564] sm:$0xf]
    %v7837 = vld [vmem:[%s11 + $0x568] sm:$0xf]
    %v7838 = vld [vmem:[%s11 + $0x56c] sm:$0xf]
    %v7839 = vld [vmem:[%s11 + $0x570] sm:$0xf]
    %v7840 = vld [vmem:[%s11 + $0x574] sm:$0xf]
    %v7841 = vld [vmem:[%s11 + $0x578] sm:$0xf]
    %v7842 = vld [vmem:[%s11 + $0x57c] sm:$0xf]
    %v7843 = vld [vmem:[%s11 + $0x580] sm:$0xf]
    %v7844 = vld [vmem:[%s11 + $0x584] sm:$0xf]
    %v7845 = vld [vmem:[%s11 + $0x588] sm:$0xf]
    %v7846 = vld [vmem:[%s11 + $0x58c] sm:$0xf]
    %v7847 = vld [vmem:[%s11 + $0x590] sm:$0xf]
    %v7848 = vld [vmem:[%s11 + $0x594] sm:$0xf]
    %v7849 = vld [vmem:[%s11 + $0x598] sm:$0xf]
    %v7850 = vld [vmem:[%s11 + $0x59c] sm:$0xf]
    %v7851 = vld [vmem:[%s11 + $0x5a0] sm:$0xf]
    %v7852 = vld [vmem:[%s11 + $0x5a4] sm:$0xf]
    %v7853 = vld [vmem:[%s11 + $0x5a8] sm:$0xf]
    %v7854 = vld [vmem:[%s11 + $0x5ac] sm:$0xf]
    %v7855 = vld [vmem:[%s11 + $0x5b0] sm:$0xf]
    %v7856 = vld [vmem:[%s11 + $0x5b4] sm:$0xf]
    %v7857 = vld [vmem:[%s11 + $0x5b8] sm:$0xf]
    %v7858 = vld [vmem:[%s11 + $0x5bc] sm:$0xf]
    %v7859 = vld [vmem:[%s11 + $0x5c0] sm:$0xf]
    %v7860 = vld [vmem:[%s11 + $0x5c4] sm:$0xf]
    %v7861 = vld [vmem:[%s11 + $0x5c8] sm:$0xf]
    %v7862 = vld [vmem:[%s11 + $0x5cc] sm:$0xf]
    %v7863 = vld [vmem:[%s11 + $0x5d0] sm:$0xf]
    %v7864 = vld [vmem:[%s11 + $0x5d4] sm:$0xf]
    %v7865 = vld [vmem:[%s11 + $0x5d8] sm:$0xf]
    %v7866 = vld [vmem:[%s11 + $0x5dc] sm:$0xf]
    %v7867 = vld [vmem:[%s11 + $0x5e0] sm:$0xf]
    %v7868 = vld [vmem:[%s11 + $0x5e4] sm:$0xf]
    %v7869 = vld [vmem:[%s11 + $0x5e8] sm:$0xf]
    %v7870 = vld [vmem:[%s11 + $0x5ec] sm:$0xf]
    %v7871 = vld [vmem:[%s11 + $0x5f0] sm:$0xf]
    %v7872 = vld [vmem:[%s11 + $0x5f4] sm:$0xf]
    %v7873 = vld [vmem:[%s11 + $0x5f8] sm:$0xf]
    %v7874 = vld [vmem:[%s11 + $0x5fc] sm:$0xf]
    %v7875 = vld [vmem:[%s11 + $0x600] sm:$0xf]
    %v7876 = vld [vmem:[%s11 + $0x604] sm:$0xf]
    %v7877 = vld [vmem:[%s11 + $0x608] sm:$0xf]
    %v7878 = vld [vmem:[%s11 + $0x60c] sm:$0xf]
    %v7879 = vld [vmem:[%s11 + $0x610] sm:$0xf]
    %v7880 = vld [vmem:[%s11 + $0x614] sm:$0xf]
    %v7881 = vld [vmem:[%s11 + $0x618] sm:$0xf]
    %v7882 = vld [vmem:[%s11 + $0x61c] sm:$0xf]
    %v7883 = vld [vmem:[%s11 + $0x620] sm:$0xf]
    %v7884 = vld [vmem:[%s11 + $0x624] sm:$0xf]
    %v7885 = vld [vmem:[%s11 + $0x628] sm:$0xf]
    %v7886 = vld [vmem:[%s11 + $0x62c] sm:$0xf]
    %v7887 = vld [vmem:[%s11 + $0x630] sm:$0xf]
    %v7888 = vld [vmem:[%s11 + $0x634] sm:$0xf]
    %v7889 = vld [vmem:[%s11 + $0x638] sm:$0xf]
    %v7890 = vld [vmem:[%s11 + $0x63c] sm:$0xf]
    %v7891 = vld [vmem:[%s11 + $0x640] sm:$0xf]
    %v7892 = vld [vmem:[%s11 + $0x644] sm:$0xf]
    %v7893 = vld [vmem:[%s11 + $0x648] sm:$0xf]
    %v7894 = vld [vmem:[%s11 + $0x64c] sm:$0xf]
    %v7895 = vld [vmem:[%s11 + $0x650] sm:$0xf]
    %v7896 = vld [vmem:[%s11 + $0x654] sm:$0xf]
    %v7897 = vld [vmem:[%s11 + $0x658] sm:$0xf]
    %v7898 = vld [vmem:[%s11 + $0x65c] sm:$0xf]
    %v7899 = vld [vmem:[%s11 + $0x660] sm:$0xf]
    %v7900 = vld [vmem:[%s11 + $0x664] sm:$0xf]
    %v7901 = vld [vmem:[%s11 + $0x668] sm:$0xf]
    %v7902 = vld [vmem:[%s11 + $0x66c] sm:$0xf]
    %v7903 = vld [vmem:[%s11 + $0x670] sm:$0xf]
    %v7904 = vld [vmem:[%s11 + $0x674] sm:$0xf]
    %v7905 = vld [vmem:[%s11 + $0x678] sm:$0xf]
    %v7906 = vld [vmem:[%s11 + $0x67c] sm:$0xf]
    %v7907 = vld [vmem:[%s11 + $0x680] sm:$0xf]
    %v7908 = vld [vmem:[%s11 + $0x684] sm:$0xf]
    %v7909 = vld [vmem:[%s11 + $0x688] sm:$0xf]
    %v7910 = vld [vmem:[%s11 + $0x68c] sm:$0xf]
    %v7911 = vld [vmem:[%s11 + $0x690] sm:$0xf]
    %v7912 = vld [vmem:[%s11 + $0x694] sm:$0xf]
    %v7913 = vld [vmem:[%s11 + $0x698] sm:$0xf]
    %v7914 = vld [vmem:[%s11 + $0x69c] sm:$0xf]
    %v7915 = vld [vmem:[%s11 + $0x6a0] sm:$0xf]
    %v7916 = vld [vmem:[%s11 + $0x6a4] sm:$0xf]
    %v7917 = vld [vmem:[%s11 + $0x6a8] sm:$0xf]
    %v7918 = vld [vmem:[%s11 + $0x6ac] sm:$0xf]
    %v7919 = vld [vmem:[%s11 + $0x6b0] sm:$0xf]
    %v7920 = vld [vmem:[%s11 + $0x6b4] sm:$0xf]
    %v7921 = vld [vmem:[%s11 + $0x6b8] sm:$0xf]
    %v7922 = vld [vmem:[%s11 + $0x6bc] sm:$0xf]
    %v7923 = vld [vmem:[%s11 + $0x6c0] sm:$0xf]
    %v7924 = vld [vmem:[%s11 + $0x6c4] sm:$0xf]
    %v7925 = vld [vmem:[%s11 + $0x6c8] sm:$0xf]
    %v7926 = vld [vmem:[%s11 + $0x6cc] sm:$0xf]
    %v7927 = vld [vmem:[%s11 + $0x6d0] sm:$0xf]
    %v7928 = vld [vmem:[%s11 + $0x6d4] sm:$0xf]
    %v7929 = vld [vmem:[%s11 + $0x6d8] sm:$0xf]
    %v7930 = vld [vmem:[%s11 + $0x6dc] sm:$0xf]
    %v7931 = vld [vmem:[%s11 + $0x6e0] sm:$0xf]
    %v7932 = vld [vmem:[%s11 + $0x6e4] sm:$0xf]
    %v7933 = vld [vmem:[%s11 + $0x6e8] sm:$0xf]
    %v7934 = vld [vmem:[%s11 + $0x6ec] sm:$0xf]
    %v7935 = vld [vmem:[%s11 + $0x6f0] sm:$0xf]
    %v7936 = vld [vmem:[%s11 + $0x6f4] sm:$0xf]
    %v7937 = vld [vmem:[%s11 + $0x6f8] sm:$0xf]
    %v7938 = vld [vmem:[%s11 + $0x6fc] sm:$0xf]
    %v7939 = vld [vmem:[%s11 + $0x700] sm:$0xf]
    %v7940 = vld [vmem:[%s11 + $0x704] sm:$0xf]
    %v7941 = vld [vmem:[%s11 + $0x708] sm:$0xf]
    %v7942 = vld [vmem:[%s11 + $0x70c] sm:$0xf]
    %v7943 = vld [vmem:[%s11 + $0x710] sm:$0xf]
    %v7944 = vld [vmem:[%s11 + $0x714] sm:$0xf]
    %v7945 = vld [vmem:[%s11 + $0x718] sm:$0xf]
    %v7946 = vld [vmem:[%s11 + $0x71c] sm:$0xf]
    %v7947 = vld [vmem:[%s11 + $0x720] sm:$0xf]
    %v7948 = vld [vmem:[%s11 + $0x724] sm:$0xf]
    %v7949 = vld [vmem:[%s11 + $0x728] sm:$0xf]
    %v7950 = vld [vmem:[%s11 + $0x72c] sm:$0xf]
    %v7951 = vld [vmem:[%s11 + $0x730] sm:$0xf]
    %v7952 = vld [vmem:[%s11 + $0x734] sm:$0xf]
    %v7953 = vld [vmem:[%s11 + $0x738] sm:$0xf]
    %v7954 = vld [vmem:[%s11 + $0x73c] sm:$0xf]
    %v7955 = vld [vmem:[%s11 + $0x740] sm:$0xf]
    %v7956 = vld [vmem:[%s11 + $0x744] sm:$0xf]
    %v7957 = vld [vmem:[%s11 + $0x748] sm:$0xf]
    %v7958 = vld [vmem:[%s11 + $0x74c] sm:$0xf]
    %v7959 = vld [vmem:[%s11 + $0x750] sm:$0xf]
    %v7960 = vld [vmem:[%s11 + $0x754] sm:$0xf]
    %v7961 = vld [vmem:[%s11 + $0x758] sm:$0xf]
    %v7962 = vld [vmem:[%s11 + $0x75c] sm:$0xf]
    %v7963 = vld [vmem:[%s11 + $0x760] sm:$0xf]
    %v7964 = vld [vmem:[%s11 + $0x764] sm:$0xf]
    %v7965 = vld [vmem:[%s11 + $0x768] sm:$0xf]
    %v7966 = vld [vmem:[%s11 + $0x76c] sm:$0xf]
    %v7967 = vld [vmem:[%s11 + $0x770] sm:$0xf]
    %v7968 = vld [vmem:[%s11 + $0x774] sm:$0xf]
    %v7969 = vld [vmem:[%s11 + $0x778] sm:$0xf]
    %v7970 = vld [vmem:[%s11 + $0x77c] sm:$0xf]
    %v7971 = vld [vmem:[%s11 + $0x780] sm:$0xf]
    %v7972 = vld [vmem:[%s11 + $0x784] sm:$0xf]
    %v7973 = vld [vmem:[%s11 + $0x788] sm:$0xf]
    %v7974 = vld [vmem:[%s11 + $0x78c] sm:$0xf]
    %v7975 = vld [vmem:[%s11 + $0x790] sm:$0xf]
    %v7976 = vld [vmem:[%s11 + $0x794] sm:$0xf]
    %v7977 = vld [vmem:[%s11 + $0x798] sm:$0xf]
    %v7978 = vld [vmem:[%s11 + $0x79c] sm:$0xf]
    %v7979 = vld [vmem:[%s11 + $0x7a0] sm:$0xf]
    %v7980 = vld [vmem:[%s11 + $0x7a4] sm:$0xf]
    %v7981 = vld [vmem:[%s11 + $0x7a8] sm:$0xf]
    %v7982 = vld [vmem:[%s11 + $0x7ac] sm:$0xf]
    %v7983 = vld [vmem:[%s11 + $0x7b0] sm:$0xf]
    %v7984 = vld [vmem:[%s11 + $0x7b4] sm:$0xf]
    %v7985 = vld [vmem:[%s11 + $0x7b8] sm:$0xf]
    %v7986 = vld [vmem:[%s11 + $0x7bc] sm:$0xf]
    %v7987 = vld [vmem:[%s11 + $0x7c0] sm:$0xf]
    %v7988 = vld [vmem:[%s11 + $0x7c4] sm:$0xf]
    %v7989 = vld [vmem:[%s11 + $0x7c8] sm:$0xf]
    %v7990 = vld [vmem:[%s11 + $0x7cc] sm:$0xf]
    %v7991 = vld [vmem:[%s11 + $0x7d0] sm:$0xf]
    %v7992 = vld [vmem:[%s11 + $0x7d4] sm:$0xf]
    %v7993 = vld [vmem:[%s11 + $0x7d8] sm:$0xf]
    %v7994 = vld [vmem:[%s11 + $0x7dc] sm:$0xf]
    %v7995 = vld [vmem:[%s11 + $0x7e0] sm:$0xf]
    %v7996 = vld [vmem:[%s11 + $0x7e4] sm:$0xf]
    %v7997 = vld [vmem:[%s11 + $0x7e8] sm:$0xf]
    %v7998 = vld [vmem:[%s11 + $0x7ec] sm:$0xf]
    %v7999 = vld [vmem:[%s11 + $0x7f0] sm:$0xf]
    %v8000 = vld [vmem:[%s11 + $0x7f4] sm:$0xf]
    %v8001 = vld [vmem:[%s11 + $0x7f8] sm:$0xf]
    %v8002 = vld [vmem:[%s11 + $0x7fc] sm:$0xf]
    %v8003 = vld [vmem:[%s11 + $0x800] sm:$0xf]
    %v8004 = vld [vmem:[%s11 + $0x804] sm:$0xf]
    %v8005 = vld [vmem:[%s11 + $0x808] sm:$0xf]
    %v8006 = vld [vmem:[%s11 + $0x80c] sm:$0xf]
    %v8007 = vld [vmem:[%s11 + $0x810] sm:$0xf]
    %v8008 = vld [vmem:[%s11 + $0x814] sm:$0xf]
    %v8009 = vld [vmem:[%s11 + $0x818] sm:$0xf]
    %v8010 = vld [vmem:[%s11 + $0x81c] sm:$0xf]
    %v8011 = vld [vmem:[%s11 + $0x820] sm:$0xf]
    %v8012 = vld [vmem:[%s11 + $0x824] sm:$0xf]
    %v8013 = vld [vmem:[%s11 + $0x828] sm:$0xf]
    %v8014 = vld [vmem:[%s11 + $0x82c] sm:$0xf]
    %v8015 = vld [vmem:[%s11 + $0x830] sm:$0xf]
    %v8016 = vld [vmem:[%s11 + $0x834] sm:$0xf]
    %v8017 = vld [vmem:[%s11 + $0x838] sm:$0xf]
    %v8018 = vld [vmem:[%s11 + $0x83c] sm:$0xf]
    %v8019 = vld [vmem:[%s11 + $0x840] sm:$0xf]
    %v8020 = vld [vmem:[%s11 + $0x844] sm:$0xf]
    %v8021 = vld [vmem:[%s11 + $0x848] sm:$0xf]
    %v8022 = vld [vmem:[%s11 + $0x84c] sm:$0xf]
    %v8023 = vld [vmem:[%s11 + $0x850] sm:$0xf]
    %v8024 = vld [vmem:[%s11 + $0x854] sm:$0xf]
    %v8025 = vld [vmem:[%s11 + $0x858] sm:$0xf]
    %v8026 = vld [vmem:[%s11 + $0x85c] sm:$0xf]
    %v8027 = vld [vmem:[%s11 + $0x860] sm:$0xf]
    %v8028 = vld [vmem:[%s11 + $0x864] sm:$0xf]
    %v8029 = vld [vmem:[%s11 + $0x868] sm:$0xf]
    %v8030 = vld [vmem:[%s11 + $0x86c] sm:$0xf]
    %v8031 = vld [vmem:[%s11 + $0x870] sm:$0xf]
    %v8032 = vld [vmem:[%s11 + $0x874] sm:$0xf]
    %v8033 = vld [vmem:[%s11 + $0x878] sm:$0xf]
    %v8034 = vld [vmem:[%s11 + $0x87c] sm:$0xf]
    %v8035 = vld [vmem:[%s11 + $0x880] sm:$0xf]
    %v8036 = vld [vmem:[%s11 + $0x884] sm:$0xf]
    %v8037 = vld [vmem:[%s11 + $0x888] sm:$0xf]
    %v8038 = vld [vmem:[%s11 + $0x88c] sm:$0xf]
    %v8039 = vld [vmem:[%s11 + $0x890] sm:$0xf]
    %v8040 = vld [vmem:[%s11 + $0x894] sm:$0xf]
    %v8041 = vld [vmem:[%s11 + $0x898] sm:$0xf]
    %v8042 = vld [vmem:[%s11 + $0x89c] sm:$0xf]
    %v8043 = vld [vmem:[%s11 + $0x8a0] sm:$0xf]
    %v8044 = vld [vmem:[%s11 + $0x8a4] sm:$0xf]
    %v8045 = vld [vmem:[%s11 + $0x8a8] sm:$0xf]
    %v8046 = vld [vmem:[%s11 + $0x8ac] sm:$0xf]
    %v8047 = vld [vmem:[%s11 + $0x8b0] sm:$0xf]
    %v8048 = vld [vmem:[%s11 + $0x8b4] sm:$0xf]
    %v8049 = vld [vmem:[%s11 + $0x8b8] sm:$0xf]
    %v8050 = vld [vmem:[%s11 + $0x8bc] sm:$0xf]
    %v8051 = vld [vmem:[%s11 + $0x8c0] sm:$0xf]
    %v8052 = vld [vmem:[%s11 + $0x8c4] sm:$0xf]
    %v8053 = vld [vmem:[%s11 + $0x8c8] sm:$0xf]
    %v8054 = vld [vmem:[%s11 + $0x8cc] sm:$0xf]
    %v8055 = vld [vmem:[%s11 + $0x8d0] sm:$0xf]
    %v8056 = vld [vmem:[%s11 + $0x8d4] sm:$0xf]
    %v8057 = vld [vmem:[%s11 + $0x8d8] sm:$0xf]
    %v8058 = vld [vmem:[%s11 + $0x8dc] sm:$0xf]
    %v8059 = vld [vmem:[%s11 + $0x8e0] sm:$0xf]
    %v8060 = vld [vmem:[%s11 + $0x8e4] sm:$0xf]
    %v8061 = vld [vmem:[%s11 + $0x8e8] sm:$0xf]
    %v8062 = vld [vmem:[%s11 + $0x8ec] sm:$0xf]
    %v8063 = vld [vmem:[%s11 + $0x8f0] sm:$0xf]
    %v8064 = vld [vmem:[%s11 + $0x8f4] sm:$0xf]
    %v8065 = vld [vmem:[%s11 + $0x8f8] sm:$0xf]
    %v8066 = vld [vmem:[%s11 + $0x8fc] sm:$0xf]
    %v8067 = vld [vmem:[%s11 + $0x900] sm:$0xf]
    %v8068 = vld [vmem:[%s11 + $0x904] sm:$0xf]
    %v8069 = vld [vmem:[%s11 + $0x908] sm:$0xf]
    %v8070 = vld [vmem:[%s11 + $0x90c] sm:$0xf]
    %v8071 = vld [vmem:[%s11 + $0x910] sm:$0xf]
    %v8072 = vld [vmem:[%s11 + $0x914] sm:$0xf]
    %v8073 = vld [vmem:[%s11 + $0x918] sm:$0xf]
    %v8074 = vld [vmem:[%s11 + $0x91c] sm:$0xf]
    %v8075 = vld [vmem:[%s11 + $0x920] sm:$0xf]
    %v8076 = vld [vmem:[%s11 + $0x924] sm:$0xf]
    %v8077 = vld [vmem:[%s11 + $0x928] sm:$0xf]
    %v8078 = vld [vmem:[%s11 + $0x92c] sm:$0xf]
    %v8079 = vld [vmem:[%s11 + $0x930] sm:$0xf]
    %v8080 = vld [vmem:[%s11 + $0x934] sm:$0xf]
    %v8081 = vld [vmem:[%s11 + $0x938] sm:$0xf]
    %v8082 = vld [vmem:[%s11 + $0x93c] sm:$0xf]
    %v8083 = vld [vmem:[%s11 + $0x940] sm:$0xf]
    %v8084 = vld [vmem:[%s11 + $0x944] sm:$0xf]
    %v8085 = vld [vmem:[%s11 + $0x948] sm:$0xf]
    %v8086 = vld [vmem:[%s11 + $0x94c] sm:$0xf]
    %v8087 = vld [vmem:[%s11 + $0x950] sm:$0xf]
    %v8088 = vld [vmem:[%s11 + $0x954] sm:$0xf]
    %v8089 = vld [vmem:[%s11 + $0x958] sm:$0xf]
    %v8090 = vld [vmem:[%s11 + $0x95c] sm:$0xf]
    %v8091 = vld [vmem:[%s11 + $0x960] sm:$0xf]
    %v8092 = vld [vmem:[%s11 + $0x964] sm:$0xf]
    %v8093 = vld [vmem:[%s11 + $0x968] sm:$0xf]
    %v8094 = vld [vmem:[%s11 + $0x96c] sm:$0xf]
    %v8095 = vld [vmem:[%s11 + $0x970] sm:$0xf]
    %v8096 = vld [vmem:[%s11 + $0x974] sm:$0xf]
    %v8097 = vld [vmem:[%s11 + $0x978] sm:$0xf]
    %v8098 = vld [vmem:[%s11 + $0x97c] sm:$0xf]
    %v8099 = vld [vmem:[%s11 + $0x980] sm:$0xf]
    %v8100 = vld [vmem:[%s11 + $0x984] sm:$0xf]
    %v8101 = vld [vmem:[%s11 + $0x988] sm:$0xf]
    %v8102 = vld [vmem:[%s11 + $0x98c] sm:$0xf]
    %v8103 = vld [vmem:[%s11 + $0x990] sm:$0xf]
    %v8104 = vld [vmem:[%s11 + $0x994] sm:$0xf]
    %v8105 = vld [vmem:[%s11 + $0x998] sm:$0xf]
    %v8106 = vld [vmem:[%s11 + $0x99c] sm:$0xf]
    %v8107 = vld [vmem:[%s11 + $0x9a0] sm:$0xf]
    %v8108 = vld [vmem:[%s11 + $0x9a4] sm:$0xf]
    %v8109 = vld [vmem:[%s11 + $0x9a8] sm:$0xf]
    %v8110 = vld [vmem:[%s11 + $0x9ac] sm:$0xf]
    %v8111 = vld [vmem:[%s11 + $0x9b0] sm:$0xf]
    %v8112 = vld [vmem:[%s11 + $0x9b4] sm:$0xf]
    %v8113 = vld [vmem:[%s11 + $0x9b8] sm:$0xf]
    %v8114 = vld [vmem:[%s11 + $0x9bc] sm:$0xf]
    %v8115 = vld [vmem:[%s11 + $0x9c0] sm:$0xf]
    %v8116 = vld [vmem:[%s11 + $0x9c4] sm:$0xf]
    %v8117 = vld [vmem:[%s11 + $0x9c8] sm:$0xf]
    %v8118 = vld [vmem:[%s11 + $0x9cc] sm:$0xf]
    %v8119 = vld [vmem:[%s11 + $0x9d0] sm:$0xf]
    %v8120 = vld [vmem:[%s11 + $0x9d4] sm:$0xf]
    %v8121 = vld [vmem:[%s11 + $0x9d8] sm:$0xf]
    %v8122 = vld [vmem:[%s11 + $0x9dc] sm:$0xf]
    %v8123 = vld [vmem:[%s11 + $0x9e0] sm:$0xf]
    %v8124 = vld [vmem:[%s11 + $0x9e4] sm:$0xf]
    %v8125 = vld [vmem:[%s11 + $0x9e8] sm:$0xf]
    %v8126 = vld [vmem:[%s11 + $0x9ec] sm:$0xf]
    %v8127 = vld [vmem:[%s11 + $0x9f0] sm:$0xf]
    %v8128 = vld [vmem:[%s11 + $0x9f4] sm:$0xf]
    %v8129 = vld [vmem:[%s11 + $0x9f8] sm:$0xf]
    %v8130 = vld [vmem:[%s11 + $0x9fc] sm:$0xf]
    %v8131 = vld [vmem:[%s11 + $0xa00] sm:$0xf]
    %v8132 = vld [vmem:[%s11 + $0xa04] sm:$0xf]
    %v8133 = vld [vmem:[%s11 + $0xa08] sm:$0xf]
    %v8134 = vld [vmem:[%s11 + $0xa0c] sm:$0xf]
    %v8135 = vld [vmem:[%s11 + $0xa10] sm:$0xf]
    %v8136 = vld [vmem:[%s11 + $0xa14] sm:$0xf]
    %v8137 = vld [vmem:[%s11 + $0xa18] sm:$0xf]
    %v8138 = vld [vmem:[%s11 + $0xa1c] sm:$0xf]
    %v8139 = vld [vmem:[%s11 + $0xa20] sm:$0xf]
    %v8140 = vld [vmem:[%s11 + $0xa24] sm:$0xf]
    %v8141 = vld [vmem:[%s11 + $0xa28] sm:$0xf]
    %v8142 = vld [vmem:[%s11 + $0xa2c] sm:$0xf]
    %v8143 = vld [vmem:[%s11 + $0xa30] sm:$0xf]
    %v8144 = vld [vmem:[%s11 + $0xa34] sm:$0xf]
    %v8145 = vld [vmem:[%s11 + $0xa38] sm:$0xf]
    %v8146 = vld [vmem:[%s11 + $0xa3c] sm:$0xf]
    %v8147 = vld [vmem:[%s11 + $0xa40] sm:$0xf]
    %v8148 = vld [vmem:[%s11 + $0xa44] sm:$0xf]
    %v8149 = vld [vmem:[%s11 + $0xa48] sm:$0xf]
    %v8150 = vld [vmem:[%s11 + $0xa4c] sm:$0xf]
    %v8151 = vld [vmem:[%s11 + $0xa50] sm:$0xf]
    %v8152 = vld [vmem:[%s11 + $0xa54] sm:$0xf]
    %v8153 = vld [vmem:[%s11 + $0xa58] sm:$0xf]
    %v8154 = vld [vmem:[%s11 + $0xa5c] sm:$0xf]
    %v8155 = vld [vmem:[%s11 + $0xa60] sm:$0xf]
    %v8156 = vld [vmem:[%s11 + $0xa64] sm:$0xf]
    %v8157 = vld [vmem:[%s11 + $0xa68] sm:$0xf]
    %v8158 = vld [vmem:[%s11 + $0xa6c] sm:$0xf]
    %v8159 = vld [vmem:[%s11 + $0xa70] sm:$0xf]
    %v8160 = vld [vmem:[%s11 + $0xa74] sm:$0xf]
    %v8161 = vld [vmem:[%s11 + $0xa78] sm:$0xf]
    %v8162 = vld [vmem:[%s11 + $0xa7c] sm:$0xf]
    %v8163 = vld [vmem:[%s11 + $0xa80] sm:$0xf]
    %v8164 = vld [vmem:[%s11 + $0xa84] sm:$0xf]
    %v8165 = vld [vmem:[%s11 + $0xa88] sm:$0xf]
    %v8166 = vld [vmem:[%s11 + $0xa8c] sm:$0xf]
    %v8167 = vld [vmem:[%s11 + $0xa90] sm:$0xf]
    %v8168 = vld [vmem:[%s11 + $0xa94] sm:$0xf]
    %v8169 = vld [vmem:[%s11 + $0xa98] sm:$0xf]
    %v8170 = vld [vmem:[%s11 + $0xa9c] sm:$0xf]
    %v8171 = vld [vmem:[%s11 + $0xaa0] sm:$0xf]
    %v8172 = vld [vmem:[%s11 + $0xaa4] sm:$0xf]
    %v8173 = vld [vmem:[%s11 + $0xaa8] sm:$0xf]
    %v8174 = vld [vmem:[%s11 + $0xaac] sm:$0xf]
    %v8175 = vld [vmem:[%s11 + $0xab0] sm:$0xf]
    %v8176 = vld [vmem:[%s11 + $0xab4] sm:$0xf]
    %v8177 = vld [vmem:[%s11 + $0xab8] sm:$0xf]
    %v8178 = vld [vmem:[%s11 + $0xabc] sm:$0xf]
    %v8179 = vld [vmem:[%s11 + $0xac0] sm:$0xf]
    %v8180 = vld [vmem:[%s11 + $0xac4] sm:$0xf]
    %v8181 = vld [vmem:[%s11 + $0xac8] sm:$0xf]
    %v8182 = vld [vmem:[%s11 + $0xacc] sm:$0xf]
    %v8183 = vld [vmem:[%s11 + $0xad0] sm:$0xf]
    %v8184 = vld [vmem:[%s11 + $0xad4] sm:$0xf]
    %v8185 = vld [vmem:[%s11 + $0xad8] sm:$0xf]
    %v8186 = vld [vmem:[%s11 + $0xadc] sm:$0xf]
    %v8187 = vld [vmem:[%s11 + $0xae0] sm:$0xf]
    %v8188 = vld [vmem:[%s11 + $0xae4] sm:$0xf]
    %v8189 = vld [vmem:[%s11 + $0xae8] sm:$0xf]
    %v8190 = vld [vmem:[%s11 + $0xaec] sm:$0xf]
    %v8191 = vld [vmem:[%s11 + $0xaf0] sm:$0xf]
    %v8192 = vld [vmem:[%s11 + $0xaf4] sm:$0xf]
    %v8193 = vld [vmem:[%s11 + $0xaf8] sm:$0xf]
    %v8194 = vld [vmem:[%s11 + $0xafc] sm:$0xf]
    %v8195 = vld [vmem:[%s11 + $0xb00] sm:$0xf]
    %v8196 = vld [vmem:[%s11 + $0xb04] sm:$0xf]
    %v8197 = vld [vmem:[%s11 + $0xb08] sm:$0xf]
    %v8198 = vld [vmem:[%s11 + $0xb0c] sm:$0xf]
    %v8199 = vld [vmem:[%s11 + $0xb10] sm:$0xf]
    %v8200 = vld [vmem:[%s11 + $0xb14] sm:$0xf]
    %v8201 = vld [vmem:[%s11 + $0xb18] sm:$0xf]
    %v8202 = vld [vmem:[%s11 + $0xb1c] sm:$0xf]
    %v8203 = vld [vmem:[%s11 + $0xb20] sm:$0xf]
    %v8204 = vld [vmem:[%s11 + $0xb24] sm:$0xf]
    %v8205 = vld [vmem:[%s11 + $0xb28] sm:$0xf]
    %v8206 = vld [vmem:[%s11 + $0xb2c] sm:$0xf]
    %v8207 = vld [vmem:[%s11 + $0xb30] sm:$0xf]
    %v8208 = vld [vmem:[%s11 + $0xb34] sm:$0xf]
    %v8209 = vld [vmem:[%s11 + $0xb38] sm:$0xf]
    %v8210 = vld [vmem:[%s11 + $0xb3c] sm:$0xf]
    %v8211 = vld [vmem:[%s11 + $0xb40] sm:$0xf]
    %v8212 = vld [vmem:[%s11 + $0xb44] sm:$0xf]
    %v8213 = vld [vmem:[%s11 + $0xb48] sm:$0xf]
    %v8214 = vld [vmem:[%s11 + $0xb4c] sm:$0xf]
    %v8215 = vld [vmem:[%s11 + $0xb50] sm:$0xf]
    %v8216 = vld [vmem:[%s11 + $0xb54] sm:$0xf]
    %v8217 = vld [vmem:[%s11 + $0xb58] sm:$0xf]
    %v8218 = vld [vmem:[%s11 + $0xb5c] sm:$0xf]
    %v8219 = vld [vmem:[%s11 + $0xb60] sm:$0xf]
    %v8220 = vld [vmem:[%s11 + $0xb64] sm:$0xf]
    %v8221 = vld [vmem:[%s11 + $0xb68] sm:$0xf]
    %v8222 = vld [vmem:[%s11 + $0xb6c] sm:$0xf]
    %v8223 = vld [vmem:[%s11 + $0xb70] sm:$0xf]
    %v8224 = vld [vmem:[%s11 + $0xb74] sm:$0xf]
    %v8225 = vld [vmem:[%s11 + $0xb78] sm:$0xf]
    %v8226 = vld [vmem:[%s11 + $0xb7c] sm:$0xf]
    %v8227 = vld [vmem:[%s11 + $0xb80] sm:$0xf]
    %v8228 = vld [vmem:[%s11 + $0xb84] sm:$0xf]
    %v8229 = vld [vmem:[%s11 + $0xb88] sm:$0xf]
    %v8230 = vld [vmem:[%s11 + $0xb8c] sm:$0xf]
    %v8231 = vld [vmem:[%s11 + $0xb90] sm:$0xf]
    %v8232 = vld [vmem:[%s11 + $0xb94] sm:$0xf]
    %v8233 = vld [vmem:[%s11 + $0xb98] sm:$0xf]
    %v8234 = vld [vmem:[%s11 + $0xb9c] sm:$0xf]
    %v8235 = vld [vmem:[%s11 + $0xba0] sm:$0xf]
    %v8236 = vld [vmem:[%s11 + $0xba4] sm:$0xf]
    %v8237 = vld [vmem:[%s11 + $0xba8] sm:$0xf]
    %v8238 = vld [vmem:[%s11 + $0xbac] sm:$0xf]
    %v8239 = vld [vmem:[%s11 + $0xbb0] sm:$0xf]
    %v8240 = vld [vmem:[%s11 + $0xbb4] sm:$0xf]
    %v8241 = vld [vmem:[%s11 + $0xbb8] sm:$0xf]
    %v8242 = vld [vmem:[%s11 + $0xbbc] sm:$0xf]
    %v8243 = vld [vmem:[%s11 + $0xbc0] sm:$0xf]
    %v8244 = vld [vmem:[%s11 + $0xbc4] sm:$0xf]
    %v8245 = vld [vmem:[%s11 + $0xbc8] sm:$0xf]
    %v8246 = vld [vmem:[%s11 + $0xbcc] sm:$0xf]
    %v8247 = vld [vmem:[%s11 + $0xbd0] sm:$0xf]
    %v8248 = vld [vmem:[%s11 + $0xbd4] sm:$0xf]
    %v8249 = vld [vmem:[%s11 + $0xbd8] sm:$0xf]
    %v8250 = vld [vmem:[%s11 + $0xbdc] sm:$0xf]
    %v8251 = vld [vmem:[%s11 + $0xbe0] sm:$0xf]
    %v8252 = vld [vmem:[%s11 + $0xbe4] sm:$0xf]
    %v8253 = vld [vmem:[%s11 + $0xbe8] sm:$0xf]
    %v8254 = vld [vmem:[%s11 + $0xbec] sm:$0xf]
    %v8255 = vld [vmem:[%s11 + $0xbf0] sm:$0xf]
    %v8256 = vld [vmem:[%s11 + $0xbf4] sm:$0xf]
    %v8257 = vld [vmem:[%s11 + $0xbf8] sm:$0xf]
    %v8258 = vld [vmem:[%s11 + $0xbfc] sm:$0xf]
    %v8259 = vld [vmem:[%s11 + $0xc00] sm:$0xf]
    %v8260 = vld [vmem:[%s11 + $0xc04] sm:$0xf]
    %v8261 = vld [vmem:[%s11 + $0xc08] sm:$0xf]
    %v8262 = vld [vmem:[%s11 + $0xc0c] sm:$0xf]
    %v8263 = vld [vmem:[%s11 + $0xc10] sm:$0xf]
    %v8264 = vld [vmem:[%s11 + $0xc14] sm:$0xf]
    %v8265 = vld [vmem:[%s11 + $0xc18] sm:$0xf]
    %v8266 = vld [vmem:[%s11 + $0xc1c] sm:$0xf]
    %v8267 = vld [vmem:[%s11 + $0xc20] sm:$0xf]
    %v8268 = vld [vmem:[%s11 + $0xc24] sm:$0xf]
    %v8269 = vld [vmem:[%s11 + $0xc28] sm:$0xf]
    %v8270 = vld [vmem:[%s11 + $0xc2c] sm:$0xf]
    %v8271 = vld [vmem:[%s11 + $0xc30] sm:$0xf]
    %v8272 = vld [vmem:[%s11 + $0xc34] sm:$0xf]
    %v8273 = vld [vmem:[%s11 + $0xc38] sm:$0xf]
    %v8274 = vld [vmem:[%s11 + $0xc3c] sm:$0xf]
    %v8275 = vld [vmem:[%s11 + $0xc40] sm:$0xf]
    %v8276 = vld [vmem:[%s11 + $0xc44] sm:$0xf]
    %v8277 = vld [vmem:[%s11 + $0xc48] sm:$0xf]
    %v8278 = vld [vmem:[%s11 + $0xc4c] sm:$0xf]
    %v8279 = vld [vmem:[%s11 + $0xc50] sm:$0xf]
    %v8280 = vld [vmem:[%s11 + $0xc54] sm:$0xf]
    %v8281 = vld [vmem:[%s11 + $0xc58] sm:$0xf]
    %v8282 = vld [vmem:[%s11 + $0xc5c] sm:$0xf]
    %v8283 = vld [vmem:[%s11 + $0xc60] sm:$0xf]
    %v8284 = vld [vmem:[%s11 + $0xc64] sm:$0xf]
    %v8285 = vld [vmem:[%s11 + $0xc68] sm:$0xf]
    %v8286 = vld [vmem:[%s11 + $0xc6c] sm:$0xf]
    %v8287 = vld [vmem:[%s11 + $0xc70] sm:$0xf]
    %v8288 = vld [vmem:[%s11 + $0xc74] sm:$0xf]
    %v8289 = vld [vmem:[%s11 + $0xc78] sm:$0xf]
    %v8290 = vld [vmem:[%s11 + $0xc7c] sm:$0xf]
    %v8291 = vld [vmem:[%s11 + $0xc80] sm:$0xf]
    %v8292 = vld [vmem:[%s11 + $0xc84] sm:$0xf]
    %v8293 = vld [vmem:[%s11 + $0xc88] sm:$0xf]
    %v8294 = vld [vmem:[%s11 + $0xc8c] sm:$0xf]
    %v8295 = vld [vmem:[%s11 + $0xc90] sm:$0xf]
    %v8296 = vld [vmem:[%s11 + $0xc94] sm:$0xf]
    %v8297 = vld [vmem:[%s11 + $0xc98] sm:$0xf]
    %v8298 = vld [vmem:[%s11 + $0xc9c] sm:$0xf]
    %v8299 = vld [vmem:[%s11 + $0xca0] sm:$0xf]
    %v8300 = vld [vmem:[%s11 + $0xca4] sm:$0xf]
    %v8301 = vld [vmem:[%s11 + $0xca8] sm:$0xf]
    %v8302 = vld [vmem:[%s11 + $0xcac] sm:$0xf]
    %v8303 = vld [vmem:[%s11 + $0xcb0] sm:$0xf]
    %v8304 = vld [vmem:[%s11 + $0xcb4] sm:$0xf]
    %v8305 = vld [vmem:[%s11 + $0xcb8] sm:$0xf]
    %v8306 = vld [vmem:[%s11 + $0xcbc] sm:$0xf]
    %v8307 = vld [vmem:[%s11 + $0xcc0] sm:$0xf]
    %v8308 = vld [vmem:[%s11 + $0xcc4] sm:$0xf]
    %v8309 = vld [vmem:[%s11 + $0xcc8] sm:$0xf]
    %v8310 = vld [vmem:[%s11 + $0xccc] sm:$0xf]
    %v8311 = vld [vmem:[%s11 + $0xcd0] sm:$0xf]
    %v8312 = vld [vmem:[%s11 + $0xcd4] sm:$0xf]
    %v8313 = vld [vmem:[%s11 + $0xcd8] sm:$0xf]
    %v8314 = vld [vmem:[%s11 + $0xcdc] sm:$0xf]
    %v8315 = vld [vmem:[%s11 + $0xce0] sm:$0xf]
    %v8316 = vld [vmem:[%s11 + $0xce4] sm:$0xf]
    %v8317 = vld [vmem:[%s11 + $0xce8] sm:$0xf]
    %v8318 = vld [vmem:[%s11 + $0xcec] sm:$0xf]
    %v8319 = vld [vmem:[%s11 + $0xcf0] sm:$0xf]
    %v8320 = vld [vmem:[%s11 + $0xcf4] sm:$0xf]
    %v8321 = vld [vmem:[%s11 + $0xcf8] sm:$0xf]
    %v8322 = vld [vmem:[%s11 + $0xcfc] sm:$0xf]
    %v8323 = vld [vmem:[%s11 + $0xd00] sm:$0xf]
    %v8324 = vld [vmem:[%s11 + $0xd04] sm:$0xf]
    %v8325 = vld [vmem:[%s11 + $0xd08] sm:$0xf]
    %v8326 = vld [vmem:[%s11 + $0xd0c] sm:$0xf]
    %v8327 = vld [vmem:[%s11 + $0xd10] sm:$0xf]
    %v8328 = vld [vmem:[%s11 + $0xd14] sm:$0xf]
    %v8329 = vld [vmem:[%s11 + $0xd18] sm:$0xf]
    %v8330 = vld [vmem:[%s11 + $0xd1c] sm:$0xf]
    %v8331 = vld [vmem:[%s11 + $0xd20] sm:$0xf]
    %v8332 = vld [vmem:[%s11 + $0xd24] sm:$0xf]
    %v8333 = vld [vmem:[%s11 + $0xd28] sm:$0xf]
    %v8334 = vld [vmem:[%s11 + $0xd2c] sm:$0xf]
    %v8335 = vld [vmem:[%s11 + $0xd30] sm:$0xf]
    %v8336 = vld [vmem:[%s11 + $0xd34] sm:$0xf]
    %v8337 = vld [vmem:[%s11 + $0xd38] sm:$0xf]
    %v8338 = vld [vmem:[%s11 + $0xd3c] sm:$0xf]
    %v8339 = vld [vmem:[%s11 + $0xd40] sm:$0xf]
    %v8340 = vld [vmem:[%s11 + $0xd44] sm:$0xf]
    %v8341 = vld [vmem:[%s11 + $0xd48] sm:$0xf]
    %v8342 = vld [vmem:[%s11 + $0xd4c] sm:$0xf]
    %v8343 = vld [vmem:[%s11 + $0xd50] sm:$0xf]
    %v8344 = vld [vmem:[%s11 + $0xd54] sm:$0xf]
    %v8345 = vld [vmem:[%s11 + $0xd58] sm:$0xf]
    %v8346 = vld [vmem:[%s11 + $0xd5c] sm:$0xf]
    %v8347 = vld [vmem:[%s11 + $0xd60] sm:$0xf]
    %v8348 = vld [vmem:[%s11 + $0xd64] sm:$0xf]
    %v8349 = vld [vmem:[%s11 + $0xd68] sm:$0xf]
    %v8350 = vld [vmem:[%s11 + $0xd6c] sm:$0xf]
    %v8351 = vld [vmem:[%s11 + $0xd70] sm:$0xf]
    %v8352 = vld [vmem:[%s11 + $0xd74] sm:$0xf]
    %v8353 = vld [vmem:[%s11 + $0xd78] sm:$0xf]
    %v8354 = vld [vmem:[%s11 + $0xd7c] sm:$0xf]
    %v8355 = vld [vmem:[%s11 + $0xd80] sm:$0xf]
    %v8356 = vld [vmem:[%s11 + $0xd84] sm:$0xf]
    %v8357 = vld [vmem:[%s11 + $0xd88] sm:$0xf]
    %v8358 = vld [vmem:[%s11 + $0xd8c] sm:$0xf]
    %v8359 = vld [vmem:[%s11 + $0xd90] sm:$0xf]
    %v8360 = vld [vmem:[%s11 + $0xd94] sm:$0xf]
    %v8361 = vld [vmem:[%s11 + $0xd98] sm:$0xf]
    %v8362 = vld [vmem:[%s11 + $0xd9c] sm:$0xf]
    %v8363 = vld [vmem:[%s11 + $0xda0] sm:$0xf]
    %v8364 = vld [vmem:[%s11 + $0xda4] sm:$0xf]
    %v8365 = vld [vmem:[%s11 + $0xda8] sm:$0xf]
    %v8366 = vld [vmem:[%s11 + $0xdac] sm:$0xf]
    %v8367 = vld [vmem:[%s11 + $0xdb0] sm:$0xf]
    %v8368 = vld [vmem:[%s11 + $0xdb4] sm:$0xf]
    %v8369 = vld [vmem:[%s11 + $0xdb8] sm:$0xf]
    %v8370 = vld [vmem:[%s11 + $0xdbc] sm:$0xf]
    %v8371 = vld [vmem:[%s11 + $0xdc0] sm:$0xf]
    %v8372 = vld [vmem:[%s11 + $0xdc4] sm:$0xf]
    %v8373 = vld [vmem:[%s11 + $0xdc8] sm:$0xf]
    %v8374 = vld [vmem:[%s11 + $0xdcc] sm:$0xf]
    %v8375 = vld [vmem:[%s11 + $0xdd0] sm:$0xf]
    %v8376 = vld [vmem:[%s11 + $0xdd4] sm:$0xf]
    %v8377 = vld [vmem:[%s11 + $0xdd8] sm:$0xf]
    %v8378 = vld [vmem:[%s11 + $0xddc] sm:$0xf]
    %v8379 = vld [vmem:[%s11 + $0xde0] sm:$0xf]
    %v8380 = vld [vmem:[%s11 + $0xde4] sm:$0xf]
    %v8381 = vld [vmem:[%s11 + $0xde8] sm:$0xf]
    %v8382 = vld [vmem:[%s11 + $0xdec] sm:$0xf]
    %v8383 = vld [vmem:[%s11 + $0xdf0] sm:$0xf]
    %v8384 = vld [vmem:[%s11 + $0xdf4] sm:$0xf]
    %v8385 = vld [vmem:[%s11 + $0xdf8] sm:$0xf]
    %v8386 = vld [vmem:[%s11 + $0xdfc] sm:$0xf]
    %v8387 = vld [vmem:[%s12] sm:$0x1]
    %v8389 = vlaneseq
    %v8390 = vshrl.u32 %v8389, 7
    %v8391 = vsub.s32 0, %v8390
    %v8392 = vrot.slane %v8387, %v8391
    %v9290 = vunpack.c.l.b16 %v7491
    %v9291 = vunpack.c.l.b16 %v7492
    %v9292 = vunpack.c.l.b16 %v7493
    %v9293 = vunpack.c.l.b16 %v7494
    %v9294 = vunpack.c.l.b16 %v7495
    %v9295 = vunpack.c.l.b16 %v7496
    %v9296 = vunpack.c.l.b16 %v7497
    %v9297 = vunpack.c.l.b16 %v7498
    %v9298 = vunpack.c.l.b16 %v7499
    %v9299 = vunpack.c.l.b16 %v7500
    %v9300 = vunpack.c.l.b16 %v7501
    %v9301 = vunpack.c.l.b16 %v7502
    %v9302 = vunpack.c.l.b16 %v7503
    %v9303 = vunpack.c.l.b16 %v7504
    %v9304 = vunpack.c.l.b16 %v7505
    %v9305 = vunpack.c.l.b16 %v7506
    %v9306 = vunpack.c.l.b16 %v7507
    %v9307 = vunpack.c.l.b16 %v7508
    %v9308 = vunpack.c.l.b16 %v7509
    %v9309 = vunpack.c.l.b16 %v7510
    %v9310 = vunpack.c.l.b16 %v7511
    %v9311 = vunpack.c.l.b16 %v7512
    %v9312 = vunpack.c.l.b16 %v7513
    %v9313 = vunpack.c.l.b16 %v7514
    %v9314 = vunpack.c.l.b16 %v7515
    %v9315 = vunpack.c.l.b16 %v7516
    %v9316 = vunpack.c.l.b16 %v7517
    %v9317 = vunpack.c.l.b16 %v7518
    %v9318 = vunpack.c.l.b16 %v7519
    %v9319 = vunpack.c.l.b16 %v7520
    %v9320 = vunpack.c.l.b16 %v7521
    %v9321 = vunpack.c.l.b16 %v7522
    %v9322 = vunpack.c.l.b16 %v7523
    %v9323 = vunpack.c.l.b16 %v7524
    %v9324 = vunpack.c.l.b16 %v7525
    %v9325 = vunpack.c.l.b16 %v7526
    %v9326 = vunpack.c.l.b16 %v7527
    %v9327 = vunpack.c.l.b16 %v7528
    %v9328 = vunpack.c.l.b16 %v7529
    %v9329 = vunpack.c.l.b16 %v7530
    %v9330 = vunpack.c.l.b16 %v7531
    %v9331 = vunpack.c.l.b16 %v7532
    %v9332 = vunpack.c.l.b16 %v7533
    %v9333 = vunpack.c.l.b16 %v7534
    %v9334 = vunpack.c.l.b16 %v7535
    %v9335 = vunpack.c.l.b16 %v7536
    %v9336 = vunpack.c.l.b16 %v7537
    %v9337 = vunpack.c.l.b16 %v7538
    %v9338 = vunpack.c.l.b16 %v7539
    %v9339 = vunpack.c.l.b16 %v7540
    %v9340 = vunpack.c.l.b16 %v7541
    %v9341 = vunpack.c.l.b16 %v7542
    %v9342 = vunpack.c.l.b16 %v7543
    %v9343 = vunpack.c.l.b16 %v7544
    %v9344 = vunpack.c.l.b16 %v7545
    %v9345 = vunpack.c.l.b16 %v7546
    %v9346 = vunpack.c.l.b16 %v7547
    %v9347 = vunpack.c.l.b16 %v7548
    %v9348 = vunpack.c.l.b16 %v7549
    %v9349 = vunpack.c.l.b16 %v7550
    %v9350 = vunpack.c.l.b16 %v7551
    %v9351 = vunpack.c.l.b16 %v7552
    %v9352 = vunpack.c.l.b16 %v7553
    %v9353 = vunpack.c.l.b16 %v7554
    %v9354 = vunpack.c.l.b16 %v7555
    %v9355 = vunpack.c.l.b16 %v7556
    %v9356 = vunpack.c.l.b16 %v7557
    %v9357 = vunpack.c.l.b16 %v7558
    %v9358 = vunpack.c.l.b16 %v7559
    %v9359 = vunpack.c.l.b16 %v7560
    %v9360 = vunpack.c.l.b16 %v7561
    %v9361 = vunpack.c.l.b16 %v7562
    %v9362 = vunpack.c.l.b16 %v7563
    %v9363 = vunpack.c.l.b16 %v7564
    %v9364 = vunpack.c.l.b16 %v7565
    %v9365 = vunpack.c.l.b16 %v7566
    %v9366 = vunpack.c.l.b16 %v7567
    %v9367 = vunpack.c.l.b16 %v7568
    %v9368 = vunpack.c.l.b16 %v7569
    %v9369 = vunpack.c.l.b16 %v7570
    %v9370 = vunpack.c.l.b16 %v7571
    %v9371 = vunpack.c.l.b16 %v7572
    %v9372 = vunpack.c.l.b16 %v7573
    %v9373 = vunpack.c.l.b16 %v7574
    %v9374 = vunpack.c.l.b16 %v7575
    %v9375 = vunpack.c.l.b16 %v7576
    %v9376 = vunpack.c.l.b16 %v7577
    %v9377 = vunpack.c.l.b16 %v7578
    %v9378 = vunpack.c.l.b16 %v7579
    %v9379 = vunpack.c.l.b16 %v7580
    %v9380 = vunpack.c.l.b16 %v7581
    %v9381 = vunpack.c.l.b16 %v7582
    %v9382 = vunpack.c.l.b16 %v7583
    %v9383 = vunpack.c.l.b16 %v7584
    %v9384 = vunpack.c.l.b16 %v7585
    %v9385 = vunpack.c.l.b16 %v7586
    %v9386 = vunpack.c.l.b16 %v7587
    %v9387 = vunpack.c.l.b16 %v7588
    %v9388 = vunpack.c.l.b16 %v7589
    %v9389 = vunpack.c.l.b16 %v7590
    %v9390 = vunpack.c.l.b16 %v7591
    %v9391 = vunpack.c.l.b16 %v7592
    %v9392 = vunpack.c.l.b16 %v7593
    %v9393 = vunpack.c.l.b16 %v7594
    %v9394 = vunpack.c.l.b16 %v7595
    %v9395 = vunpack.c.l.b16 %v7596
    %v9396 = vunpack.c.l.b16 %v7597
    %v9397 = vunpack.c.l.b16 %v7598
    %v9398 = vunpack.c.l.b16 %v7599
    %v9399 = vunpack.c.l.b16 %v7600
    %v9400 = vunpack.c.l.b16 %v7601
    %v9401 = vunpack.c.l.b16 %v7602
    %v9402 = vunpack.c.l.b16 %v7603
    %v9403 = vunpack.c.l.b16 %v7604
    %v9404 = vunpack.c.l.b16 %v7605
    %v9405 = vunpack.c.l.b16 %v7606
    %v9406 = vunpack.c.l.b16 %v7607
    %v9407 = vunpack.c.l.b16 %v7608
    %v9408 = vunpack.c.l.b16 %v7609
    %v9409 = vunpack.c.l.b16 %v7610
    %v9410 = vunpack.c.l.b16 %v7611
    %v9411 = vunpack.c.l.b16 %v7612
    %v9412 = vunpack.c.l.b16 %v7613
    %v9413 = vunpack.c.l.b16 %v7614
    %v9414 = vunpack.c.l.b16 %v7615
    %v9415 = vunpack.c.l.b16 %v7616
    %v9416 = vunpack.c.l.b16 %v7617
    %v9417 = vunpack.c.l.b16 %v7618
    %v9418 = vunpack.c.l.b16 %v7619
    %v9419 = vunpack.c.l.b16 %v7620
    %v9420 = vunpack.c.l.b16 %v7621
    %v9421 = vunpack.c.l.b16 %v7622
    %v9422 = vunpack.c.l.b16 %v7623
    %v9423 = vunpack.c.l.b16 %v7624
    %v9424 = vunpack.c.l.b16 %v7625
    %v9425 = vunpack.c.l.b16 %v7626
    %v9426 = vunpack.c.l.b16 %v7627
    %v9427 = vunpack.c.l.b16 %v7628
    %v9428 = vunpack.c.l.b16 %v7629
    %v9429 = vunpack.c.l.b16 %v7630
    %v9430 = vunpack.c.l.b16 %v7631
    %v9431 = vunpack.c.l.b16 %v7632
    %v9432 = vunpack.c.l.b16 %v7633
    %v9433 = vunpack.c.l.b16 %v7634
    %v9434 = vunpack.c.l.b16 %v7635
    %v9435 = vunpack.c.l.b16 %v7636
    %v9436 = vunpack.c.l.b16 %v7637
    %v9437 = vunpack.c.l.b16 %v7638
    %v9438 = vunpack.c.l.b16 %v7639
    %v9439 = vunpack.c.l.b16 %v7640
    %v9440 = vunpack.c.l.b16 %v7641
    %v9441 = vunpack.c.l.b16 %v7642
    %v9442 = vunpack.c.l.b16 %v7643
    %v9443 = vunpack.c.l.b16 %v7644
    %v9444 = vunpack.c.l.b16 %v7645
    %v9445 = vunpack.c.l.b16 %v7646
    %v9446 = vunpack.c.l.b16 %v7647
    %v9447 = vunpack.c.l.b16 %v7648
    %v9448 = vunpack.c.l.b16 %v7649
    %v9449 = vunpack.c.l.b16 %v7650
    %v9450 = vunpack.c.l.b16 %v7651
    %v9451 = vunpack.c.l.b16 %v7652
    %v9452 = vunpack.c.l.b16 %v7653
    %v9453 = vunpack.c.l.b16 %v7654
    %v9454 = vunpack.c.l.b16 %v7655
    %v9455 = vunpack.c.l.b16 %v7656
    %v9456 = vunpack.c.l.b16 %v7657
    %v9457 = vunpack.c.l.b16 %v7658
    %v9458 = vunpack.c.l.b16 %v7659
    %v9459 = vunpack.c.l.b16 %v7660
    %v9460 = vunpack.c.l.b16 %v7661
    %v9461 = vunpack.c.l.b16 %v7662
    %v9462 = vunpack.c.l.b16 %v7663
    %v9463 = vunpack.c.l.b16 %v7664
    %v9464 = vunpack.c.l.b16 %v7665
    %v9465 = vunpack.c.l.b16 %v7666
    %v9466 = vunpack.c.l.b16 %v7667
    %v9467 = vunpack.c.l.b16 %v7668
    %v9468 = vunpack.c.l.b16 %v7669
    %v9469 = vunpack.c.l.b16 %v7670
    %v9470 = vunpack.c.l.b16 %v7671
    %v9471 = vunpack.c.l.b16 %v7672
    %v9472 = vunpack.c.l.b16 %v7673
    %v9473 = vunpack.c.l.b16 %v7674
    %v9474 = vunpack.c.l.b16 %v7675
    %v9475 = vunpack.c.l.b16 %v7676
    %v9476 = vunpack.c.l.b16 %v7677
    %v9477 = vunpack.c.l.b16 %v7678
    %v9478 = vunpack.c.l.b16 %v7679
    %v9479 = vunpack.c.l.b16 %v7680
    %v9480 = vunpack.c.l.b16 %v7681
    %v9481 = vunpack.c.l.b16 %v7682
    %v9482 = vunpack.c.l.b16 %v7683
    %v9483 = vunpack.c.l.b16 %v7684
    %v9484 = vunpack.c.l.b16 %v7685
    %v9485 = vunpack.c.l.b16 %v7686
    %v9486 = vunpack.c.l.b16 %v7687
    %v9487 = vunpack.c.l.b16 %v7688
    %v9488 = vunpack.c.l.b16 %v7689
    %v9489 = vunpack.c.l.b16 %v7690
    %v9490 = vunpack.c.l.b16 %v7691
    %v9491 = vunpack.c.l.b16 %v7692
    %v9492 = vunpack.c.l.b16 %v7693
    %v9493 = vunpack.c.l.b16 %v7694
    %v9494 = vunpack.c.l.b16 %v7695
    %v9495 = vunpack.c.l.b16 %v7696
    %v9496 = vunpack.c.l.b16 %v7697
    %v9497 = vunpack.c.l.b16 %v7698
    %v9498 = vunpack.c.l.b16 %v7699
    %v9499 = vunpack.c.l.b16 %v7700
    %v9500 = vunpack.c.l.b16 %v7701
    %v9501 = vunpack.c.l.b16 %v7702
    %v9502 = vunpack.c.l.b16 %v7703
    %v9503 = vunpack.c.l.b16 %v7704
    %v9504 = vunpack.c.l.b16 %v7705
    %v9505 = vunpack.c.l.b16 %v7706
    %v9506 = vunpack.c.l.b16 %v7707
    %v9507 = vunpack.c.l.b16 %v7708
    %v9508 = vunpack.c.l.b16 %v7709
    %v9509 = vunpack.c.l.b16 %v7710
    %v9510 = vunpack.c.l.b16 %v7711
    %v9511 = vunpack.c.l.b16 %v7712
    %v9512 = vunpack.c.l.b16 %v7713
    %v9513 = vunpack.c.l.b16 %v7714
    %v9514 = vunpack.c.l.b16 %v7715
    %v9515 = vunpack.c.l.b16 %v7716
    %v9516 = vunpack.c.l.b16 %v7717
    %v9517 = vunpack.c.l.b16 %v7718
    %v9518 = vunpack.c.l.b16 %v7719
    %v9519 = vunpack.c.l.b16 %v7720
    %v9520 = vunpack.c.l.b16 %v7721
    %v9521 = vunpack.c.l.b16 %v7722
    %v9522 = vunpack.c.l.b16 %v7723
    %v9523 = vunpack.c.l.b16 %v7724
    %v9524 = vunpack.c.l.b16 %v7725
    %v9525 = vunpack.c.l.b16 %v7726
    %v9526 = vunpack.c.l.b16 %v7727
    %v9527 = vunpack.c.l.b16 %v7728
    %v9528 = vunpack.c.l.b16 %v7729
    %v9529 = vunpack.c.l.b16 %v7730
    %v9530 = vunpack.c.l.b16 %v7731
    %v9531 = vunpack.c.l.b16 %v7732
    %v9532 = vunpack.c.l.b16 %v7733
    %v9533 = vunpack.c.l.b16 %v7734
    %v9534 = vunpack.c.l.b16 %v7735
    %v9535 = vunpack.c.l.b16 %v7736
    %v9536 = vunpack.c.l.b16 %v7737
    %v9537 = vunpack.c.l.b16 %v7738
    %v9538 = vunpack.c.l.b16 %v7739
    %v9539 = vunpack.c.l.b16 %v7740
    %v9540 = vunpack.c.l.b16 %v7741
    %v9541 = vunpack.c.l.b16 %v7742
    %v9542 = vunpack.c.l.b16 %v7743
    %v9543 = vunpack.c.l.b16 %v7744
    %v9544 = vunpack.c.l.b16 %v7745
    %v9545 = vunpack.c.l.b16 %v7746
    %v9546 = vunpack.c.l.b16 %v7747
    %v9547 = vunpack.c.l.b16 %v7748
    %v9548 = vunpack.c.l.b16 %v7749
    %v9549 = vunpack.c.l.b16 %v7750
    %v9550 = vunpack.c.l.b16 %v7751
    %v9551 = vunpack.c.l.b16 %v7752
    %v9552 = vunpack.c.l.b16 %v7753
    %v9553 = vunpack.c.l.b16 %v7754
    %v9554 = vunpack.c.l.b16 %v7755
    %v9555 = vunpack.c.l.b16 %v7756
    %v9556 = vunpack.c.l.b16 %v7757
    %v9557 = vunpack.c.l.b16 %v7758
    %v9558 = vunpack.c.l.b16 %v7759
    %v9559 = vunpack.c.l.b16 %v7760
    %v9560 = vunpack.c.l.b16 %v7761
    %v9561 = vunpack.c.l.b16 %v7762
    %v9562 = vunpack.c.l.b16 %v7763
    %v9563 = vunpack.c.l.b16 %v7764
    %v9564 = vunpack.c.l.b16 %v7765
    %v9565 = vunpack.c.l.b16 %v7766
    %v9566 = vunpack.c.l.b16 %v7767
    %v9567 = vunpack.c.l.b16 %v7768
    %v9568 = vunpack.c.l.b16 %v7769
    %v9569 = vunpack.c.l.b16 %v7770
    %v9570 = vunpack.c.l.b16 %v7771
    %v9571 = vunpack.c.l.b16 %v7772
    %v9572 = vunpack.c.l.b16 %v7773
    %v9573 = vunpack.c.l.b16 %v7774
    %v9574 = vunpack.c.l.b16 %v7775
    %v9575 = vunpack.c.l.b16 %v7776
    %v9576 = vunpack.c.l.b16 %v7777
    %v9577 = vunpack.c.l.b16 %v7778
    %v9578 = vunpack.c.l.b16 %v7779
    %v9579 = vunpack.c.l.b16 %v7780
    %v9580 = vunpack.c.l.b16 %v7781
    %v9581 = vunpack.c.l.b16 %v7782
    %v9582 = vunpack.c.l.b16 %v7783
    %v9583 = vunpack.c.l.b16 %v7784
    %v9584 = vunpack.c.l.b16 %v7785
    %v9585 = vunpack.c.l.b16 %v7786
    %v9586 = vunpack.c.l.b16 %v7787
    %v9587 = vunpack.c.l.b16 %v7788
    %v9588 = vunpack.c.l.b16 %v7789
    %v9589 = vunpack.c.l.b16 %v7790
    %v9590 = vunpack.c.l.b16 %v7791
    %v9591 = vunpack.c.l.b16 %v7792
    %v9592 = vunpack.c.l.b16 %v7793
    %v9593 = vunpack.c.l.b16 %v7794
    %v9594 = vunpack.c.l.b16 %v7795
    %v9595 = vunpack.c.l.b16 %v7796
    %v9596 = vunpack.c.l.b16 %v7797
    %v9597 = vunpack.c.l.b16 %v7798
    %v9598 = vunpack.c.l.b16 %v7799
    %v9599 = vunpack.c.l.b16 %v7800
    %v9600 = vunpack.c.l.b16 %v7801
    %v9601 = vunpack.c.l.b16 %v7802
    %v9602 = vunpack.c.l.b16 %v7803
    %v9603 = vunpack.c.l.b16 %v7804
    %v9604 = vunpack.c.l.b16 %v7805
    %v9605 = vunpack.c.l.b16 %v7806
    %v9606 = vunpack.c.l.b16 %v7807
    %v9607 = vunpack.c.l.b16 %v7808
    %v9608 = vunpack.c.l.b16 %v7809
    %v9609 = vunpack.c.l.b16 %v7810
    %v9610 = vunpack.c.l.b16 %v7811
    %v9611 = vunpack.c.l.b16 %v7812
    %v9612 = vunpack.c.l.b16 %v7813
    %v9613 = vunpack.c.l.b16 %v7814
    %v9614 = vunpack.c.l.b16 %v7815
    %v9615 = vunpack.c.l.b16 %v7816
    %v9616 = vunpack.c.l.b16 %v7817
    %v9617 = vunpack.c.l.b16 %v7818
    %v9618 = vunpack.c.l.b16 %v7819
    %v9619 = vunpack.c.l.b16 %v7820
    %v9620 = vunpack.c.l.b16 %v7821
    %v9621 = vunpack.c.l.b16 %v7822
    %v9622 = vunpack.c.l.b16 %v7823
    %v9623 = vunpack.c.l.b16 %v7824
    %v9624 = vunpack.c.l.b16 %v7825
    %v9625 = vunpack.c.l.b16 %v7826
    %v9626 = vunpack.c.l.b16 %v7827
    %v9627 = vunpack.c.l.b16 %v7828
    %v9628 = vunpack.c.l.b16 %v7829
    %v9629 = vunpack.c.l.b16 %v7830
    %v9630 = vunpack.c.l.b16 %v7831
    %v9631 = vunpack.c.l.b16 %v7832
    %v9632 = vunpack.c.l.b16 %v7833
    %v9633 = vunpack.c.l.b16 %v7834
    %v9634 = vunpack.c.l.b16 %v7835
    %v9635 = vunpack.c.l.b16 %v7836
    %v9636 = vunpack.c.l.b16 %v7837
    %v9637 = vunpack.c.l.b16 %v7838
    %v9638 = vunpack.c.l.b16 %v7839
    %v9639 = vunpack.c.l.b16 %v7840
    %v9640 = vunpack.c.l.b16 %v7841
    %v9641 = vunpack.c.l.b16 %v7842
    %v9642 = vunpack.c.l.b16 %v7843
    %v9643 = vunpack.c.l.b16 %v7844
    %v9644 = vunpack.c.l.b16 %v7845
    %v9645 = vunpack.c.l.b16 %v7846
    %v9646 = vunpack.c.l.b16 %v7847
    %v9647 = vunpack.c.l.b16 %v7848
    %v9648 = vunpack.c.l.b16 %v7849
    %v9649 = vunpack.c.l.b16 %v7850
    %v9650 = vunpack.c.l.b16 %v7851
    %v9651 = vunpack.c.l.b16 %v7852
    %v9652 = vunpack.c.l.b16 %v7853
    %v9653 = vunpack.c.l.b16 %v7854
    %v9654 = vunpack.c.l.b16 %v7855
    %v9655 = vunpack.c.l.b16 %v7856
    %v9656 = vunpack.c.l.b16 %v7857
    %v9657 = vunpack.c.l.b16 %v7858
    %v9658 = vunpack.c.l.b16 %v7859
    %v9659 = vunpack.c.l.b16 %v7860
    %v9660 = vunpack.c.l.b16 %v7861
    %v9661 = vunpack.c.l.b16 %v7862
    %v9662 = vunpack.c.l.b16 %v7863
    %v9663 = vunpack.c.l.b16 %v7864
    %v9664 = vunpack.c.l.b16 %v7865
    %v9665 = vunpack.c.l.b16 %v7866
    %v9666 = vunpack.c.l.b16 %v7867
    %v9667 = vunpack.c.l.b16 %v7868
    %v9668 = vunpack.c.l.b16 %v7869
    %v9669 = vunpack.c.l.b16 %v7870
    %v9670 = vunpack.c.l.b16 %v7871
    %v9671 = vunpack.c.l.b16 %v7872
    %v9672 = vunpack.c.l.b16 %v7873
    %v9673 = vunpack.c.l.b16 %v7874
    %v9674 = vunpack.c.l.b16 %v7875
    %v9675 = vunpack.c.l.b16 %v7876
    %v9676 = vunpack.c.l.b16 %v7877
    %v9677 = vunpack.c.l.b16 %v7878
    %v9678 = vunpack.c.l.b16 %v7879
    %v9679 = vunpack.c.l.b16 %v7880
    %v9680 = vunpack.c.l.b16 %v7881
    %v9681 = vunpack.c.l.b16 %v7882
    %v9682 = vunpack.c.l.b16 %v7883
    %v9683 = vunpack.c.l.b16 %v7884
    %v9684 = vunpack.c.l.b16 %v7885
    %v9685 = vunpack.c.l.b16 %v7886
    %v9686 = vunpack.c.l.b16 %v7887
    %v9687 = vunpack.c.l.b16 %v7888
    %v9688 = vunpack.c.l.b16 %v7889
    %v9689 = vunpack.c.l.b16 %v7890
    %v9690 = vunpack.c.l.b16 %v7891
    %v9691 = vunpack.c.l.b16 %v7892
    %v9692 = vunpack.c.l.b16 %v7893
    %v9693 = vunpack.c.l.b16 %v7894
    %v9694 = vunpack.c.l.b16 %v7895
    %v9695 = vunpack.c.l.b16 %v7896
    %v9696 = vunpack.c.l.b16 %v7897
    %v9697 = vunpack.c.l.b16 %v7898
    %v9698 = vunpack.c.l.b16 %v7899
    %v9699 = vunpack.c.l.b16 %v7900
    %v9700 = vunpack.c.l.b16 %v7901
    %v9701 = vunpack.c.l.b16 %v7902
    %v9702 = vunpack.c.l.b16 %v7903
    %v9703 = vunpack.c.l.b16 %v7904
    %v9704 = vunpack.c.l.b16 %v7905
    %v9705 = vunpack.c.l.b16 %v7906
    %v9706 = vunpack.c.l.b16 %v7907
    %v9707 = vunpack.c.l.b16 %v7908
    %v9708 = vunpack.c.l.b16 %v7909
    %v9709 = vunpack.c.l.b16 %v7910
    %v9710 = vunpack.c.l.b16 %v7911
    %v9711 = vunpack.c.l.b16 %v7912
    %v9712 = vunpack.c.l.b16 %v7913
    %v9713 = vunpack.c.l.b16 %v7914
    %v9714 = vunpack.c.l.b16 %v7915
    %v9715 = vunpack.c.l.b16 %v7916
    %v9716 = vunpack.c.l.b16 %v7917
    %v9717 = vunpack.c.l.b16 %v7918
    %v9718 = vunpack.c.l.b16 %v7919
    %v9719 = vunpack.c.l.b16 %v7920
    %v9720 = vunpack.c.l.b16 %v7921
    %v9721 = vunpack.c.l.b16 %v7922
    %v9722 = vunpack.c.l.b16 %v7923
    %v9723 = vunpack.c.l.b16 %v7924
    %v9724 = vunpack.c.l.b16 %v7925
    %v9725 = vunpack.c.l.b16 %v7926
    %v9726 = vunpack.c.l.b16 %v7927
    %v9727 = vunpack.c.l.b16 %v7928
    %v9728 = vunpack.c.l.b16 %v7929
    %v9729 = vunpack.c.l.b16 %v7930
    %v9730 = vunpack.c.l.b16 %v7931
    %v9731 = vunpack.c.l.b16 %v7932
    %v9732 = vunpack.c.l.b16 %v7933
    %v9733 = vunpack.c.l.b16 %v7934
    %v9734 = vunpack.c.l.b16 %v7935
    %v9735 = vunpack.c.l.b16 %v7936
    %v9736 = vunpack.c.l.b16 %v7937
    %v9737 = vunpack.c.l.b16 %v7938
    %v9738 = vunpack.c.l.b16 %v7939
    %v9739 = vunpack.c.l.b16 %v7940
    %v9740 = vunpack.c.l.b16 %v7941
    %v9741 = vunpack.c.l.b16 %v7942
    %v9742 = vunpack.c.l.b16 %v7943
    %v9743 = vunpack.c.l.b16 %v7944
    %v9744 = vunpack.c.l.b16 %v7945
    %v9745 = vunpack.c.l.b16 %v7946
    %v9746 = vunpack.c.l.b16 %v7947
    %v9747 = vunpack.c.l.b16 %v7948
    %v9748 = vunpack.c.l.b16 %v7949
    %v9749 = vunpack.c.l.b16 %v7950
    %v9750 = vunpack.c.l.b16 %v7951
    %v9751 = vunpack.c.l.b16 %v7952
    %v9752 = vunpack.c.l.b16 %v7953
    %v9753 = vunpack.c.l.b16 %v7954
    %v9754 = vunpack.c.l.b16 %v7955
    %v9755 = vunpack.c.l.b16 %v7956
    %v9756 = vunpack.c.l.b16 %v7957
    %v9757 = vunpack.c.l.b16 %v7958
    %v9758 = vunpack.c.l.b16 %v7959
    %v9759 = vunpack.c.l.b16 %v7960
    %v9760 = vunpack.c.l.b16 %v7961
    %v9761 = vunpack.c.l.b16 %v7962
    %v9762 = vunpack.c.l.b16 %v7963
    %v9763 = vunpack.c.l.b16 %v7964
    %v9764 = vunpack.c.l.b16 %v7965
    %v9765 = vunpack.c.l.b16 %v7966
    %v9766 = vunpack.c.l.b16 %v7967
    %v9767 = vunpack.c.l.b16 %v7968
    %v9768 = vunpack.c.l.b16 %v7969
    %v9769 = vunpack.c.l.b16 %v7970
    %v9770 = vunpack.c.l.b16 %v7971
    %v9771 = vunpack.c.l.b16 %v7972
    %v9772 = vunpack.c.l.b16 %v7973
    %v9773 = vunpack.c.l.b16 %v7974
    %v9774 = vunpack.c.l.b16 %v7975
    %v9775 = vunpack.c.l.b16 %v7976
    %v9776 = vunpack.c.l.b16 %v7977
    %v9777 = vunpack.c.l.b16 %v7978
    %v9778 = vunpack.c.l.b16 %v7979
    %v9779 = vunpack.c.l.b16 %v7980
    %v9780 = vunpack.c.l.b16 %v7981
    %v9781 = vunpack.c.l.b16 %v7982
    %v9782 = vunpack.c.l.b16 %v7983
    %v9783 = vunpack.c.l.b16 %v7984
    %v9784 = vunpack.c.l.b16 %v7985
    %v9785 = vunpack.c.l.b16 %v7986
    %v9786 = vunpack.c.l.b16 %v7987
    %v9787 = vunpack.c.l.b16 %v7988
    %v9788 = vunpack.c.l.b16 %v7989
    %v9789 = vunpack.c.l.b16 %v7990
    %v9790 = vunpack.c.l.b16 %v7991
    %v9791 = vunpack.c.l.b16 %v7992
    %v9792 = vunpack.c.l.b16 %v7993
    %v9793 = vunpack.c.l.b16 %v7994
    %v9794 = vunpack.c.l.b16 %v7995
    %v9795 = vunpack.c.l.b16 %v7996
    %v9796 = vunpack.c.l.b16 %v7997
    %v9797 = vunpack.c.l.b16 %v7998
    %v9798 = vunpack.c.l.b16 %v7999
    %v9799 = vunpack.c.l.b16 %v8000
    %v9800 = vunpack.c.l.b16 %v8001
    %v9801 = vunpack.c.l.b16 %v8002
    %v9802 = vunpack.c.l.b16 %v8003
    %v9803 = vunpack.c.l.b16 %v8004
    %v9804 = vunpack.c.l.b16 %v8005
    %v9805 = vunpack.c.l.b16 %v8006
    %v9806 = vunpack.c.l.b16 %v8007
    %v9807 = vunpack.c.l.b16 %v8008
    %v9808 = vunpack.c.l.b16 %v8009
    %v9809 = vunpack.c.l.b16 %v8010
    %v9810 = vunpack.c.l.b16 %v8011
    %v9811 = vunpack.c.l.b16 %v8012
    %v9812 = vunpack.c.l.b16 %v8013
    %v9813 = vunpack.c.l.b16 %v8014
    %v9814 = vunpack.c.l.b16 %v8015
    %v9815 = vunpack.c.l.b16 %v8016
    %v9816 = vunpack.c.l.b16 %v8017
    %v9817 = vunpack.c.l.b16 %v8018
    %v9818 = vunpack.c.l.b16 %v8019
    %v9819 = vunpack.c.l.b16 %v8020
    %v9820 = vunpack.c.l.b16 %v8021
    %v9821 = vunpack.c.l.b16 %v8022
    %v9822 = vunpack.c.l.b16 %v8023
    %v9823 = vunpack.c.l.b16 %v8024
    %v9824 = vunpack.c.l.b16 %v8025
    %v9825 = vunpack.c.l.b16 %v8026
    %v9826 = vunpack.c.l.b16 %v8027
    %v9827 = vunpack.c.l.b16 %v8028
    %v9828 = vunpack.c.l.b16 %v8029
    %v9829 = vunpack.c.l.b16 %v8030
    %v9830 = vunpack.c.l.b16 %v8031
    %v9831 = vunpack.c.l.b16 %v8032
    %v9832 = vunpack.c.l.b16 %v8033
    %v9833 = vunpack.c.l.b16 %v8034
    %v9834 = vunpack.c.l.b16 %v8035
    %v9835 = vunpack.c.l.b16 %v8036
    %v9836 = vunpack.c.l.b16 %v8037
    %v9837 = vunpack.c.l.b16 %v8038
    %v9838 = vunpack.c.l.b16 %v8039
    %v9839 = vunpack.c.l.b16 %v8040
    %v9840 = vunpack.c.l.b16 %v8041
    %v9841 = vunpack.c.l.b16 %v8042
    %v9842 = vunpack.c.l.b16 %v8043
    %v9843 = vunpack.c.l.b16 %v8044
    %v9844 = vunpack.c.l.b16 %v8045
    %v9845 = vunpack.c.l.b16 %v8046
    %v9846 = vunpack.c.l.b16 %v8047
    %v9847 = vunpack.c.l.b16 %v8048
    %v9848 = vunpack.c.l.b16 %v8049
    %v9849 = vunpack.c.l.b16 %v8050
    %v9850 = vunpack.c.l.b16 %v8051
    %v9851 = vunpack.c.l.b16 %v8052
    %v9852 = vunpack.c.l.b16 %v8053
    %v9853 = vunpack.c.l.b16 %v8054
    %v9854 = vunpack.c.l.b16 %v8055
    %v9855 = vunpack.c.l.b16 %v8056
    %v9856 = vunpack.c.l.b16 %v8057
    %v9857 = vunpack.c.l.b16 %v8058
    %v9858 = vunpack.c.l.b16 %v8059
    %v9859 = vunpack.c.l.b16 %v8060
    %v9860 = vunpack.c.l.b16 %v8061
    %v9861 = vunpack.c.l.b16 %v8062
    %v9862 = vunpack.c.l.b16 %v8063
    %v9863 = vunpack.c.l.b16 %v8064
    %v9864 = vunpack.c.l.b16 %v8065
    %v9865 = vunpack.c.l.b16 %v8066
    %v9866 = vunpack.c.l.b16 %v8067
    %v9867 = vunpack.c.l.b16 %v8068
    %v9868 = vunpack.c.l.b16 %v8069
    %v9869 = vunpack.c.l.b16 %v8070
    %v9870 = vunpack.c.l.b16 %v8071
    %v9871 = vunpack.c.l.b16 %v8072
    %v9872 = vunpack.c.l.b16 %v8073
    %v9873 = vunpack.c.l.b16 %v8074
    %v9874 = vunpack.c.l.b16 %v8075
    %v9875 = vunpack.c.l.b16 %v8076
    %v9876 = vunpack.c.l.b16 %v8077
    %v9877 = vunpack.c.l.b16 %v8078
    %v9878 = vunpack.c.l.b16 %v8079
    %v9879 = vunpack.c.l.b16 %v8080
    %v9880 = vunpack.c.l.b16 %v8081
    %v9881 = vunpack.c.l.b16 %v8082
    %v9882 = vunpack.c.l.b16 %v8083
    %v9883 = vunpack.c.l.b16 %v8084
    %v9884 = vunpack.c.l.b16 %v8085
    %v9885 = vunpack.c.l.b16 %v8086
    %v9886 = vunpack.c.l.b16 %v8087
    %v9887 = vunpack.c.l.b16 %v8088
    %v9888 = vunpack.c.l.b16 %v8089
    %v9889 = vunpack.c.l.b16 %v8090
    %v9890 = vunpack.c.l.b16 %v8091
    %v9891 = vunpack.c.l.b16 %v8092
    %v9892 = vunpack.c.l.b16 %v8093
    %v9893 = vunpack.c.l.b16 %v8094
    %v9894 = vunpack.c.l.b16 %v8095
    %v9895 = vunpack.c.l.b16 %v8096
    %v9896 = vunpack.c.l.b16 %v8097
    %v9897 = vunpack.c.l.b16 %v8098
    %v9898 = vunpack.c.l.b16 %v8099
    %v9899 = vunpack.c.l.b16 %v8100
    %v9900 = vunpack.c.l.b16 %v8101
    %v9901 = vunpack.c.l.b16 %v8102
    %v9902 = vunpack.c.l.b16 %v8103
    %v9903 = vunpack.c.l.b16 %v8104
    %v9904 = vunpack.c.l.b16 %v8105
    %v9905 = vunpack.c.l.b16 %v8106
    %v9906 = vunpack.c.l.b16 %v8107
    %v9907 = vunpack.c.l.b16 %v8108
    %v9908 = vunpack.c.l.b16 %v8109
    %v9909 = vunpack.c.l.b16 %v8110
    %v9910 = vunpack.c.l.b16 %v8111
    %v9911 = vunpack.c.l.b16 %v8112
    %v9912 = vunpack.c.l.b16 %v8113
    %v9913 = vunpack.c.l.b16 %v8114
    %v9914 = vunpack.c.l.b16 %v8115
    %v9915 = vunpack.c.l.b16 %v8116
    %v9916 = vunpack.c.l.b16 %v8117
    %v9917 = vunpack.c.l.b16 %v8118
    %v9918 = vunpack.c.l.b16 %v8119
    %v9919 = vunpack.c.l.b16 %v8120
    %v9920 = vunpack.c.l.b16 %v8121
    %v9921 = vunpack.c.l.b16 %v8122
    %v9922 = vunpack.c.l.b16 %v8123
    %v9923 = vunpack.c.l.b16 %v8124
    %v9924 = vunpack.c.l.b16 %v8125
    %v9925 = vunpack.c.l.b16 %v8126
    %v9926 = vunpack.c.l.b16 %v8127
    %v9927 = vunpack.c.l.b16 %v8128
    %v9928 = vunpack.c.l.b16 %v8129
    %v9929 = vunpack.c.l.b16 %v8130
    %v9930 = vunpack.c.l.b16 %v8131
    %v9931 = vunpack.c.l.b16 %v8132
    %v9932 = vunpack.c.l.b16 %v8133
    %v9933 = vunpack.c.l.b16 %v8134
    %v9934 = vunpack.c.l.b16 %v8135
    %v9935 = vunpack.c.l.b16 %v8136
    %v9936 = vunpack.c.l.b16 %v8137
    %v9937 = vunpack.c.l.b16 %v8138
    %v9938 = vunpack.c.l.b16 %v8139
    %v9939 = vunpack.c.l.b16 %v8140
    %v9940 = vunpack.c.l.b16 %v8141
    %v9941 = vunpack.c.l.b16 %v8142
    %v9942 = vunpack.c.l.b16 %v8143
    %v9943 = vunpack.c.l.b16 %v8144
    %v9944 = vunpack.c.l.b16 %v8145
    %v9945 = vunpack.c.l.b16 %v8146
    %v9946 = vunpack.c.l.b16 %v8147
    %v9947 = vunpack.c.l.b16 %v8148
    %v9948 = vunpack.c.l.b16 %v8149
    %v9949 = vunpack.c.l.b16 %v8150
    %v9950 = vunpack.c.l.b16 %v8151
    %v9951 = vunpack.c.l.b16 %v8152
    %v9952 = vunpack.c.l.b16 %v8153
    %v9953 = vunpack.c.l.b16 %v8154
    %v9954 = vunpack.c.l.b16 %v8155
    %v9955 = vunpack.c.l.b16 %v8156
    %v9956 = vunpack.c.l.b16 %v8157
    %v9957 = vunpack.c.l.b16 %v8158
    %v9958 = vunpack.c.l.b16 %v8159
    %v9959 = vunpack.c.l.b16 %v8160
    %v9960 = vunpack.c.l.b16 %v8161
    %v9961 = vunpack.c.l.b16 %v8162
    %v9962 = vunpack.c.l.b16 %v8163
    %v9963 = vunpack.c.l.b16 %v8164
    %v9964 = vunpack.c.l.b16 %v8165
    %v9965 = vunpack.c.l.b16 %v8166
    %v9966 = vunpack.c.l.b16 %v8167
    %v9967 = vunpack.c.l.b16 %v8168
    %v9968 = vunpack.c.l.b16 %v8169
    %v9969 = vunpack.c.l.b16 %v8170
    %v9970 = vunpack.c.l.b16 %v8171
    %v9971 = vunpack.c.l.b16 %v8172
    %v9972 = vunpack.c.l.b16 %v8173
    %v9973 = vunpack.c.l.b16 %v8174
    %v9974 = vunpack.c.l.b16 %v8175
    %v9975 = vunpack.c.l.b16 %v8176
    %v9976 = vunpack.c.l.b16 %v8177
    %v9977 = vunpack.c.l.b16 %v8178
    %v9978 = vunpack.c.l.b16 %v8179
    %v9979 = vunpack.c.l.b16 %v8180
    %v9980 = vunpack.c.l.b16 %v8181
    %v9981 = vunpack.c.l.b16 %v8182
    %v9982 = vunpack.c.l.b16 %v8183
    %v9983 = vunpack.c.l.b16 %v8184
    %v9984 = vunpack.c.l.b16 %v8185
    %v9985 = vunpack.c.l.b16 %v8186
    %v9986 = vunpack.c.l.b16 %v8187
    %v9987 = vunpack.c.l.b16 %v8188
    %v9988 = vunpack.c.l.b16 %v8189
    %v9989 = vunpack.c.l.b16 %v8190
    %v9990 = vunpack.c.l.b16 %v8191
    %v9991 = vunpack.c.l.b16 %v8192
    %v9992 = vunpack.c.l.b16 %v8193
    %v9993 = vunpack.c.l.b16 %v8194
    %v9994 = vunpack.c.l.b16 %v8195
    %v9995 = vunpack.c.l.b16 %v8196
    %v9996 = vunpack.c.l.b16 %v8197
    %v9997 = vunpack.c.l.b16 %v8198
    %v9998 = vunpack.c.l.b16 %v8199
    %v9999 = vunpack.c.l.b16 %v8200
    %v10000 = vunpack.c.l.b16 %v8201
    %v10001 = vunpack.c.l.b16 %v8202
    %v10002 = vunpack.c.l.b16 %v8203
    %v10003 = vunpack.c.l.b16 %v8204
    %v10004 = vunpack.c.l.b16 %v8205
    %v10005 = vunpack.c.l.b16 %v8206
    %v10006 = vunpack.c.l.b16 %v8207
    %v10007 = vunpack.c.l.b16 %v8208
    %v10008 = vunpack.c.l.b16 %v8209
    %v10009 = vunpack.c.l.b16 %v8210
    %v10010 = vunpack.c.l.b16 %v8211
    %v10011 = vunpack.c.l.b16 %v8212
    %v10012 = vunpack.c.l.b16 %v8213
    %v10013 = vunpack.c.l.b16 %v8214
    %v10014 = vunpack.c.l.b16 %v8215
    %v10015 = vunpack.c.l.b16 %v8216
    %v10016 = vunpack.c.l.b16 %v8217
    %v10017 = vunpack.c.l.b16 %v8218
    %v10018 = vunpack.c.l.b16 %v8219
    %v10019 = vunpack.c.l.b16 %v8220
    %v10020 = vunpack.c.l.b16 %v8221
    %v10021 = vunpack.c.l.b16 %v8222
    %v10022 = vunpack.c.l.b16 %v8223
    %v10023 = vunpack.c.l.b16 %v8224
    %v10024 = vunpack.c.l.b16 %v8225
    %v10025 = vunpack.c.l.b16 %v8226
    %v10026 = vunpack.c.l.b16 %v8227
    %v10027 = vunpack.c.l.b16 %v8228
    %v10028 = vunpack.c.l.b16 %v8229
    %v10029 = vunpack.c.l.b16 %v8230
    %v10030 = vunpack.c.l.b16 %v8231
    %v10031 = vunpack.c.l.b16 %v8232
    %v10032 = vunpack.c.l.b16 %v8233
    %v10033 = vunpack.c.l.b16 %v8234
    %v10034 = vunpack.c.l.b16 %v8235
    %v10035 = vunpack.c.l.b16 %v8236
    %v10036 = vunpack.c.l.b16 %v8237
    %v10037 = vunpack.c.l.b16 %v8238
    %v10038 = vunpack.c.l.b16 %v8239
    %v10039 = vunpack.c.l.b16 %v8240
    %v10040 = vunpack.c.l.b16 %v8241
    %v10041 = vunpack.c.l.b16 %v8242
    %v10042 = vunpack.c.l.b16 %v8243
    %v10043 = vunpack.c.l.b16 %v8244
    %v10044 = vunpack.c.l.b16 %v8245
    %v10045 = vunpack.c.l.b16 %v8246
    %v10046 = vunpack.c.l.b16 %v8247
    %v10047 = vunpack.c.l.b16 %v8248
    %v10048 = vunpack.c.l.b16 %v8249
    %v10049 = vunpack.c.l.b16 %v8250
    %v10050 = vunpack.c.l.b16 %v8251
    %v10051 = vunpack.c.l.b16 %v8252
    %v10052 = vunpack.c.l.b16 %v8253
    %v10053 = vunpack.c.l.b16 %v8254
    %v10054 = vunpack.c.l.b16 %v8255
    %v10055 = vunpack.c.l.b16 %v8256
    %v10056 = vunpack.c.l.b16 %v8257
    %v10057 = vunpack.c.l.b16 %v8258
    %v10058 = vunpack.c.l.b16 %v8259
    %v10059 = vunpack.c.l.b16 %v8260
    %v10060 = vunpack.c.l.b16 %v8261
    %v10061 = vunpack.c.l.b16 %v8262
    %v10062 = vunpack.c.l.b16 %v8263
    %v10063 = vunpack.c.l.b16 %v8264
    %v10064 = vunpack.c.l.b16 %v8265
    %v10065 = vunpack.c.l.b16 %v8266
    %v10066 = vunpack.c.l.b16 %v8267
    %v10067 = vunpack.c.l.b16 %v8268
    %v10068 = vunpack.c.l.b16 %v8269
    %v10069 = vunpack.c.l.b16 %v8270
    %v10070 = vunpack.c.l.b16 %v8271
    %v10071 = vunpack.c.l.b16 %v8272
    %v10072 = vunpack.c.l.b16 %v8273
    %v10073 = vunpack.c.l.b16 %v8274
    %v10074 = vunpack.c.l.b16 %v8275
    %v10075 = vunpack.c.l.b16 %v8276
    %v10076 = vunpack.c.l.b16 %v8277
    %v10077 = vunpack.c.l.b16 %v8278
    %v10078 = vunpack.c.l.b16 %v8279
    %v10079 = vunpack.c.l.b16 %v8280
    %v10080 = vunpack.c.l.b16 %v8281
    %v10081 = vunpack.c.l.b16 %v8282
    %v10082 = vunpack.c.l.b16 %v8283
    %v10083 = vunpack.c.l.b16 %v8284
    %v10084 = vunpack.c.l.b16 %v8285
    %v10085 = vunpack.c.l.b16 %v8286
    %v10086 = vunpack.c.l.b16 %v8287
    %v10087 = vunpack.c.l.b16 %v8288
    %v10088 = vunpack.c.l.b16 %v8289
    %v10089 = vunpack.c.l.b16 %v8290
    %v10090 = vunpack.c.l.b16 %v8291
    %v10091 = vunpack.c.l.b16 %v8292
    %v10092 = vunpack.c.l.b16 %v8293
    %v10093 = vunpack.c.l.b16 %v8294
    %v10094 = vunpack.c.l.b16 %v8295
    %v10095 = vunpack.c.l.b16 %v8296
    %v10096 = vunpack.c.l.b16 %v8297
    %v10097 = vunpack.c.l.b16 %v8298
    %v10098 = vunpack.c.l.b16 %v8299
    %v10099 = vunpack.c.l.b16 %v8300
    %v10100 = vunpack.c.l.b16 %v8301
    %v10101 = vunpack.c.l.b16 %v8302
    %v10102 = vunpack.c.l.b16 %v8303
    %v10103 = vunpack.c.l.b16 %v8304
    %v10104 = vunpack.c.l.b16 %v8305
    %v10105 = vunpack.c.l.b16 %v8306
    %v10106 = vunpack.c.l.b16 %v8307
    %v10107 = vunpack.c.l.b16 %v8308
    %v10108 = vunpack.c.l.b16 %v8309
    %v10109 = vunpack.c.l.b16 %v8310
    %v10110 = vunpack.c.l.b16 %v8311
    %v10111 = vunpack.c.l.b16 %v8312
    %v10112 = vunpack.c.l.b16 %v8313
    %v10113 = vunpack.c.l.b16 %v8314
    %v10114 = vunpack.c.l.b16 %v8315
    %v10115 = vunpack.c.l.b16 %v8316
    %v10116 = vunpack.c.l.b16 %v8317
    %v10117 = vunpack.c.l.b16 %v8318
    %v10118 = vunpack.c.l.b16 %v8319
    %v10119 = vunpack.c.l.b16 %v8320
    %v10120 = vunpack.c.l.b16 %v8321
    %v10121 = vunpack.c.l.b16 %v8322
    %v10122 = vunpack.c.l.b16 %v8323
    %v10123 = vunpack.c.l.b16 %v8324
    %v10124 = vunpack.c.l.b16 %v8325
    %v10125 = vunpack.c.l.b16 %v8326
    %v10126 = vunpack.c.l.b16 %v8327
    %v10127 = vunpack.c.l.b16 %v8328
    %v10128 = vunpack.c.l.b16 %v8329
    %v10129 = vunpack.c.l.b16 %v8330
    %v10130 = vunpack.c.l.b16 %v8331
    %v10131 = vunpack.c.l.b16 %v8332
    %v10132 = vunpack.c.l.b16 %v8333
    %v10133 = vunpack.c.l.b16 %v8334
    %v10134 = vunpack.c.l.b16 %v8335
    %v10135 = vunpack.c.l.b16 %v8336
    %v10136 = vunpack.c.l.b16 %v8337
    %v10137 = vunpack.c.l.b16 %v8338
    %v10138 = vunpack.c.l.b16 %v8339
    %v10139 = vunpack.c.l.b16 %v8340
    %v10140 = vunpack.c.l.b16 %v8341
    %v10141 = vunpack.c.l.b16 %v8342
    %v10142 = vunpack.c.l.b16 %v8343
    %v10143 = vunpack.c.l.b16 %v8344
    %v10144 = vunpack.c.l.b16 %v8345
    %v10145 = vunpack.c.l.b16 %v8346
    %v10146 = vunpack.c.l.b16 %v8347
    %v10147 = vunpack.c.l.b16 %v8348
    %v10148 = vunpack.c.l.b16 %v8349
    %v10149 = vunpack.c.l.b16 %v8350
    %v10150 = vunpack.c.l.b16 %v8351
    %v10151 = vunpack.c.l.b16 %v8352
    %v10152 = vunpack.c.l.b16 %v8353
    %v10153 = vunpack.c.l.b16 %v8354
    %v10154 = vunpack.c.l.b16 %v8355
    %v10155 = vunpack.c.l.b16 %v8356
    %v10156 = vunpack.c.l.b16 %v8357
    %v10157 = vunpack.c.l.b16 %v8358
    %v10158 = vunpack.c.l.b16 %v8359
    %v10159 = vunpack.c.l.b16 %v8360
    %v10160 = vunpack.c.l.b16 %v8361
    %v10161 = vunpack.c.l.b16 %v8362
    %v10162 = vunpack.c.l.b16 %v8363
    %v10163 = vunpack.c.l.b16 %v8364
    %v10164 = vunpack.c.l.b16 %v8365
    %v10165 = vunpack.c.l.b16 %v8366
    %v10166 = vunpack.c.l.b16 %v8367
    %v10167 = vunpack.c.l.b16 %v8368
    %v10168 = vunpack.c.l.b16 %v8369
    %v10169 = vunpack.c.l.b16 %v8370
    %v10170 = vunpack.c.l.b16 %v8371
    %v10171 = vunpack.c.l.b16 %v8372
    %v10172 = vunpack.c.l.b16 %v8373
    %v10173 = vunpack.c.l.b16 %v8374
    %v10174 = vunpack.c.l.b16 %v8375
    %v10175 = vunpack.c.l.b16 %v8376
    %v10176 = vunpack.c.l.b16 %v8377
    %v10177 = vunpack.c.l.b16 %v8378
    %v10178 = vunpack.c.l.b16 %v8379
    %v10179 = vunpack.c.l.b16 %v8380
    %v10180 = vunpack.c.l.b16 %v8381
    %v10181 = vunpack.c.l.b16 %v8382
    %v10182 = vunpack.c.l.b16 %v8383
    %v10183 = vunpack.c.l.b16 %v8384
    %v10184 = vunpack.c.l.b16 %v8385
    %v10185 = vunpack.c.l.b16 %v8386
    %v10186 = vpack.c.b16 %v9291, %v9290
    %v10187 = vpack.c.b16 %v9293, %v9292
    %v10188 = vpack.c.b16 %v9295, %v9294
    %v10189 = vpack.c.b16 %v9297, %v9296
    %v10190 = vpack.c.b16 %v9299, %v9298
    %v10191 = vpack.c.b16 %v9301, %v9300
    %v10192 = vpack.c.b16 %v9303, %v9302
    %v10193 = vpack.c.b16 %v9305, %v9304
    %v10194 = vpack.c.b16 %v9307, %v9306
    %v10195 = vpack.c.b16 %v9309, %v9308
    %v10196 = vpack.c.b16 %v9311, %v9310
    %v10197 = vpack.c.b16 %v9313, %v9312
    %v10198 = vpack.c.b16 %v9315, %v9314
    %v10199 = vpack.c.b16 %v9317, %v9316
    %v10200 = vpack.c.b16 %v9319, %v9318
    %v10201 = vpack.c.b16 %v9321, %v9320
    %v10202 = vpack.c.b16 %v9323, %v9322
    %v10203 = vpack.c.b16 %v9325, %v9324
    %v10204 = vpack.c.b16 %v9327, %v9326
    %v10205 = vpack.c.b16 %v9329, %v9328
    %v10206 = vpack.c.b16 %v9331, %v9330
    %v10207 = vpack.c.b16 %v9333, %v9332
    %v10208 = vpack.c.b16 %v9335, %v9334
    %v10209 = vpack.c.b16 %v9337, %v9336
    %v10210 = vpack.c.b16 %v9339, %v9338
    %v10211 = vpack.c.b16 %v9341, %v9340
    %v10212 = vpack.c.b16 %v9343, %v9342
    %v10213 = vpack.c.b16 %v9345, %v9344
    %v10214 = vpack.c.b16 %v9347, %v9346
    %v10215 = vpack.c.b16 %v9349, %v9348
    %v10216 = vpack.c.b16 %v9351, %v9350
    %v10217 = vpack.c.b16 %v9353, %v9352
    %v10218 = vpack.c.b16 %v9355, %v9354
    %v10219 = vpack.c.b16 %v9357, %v9356
    %v10220 = vpack.c.b16 %v9359, %v9358
    %v10221 = vpack.c.b16 %v9361, %v9360
    %v10222 = vpack.c.b16 %v9363, %v9362
    %v10223 = vpack.c.b16 %v9365, %v9364
    %v10224 = vpack.c.b16 %v9367, %v9366
    %v10225 = vpack.c.b16 %v9369, %v9368
    %v10226 = vpack.c.b16 %v9371, %v9370
    %v10227 = vpack.c.b16 %v9373, %v9372
    %v10228 = vpack.c.b16 %v9375, %v9374
    %v10229 = vpack.c.b16 %v9377, %v9376
    %v10230 = vpack.c.b16 %v9379, %v9378
    %v10231 = vpack.c.b16 %v9381, %v9380
    %v10232 = vpack.c.b16 %v9383, %v9382
    %v10233 = vpack.c.b16 %v9385, %v9384
    %v10234 = vpack.c.b16 %v9387, %v9386
    %v10235 = vpack.c.b16 %v9389, %v9388
    %v10236 = vpack.c.b16 %v9391, %v9390
    %v10237 = vpack.c.b16 %v9393, %v9392
    %v10238 = vpack.c.b16 %v9395, %v9394
    %v10239 = vpack.c.b16 %v9397, %v9396
    %v10240 = vpack.c.b16 %v9399, %v9398
    %v10241 = vpack.c.b16 %v9401, %v9400
    %v10242 = vpack.c.b16 %v9403, %v9402
    %v10243 = vpack.c.b16 %v9405, %v9404
    %v10244 = vpack.c.b16 %v9407, %v9406
    %v10245 = vpack.c.b16 %v9409, %v9408
    %v10246 = vpack.c.b16 %v9411, %v9410
    %v10247 = vpack.c.b16 %v9413, %v9412
    %v10248 = vpack.c.b16 %v9415, %v9414
    %v10249 = vpack.c.b16 %v9417, %v9416
    %v10250 = vpack.c.b16 %v9419, %v9418
    %v10251 = vpack.c.b16 %v9421, %v9420
    %v10252 = vpack.c.b16 %v9423, %v9422
    %v10253 = vpack.c.b16 %v9425, %v9424
    %v10254 = vpack.c.b16 %v9427, %v9426
    %v10255 = vpack.c.b16 %v9429, %v9428
    %v10256 = vpack.c.b16 %v9431, %v9430
    %v10257 = vpack.c.b16 %v9433, %v9432
    %v10258 = vpack.c.b16 %v9435, %v9434
    %v10259 = vpack.c.b16 %v9437, %v9436
    %v10260 = vpack.c.b16 %v9439, %v9438
    %v10261 = vpack.c.b16 %v9441, %v9440
    %v10262 = vpack.c.b16 %v9443, %v9442
    %v10263 = vpack.c.b16 %v9445, %v9444
    %v10264 = vpack.c.b16 %v9447, %v9446
    %v10265 = vpack.c.b16 %v9449, %v9448
    %v10266 = vpack.c.b16 %v9451, %v9450
    %v10267 = vpack.c.b16 %v9453, %v9452
    %v10268 = vpack.c.b16 %v9455, %v9454
    %v10269 = vpack.c.b16 %v9457, %v9456
    %v10270 = vpack.c.b16 %v9459, %v9458
    %v10271 = vpack.c.b16 %v9461, %v9460
    %v10272 = vpack.c.b16 %v9463, %v9462
    %v10273 = vpack.c.b16 %v9465, %v9464
    %v10274 = vpack.c.b16 %v9467, %v9466
    %v10275 = vpack.c.b16 %v9469, %v9468
    %v10276 = vpack.c.b16 %v9471, %v9470
    %v10277 = vpack.c.b16 %v9473, %v9472
    %v10278 = vpack.c.b16 %v9475, %v9474
    %v10279 = vpack.c.b16 %v9477, %v9476
    %v10280 = vpack.c.b16 %v9479, %v9478
    %v10281 = vpack.c.b16 %v9481, %v9480
    %v10282 = vpack.c.b16 %v9483, %v9482
    %v10283 = vpack.c.b16 %v9485, %v9484
    %v10284 = vpack.c.b16 %v9487, %v9486
    %v10285 = vpack.c.b16 %v9489, %v9488
    %v10286 = vpack.c.b16 %v9491, %v9490
    %v10287 = vpack.c.b16 %v9493, %v9492
    %v10288 = vpack.c.b16 %v9495, %v9494
    %v10289 = vpack.c.b16 %v9497, %v9496
    %v10290 = vpack.c.b16 %v9499, %v9498
    %v10291 = vpack.c.b16 %v9501, %v9500
    %v10292 = vpack.c.b16 %v9503, %v9502
    %v10293 = vpack.c.b16 %v9505, %v9504
    %v10294 = vpack.c.b16 %v9507, %v9506
    %v10295 = vpack.c.b16 %v9509, %v9508
    %v10296 = vpack.c.b16 %v9511, %v9510
    %v10297 = vpack.c.b16 %v9513, %v9512
    %v10298 = vpack.c.b16 %v9515, %v9514
    %v10299 = vpack.c.b16 %v9517, %v9516
    %v10300 = vpack.c.b16 %v9519, %v9518
    %v10301 = vpack.c.b16 %v9521, %v9520
    %v10302 = vpack.c.b16 %v9523, %v9522
    %v10303 = vpack.c.b16 %v9525, %v9524
    %v10304 = vpack.c.b16 %v9527, %v9526
    %v10305 = vpack.c.b16 %v9529, %v9528
    %v10306 = vpack.c.b16 %v9531, %v9530
    %v10307 = vpack.c.b16 %v9533, %v9532
    %v10308 = vpack.c.b16 %v9535, %v9534
    %v10309 = vpack.c.b16 %v9537, %v9536
    %v10310 = vpack.c.b16 %v9539, %v9538
    %v10311 = vpack.c.b16 %v9541, %v9540
    %v10312 = vpack.c.b16 %v9543, %v9542
    %v10313 = vpack.c.b16 %v9545, %v9544
    %v10314 = vpack.c.b16 %v9547, %v9546
    %v10315 = vpack.c.b16 %v9549, %v9548
    %v10316 = vpack.c.b16 %v9551, %v9550
    %v10317 = vpack.c.b16 %v9553, %v9552
    %v10318 = vpack.c.b16 %v9555, %v9554
    %v10319 = vpack.c.b16 %v9557, %v9556
    %v10320 = vpack.c.b16 %v9559, %v9558
    %v10321 = vpack.c.b16 %v9561, %v9560
    %v10322 = vpack.c.b16 %v9563, %v9562
    %v10323 = vpack.c.b16 %v9565, %v9564
    %v10324 = vpack.c.b16 %v9567, %v9566
    %v10325 = vpack.c.b16 %v9569, %v9568
    %v10326 = vpack.c.b16 %v9571, %v9570
    %v10327 = vpack.c.b16 %v9573, %v9572
    %v10328 = vpack.c.b16 %v9575, %v9574
    %v10329 = vpack.c.b16 %v9577, %v9576
    %v10330 = vpack.c.b16 %v9579, %v9578
    %v10331 = vpack.c.b16 %v9581, %v9580
    %v10332 = vpack.c.b16 %v9583, %v9582
    %v10333 = vpack.c.b16 %v9585, %v9584
    %v10334 = vpack.c.b16 %v9587, %v9586
    %v10335 = vpack.c.b16 %v9589, %v9588
    %v10336 = vpack.c.b16 %v9591, %v9590
    %v10337 = vpack.c.b16 %v9593, %v9592
    %v10338 = vpack.c.b16 %v9595, %v9594
    %v10339 = vpack.c.b16 %v9597, %v9596
    %v10340 = vpack.c.b16 %v9599, %v9598
    %v10341 = vpack.c.b16 %v9601, %v9600
    %v10342 = vpack.c.b16 %v9603, %v9602
    %v10343 = vpack.c.b16 %v9605, %v9604
    %v10344 = vpack.c.b16 %v9607, %v9606
    %v10345 = vpack.c.b16 %v9609, %v9608
    %v10346 = vpack.c.b16 %v9611, %v9610
    %v10347 = vpack.c.b16 %v9613, %v9612
    %v10348 = vpack.c.b16 %v9615, %v9614
    %v10349 = vpack.c.b16 %v9617, %v9616
    %v10350 = vpack.c.b16 %v9619, %v9618
    %v10351 = vpack.c.b16 %v9621, %v9620
    %v10352 = vpack.c.b16 %v9623, %v9622
    %v10353 = vpack.c.b16 %v9625, %v9624
    %v10354 = vpack.c.b16 %v9627, %v9626
    %v10355 = vpack.c.b16 %v9629, %v9628
    %v10356 = vpack.c.b16 %v9631, %v9630
    %v10357 = vpack.c.b16 %v9633, %v9632
    %v10358 = vpack.c.b16 %v9635, %v9634
    %v10359 = vpack.c.b16 %v9637, %v9636
    %v10360 = vpack.c.b16 %v9639, %v9638
    %v10361 = vpack.c.b16 %v9641, %v9640
    %v10362 = vpack.c.b16 %v9643, %v9642
    %v10363 = vpack.c.b16 %v9645, %v9644
    %v10364 = vpack.c.b16 %v9647, %v9646
    %v10365 = vpack.c.b16 %v9649, %v9648
    %v10366 = vpack.c.b16 %v9651, %v9650
    %v10367 = vpack.c.b16 %v9653, %v9652
    %v10368 = vpack.c.b16 %v9655, %v9654
    %v10369 = vpack.c.b16 %v9657, %v9656
    %v10370 = vpack.c.b16 %v9659, %v9658
    %v10371 = vpack.c.b16 %v9661, %v9660
    %v10372 = vpack.c.b16 %v9663, %v9662
    %v10373 = vpack.c.b16 %v9665, %v9664
    %v10374 = vpack.c.b16 %v9667, %v9666
    %v10375 = vpack.c.b16 %v9669, %v9668
    %v10376 = vpack.c.b16 %v9671, %v9670
    %v10377 = vpack.c.b16 %v9673, %v9672
    %v10378 = vpack.c.b16 %v9675, %v9674
    %v10379 = vpack.c.b16 %v9677, %v9676
    %v10380 = vpack.c.b16 %v9679, %v9678
    %v10381 = vpack.c.b16 %v9681, %v9680
    %v10382 = vpack.c.b16 %v9683, %v9682
    %v10383 = vpack.c.b16 %v9685, %v9684
    %v10384 = vpack.c.b16 %v9687, %v9686
    %v10385 = vpack.c.b16 %v9689, %v9688
    %v10386 = vpack.c.b16 %v9691, %v9690
    %v10387 = vpack.c.b16 %v9693, %v9692
    %v10388 = vpack.c.b16 %v9695, %v9694
    %v10389 = vpack.c.b16 %v9697, %v9696
    %v10390 = vpack.c.b16 %v9699, %v9698
    %v10391 = vpack.c.b16 %v9701, %v9700
    %v10392 = vpack.c.b16 %v9703, %v9702
    %v10393 = vpack.c.b16 %v9705, %v9704
    %v10394 = vpack.c.b16 %v9707, %v9706
    %v10395 = vpack.c.b16 %v9709, %v9708
    %v10396 = vpack.c.b16 %v9711, %v9710
    %v10397 = vpack.c.b16 %v9713, %v9712
    %v10398 = vpack.c.b16 %v9715, %v9714
    %v10399 = vpack.c.b16 %v9717, %v9716
    %v10400 = vpack.c.b16 %v9719, %v9718
    %v10401 = vpack.c.b16 %v9721, %v9720
    %v10402 = vpack.c.b16 %v9723, %v9722
    %v10403 = vpack.c.b16 %v9725, %v9724
    %v10404 = vpack.c.b16 %v9727, %v9726
    %v10405 = vpack.c.b16 %v9729, %v9728
    %v10406 = vpack.c.b16 %v9731, %v9730
    %v10407 = vpack.c.b16 %v9733, %v9732
    %v10408 = vpack.c.b16 %v9735, %v9734
    %v10409 = vpack.c.b16 %v9737, %v9736
    %v10410 = vpack.c.b16 %v9739, %v9738
    %v10411 = vpack.c.b16 %v9741, %v9740
    %v10412 = vpack.c.b16 %v9743, %v9742
    %v10413 = vpack.c.b16 %v9745, %v9744
    %v10414 = vpack.c.b16 %v9747, %v9746
    %v10415 = vpack.c.b16 %v9749, %v9748
    %v10416 = vpack.c.b16 %v9751, %v9750
    %v10417 = vpack.c.b16 %v9753, %v9752
    %v10418 = vpack.c.b16 %v9755, %v9754
    %v10419 = vpack.c.b16 %v9757, %v9756
    %v10420 = vpack.c.b16 %v9759, %v9758
    %v10421 = vpack.c.b16 %v9761, %v9760
    %v10422 = vpack.c.b16 %v9763, %v9762
    %v10423 = vpack.c.b16 %v9765, %v9764
    %v10424 = vpack.c.b16 %v9767, %v9766
    %v10425 = vpack.c.b16 %v9769, %v9768
    %v10426 = vpack.c.b16 %v9771, %v9770
    %v10427 = vpack.c.b16 %v9773, %v9772
    %v10428 = vpack.c.b16 %v9775, %v9774
    %v10429 = vpack.c.b16 %v9777, %v9776
    %v10430 = vpack.c.b16 %v9779, %v9778
    %v10431 = vpack.c.b16 %v9781, %v9780
    %v10432 = vpack.c.b16 %v9783, %v9782
    %v10433 = vpack.c.b16 %v9785, %v9784
    %v10434 = vpack.c.b16 %v9787, %v9786
    %v10435 = vpack.c.b16 %v9789, %v9788
    %v10436 = vpack.c.b16 %v9791, %v9790
    %v10437 = vpack.c.b16 %v9793, %v9792
    %v10438 = vpack.c.b16 %v9795, %v9794
    %v10439 = vpack.c.b16 %v9797, %v9796
    %v10440 = vpack.c.b16 %v9799, %v9798
    %v10441 = vpack.c.b16 %v9801, %v9800
    %v10442 = vpack.c.b16 %v9803, %v9802
    %v10443 = vpack.c.b16 %v9805, %v9804
    %v10444 = vpack.c.b16 %v9807, %v9806
    %v10445 = vpack.c.b16 %v9809, %v9808
    %v10446 = vpack.c.b16 %v9811, %v9810
    %v10447 = vpack.c.b16 %v9813, %v9812
    %v10448 = vpack.c.b16 %v9815, %v9814
    %v10449 = vpack.c.b16 %v9817, %v9816
    %v10450 = vpack.c.b16 %v9819, %v9818
    %v10451 = vpack.c.b16 %v9821, %v9820
    %v10452 = vpack.c.b16 %v9823, %v9822
    %v10453 = vpack.c.b16 %v9825, %v9824
    %v10454 = vpack.c.b16 %v9827, %v9826
    %v10455 = vpack.c.b16 %v9829, %v9828
    %v10456 = vpack.c.b16 %v9831, %v9830
    %v10457 = vpack.c.b16 %v9833, %v9832
    %v10458 = vpack.c.b16 %v9835, %v9834
    %v10459 = vpack.c.b16 %v9837, %v9836
    %v10460 = vpack.c.b16 %v9839, %v9838
    %v10461 = vpack.c.b16 %v9841, %v9840
    %v10462 = vpack.c.b16 %v9843, %v9842
    %v10463 = vpack.c.b16 %v9845, %v9844
    %v10464 = vpack.c.b16 %v9847, %v9846
    %v10465 = vpack.c.b16 %v9849, %v9848
    %v10466 = vpack.c.b16 %v9851, %v9850
    %v10467 = vpack.c.b16 %v9853, %v9852
    %v10468 = vpack.c.b16 %v9855, %v9854
    %v10469 = vpack.c.b16 %v9857, %v9856
    %v10470 = vpack.c.b16 %v9859, %v9858
    %v10471 = vpack.c.b16 %v9861, %v9860
    %v10472 = vpack.c.b16 %v9863, %v9862
    %v10473 = vpack.c.b16 %v9865, %v9864
    %v10474 = vpack.c.b16 %v9867, %v9866
    %v10475 = vpack.c.b16 %v9869, %v9868
    %v10476 = vpack.c.b16 %v9871, %v9870
    %v10477 = vpack.c.b16 %v9873, %v9872
    %v10478 = vpack.c.b16 %v9875, %v9874
    %v10479 = vpack.c.b16 %v9877, %v9876
    %v10480 = vpack.c.b16 %v9879, %v9878
    %v10481 = vpack.c.b16 %v9881, %v9880
    %v10482 = vpack.c.b16 %v9883, %v9882
    %v10483 = vpack.c.b16 %v9885, %v9884
    %v10484 = vpack.c.b16 %v9887, %v9886
    %v10485 = vpack.c.b16 %v9889, %v9888
    %v10486 = vpack.c.b16 %v9891, %v9890
    %v10487 = vpack.c.b16 %v9893, %v9892
    %v10488 = vpack.c.b16 %v9895, %v9894
    %v10489 = vpack.c.b16 %v9897, %v9896
    %v10490 = vpack.c.b16 %v9899, %v9898
    %v10491 = vpack.c.b16 %v9901, %v9900
    %v10492 = vpack.c.b16 %v9903, %v9902
    %v10493 = vpack.c.b16 %v9905, %v9904
    %v10494 = vpack.c.b16 %v9907, %v9906
    %v10495 = vpack.c.b16 %v9909, %v9908
    %v10496 = vpack.c.b16 %v9911, %v9910
    %v10497 = vpack.c.b16 %v9913, %v9912
    %v10498 = vpack.c.b16 %v9915, %v9914
    %v10499 = vpack.c.b16 %v9917, %v9916
    %v10500 = vpack.c.b16 %v9919, %v9918
    %v10501 = vpack.c.b16 %v9921, %v9920
    %v10502 = vpack.c.b16 %v9923, %v9922
    %v10503 = vpack.c.b16 %v9925, %v9924
    %v10504 = vpack.c.b16 %v9927, %v9926
    %v10505 = vpack.c.b16 %v9929, %v9928
    %v10506 = vpack.c.b16 %v9931, %v9930
    %v10507 = vpack.c.b16 %v9933, %v9932
    %v10508 = vpack.c.b16 %v9935, %v9934
    %v10509 = vpack.c.b16 %v9937, %v9936
    %v10510 = vpack.c.b16 %v9939, %v9938
    %v10511 = vpack.c.b16 %v9941, %v9940
    %v10512 = vpack.c.b16 %v9943, %v9942
    %v10513 = vpack.c.b16 %v9945, %v9944
    %v10514 = vpack.c.b16 %v9947, %v9946
    %v10515 = vpack.c.b16 %v9949, %v9948
    %v10516 = vpack.c.b16 %v9951, %v9950
    %v10517 = vpack.c.b16 %v9953, %v9952
    %v10518 = vpack.c.b16 %v9955, %v9954
    %v10519 = vpack.c.b16 %v9957, %v9956
    %v10520 = vpack.c.b16 %v9959, %v9958
    %v10521 = vpack.c.b16 %v9961, %v9960
    %v10522 = vpack.c.b16 %v9963, %v9962
    %v10523 = vpack.c.b16 %v9965, %v9964
    %v10524 = vpack.c.b16 %v9967, %v9966
    %v10525 = vpack.c.b16 %v9969, %v9968
    %v10526 = vpack.c.b16 %v9971, %v9970
    %v10527 = vpack.c.b16 %v9973, %v9972
    %v10528 = vpack.c.b16 %v9975, %v9974
    %v10529 = vpack.c.b16 %v9977, %v9976
    %v10530 = vpack.c.b16 %v9979, %v9978
    %v10531 = vpack.c.b16 %v9981, %v9980
    %v10532 = vpack.c.b16 %v9983, %v9982
    %v10533 = vpack.c.b16 %v9985, %v9984
    %v10534 = vpack.c.b16 %v9987, %v9986
    %v10535 = vpack.c.b16 %v9989, %v9988
    %v10536 = vpack.c.b16 %v9991, %v9990
    %v10537 = vpack.c.b16 %v9993, %v9992
    %v10538 = vpack.c.b16 %v9995, %v9994
    %v10539 = vpack.c.b16 %v9997, %v9996
    %v10540 = vpack.c.b16 %v9999, %v9998
    %v10541 = vpack.c.b16 %v10001, %v10000
    %v10542 = vpack.c.b16 %v10003, %v10002
    %v10543 = vpack.c.b16 %v10005, %v10004
    %v10544 = vpack.c.b16 %v10007, %v10006
    %v10545 = vpack.c.b16 %v10009, %v10008
    %v10546 = vpack.c.b16 %v10011, %v10010
    %v10547 = vpack.c.b16 %v10013, %v10012
    %v10548 = vpack.c.b16 %v10015, %v10014
    %v10549 = vpack.c.b16 %v10017, %v10016
    %v10550 = vpack.c.b16 %v10019, %v10018
    %v10551 = vpack.c.b16 %v10021, %v10020
    %v10552 = vpack.c.b16 %v10023, %v10022
    %v10553 = vpack.c.b16 %v10025, %v10024
    %v10554 = vpack.c.b16 %v10027, %v10026
    %v10555 = vpack.c.b16 %v10029, %v10028
    %v10556 = vpack.c.b16 %v10031, %v10030
    %v10557 = vpack.c.b16 %v10033, %v10032
    %v10558 = vpack.c.b16 %v10035, %v10034
    %v10559 = vpack.c.b16 %v10037, %v10036
    %v10560 = vpack.c.b16 %v10039, %v10038
    %v10561 = vpack.c.b16 %v10041, %v10040
    %v10562 = vpack.c.b16 %v10043, %v10042
    %v10563 = vpack.c.b16 %v10045, %v10044
    %v10564 = vpack.c.b16 %v10047, %v10046
    %v10565 = vpack.c.b16 %v10049, %v10048
    %v10566 = vpack.c.b16 %v10051, %v10050
    %v10567 = vpack.c.b16 %v10053, %v10052
    %v10568 = vpack.c.b16 %v10055, %v10054
    %v10569 = vpack.c.b16 %v10057, %v10056
    %v10570 = vpack.c.b16 %v10059, %v10058
    %v10571 = vpack.c.b16 %v10061, %v10060
    %v10572 = vpack.c.b16 %v10063, %v10062
    %v10573 = vpack.c.b16 %v10065, %v10064
    %v10574 = vpack.c.b16 %v10067, %v10066
    %v10575 = vpack.c.b16 %v10069, %v10068
    %v10576 = vpack.c.b16 %v10071, %v10070
    %v10577 = vpack.c.b16 %v10073, %v10072
    %v10578 = vpack.c.b16 %v10075, %v10074
    %v10579 = vpack.c.b16 %v10077, %v10076
    %v10580 = vpack.c.b16 %v10079, %v10078
    %v10581 = vpack.c.b16 %v10081, %v10080
    %v10582 = vpack.c.b16 %v10083, %v10082
    %v10583 = vpack.c.b16 %v10085, %v10084
    %v10584 = vpack.c.b16 %v10087, %v10086
    %v10585 = vpack.c.b16 %v10089, %v10088
    %v10586 = vpack.c.b16 %v10091, %v10090
    %v10587 = vpack.c.b16 %v10093, %v10092
    %v10588 = vpack.c.b16 %v10095, %v10094
    %v10589 = vpack.c.b16 %v10097, %v10096
    %v10590 = vpack.c.b16 %v10099, %v10098
    %v10591 = vpack.c.b16 %v10101, %v10100
    %v10592 = vpack.c.b16 %v10103, %v10102
    %v10593 = vpack.c.b16 %v10105, %v10104
    %v10594 = vpack.c.b16 %v10107, %v10106
    %v10595 = vpack.c.b16 %v10109, %v10108
    %v10596 = vpack.c.b16 %v10111, %v10110
    %v10597 = vpack.c.b16 %v10113, %v10112
    %v10598 = vpack.c.b16 %v10115, %v10114
    %v10599 = vpack.c.b16 %v10117, %v10116
    %v10600 = vpack.c.b16 %v10119, %v10118
    %v10601 = vpack.c.b16 %v10121, %v10120
    %v10602 = vpack.c.b16 %v10123, %v10122
    %v10603 = vpack.c.b16 %v10125, %v10124
    %v10604 = vpack.c.b16 %v10127, %v10126
    %v10605 = vpack.c.b16 %v10129, %v10128
    %v10606 = vpack.c.b16 %v10131, %v10130
    %v10607 = vpack.c.b16 %v10133, %v10132
    %v10608 = vpack.c.b16 %v10135, %v10134
    %v10609 = vpack.c.b16 %v10137, %v10136
    %v10610 = vpack.c.b16 %v10139, %v10138
    %v10611 = vpack.c.b16 %v10141, %v10140
    %v10612 = vpack.c.b16 %v10143, %v10142
    %v10613 = vpack.c.b16 %v10145, %v10144
    %v10614 = vpack.c.b16 %v10147, %v10146
    %v10615 = vpack.c.b16 %v10149, %v10148
    %v10616 = vpack.c.b16 %v10151, %v10150
    %v10617 = vpack.c.b16 %v10153, %v10152
    %v10618 = vpack.c.b16 %v10155, %v10154
    %v10619 = vpack.c.b16 %v10157, %v10156
    %v10620 = vpack.c.b16 %v10159, %v10158
    %v10621 = vpack.c.b16 %v10161, %v10160
    %v10622 = vpack.c.b16 %v10163, %v10162
    %v10623 = vpack.c.b16 %v10165, %v10164
    %v10624 = vpack.c.b16 %v10167, %v10166
    %v10625 = vpack.c.b16 %v10169, %v10168
    %v10626 = vpack.c.b16 %v10171, %v10170
    %v10627 = vpack.c.b16 %v10173, %v10172
    %v10628 = vpack.c.b16 %v10175, %v10174
    %v10629 = vpack.c.b16 %v10177, %v10176
    %v10630 = vpack.c.b16 %v10179, %v10178
    %v10631 = vpack.c.b16 %v10181, %v10180
    %v10632 = vpack.c.b16 %v10183, %v10182
    %v10633 = vpack.c.b16 %v10185, %v10184
    %11082 = vmatprep.subr.bf16.mxu0 0
    %11083 = vmatpush1.bf16.msra.mxu0 %v10186
    %11084 = vmatprep.subr.bf16.mxu0 0
    %11085 = vmatpush1.bf16.msra.mxu0 %v10187
    %11086 = vmatprep.subr.bf16.mxu0 0
    %11087 = vmatpush1.bf16.msra.mxu0 %v10188
    %11088 = vmatprep.subr.bf16.mxu0 0
    %11089 = vmatpush1.bf16.msra.mxu0 %v10189
    %11090 = vmatprep.subr.bf16.mxu0 0
    %11091 = vmatpush1.bf16.msra.mxu0 %v10190
    %11092 = vmatprep.subr.bf16.mxu0 0
    %11093 = vmatpush1.bf16.msra.mxu0 %v10191
    %11094 = vmatprep.subr.bf16.mxu0 0
    %11095 = vmatpush1.bf16.msra.mxu0 %v10192
    %11096 = vmatprep.subr.bf16.mxu0 0
    %11097 = vmatpush1.bf16.msra.mxu0 %v10193
    %11098 = vmatprep.subr.bf16.mxu0 0
    %11099 = vmatpush1.bf16.msra.mxu0 %v10194
    %11100 = vmatprep.subr.bf16.mxu0 0
    %11101 = vmatpush1.bf16.msra.mxu0 %v10195
    %11102 = vmatprep.subr.bf16.mxu0 0
    %11103 = vmatpush1.bf16.msra.mxu0 %v10196
    %11104 = vmatprep.subr.bf16.mxu0 0
    %11105 = vmatpush1.bf16.msra.mxu0 %v10197
    %11106 = vmatprep.subr.bf16.mxu0 0
    %11107 = vmatpush1.bf16.msra.mxu0 %v10198
    %11108 = vmatprep.subr.bf16.mxu0 0
    %11109 = vmatpush1.bf16.msra.mxu0 %v10199
    %11110 = vmatprep.subr.bf16.mxu0 0
    %11111 = vmatpush1.bf16.msra.mxu0 %v10200
    %11112 = vmatprep.subr.bf16.mxu0 0
    %11113 = vmatpush1.bf16.msra.mxu0 %v10201
    %11114 = vmatprep.mubr.bf16.mxu0 %v7436
    %11115 = vmatmul.mubr.bf16.gmra.mrb[0].mxu0 %v7435
    %v11116 = vpop.f32.mrb[0].mxu0
    %v11117 = vadd.f32 %v8392, %v11116
    %v11118 = vpop.f32.mrb[0].mxu0
    %v11119 = vpop.f32.mrb[0].mxu0
    %v11120 = vpop.f32.mrb[0].mxu0
    %11121 = vdwg.mxu0
    %11122 = vmatprep.subr.bf16.mxu0 0
    %11123 = vmatpush1.bf16.msra.mxu0 %v10202
    %11124 = vmatprep.subr.bf16.mxu0 0
    %11125 = vmatpush1.bf16.msra.mxu0 %v10203
    %11126 = vmatprep.subr.bf16.mxu0 0
    %11127 = vmatpush1.bf16.msra.mxu0 %v10204
    %11128 = vmatprep.subr.bf16.mxu0 0
    %11129 = vmatpush1.bf16.msra.mxu0 %v10205
    %11130 = vmatprep.subr.bf16.mxu0 0
    %11131 = vmatpush1.bf16.msra.mxu0 %v10206
    %11132 = vmatprep.subr.bf16.mxu0 0
    %11133 = vmatpush1.bf16.msra.mxu0 %v10207
    %11134 = vmatprep.subr.bf16.mxu0 0
    %11135 = vmatpush1.bf16.msra.mxu0 %v10208
    %11136 = vmatprep.subr.bf16.mxu0 0
    %11137 = vmatpush1.bf16.msra.mxu0 %v10209
    %11138 = vmatprep.subr.bf16.mxu0 0
    %11139 = vmatpush1.bf16.msra.mxu0 %v10210
    %11140 = vmatprep.subr.bf16.mxu0 0
    %11141 = vmatpush1.bf16.msra.mxu0 %v10211
    %11142 = vmatprep.subr.bf16.mxu0 0
    %11143 = vmatpush1.bf16.msra.mxu0 %v10212
    %11144 = vmatprep.subr.bf16.mxu0 0
    %11145 = vmatpush1.bf16.msra.mxu0 %v10213
    %11146 = vmatprep.subr.bf16.mxu0 0
    %11147 = vmatpush1.bf16.msra.mxu0 %v10214
    %11148 = vmatprep.subr.bf16.mxu0 0
    %11149 = vmatpush1.bf16.msra.mxu0 %v10215
    %11150 = vmatprep.subr.bf16.mxu0 0
    %11151 = vmatpush1.bf16.msra.mxu0 %v10216
    %11152 = vmatprep.subr.bf16.mxu0 0
    %11153 = vmatpush1.bf16.msra.mxu0 %v10217
    %11154 = vmatprep.mubr.bf16.mxu0 %v7438
    %11155 = vmatmul.mubr.bf16.gmra.mrb[0].mxu0 %v7437
    %v11156 = vpop.f32.mrb[0].mxu0
    %v11157 = vadd.f32 %v11117, %v11156
    %v11158 = vpop.f32.mrb[0].mxu0
    %v11159 = vpop.f32.mrb[0].mxu0
    %v11160 = vpop.f32.mrb[0].mxu0
    %11161 = vdwg.mxu0
    %11162 = vmatprep.subr.bf16.mxu0 0
    %11163 = vmatpush1.bf16.msra.mxu0 %v10218
    %11164 = vmatprep.subr.bf16.mxu0 0
    %11165 = vmatpush1.bf16.msra.mxu0 %v10219
    %11166 = vmatprep.subr.bf16.mxu0 0
    %11167 = vmatpush1.bf16.msra.mxu0 %v10220
    %11168 = vmatprep.subr.bf16.mxu0 0
    %11169 = vmatpush1.bf16.msra.mxu0 %v10221
    %11170 = vmatprep.subr.bf16.mxu0 0
    %11171 = vmatpush1.bf16.msra.mxu0 %v10222
    %11172 = vmatprep.subr.bf16.mxu0 0
    %11173 = vmatpush1.bf16.msra.mxu0 %v10223
    %11174 = vmatprep.subr.bf16.mxu0 0
    %11175 = vmatpush1.bf16.msra.mxu0 %v10224
    %11176 = vmatprep.subr.bf16.mxu0 0
    %11177 = vmatpush1.bf16.msra.mxu0 %v10225
    %11178 = vmatprep.subr.bf16.mxu0 0
    %11179 = vmatpush1.bf16.msra.mxu0 %v10226
    %11180 = vmatprep.subr.bf16.mxu0 0
    %11181 = vmatpush1.bf16.msra.mxu0 %v10227
    %11182 = vmatprep.subr.bf16.mxu0 0
    %11183 = vmatpush1.bf16.msra.mxu0 %v10228
    %11184 = vmatprep.subr.bf16.mxu0 0
    %11185 = vmatpush1.bf16.msra.mxu0 %v10229
    %11186 = vmatprep.subr.bf16.mxu0 0
    %11187 = vmatpush1.bf16.msra.mxu0 %v10230
    %11188 = vmatprep.subr.bf16.mxu0 0
    %11189 = vmatpush1.bf16.msra.mxu0 %v10231
    %11190 = vmatprep.subr.bf16.mxu0 0
    %11191 = vmatpush1.bf16.msra.mxu0 %v10232
    %11192 = vmatprep.subr.bf16.mxu0 0
    %11193 = vmatpush1.bf16.msra.mxu0 %v10233
    %11194 = vmatprep.mubr.bf16.mxu0 %v7440
    %11195 = vmatmul.mubr.bf16.gmra.mrb[0].mxu0 %v7439
    %v11196 = vpop.f32.mrb[0].mxu0
    %v11197 = vadd.f32 %v11157, %v11196
    %v11198 = vpop.f32.mrb[0].mxu0
    %v11199 = vpop.f32.mrb[0].mxu0
    %v11200 = vpop.f32.mrb[0].mxu0
    %11201 = vdwg.mxu0
    %11202 = vmatprep.subr.bf16.mxu0 0
    %11203 = vmatpush1.bf16.msra.mxu0 %v10234
    %11204 = vmatprep.subr.bf16.mxu0 0
    %11205 = vmatpush1.bf16.msra.mxu0 %v10235
    %11206 = vmatprep.subr.bf16.mxu0 0
    %11207 = vmatpush1.bf16.msra.mxu0 %v10236
    %11208 = vmatprep.subr.bf16.mxu0 0
    %11209 = vmatpush1.bf16.msra.mxu0 %v10237
    %11210 = vmatprep.subr.bf16.mxu0 0
    %11211 = vmatpush1.bf16.msra.mxu0 %v10238
    %11212 = vmatprep.subr.bf16.mxu0 0
    %11213 = vmatpush1.bf16.msra.mxu0 %v10239
    %11214 = vmatprep.subr.bf16.mxu0 0
    %11215 = vmatpush1.bf16.msra.mxu0 %v10240
    %11216 = vmatprep.subr.bf16.mxu0 0
    %11217 = vmatpush1.bf16.msra.mxu0 %v10241
    %11218 = vmatprep.subr.bf16.mxu0 0
    %11219 = vmatpush1.bf16.msra.mxu0 %v10242
    %11220 = vmatprep.subr.bf16.mxu0 0
    %11221 = vmatpush1.bf16.msra.mxu0 %v10243
    %11222 = vmatprep.subr.bf16.mxu0 0
    %11223 = vmatpush1.bf16.msra.mxu0 %v10244
    %11224 = vmatprep.subr.bf16.mxu0 0
    %11225 = vmatpush1.bf16.msra.mxu0 %v10245
    %11226 = vmatprep.subr.bf16.mxu0 0
    %11227 = vmatpush1.bf16.msra.mxu0 %v10246
    %11228 = vmatprep.subr.bf16.mxu0 0
    %11229 = vmatpush1.bf16.msra.mxu0 %v10247
    %11230 = vmatprep.subr.bf16.mxu0 0
    %11231 = vmatpush1.bf16.msra.mxu0 %v10248
    %11232 = vmatprep.subr.bf16.mxu0 0
    %11233 = vmatpush1.bf16.msra.mxu0 %v10249
    %11234 = vmatprep.mubr.bf16.mxu0 %v7442
    %11235 = vmatmul.mubr.bf16.gmra.mrb[0].mxu0 %v7441
    %v11236 = vpop.f32.mrb[0].mxu0
    %v11237 = vadd.f32 %v11197, %v11236
    %v11238 = vpop.f32.mrb[0].mxu0
    %v11239 = vpop.f32.mrb[0].mxu0
    %v11240 = vpop.f32.mrb[0].mxu0
    %11241 = vdwg.mxu0
    %11242 = vmatprep.subr.bf16.mxu0 0
    %11243 = vmatpush1.bf16.msra.mxu0 %v10250
    %11244 = vmatprep.subr.bf16.mxu0 0
    %11245 = vmatpush1.bf16.msra.mxu0 %v10251
    %11246 = vmatprep.subr.bf16.mxu0 0
    %11247 = vmatpush1.bf16.msra.mxu0 %v10252
    %11248 = vmatprep.subr.bf16.mxu0 0
    %11249 = vmatpush1.bf16.msra.mxu0 %v10253
    %11250 = vmatprep.subr.bf16.mxu0 0
    %11251 = vmatpush1.bf16.msra.mxu0 %v10254
    %11252 = vmatprep.subr.bf16.mxu0 0
    %11253 = vmatpush1.bf16.msra.mxu0 %v10255
    %11254 = vmatprep.subr.bf16.mxu0 0
    %11255 = vmatpush1.bf16.msra.mxu0 %v10256
    %11256 = vmatprep.subr.bf16.mxu0 0
    %11257 = vmatpush1.bf16.msra.mxu0 %v10257
    %11258 = vmatprep.subr.bf16.mxu0 0
    %11259 = vmatpush1.bf16.msra.mxu0 %v10258
    %11260 = vmatprep.subr.bf16.mxu0 0
    %11261 = vmatpush1.bf16.msra.mxu0 %v10259
    %11262 = vmatprep.subr.bf16.mxu0 0
    %11263 = vmatpush1.bf16.msra.mxu0 %v10260
    %11264 = vmatprep.subr.bf16.mxu0 0
    %11265 = vmatpush1.bf16.msra.mxu0 %v10261
    %11266 = vmatprep.subr.bf16.mxu0 0
    %11267 = vmatpush1.bf16.msra.mxu0 %v10262
    %11268 = vmatprep.subr.bf16.mxu0 0
    %11269 = vmatpush1.bf16.msra.mxu0 %v10263
    %11270 = vmatprep.subr.bf16.mxu0 0
    %11271 = vmatpush1.bf16.msra.mxu0 %v10264
    %11272 = vmatprep.subr.bf16.mxu0 0
    %11273 = vmatpush1.bf16.msra.mxu0 %v10265
    %11274 = vmatprep.mubr.bf16.mxu0 %v7444
    %11275 = vmatmul.mubr.bf16.gmra.mrb[0].mxu0 %v7443
    %v11276 = vpop.f32.mrb[0].mxu0
    %v11277 = vadd.f32 %v11237, %v11276
    %v11278 = vpop.f32.mrb[0].mxu0
    %v11279 = vpop.f32.mrb[0].mxu0
    %v11280 = vpop.f32.mrb[0].mxu0
    %11281 = vdwg.mxu0
    %11282 = vmatprep.subr.bf16.mxu0 0
    %11283 = vmatpush1.bf16.msra.mxu0 %v10266
    %11284 = vmatprep.subr.bf16.mxu0 0
    %11285 = vmatpush1.bf16.msra.mxu0 %v10267
    %11286 = vmatprep.subr.bf16.mxu0 0
    %11287 = vmatpush1.bf16.msra.mxu0 %v10268
    %11288 = vmatprep.subr.bf16.mxu0 0
    %11289 = vmatpush1.bf16.msra.mxu0 %v10269
    %11290 = vmatprep.subr.bf16.mxu0 0
    %11291 = vmatpush1.bf16.msra.mxu0 %v10270
    %11292 = vmatprep.subr.bf16.mxu0 0
    %11293 = vmatpush1.bf16.msra.mxu0 %v10271
    %11294 = vmatprep.subr.bf16.mxu0 0
    %11295 = vmatpush1.bf16.msra.mxu0 %v10272
    %11296 = vmatprep.subr.bf16.mxu0 0
    %11297 = vmatpush1.bf16.msra.mxu0 %v10273
    %11298 = vmatprep.subr.bf16.mxu0 0
    %11299 = vmatpush1.bf16.msra.mxu0 %v10274
    %11300 = vmatprep.subr.bf16.mxu0 0
    %11301 = vmatpush1.bf16.msra.mxu0 %v10275
    %11302 = vmatprep.subr.bf16.mxu0 0
    %11303 = vmatpush1.bf16.msra.mxu0 %v10276
    %11304 = vmatprep.subr.bf16.mxu0 0
    %11305 = vmatpush1.bf16.msra.mxu0 %v10277
    %11306 = vmatprep.subr.bf16.mxu0 0
    %11307 = vmatpush1.bf16.msra.mxu0 %v10278
    %11308 = vmatprep.subr.bf16.mxu0 0
    %11309 = vmatpush1.bf16.msra.mxu0 %v10279
    %11310 = vmatprep.subr.bf16.mxu0 0
    %11311 = vmatpush1.bf16.msra.mxu0 %v10280
    %11312 = vmatprep.subr.bf16.mxu0 0
    %11313 = vmatpush1.bf16.msra.mxu0 %v10281
    %11314 = vmatprep.mubr.bf16.mxu0 %v7446
    %11315 = vmatmul.mubr.bf16.gmra.mrb[0].mxu0 %v7445
    %v11316 = vpop.f32.mrb[0].mxu0
    %v11317 = vadd.f32 %v11277, %v11316
    %v11318 = vpop.f32.mrb[0].mxu0
    %v11319 = vpop.f32.mrb[0].mxu0
    %v11320 = vpop.f32.mrb[0].mxu0
    %11321 = vdwg.mxu0
    %11322 = vmatprep.subr.bf16.mxu0 0
    %11323 = vmatpush1.bf16.msra.mxu0 %v10282
    %11324 = vmatprep.subr.bf16.mxu0 0
    %11325 = vmatpush1.bf16.msra.mxu0 %v10283
    %11326 = vmatprep.subr.bf16.mxu0 0
    %11327 = vmatpush1.bf16.msra.mxu0 %v10284
    %11328 = vmatprep.subr.bf16.mxu0 0
    %11329 = vmatpush1.bf16.msra.mxu0 %v10285
    %11330 = vmatprep.subr.bf16.mxu0 0
    %11331 = vmatpush1.bf16.msra.mxu0 %v10286
    %11332 = vmatprep.subr.bf16.mxu0 0
    %11333 = vmatpush1.bf16.msra.mxu0 %v10287
    %11334 = vmatprep.subr.bf16.mxu0 0
    %11335 = vmatpush1.bf16.msra.mxu0 %v10288
    %11336 = vmatprep.subr.bf16.mxu0 0
    %11337 = vmatpush1.bf16.msra.mxu0 %v10289
    %11338 = vmatprep.subr.bf16.mxu0 0
    %11339 = vmatpush1.bf16.msra.mxu0 %v10290
    %11340 = vmatprep.subr.bf16.mxu0 0
    %11341 = vmatpush1.bf16.msra.mxu0 %v10291
    %11342 = vmatprep.subr.bf16.mxu0 0
    %11343 = vmatpush1.bf16.msra.mxu0 %v10292
    %11344 = vmatprep.subr.bf16.mxu0 0
    %11345 = vmatpush1.bf16.msra.mxu0 %v10293
    %11346 = vmatprep.subr.bf16.mxu0 0
    %11347 = vmatpush1.bf16.msra.mxu0 %v10294
    %11348 = vmatprep.subr.bf16.mxu0 0
    %11349 = vmatpush1.bf16.msra.mxu0 %v10295
    %11350 = vmatprep.subr.bf16.mxu0 0
    %11351 = vmatpush1.bf16.msra.mxu0 %v10296
    %11352 = vmatprep.subr.bf16.mxu0 0
    %11353 = vmatpush1.bf16.msra.mxu0 %v10297
    %11354 = vmatprep.mubr.bf16.mxu0 %v7448
    %11355 = vmatmul.mubr.bf16.gmra.mrb[0].mxu0 %v7447
    %v11356 = vpop.f32.mrb[0].mxu0
    %v11357 = vadd.f32 %v11317, %v11356
    %v11358 = vpop.f32.mrb[0].mxu0
    %v11359 = vpop.f32.mrb[0].mxu0
    %v11360 = vpop.f32.mrb[0].mxu0
    %11361 = vdwg.mxu0
    %11362 = vmatprep.subr.bf16.mxu0 0
    %11363 = vmatpush1.bf16.msra.mxu0 %v10298
    %11364 = vmatprep.subr.bf16.mxu0 0
    %11365 = vmatpush1.bf16.msra.mxu0 %v10299
    %11366 = vmatprep.subr.bf16.mxu0 0
    %11367 = vmatpush1.bf16.msra.mxu0 %v10300
    %11368 = vmatprep.subr.bf16.mxu0 0
    %11369 = vmatpush1.bf16.msra.mxu0 %v10301
    %11370 = vmatprep.subr.bf16.mxu0 0
    %11371 = vmatpush1.bf16.msra.mxu0 %v10302
    %11372 = vmatprep.subr.bf16.mxu0 0
    %11373 = vmatpush1.bf16.msra.mxu0 %v10303
    %11374 = vmatprep.subr.bf16.mxu0 0
    %11375 = vmatpush1.bf16.msra.mxu0 %v10304
    %11376 = vmatprep.subr.bf16.mxu0 0
    %11377 = vmatpush1.bf16.msra.mxu0 %v10305
    %11378 = vmatprep.subr.bf16.mxu0 0
    %11379 = vmatpush1.bf16.msra.mxu0 %v10306
    %11380 = vmatprep.subr.bf16.mxu0 0
    %11381 = vmatpush1.bf16.msra.mxu0 %v10307
    %11382 = vmatprep.subr.bf16.mxu0 0
    %11383 = vmatpush1.bf16.msra.mxu0 %v10308
    %11384 = vmatprep.subr.bf16.mxu0 0
    %11385 = vmatpush1.bf16.msra.mxu0 %v10309
    %11386 = vmatprep.subr.bf16.mxu0 0
    %11387 = vmatpush1.bf16.msra.mxu0 %v10310
    %11388 = vmatprep.subr.bf16.mxu0 0
    %11389 = vmatpush1.bf16.msra.mxu0 %v10311
    %11390 = vmatprep.subr.bf16.mxu0 0
    %11391 = vmatpush1.bf16.msra.mxu0 %v10312
    %11392 = vmatprep.subr.bf16.mxu0 0
    %11393 = vmatpush1.bf16.msra.mxu0 %v10313
    %11394 = vmatprep.mubr.bf16.mxu0 %v7450
    %11395 = vmatmul.mubr.bf16.gmra.mrb[0].mxu0 %v7449
    %v11396 = vpop.f32.mrb[0].mxu0
    %v11397 = vadd.f32 %v11357, %v11396
    %v11398 = vpop.f32.mrb[0].mxu0
    %v11399 = vpop.f32.mrb[0].mxu0
    %v11400 = vpop.f32.mrb[0].mxu0
    %11401 = vdwg.mxu0
    %11402 = vmatprep.subr.bf16.mxu0 0
    %11403 = vmatpush1.bf16.msra.mxu0 %v10314
    %11404 = vmatprep.subr.bf16.mxu0 0
    %11405 = vmatpush1.bf16.msra.mxu0 %v10315
    %11406 = vmatprep.subr.bf16.mxu0 0
    %11407 = vmatpush1.bf16.msra.mxu0 %v10316
    %11408 = vmatprep.subr.bf16.mxu0 0
    %11409 = vmatpush1.bf16.msra.mxu0 %v10317
    %11410 = vmatprep.subr.bf16.mxu0 0
    %11411 = vmatpush1.bf16.msra.mxu0 %v10318
    %11412 = vmatprep.subr.bf16.mxu0 0
    %11413 = vmatpush1.bf16.msra.mxu0 %v10319
    %11414 = vmatprep.subr.bf16.mxu0 0
    %11415 = vmatpush1.bf16.msra.mxu0 %v10320
    %11416 = vmatprep.subr.bf16.mxu0 0
    %11417 = vmatpush1.bf16.msra.mxu0 %v10321
    %11418 = vmatprep.subr.bf16.mxu0 0
    %11419 = vmatpush1.bf16.msra.mxu0 %v10322
    %11420 = vmatprep.subr.bf16.mxu0 0
    %11421 = vmatpush1.bf16.msra.mxu0 %v10323
    %11422 = vmatprep.subr.bf16.mxu0 0
    %11423 = vmatpush1.bf16.msra.mxu0 %v10324
    %11424 = vmatprep.subr.bf16.mxu0 0
    %11425 = vmatpush1.bf16.msra.mxu0 %v10325
    %11426 = vmatprep.subr.bf16.mxu0 0
    %11427 = vmatpush1.bf16.msra.mxu0 %v10326
    %11428 = vmatprep.subr.bf16.mxu0 0
    %11429 = vmatpush1.bf16.msra.mxu0 %v10327
    %11430 = vmatprep.subr.bf16.mxu0 0
    %11431 = vmatpush1.bf16.msra.mxu0 %v10328
    %11432 = vmatprep.subr.bf16.mxu0 0
    %11433 = vmatpush1.bf16.msra.mxu0 %v10329
    %11434 = vmatprep.mubr.bf16.mxu0 %v7452
    %11435 = vmatmul.mubr.bf16.gmra.mrb[0].mxu0 %v7451
    %v11436 = vpop.f32.mrb[0].mxu0
    %v11437 = vadd.f32 %v11397, %v11436
    %v11438 = vpop.f32.mrb[0].mxu0
    %v11439 = vpop.f32.mrb[0].mxu0
    %v11440 = vpop.f32.mrb[0].mxu0
    %11441 = vdwg.mxu0
    %11442 = vmatprep.subr.bf16.mxu0 0
    %11443 = vmatpush1.bf16.msra.mxu0 %v10330
    %11444 = vmatprep.subr.bf16.mxu0 0
    %11445 = vmatpush1.bf16.msra.mxu0 %v10331
    %11446 = vmatprep.subr.bf16.mxu0 0
    %11447 = vmatpush1.bf16.msra.mxu0 %v10332
    %11448 = vmatprep.subr.bf16.mxu0 0
    %11449 = vmatpush1.bf16.msra.mxu0 %v10333
    %11450 = vmatprep.subr.bf16.mxu0 0
    %11451 = vmatpush1.bf16.msra.mxu0 %v10334
    %11452 = vmatprep.subr.bf16.mxu0 0
    %11453 = vmatpush1.bf16.msra.mxu0 %v10335
    %11454 = vmatprep.subr.bf16.mxu0 0
    %11455 = vmatpush1.bf16.msra.mxu0 %v10336
    %11456 = vmatprep.subr.bf16.mxu0 0
    %11457 = vmatpush1.bf16.msra.mxu0 %v10337
    %11458 = vmatprep.subr.bf16.mxu0 0
    %11459 = vmatpush1.bf16.msra.mxu0 %v10338
    %11460 = vmatprep.subr.bf16.mxu0 0
    %11461 = vmatpush1.bf16.msra.mxu0 %v10339
    %11462 = vmatprep.subr.bf16.mxu0 0
    %11463 = vmatpush1.bf16.msra.mxu0 %v10340
    %11464 = vmatprep.subr.bf16.mxu0 0
    %11465 = vmatpush1.bf16.msra.mxu0 %v10341
    %11466 = vmatprep.subr.bf16.mxu0 0
    %11467 = vmatpush1.bf16.msra.mxu0 %v10342
    %11468 = vmatprep.subr.bf16.mxu0 0
    %11469 = vmatpush1.bf16.msra.mxu0 %v10343
    %11470 = vmatprep.subr.bf16.mxu0 0
    %11471 = vmatpush1.bf16.msra.mxu0 %v10344
    %11472 = vmatprep.subr.bf16.mxu0 0
    %11473 = vmatpush1.bf16.msra.mxu0 %v10345
    %11474 = vmatprep.mubr.bf16.mxu0 %v7454
    %11475 = vmatmul.mubr.bf16.gmra.mrb[0].mxu0 %v7453
    %v11476 = vpop.f32.mrb[0].mxu0
    %v11477 = vadd.f32 %v11437, %v11476
    %v11478 = vpop.f32.mrb[0].mxu0
    %v11479 = vpop.f32.mrb[0].mxu0
    %v11480 = vpop.f32.mrb[0].mxu0
    %11481 = vdwg.mxu0
    %11482 = vmatprep.subr.bf16.mxu0 0
    %11483 = vmatpush1.bf16.msra.mxu0 %v10346
    %11484 = vmatprep.subr.bf16.mxu0 0
    %11485 = vmatpush1.bf16.msra.mxu0 %v10347
    %11486 = vmatprep.subr.bf16.mxu0 0
    %11487 = vmatpush1.bf16.msra.mxu0 %v10348
    %11488 = vmatprep.subr.bf16.mxu0 0
    %11489 = vmatpush1.bf16.msra.mxu0 %v10349
    %11490 = vmatprep.subr.bf16.mxu0 0
    %11491 = vmatpush1.bf16.msra.mxu0 %v10350
    %11492 = vmatprep.subr.bf16.mxu0 0
    %11493 = vmatpush1.bf16.msra.mxu0 %v10351
    %11494 = vmatprep.subr.bf16.mxu0 0
    %11495 = vmatpush1.bf16.msra.mxu0 %v10352
    %11496 = vmatprep.subr.bf16.mxu0 0
    %11497 = vmatpush1.bf16.msra.mxu0 %v10353
    %11498 = vmatprep.subr.bf16.mxu0 0
    %11499 = vmatpush1.bf16.msra.mxu0 %v10354
    %11500 = vmatprep.subr.bf16.mxu0 0
    %11501 = vmatpush1.bf16.msra.mxu0 %v10355
    %11502 = vmatprep.subr.bf16.mxu0 0
    %11503 = vmatpush1.bf16.msra.mxu0 %v10356
    %11504 = vmatprep.subr.bf16.mxu0 0
    %11505 = vmatpush1.bf16.msra.mxu0 %v10357
    %11506 = vmatprep.subr.bf16.mxu0 0
    %11507 = vmatpush1.bf16.msra.mxu0 %v10358
    %11508 = vmatprep.subr.bf16.mxu0 0
    %11509 = vmatpush1.bf16.msra.mxu0 %v10359
    %11510 = vmatprep.subr.bf16.mxu0 0
    %11511 = vmatpush1.bf16.msra.mxu0 %v10360
    %11512 = vmatprep.subr.bf16.mxu0 0
    %11513 = vmatpush1.bf16.msra.mxu0 %v10361
    %11514 = vmatprep.mubr.bf16.mxu0 %v7456
    %11515 = vmatmul.mubr.bf16.gmra.mrb[0].mxu0 %v7455
    %v11516 = vpop.f32.mrb[0].mxu0
    %v11517 = vadd.f32 %v11477, %v11516
    %v11518 = vpop.f32.mrb[0].mxu0
    %v11519 = vpop.f32.mrb[0].mxu0
    %v11520 = vpop.f32.mrb[0].mxu0
    %11521 = vdwg.mxu0
    %11522 = vmatprep.subr.bf16.mxu0 0
    %11523 = vmatpush1.bf16.msra.mxu0 %v10362
    %11524 = vmatprep.subr.bf16.mxu0 0
    %11525 = vmatpush1.bf16.msra.mxu0 %v10363
    %11526 = vmatprep.subr.bf16.mxu0 0
    %11527 = vmatpush1.bf16.msra.mxu0 %v10364
    %11528 = vmatprep.subr.bf16.mxu0 0
    %11529 = vmatpush1.bf16.msra.mxu0 %v10365
    %11530 = vmatprep.subr.bf16.mxu0 0
    %11531 = vmatpush1.bf16.msra.mxu0 %v10366
    %11532 = vmatprep.subr.bf16.mxu0 0
    %11533 = vmatpush1.bf16.msra.mxu0 %v10367
    %11534 = vmatprep.subr.bf16.mxu0 0
    %11535 = vmatpush1.bf16.msra.mxu0 %v10368
    %11536 = vmatprep.subr.bf16.mxu0 0
    %11537 = vmatpush1.bf16.msra.mxu0 %v10369
    %11538 = vmatprep.subr.bf16.mxu0 0
    %11539 = vmatpush1.bf16.msra.mxu0 %v10370
    %11540 = vmatprep.subr.bf16.mxu0 0
    %11541 = vmatpush1.bf16.msra.mxu0 %v10371
    %11542 = vmatprep.subr.bf16.mxu0 0
    %11543 = vmatpush1.bf16.msra.mxu0 %v10372
    %11544 = vmatprep.subr.bf16.mxu0 0
    %11545 = vmatpush1.bf16.msra.mxu0 %v10373
    %11546 = vmatprep.subr.bf16.mxu0 0
    %11547 = vmatpush1.bf16.msra.mxu0 %v10374
    %11548 = vmatprep.subr.bf16.mxu0 0
    %11549 = vmatpush1.bf16.msra.mxu0 %v10375
    %11550 = vmatprep.subr.bf16.mxu0 0
    %11551 = vmatpush1.bf16.msra.mxu0 %v10376
    %11552 = vmatprep.subr.bf16.mxu0 0
    %11553 = vmatpush1.bf16.msra.mxu0 %v10377
    %11554 = vmatprep.mubr.bf16.mxu0 %v7458
    %11555 = vmatmul.mubr.bf16.gmra.mrb[0].mxu0 %v7457
    %v11556 = vpop.f32.mrb[0].mxu0
    %v11557 = vadd.f32 %v11517, %v11556
    %v11558 = vpop.f32.mrb[0].mxu0
    %v11559 = vpop.f32.mrb[0].mxu0
    %v11560 = vpop.f32.mrb[0].mxu0
    %11561 = vdwg.mxu0
    %11562 = vmatprep.subr.bf16.mxu0 0
    %11563 = vmatpush1.bf16.msra.mxu0 %v10378
    %11564 = vmatprep.subr.bf16.mxu0 0
    %11565 = vmatpush1.bf16.msra.mxu0 %v10379
    %11566 = vmatprep.subr.bf16.mxu0 0
    %11567 = vmatpush1.bf16.msra.mxu0 %v10380
    %11568 = vmatprep.subr.bf16.mxu0 0
    %11569 = vmatpush1.bf16.msra.mxu0 %v10381
    %11570 = vmatprep.subr.bf16.mxu0 0
    %11571 = vmatpush1.bf16.msra.mxu0 %v10382
    %11572 = vmatprep.subr.bf16.mxu0 0
    %11573 = vmatpush1.bf16.msra.mxu0 %v10383
    %11574 = vmatprep.subr.bf16.mxu0 0
    %11575 = vmatpush1.bf16.msra.mxu0 %v10384
    %11576 = vmatprep.subr.bf16.mxu0 0
    %11577 = vmatpush1.bf16.msra.mxu0 %v10385
    %11578 = vmatprep.subr.bf16.mxu0 0
    %11579 = vmatpush1.bf16.msra.mxu0 %v10386
    %11580 = vmatprep.subr.bf16.mxu0 0
    %11581 = vmatpush1.bf16.msra.mxu0 %v10387
    %11582 = vmatprep.subr.bf16.mxu0 0
    %11583 = vmatpush1.bf16.msra.mxu0 %v10388
    %11584 = vmatprep.subr.bf16.mxu0 0
    %11585 = vmatpush1.bf16.msra.mxu0 %v10389
    %11586 = vmatprep.subr.bf16.mxu0 0
    %11587 = vmatpush1.bf16.msra.mxu0 %v10390
    %11588 = vmatprep.subr.bf16.mxu0 0
    %11589 = vmatpush1.bf16.msra.mxu0 %v10391
    %11590 = vmatprep.subr.bf16.mxu0 0
    %11591 = vmatpush1.bf16.msra.mxu0 %v10392
    %11592 = vmatprep.subr.bf16.mxu0 0
    %11593 = vmatpush1.bf16.msra.mxu0 %v10393
    %11594 = vmatprep.mubr.bf16.mxu0 %v7460
    %11595 = vmatmul.mubr.bf16.gmra.mrb[0].mxu0 %v7459
    %v11596 = vpop.f32.mrb[0].mxu0
    %v11597 = vadd.f32 %v11557, %v11596
    %v11598 = vpop.f32.mrb[0].mxu0
    %v11599 = vpop.f32.mrb[0].mxu0
    %v11600 = vpop.f32.mrb[0].mxu0
    %11601 = vdwg.mxu0
    %11602 = vmatprep.subr.bf16.mxu0 0
    %11603 = vmatpush1.bf16.msra.mxu0 %v10394
    %11604 = vmatprep.subr.bf16.mxu0 0
    %11605 = vmatpush1.bf16.msra.mxu0 %v10395
    %11606 = vmatprep.subr.bf16.mxu0 0
    %11607 = vmatpush1.bf16.msra.mxu0 %v10396
    %11608 = vmatprep.subr.bf16.mxu0 0
    %11609 = vmatpush1.bf16.msra.mxu0 %v10397
    %11610 = vmatprep.subr.bf16.mxu0 0
    %11611 = vmatpush1.bf16.msra.mxu0 %v10398
    %11612 = vmatprep.subr.bf16.mxu0 0
    %11613 = vmatpush1.bf16.msra.mxu0 %v10399
    %11614 = vmatprep.subr.bf16.mxu0 0
    %11615 = vmatpush1.bf16.msra.mxu0 %v10400
    %11616 = vmatprep.subr.bf16.mxu0 0
    %11617 = vmatpush1.bf16.msra.mxu0 %v10401
    %11618 = vmatprep.subr.bf16.mxu0 0
    %11619 = vmatpush1.bf16.msra.mxu0 %v10402
    %11620 = vmatprep.subr.bf16.mxu0 0
    %11621 = vmatpush1.bf16.msra.mxu0 %v10403
    %11622 = vmatprep.subr.bf16.mxu0 0
    %11623 = vmatpush1.bf16.msra.mxu0 %v10404
    %11624 = vmatprep.subr.bf16.mxu0 0
    %11625 = vmatpush1.bf16.msra.mxu0 %v10405
    %11626 = vmatprep.subr.bf16.mxu0 0
    %11627 = vmatpush1.bf16.msra.mxu0 %v10406
    %11628 = vmatprep.subr.bf16.mxu0 0
    %11629 = vmatpush1.bf16.msra.mxu0 %v10407
    %11630 = vmatprep.subr.bf16.mxu0 0
    %11631 = vmatpush1.bf16.msra.mxu0 %v10408
    %11632 = vmatprep.subr.bf16.mxu0 0
    %11633 = vmatpush1.bf16.msra.mxu0 %v10409
    %11634 = vmatprep.mubr.bf16.mxu0 %v7462
    %11635 = vmatmul.mubr.bf16.gmra.mrb[0].mxu0 %v7461
    %v11636 = vpop.f32.mrb[0].mxu0
    %v11637 = vadd.f32 %v11597, %v11636
    %v11638 = vpop.f32.mrb[0].mxu0
    %v11639 = vpop.f32.mrb[0].mxu0
    %v11640 = vpop.f32.mrb[0].mxu0
    %11641 = vdwg.mxu0
    %11642 = vmatprep.subr.bf16.mxu0 0
    %11643 = vmatpush1.bf16.msra.mxu0 %v10410
    %11644 = vmatprep.subr.bf16.mxu0 0
    %11645 = vmatpush1.bf16.msra.mxu0 %v10411
    %11646 = vmatprep.subr.bf16.mxu0 0
    %11647 = vmatpush1.bf16.msra.mxu0 %v10412
    %11648 = vmatprep.subr.bf16.mxu0 0
    %11649 = vmatpush1.bf16.msra.mxu0 %v10413
    %11650 = vmatprep.subr.bf16.mxu0 0
    %11651 = vmatpush1.bf16.msra.mxu0 %v10414
    %11652 = vmatprep.subr.bf16.mxu0 0
    %11653 = vmatpush1.bf16.msra.mxu0 %v10415
    %11654 = vmatprep.subr.bf16.mxu0 0
    %11655 = vmatpush1.bf16.msra.mxu0 %v10416
    %11656 = vmatprep.subr.bf16.mxu0 0
    %11657 = vmatpush1.bf16.msra.mxu0 %v10417
    %11658 = vmatprep.subr.bf16.mxu0 0
    %11659 = vmatpush1.bf16.msra.mxu0 %v10418
    %11660 = vmatprep.subr.bf16.mxu0 0
    %11661 = vmatpush1.bf16.msra.mxu0 %v10419
    %11662 = vmatprep.subr.bf16.mxu0 0
    %11663 = vmatpush1.bf16.msra.mxu0 %v10420
    %11664 = vmatprep.subr.bf16.mxu0 0
    %11665 = vmatpush1.bf16.msra.mxu0 %v10421
    %11666 = vmatprep.subr.bf16.mxu0 0
    %11667 = vmatpush1.bf16.msra.mxu0 %v10422
    %11668 = vmatprep.subr.bf16.mxu0 0
    %11669 = vmatpush1.bf16.msra.mxu0 %v10423
    %11670 = vmatprep.subr.bf16.mxu0 0
    %11671 = vmatpush1.bf16.msra.mxu0 %v10424
    %11672 = vmatprep.subr.bf16.mxu0 0
    %11673 = vmatpush1.bf16.msra.mxu0 %v10425
    %11674 = vmatprep.mubr.bf16.mxu0 %v7464
    %11675 = vmatmul.mubr.bf16.gmra.mrb[0].mxu0 %v7463
    %v11676 = vpop.f32.mrb[0].mxu0
    %v11677 = vadd.f32 %v11637, %v11676
    %v11678 = vpop.f32.mrb[0].mxu0
    %v11679 = vpop.f32.mrb[0].mxu0
    %v11680 = vpop.f32.mrb[0].mxu0
    %11681 = vdwg.mxu0
    %11682 = vmatprep.subr.bf16.mxu0 0
    %11683 = vmatpush1.bf16.msra.mxu0 %v10426
    %11684 = vmatprep.subr.bf16.mxu0 0
    %11685 = vmatpush1.bf16.msra.mxu0 %v10427
    %11686 = vmatprep.subr.bf16.mxu0 0
    %11687 = vmatpush1.bf16.msra.mxu0 %v10428
    %11688 = vmatprep.subr.bf16.mxu0 0
    %11689 = vmatpush1.bf16.msra.mxu0 %v10429
    %11690 = vmatprep.subr.bf16.mxu0 0
    %11691 = vmatpush1.bf16.msra.mxu0 %v10430
    %11692 = vmatprep.subr.bf16.mxu0 0
    %11693 = vmatpush1.bf16.msra.mxu0 %v10431
    %11694 = vmatprep.subr.bf16.mxu0 0
    %11695 = vmatpush1.bf16.msra.mxu0 %v10432
    %11696 = vmatprep.subr.bf16.mxu0 0
    %11697 = vmatpush1.bf16.msra.mxu0 %v10433
    %11698 = vmatprep.subr.bf16.mxu0 0
    %11699 = vmatpush1.bf16.msra.mxu0 %v10434
    %11700 = vmatprep.subr.bf16.mxu0 0
    %11701 = vmatpush1.bf16.msra.mxu0 %v10435
    %11702 = vmatprep.subr.bf16.mxu0 0
    %11703 = vmatpush1.bf16.msra.mxu0 %v10436
    %11704 = vmatprep.subr.bf16.mxu0 0
    %11705 = vmatpush1.bf16.msra.mxu0 %v10437
    %11706 = vmatprep.subr.bf16.mxu0 0
    %11707 = vmatpush1.bf16.msra.mxu0 %v10438
    %11708 = vmatprep.subr.bf16.mxu0 0
    %11709 = vmatpush1.bf16.msra.mxu0 %v10439
    %11710 = vmatprep.subr.bf16.mxu0 0
    %11711 = vmatpush1.bf16.msra.mxu0 %v10440
    %11712 = vmatprep.subr.bf16.mxu0 0
    %11713 = vmatpush1.bf16.msra.mxu0 %v10441
    %11714 = vmatprep.mubr.bf16.mxu0 %v7466
    %11715 = vmatmul.mubr.bf16.gmra.mrb[0].mxu0 %v7465
    %v11716 = vpop.f32.mrb[0].mxu0
    %v11717 = vadd.f32 %v11677, %v11716
    %v11718 = vpop.f32.mrb[0].mxu0
    %v11719 = vpop.f32.mrb[0].mxu0
    %v11720 = vpop.f32.mrb[0].mxu0
    %11721 = vdwg.mxu0
    %11722 = vmatprep.subr.bf16.mxu0 0
    %11723 = vmatpush1.bf16.msra.mxu0 %v10442
    %11724 = vmatprep.subr.bf16.mxu0 0
    %11725 = vmatpush1.bf16.msra.mxu0 %v10443
    %11726 = vmatprep.subr.bf16.mxu0 0
    %11727 = vmatpush1.bf16.msra.mxu0 %v10444
    %11728 = vmatprep.subr.bf16.mxu0 0
    %11729 = vmatpush1.bf16.msra.mxu0 %v10445
    %11730 = vmatprep.subr.bf16.mxu0 0
    %11731 = vmatpush1.bf16.msra.mxu0 %v10446
    %11732 = vmatprep.subr.bf16.mxu0 0
    %11733 = vmatpush1.bf16.msra.mxu0 %v10447
    %11734 = vmatprep.subr.bf16.mxu0 0
    %11735 = vmatpush1.bf16.msra.mxu0 %v10448
    %11736 = vmatprep.subr.bf16.mxu0 0
    %11737 = vmatpush1.bf16.msra.mxu0 %v10449
    %11738 = vmatprep.subr.bf16.mxu0 0
    %11739 = vmatpush1.bf16.msra.mxu0 %v10450
    %11740 = vmatprep.subr.bf16.mxu0 0
    %11741 = vmatpush1.bf16.msra.mxu0 %v10451
    %11742 = vmatprep.subr.bf16.mxu0 0
    %11743 = vmatpush1.bf16.msra.mxu0 %v10452
    %11744 = vmatprep.subr.bf16.mxu0 0
    %11745 = vmatpush1.bf16.msra.mxu0 %v10453
    %11746 = vmatprep.subr.bf16.mxu0 0
    %11747 = vmatpush1.bf16.msra.mxu0 %v10454
    %11748 = vmatprep.subr.bf16.mxu0 0
    %11749 = vmatpush1.bf16.msra.mxu0 %v10455
    %11750 = vmatprep.subr.bf16.mxu0 0
    %11751 = vmatpush1.bf16.msra.mxu0 %v10456
    %11752 = vmatprep.subr.bf16.mxu0 0
    %11753 = vmatpush1.bf16.msra.mxu0 %v10457
    %11754 = vmatprep.mubr.bf16.mxu0 %v7468
    %11755 = vmatmul.mubr.bf16.gmra.mrb[0].mxu0 %v7467
    %v11756 = vpop.f32.mrb[0].mxu0
    %v11757 = vadd.f32 %v11717, %v11756
    %v11758 = vpop.f32.mrb[0].mxu0
    %v11759 = vpop.f32.mrb[0].mxu0
    %v11760 = vpop.f32.mrb[0].mxu0
    %11761 = vdwg.mxu0
    %11762 = vmatprep.subr.bf16.mxu0 0
    %11763 = vmatpush1.bf16.msra.mxu0 %v10458
    %11764 = vmatprep.subr.bf16.mxu0 0
    %11765 = vmatpush1.bf16.msra.mxu0 %v10459
    %11766 = vmatprep.subr.bf16.mxu0 0
    %11767 = vmatpush1.bf16.msra.mxu0 %v10460
    %11768 = vmatprep.subr.bf16.mxu0 0
    %11769 = vmatpush1.bf16.msra.mxu0 %v10461
    %11770 = vmatprep.subr.bf16.mxu0 0
    %11771 = vmatpush1.bf16.msra.mxu0 %v10462
    %11772 = vmatprep.subr.bf16.mxu0 0
    %11773 = vmatpush1.bf16.msra.mxu0 %v10463
    %11774 = vmatprep.subr.bf16.mxu0 0
    %11775 = vmatpush1.bf16.msra.mxu0 %v10464
    %11776 = vmatprep.subr.bf16.mxu0 0
    %11777 = vmatpush1.bf16.msra.mxu0 %v10465
    %11778 = vmatprep.subr.bf16.mxu0 0
    %11779 = vmatpush1.bf16.msra.mxu0 %v10466
    %11780 = vmatprep.subr.bf16.mxu0 0
    %11781 = vmatpush1.bf16.msra.mxu0 %v10467
    %11782 = vmatprep.subr.bf16.mxu0 0
    %11783 = vmatpush1.bf16.msra.mxu0 %v10468
    %11784 = vmatprep.subr.bf16.mxu0 0
    %11785 = vmatpush1.bf16.msra.mxu0 %v10469
    %11786 = vmatprep.subr.bf16.mxu0 0
    %11787 = vmatpush1.bf16.msra.mxu0 %v10470
    %11788 = vmatprep.subr.bf16.mxu0 0
    %11789 = vmatpush1.bf16.msra.mxu0 %v10471
    %11790 = vmatprep.subr.bf16.mxu0 0
    %11791 = vmatpush1.bf16.msra.mxu0 %v10472
    %11792 = vmatprep.subr.bf16.mxu0 0
    %11793 = vmatpush1.bf16.msra.mxu0 %v10473
    %11794 = vmatprep.mubr.bf16.mxu0 %v7470
    %11795 = vmatmul.mubr.bf16.gmra.mrb[0].mxu0 %v7469
    %v11796 = vpop.f32.mrb[0].mxu0
    %v11797 = vadd.f32 %v11757, %v11796
    %v11798 = vpop.f32.mrb[0].mxu0
    %v11799 = vpop.f32.mrb[0].mxu0
    %v11800 = vpop.f32.mrb[0].mxu0
    %11801 = vdwg.mxu0
    %11802 = vmatprep.subr.bf16.mxu0 0
    %11803 = vmatpush1.bf16.msra.mxu0 %v10474
    %11804 = vmatprep.subr.bf16.mxu0 0
    %11805 = vmatpush1.bf16.msra.mxu0 %v10475
    %11806 = vmatprep.subr.bf16.mxu0 0
    %11807 = vmatpush1.bf16.msra.mxu0 %v10476
    %11808 = vmatprep.subr.bf16.mxu0 0
    %11809 = vmatpush1.bf16.msra.mxu0 %v10477
    %11810 = vmatprep.subr.bf16.mxu0 0
    %11811 = vmatpush1.bf16.msra.mxu0 %v10478
    %11812 = vmatprep.subr.bf16.mxu0 0
    %11813 = vmatpush1.bf16.msra.mxu0 %v10479
    %11814 = vmatprep.subr.bf16.mxu0 0
    %11815 = vmatpush1.bf16.msra.mxu0 %v10480
    %11816 = vmatprep.subr.bf16.mxu0 0
    %11817 = vmatpush1.bf16.msra.mxu0 %v10481
    %11818 = vmatprep.subr.bf16.mxu0 0
    %11819 = vmatpush1.bf16.msra.mxu0 %v10482
    %11820 = vmatprep.subr.bf16.mxu0 0
    %11821 = vmatpush1.bf16.msra.mxu0 %v10483
    %11822 = vmatprep.subr.bf16.mxu0 0
    %11823 = vmatpush1.bf16.msra.mxu0 %v10484
    %11824 = vmatprep.subr.bf16.mxu0 0
    %11825 = vmatpush1.bf16.msra.mxu0 %v10485
    %11826 = vmatprep.subr.bf16.mxu0 0
    %11827 = vmatpush1.bf16.msra.mxu0 %v10486
    %11828 = vmatprep.subr.bf16.mxu0 0
    %11829 = vmatpush1.bf16.msra.mxu0 %v10487
    %11830 = vmatprep.subr.bf16.mxu0 0
    %11831 = vmatpush1.bf16.msra.mxu0 %v10488
    %11832 = vmatprep.subr.bf16.mxu0 0
    %11833 = vmatpush1.bf16.msra.mxu0 %v10489
    %11834 = vmatprep.mubr.bf16.mxu0 %v7472
    %11835 = vmatmul.mubr.bf16.gmra.mrb[0].mxu0 %v7471
    %v11836 = vpop.f32.mrb[0].mxu0
    %v11837 = vadd.f32 %v11797, %v11836
    %v11838 = vpop.f32.mrb[0].mxu0
    %v11839 = vpop.f32.mrb[0].mxu0
    %v11840 = vpop.f32.mrb[0].mxu0
    %11841 = vdwg.mxu0
    %11842 = vmatprep.subr.bf16.mxu0 0
    %11843 = vmatpush1.bf16.msra.mxu0 %v10490
    %11844 = vmatprep.subr.bf16.mxu0 0
    %11845 = vmatpush1.bf16.msra.mxu0 %v10491
    %11846 = vmatprep.subr.bf16.mxu0 0
    %11847 = vmatpush1.bf16.msra.mxu0 %v10492
    %11848 = vmatprep.subr.bf16.mxu0 0
    %11849 = vmatpush1.bf16.msra.mxu0 %v10493
    %11850 = vmatprep.subr.bf16.mxu0 0
    %11851 = vmatpush1.bf16.msra.mxu0 %v10494
    %11852 = vmatprep.subr.bf16.mxu0 0
    %11853 = vmatpush1.bf16.msra.mxu0 %v10495
    %11854 = vmatprep.subr.bf16.mxu0 0
    %11855 = vmatpush1.bf16.msra.mxu0 %v10496
    %11856 = vmatprep.subr.bf16.mxu0 0
    %11857 = vmatpush1.bf16.msra.mxu0 %v10497
    %11858 = vmatprep.subr.bf16.mxu0 0
    %11859 = vmatpush1.bf16.msra.mxu0 %v10498
    %11860 = vmatprep.subr.bf16.mxu0 0
    %11861 = vmatpush1.bf16.msra.mxu0 %v10499
    %11862 = vmatprep.subr.bf16.mxu0 0
    %11863 = vmatpush1.bf16.msra.mxu0 %v10500
    %11864 = vmatprep.subr.bf16.mxu0 0
    %11865 = vmatpush1.bf16.msra.mxu0 %v10501
    %11866 = vmatprep.subr.bf16.mxu0 0
    %11867 = vmatpush1.bf16.msra.mxu0 %v10502
    %11868 = vmatprep.subr.bf16.mxu0 0
    %11869 = vmatpush1.bf16.msra.mxu0 %v10503
    %11870 = vmatprep.subr.bf16.mxu0 0
    %11871 = vmatpush1.bf16.msra.mxu0 %v10504
    %11872 = vmatprep.subr.bf16.mxu0 0
    %11873 = vmatpush1.bf16.msra.mxu0 %v10505
    %11874 = vmatprep.mubr.bf16.mxu0 %v7474
    %11875 = vmatmul.mubr.bf16.gmra.mrb[0].mxu0 %v7473
    %v11876 = vpop.f32.mrb[0].mxu0
    %v11877 = vadd.f32 %v11837, %v11876
    %v11878 = vpop.f32.mrb[0].mxu0
    %v11879 = vpop.f32.mrb[0].mxu0
    %v11880 = vpop.f32.mrb[0].mxu0
    %11881 = vdwg.mxu0
    %11882 = vmatprep.subr.bf16.mxu0 0
    %11883 = vmatpush1.bf16.msra.mxu0 %v10506
    %11884 = vmatprep.subr.bf16.mxu0 0
    %11885 = vmatpush1.bf16.msra.mxu0 %v10507
    %11886 = vmatprep.subr.bf16.mxu0 0
    %11887 = vmatpush1.bf16.msra.mxu0 %v10508
    %11888 = vmatprep.subr.bf16.mxu0 0
    %11889 = vmatpush1.bf16.msra.mxu0 %v10509
    %11890 = vmatprep.subr.bf16.mxu0 0
    %11891 = vmatpush1.bf16.msra.mxu0 %v10510
    %11892 = vmatprep.subr.bf16.mxu0 0
    %11893 = vmatpush1.bf16.msra.mxu0 %v10511
    %11894 = vmatprep.subr.bf16.mxu0 0
    %11895 = vmatpush1.bf16.msra.mxu0 %v10512
    %11896 = vmatprep.subr.bf16.mxu0 0
    %11897 = vmatpush1.bf16.msra.mxu0 %v10513
    %11898 = vmatprep.subr.bf16.mxu0 0
    %11899 = vmatpush1.bf16.msra.mxu0 %v10514
    %11900 = vmatprep.subr.bf16.mxu0 0
    %11901 = vmatpush1.bf16.msra.mxu0 %v10515
    %11902 = vmatprep.subr.bf16.mxu0 0
    %11903 = vmatpush1.bf16.msra.mxu0 %v10516
    %11904 = vmatprep.subr.bf16.mxu0 0
    %11905 = vmatpush1.bf16.msra.mxu0 %v10517
    %11906 = vmatprep.subr.bf16.mxu0 0
    %11907 = vmatpush1.bf16.msra.mxu0 %v10518
    %11908 = vmatprep.subr.bf16.mxu0 0
    %11909 = vmatpush1.bf16.msra.mxu0 %v10519
    %11910 = vmatprep.subr.bf16.mxu0 0
    %11911 = vmatpush1.bf16.msra.mxu0 %v10520
    %11912 = vmatprep.subr.bf16.mxu0 0
    %11913 = vmatpush1.bf16.msra.mxu0 %v10521
    %11914 = vmatprep.mubr.bf16.mxu0 %v7476
    %11915 = vmatmul.mubr.bf16.gmra.mrb[0].mxu0 %v7475
    %v11916 = vpop.f32.mrb[0].mxu0
    %v11917 = vadd.f32 %v11877, %v11916
    %v11918 = vpop.f32.mrb[0].mxu0
    %v11919 = vpop.f32.mrb[0].mxu0
    %v11920 = vpop.f32.mrb[0].mxu0
    %11921 = vdwg.mxu0
    %11922 = vmatprep.subr.bf16.mxu0 0
    %11923 = vmatpush1.bf16.msra.mxu0 %v10522
    %11924 = vmatprep.subr.bf16.mxu0 0
    %11925 = vmatpush1.bf16.msra.mxu0 %v10523
    %11926 = vmatprep.subr.bf16.mxu0 0
    %11927 = vmatpush1.bf16.msra.mxu0 %v10524
    %11928 = vmatprep.subr.bf16.mxu0 0
    %11929 = vmatpush1.bf16.msra.mxu0 %v10525
    %11930 = vmatprep.subr.bf16.mxu0 0
    %11931 = vmatpush1.bf16.msra.mxu0 %v10526
    %11932 = vmatprep.subr.bf16.mxu0 0
    %11933 = vmatpush1.bf16.msra.mxu0 %v10527
    %11934 = vmatprep.subr.bf16.mxu0 0
    %11935 = vmatpush1.bf16.msra.mxu0 %v10528
    %11936 = vmatprep.subr.bf16.mxu0 0
    %11937 = vmatpush1.bf16.msra.mxu0 %v10529
    %11938 = vmatprep.subr.bf16.mxu0 0
    %11939 = vmatpush1.bf16.msra.mxu0 %v10530
    %11940 = vmatprep.subr.bf16.mxu0 0
    %11941 = vmatpush1.bf16.msra.mxu0 %v10531
    %11942 = vmatprep.subr.bf16.mxu0 0
    %11943 = vmatpush1.bf16.msra.mxu0 %v10532
    %11944 = vmatprep.subr.bf16.mxu0 0
    %11945 = vmatpush1.bf16.msra.mxu0 %v10533
    %11946 = vmatprep.subr.bf16.mxu0 0
    %11947 = vmatpush1.bf16.msra.mxu0 %v10534
    %11948 = vmatprep.subr.bf16.mxu0 0
    %11949 = vmatpush1.bf16.msra.mxu0 %v10535
    %11950 = vmatprep.subr.bf16.mxu0 0
    %11951 = vmatpush1.bf16.msra.mxu0 %v10536
    %11952 = vmatprep.subr.bf16.mxu0 0
    %11953 = vmatpush1.bf16.msra.mxu0 %v10537
    %11954 = vmatprep.mubr.bf16.mxu0 %v7478
    %11955 = vmatmul.mubr.bf16.gmra.mrb[0].mxu0 %v7477
    %v11956 = vpop.f32.mrb[0].mxu0
    %v11957 = vadd.f32 %v11917, %v11956
    %v11958 = vpop.f32.mrb[0].mxu0
    %v11959 = vpop.f32.mrb[0].mxu0
    %v11960 = vpop.f32.mrb[0].mxu0
    %11961 = vdwg.mxu0
    %11962 = vmatprep.subr.bf16.mxu0 0
    %11963 = vmatpush1.bf16.msra.mxu0 %v10538
    %11964 = vmatprep.subr.bf16.mxu0 0
    %11965 = vmatpush1.bf16.msra.mxu0 %v10539
    %11966 = vmatprep.subr.bf16.mxu0 0
    %11967 = vmatpush1.bf16.msra.mxu0 %v10540
    %11968 = vmatprep.subr.bf16.mxu0 0
    %11969 = vmatpush1.bf16.msra.mxu0 %v10541
    %11970 = vmatprep.subr.bf16.mxu0 0
    %11971 = vmatpush1.bf16.msra.mxu0 %v10542
    %11972 = vmatprep.subr.bf16.mxu0 0
    %11973 = vmatpush1.bf16.msra.mxu0 %v10543
    %11974 = vmatprep.subr.bf16.mxu0 0
    %11975 = vmatpush1.bf16.msra.mxu0 %v10544
    %11976 = vmatprep.subr.bf16.mxu0 0
    %11977 = vmatpush1.bf16.msra.mxu0 %v10545
    %11978 = vmatprep.subr.bf16.mxu0 0
    %11979 = vmatpush1.bf16.msra.mxu0 %v10546
    %11980 = vmatprep.subr.bf16.mxu0 0
    %11981 = vmatpush1.bf16.msra.mxu0 %v10547
    %11982 = vmatprep.subr.bf16.mxu0 0
    %11983 = vmatpush1.bf16.msra.mxu0 %v10548
    %11984 = vmatprep.subr.bf16.mxu0 0
    %11985 = vmatpush1.bf16.msra.mxu0 %v10549
    %11986 = vmatprep.subr.bf16.mxu0 0
    %11987 = vmatpush1.bf16.msra.mxu0 %v10550
    %11988 = vmatprep.subr.bf16.mxu0 0
    %11989 = vmatpush1.bf16.msra.mxu0 %v10551
    %11990 = vmatprep.subr.bf16.mxu0 0
    %11991 = vmatpush1.bf16.msra.mxu0 %v10552
    %11992 = vmatprep.subr.bf16.mxu0 0
    %11993 = vmatpush1.bf16.msra.mxu0 %v10553
    %11994 = vmatprep.mubr.bf16.mxu0 %v7480
    %11995 = vmatmul.mubr.bf16.gmra.mrb[0].mxu0 %v7479
    %v11996 = vpop.f32.mrb[0].mxu0
    %v11997 = vadd.f32 %v11957, %v11996
    %v11998 = vpop.f32.mrb[0].mxu0
    %v11999 = vpop.f32.mrb[0].mxu0
    %v12000 = vpop.f32.mrb[0].mxu0
    %12001 = vdwg.mxu0
    %12002 = vmatprep.subr.bf16.mxu0 0
    %12003 = vmatpush1.bf16.msra.mxu0 %v10554
    %12004 = vmatprep.subr.bf16.mxu0 0
    %12005 = vmatpush1.bf16.msra.mxu0 %v10555
    %12006 = vmatprep.subr.bf16.mxu0 0
    %12007 = vmatpush1.bf16.msra.mxu0 %v10556
    %12008 = vmatprep.subr.bf16.mxu0 0
    %12009 = vmatpush1.bf16.msra.mxu0 %v10557
    %12010 = vmatprep.subr.bf16.mxu0 0
    %12011 = vmatpush1.bf16.msra.mxu0 %v10558
    %12012 = vmatprep.subr.bf16.mxu0 0
    %12013 = vmatpush1.bf16.msra.mxu0 %v10559
    %12014 = vmatprep.subr.bf16.mxu0 0
    %12015 = vmatpush1.bf16.msra.mxu0 %v10560
    %12016 = vmatprep.subr.bf16.mxu0 0
    %12017 = vmatpush1.bf16.msra.mxu0 %v10561
    %12018 = vmatprep.subr.bf16.mxu0 0
    %12019 = vmatpush1.bf16.msra.mxu0 %v10562
    %12020 = vmatprep.subr.bf16.mxu0 0
    %12021 = vmatpush1.bf16.msra.mxu0 %v10563
    %12022 = vmatprep.subr.bf16.mxu0 0
    %12023 = vmatpush1.bf16.msra.mxu0 %v10564
    %12024 = vmatprep.subr.bf16.mxu0 0
    %12025 = vmatpush1.bf16.msra.mxu0 %v10565
    %12026 = vmatprep.subr.bf16.mxu0 0
    %12027 = vmatpush1.bf16.msra.mxu0 %v10566
    %12028 = vmatprep.subr.bf16.mxu0 0
    %12029 = vmatpush1.bf16.msra.mxu0 %v10567
    %12030 = vmatprep.subr.bf16.mxu0 0
    %12031 = vmatpush1.bf16.msra.mxu0 %v10568
    %12032 = vmatprep.subr.bf16.mxu0 0
    %12033 = vmatpush1.bf16.msra.mxu0 %v10569
    %12034 = vmatprep.mubr.bf16.mxu0 %v7482
    %12035 = vmatmul.mubr.bf16.gmra.mrb[0].mxu0 %v7481
    %v12036 = vpop.f32.mrb[0].mxu0
    %v12037 = vadd.f32 %v11997, %v12036
    %v12038 = vpop.f32.mrb[0].mxu0
    %v12039 = vpop.f32.mrb[0].mxu0
    %v12040 = vpop.f32.mrb[0].mxu0
    %12041 = vdwg.mxu0
    %12042 = vmatprep.subr.bf16.mxu0 0
    %12043 = vmatpush1.bf16.msra.mxu0 %v10570
    %12044 = vmatprep.subr.bf16.mxu0 0
    %12045 = vmatpush1.bf16.msra.mxu0 %v10571
    %12046 = vmatprep.subr.bf16.mxu0 0
    %12047 = vmatpush1.bf16.msra.mxu0 %v10572
    %12048 = vmatprep.subr.bf16.mxu0 0
    %12049 = vmatpush1.bf16.msra.mxu0 %v10573
    %12050 = vmatprep.subr.bf16.mxu0 0
    %12051 = vmatpush1.bf16.msra.mxu0 %v10574
    %12052 = vmatprep.subr.bf16.mxu0 0
    %12053 = vmatpush1.bf16.msra.mxu0 %v10575
    %12054 = vmatprep.subr.bf16.mxu0 0
    %12055 = vmatpush1.bf16.msra.mxu0 %v10576
    %12056 = vmatprep.subr.bf16.mxu0 0
    %12057 = vmatpush1.bf16.msra.mxu0 %v10577
    %12058 = vmatprep.subr.bf16.mxu0 0
    %12059 = vmatpush1.bf16.msra.mxu0 %v10578
    %12060 = vmatprep.subr.bf16.mxu0 0
    %12061 = vmatpush1.bf16.msra.mxu0 %v10579
    %12062 = vmatprep.subr.bf16.mxu0 0
    %12063 = vmatpush1.bf16.msra.mxu0 %v10580
    %12064 = vmatprep.subr.bf16.mxu0 0
    %12065 = vmatpush1.bf16.msra.mxu0 %v10581
    %12066 = vmatprep.subr.bf16.mxu0 0
    %12067 = vmatpush1.bf16.msra.mxu0 %v10582
    %12068 = vmatprep.subr.bf16.mxu0 0
    %12069 = vmatpush1.bf16.msra.mxu0 %v10583
    %12070 = vmatprep.subr.bf16.mxu0 0
    %12071 = vmatpush1.bf16.msra.mxu0 %v10584
    %12072 = vmatprep.subr.bf16.mxu0 0
    %12073 = vmatpush1.bf16.msra.mxu0 %v10585
    %12074 = vmatprep.mubr.bf16.mxu0 %v7484
    %12075 = vmatmul.mubr.bf16.gmra.mrb[0].mxu0 %v7483
    %v12076 = vpop.f32.mrb[0].mxu0
    %v12077 = vadd.f32 %v12037, %v12076
    %v12078 = vpop.f32.mrb[0].mxu0
    %v12079 = vpop.f32.mrb[0].mxu0
    %v12080 = vpop.f32.mrb[0].mxu0
    %12081 = vdwg.mxu0
    %12082 = vmatprep.subr.bf16.mxu0 0
    %12083 = vmatpush1.bf16.msra.mxu0 %v10586
    %12084 = vmatprep.subr.bf16.mxu0 0
    %12085 = vmatpush1.bf16.msra.mxu0 %v10587
    %12086 = vmatprep.subr.bf16.mxu0 0
    %12087 = vmatpush1.bf16.msra.mxu0 %v10588
    %12088 = vmatprep.subr.bf16.mxu0 0
    %12089 = vmatpush1.bf16.msra.mxu0 %v10589
    %12090 = vmatprep.subr.bf16.mxu0 0
    %12091 = vmatpush1.bf16.msra.mxu0 %v10590
    %12092 = vmatprep.subr.bf16.mxu0 0
    %12093 = vmatpush1.bf16.msra.mxu0 %v10591
    %12094 = vmatprep.subr.bf16.mxu0 0
    %12095 = vmatpush1.bf16.msra.mxu0 %v10592
    %12096 = vmatprep.subr.bf16.mxu0 0
    %12097 = vmatpush1.bf16.msra.mxu0 %v10593
    %12098 = vmatprep.subr.bf16.mxu0 0
    %12099 = vmatpush1.bf16.msra.mxu0 %v10594
    %12100 = vmatprep.subr.bf16.mxu0 0
    %12101 = vmatpush1.bf16.msra.mxu0 %v10595
    %12102 = vmatprep.subr.bf16.mxu0 0
    %12103 = vmatpush1.bf16.msra.mxu0 %v10596
    %12104 = vmatprep.subr.bf16.mxu0 0
    %12105 = vmatpush1.bf16.msra.mxu0 %v10597
    %12106 = vmatprep.subr.bf16.mxu0 0
    %12107 = vmatpush1.bf16.msra.mxu0 %v10598
    %12108 = vmatprep.subr.bf16.mxu0 0
    %12109 = vmatpush1.bf16.msra.mxu0 %v10599
    %12110 = vmatprep.subr.bf16.mxu0 0
    %12111 = vmatpush1.bf16.msra.mxu0 %v10600
    %12112 = vmatprep.subr.bf16.mxu0 0
    %12113 = vmatpush1.bf16.msra.mxu0 %v10601
    %12114 = vmatprep.mubr.bf16.mxu0 %v7486
    %12115 = vmatmul.mubr.bf16.gmra.mrb[0].mxu0 %v7485
    %v12116 = vpop.f32.mrb[0].mxu0
    %v12117 = vadd.f32 %v12077, %v12116
    %v12118 = vpop.f32.mrb[0].mxu0
    %v12119 = vpop.f32.mrb[0].mxu0
    %v12120 = vpop.f32.mrb[0].mxu0
    %12121 = vdwg.mxu0
    %12122 = vmatprep.subr.bf16.mxu0 0
    %12123 = vmatpush1.bf16.msra.mxu0 %v10602
    %12124 = vmatprep.subr.bf16.mxu0 0
    %12125 = vmatpush1.bf16.msra.mxu0 %v10603
    %12126 = vmatprep.subr.bf16.mxu0 0
    %12127 = vmatpush1.bf16.msra.mxu0 %v10604
    %12128 = vmatprep.subr.bf16.mxu0 0
    %12129 = vmatpush1.bf16.msra.mxu0 %v10605
    %12130 = vmatprep.subr.bf16.mxu0 0
    %12131 = vmatpush1.bf16.msra.mxu0 %v10606
    %12132 = vmatprep.subr.bf16.mxu0 0
    %12133 = vmatpush1.bf16.msra.mxu0 %v10607
    %12134 = vmatprep.subr.bf16.mxu0 0
    %12135 = vmatpush1.bf16.msra.mxu0 %v10608
    %12136 = vmatprep.subr.bf16.mxu0 0
    %12137 = vmatpush1.bf16.msra.mxu0 %v10609
    %12138 = vmatprep.subr.bf16.mxu0 0
    %12139 = vmatpush1.bf16.msra.mxu0 %v10610
    %12140 = vmatprep.subr.bf16.mxu0 0
    %12141 = vmatpush1.bf16.msra.mxu0 %v10611
    %12142 = vmatprep.subr.bf16.mxu0 0
    %12143 = vmatpush1.bf16.msra.mxu0 %v10612
    %12144 = vmatprep.subr.bf16.mxu0 0
    %12145 = vmatpush1.bf16.msra.mxu0 %v10613
    %12146 = vmatprep.subr.bf16.mxu0 0
    %12147 = vmatpush1.bf16.msra.mxu0 %v10614
    %12148 = vmatprep.subr.bf16.mxu0 0
    %12149 = vmatpush1.bf16.msra.mxu0 %v10615
    %12150 = vmatprep.subr.bf16.mxu0 0
    %12151 = vmatpush1.bf16.msra.mxu0 %v10616
    %12152 = vmatprep.subr.bf16.mxu0 0
    %12153 = vmatpush1.bf16.msra.mxu0 %v10617
    %12154 = vmatprep.mubr.bf16.mxu0 %v7488
    %12155 = vmatmul.mubr.bf16.gmra.mrb[0].mxu0 %v7487
    %v12156 = vpop.f32.mrb[0].mxu0
    %v12157 = vadd.f32 %v12117, %v12156
    %v12158 = vpop.f32.mrb[0].mxu0
    %v12159 = vpop.f32.mrb[0].mxu0
    %v12160 = vpop.f32.mrb[0].mxu0
    %12161 = vdwg.mxu0
    %12162 = vmatprep.subr.bf16.mxu0 0
    %12163 = vmatpush1.bf16.msra.mxu0 %v10618
    %12164 = vmatprep.subr.bf16.mxu0 0
    %12165 = vmatpush1.bf16.msra.mxu0 %v10619
    %12166 = vmatprep.subr.bf16.mxu0 0
    %12167 = vmatpush1.bf16.msra.mxu0 %v10620
    %12168 = vmatprep.subr.bf16.mxu0 0
    %12169 = vmatpush1.bf16.msra.mxu0 %v10621
    %12170 = vmatprep.subr.bf16.mxu0 0
    %12171 = vmatpush1.bf16.msra.mxu0 %v10622
    %12172 = vmatprep.subr.bf16.mxu0 0
    %12173 = vmatpush1.bf16.msra.mxu0 %v10623
    %12174 = vmatprep.subr.bf16.mxu0 0
    %12175 = vmatpush1.bf16.msra.mxu0 %v10624
    %12176 = vmatprep.subr.bf16.mxu0 0
    %12177 = vmatpush1.bf16.msra.mxu0 %v10625
    %12178 = vmatprep.subr.bf16.mxu0 0
    %12179 = vmatpush1.bf16.msra.mxu0 %v10626
    %12180 = vmatprep.subr.bf16.mxu0 0
    %12181 = vmatpush1.bf16.msra.mxu0 %v10627
    %12182 = vmatprep.subr.bf16.mxu0 0
    %12183 = vmatpush1.bf16.msra.mxu0 %v10628
    %12184 = vmatprep.subr.bf16.mxu0 0
    %12185 = vmatpush1.bf16.msra.mxu0 %v10629
    %12186 = vmatprep.subr.bf16.mxu0 0
    %12187 = vmatpush1.bf16.msra.mxu0 %v10630
    %12188 = vmatprep.subr.bf16.mxu0 0
    %12189 = vmatpush1.bf16.msra.mxu0 %v10631
    %12190 = vmatprep.subr.bf16.mxu0 0
    %12191 = vmatpush1.bf16.msra.mxu0 %v10632
    %12192 = vmatprep.subr.bf16.mxu0 0
    %12193 = vmatpush1.bf16.msra.mxu0 %v10633
    %12194 = vmatprep.mubr.bf16.mxu0 %v7490
    %12195 = vmatmul.mubr.bf16.gmra.mrb[0].mxu0 %v7489
    %v12196 = vpop.f32.mrb[0].mxu0
    %v12197 = vadd.f32 %v12157, %v12196
    %v12198 = vpop.f32.mrb[0].mxu0
    %v12199 = vpop.f32.mrb[0].mxu0
    %v12200 = vpop.f32.mrb[0].mxu0
    %12201 = vdwg.mxu0
    %v12202 = vld [vmem:[%s13] sm:$0xff]
    %v12203 = vld [vmem:[%s13 + $0x8] sm:$0xff]
    %v12204 = vld [vmem:[%s13 + $0x10] sm:$0xff]
    %v12205 = vld [vmem:[%s13 + $0x18] sm:$0xff]
    %v12206 = vld [vmem:[%s13 + $0x20] sm:$0xff]
    %v12207 = vld [vmem:[%s13 + $0x28] sm:$0xff]
    %v12208 = vld [vmem:[%s13 + $0x30] sm:$0xff]
    %v12209 = vld [vmem:[%s13 + $0x38] sm:$0xf]
    %v12210 = vld [vmem:[%s14] sm:$0x1]
    %v12212 = vlaneseq
    %v12213 = vshrl.u32 %v12212, 7
    %v12214 = vsub.s32 0, %v12213
    %v12215 = vrot.slane %v12210, %v12214
    %vm12217 = vcmask 490496
    %v12219 = vsel %vm12217, %v12197, 0
    %vm12221 = vcmask 1043456
    %v12223 = vsel %vm12221, %v12209, 0
    %12225 = vmatprep.subr.mxu0 0.0
    %12226 = vmatpush1.msra.mxu0 %v12202
    %12227 = vmatprep.subr.mxu0 0.0
    %12228 = vmatpush1.msra.mxu0 %v12203
    %12229 = vmatprep.subr.mxu0 0.0
    %12230 = vmatpush1.msra.mxu0 %v12204
    %12231 = vmatprep.subr.mxu0 0.0
    %12232 = vmatpush1.msra.mxu0 %v12205
    %12233 = vmatprep.subr.mxu0 0.0
    %12234 = vmatpush1.msra.mxu0 %v12206
    %12235 = vmatprep.subr.mxu0 0.0
    %12236 = vmatpush1.msra.mxu0 %v12207
    %12237 = vmatprep.subr.mxu0 0.0
    %12238 = vmatpush1.msra.mxu0 %v12208
    %12239 = vmatprep.subr.mxu0 0.0
    %12240 = vmatpush1.msra.mxu0 %v12223
    %12241 = vmatprep.subr.mxu0 0.0
    %12242 = vmatpush1.msra.mxu0 0.0
    %12243 = vmatprep.subr.mxu0 0.0
    %12244 = vmatpush1.msra.mxu0 0.0
    %12245 = vmatprep.subr.mxu0 0.0
    %12246 = vmatpush1.msra.mxu0 0.0
    %12247 = vmatprep.subr.mxu0 0.0
    %12248 = vmatpush1.msra.mxu0 0.0
    %12249 = vmatprep.subr.mxu0 0.0
    %12250 = vmatpush1.msra.mxu0 0.0
    %12251 = vmatprep.subr.mxu0 0.0
    %12252 = vmatpush1.msra.mxu0 0.0
    %12253 = vmatprep.subr.mxu0 0.0
    %12254 = vmatpush1.msra.mxu0 0.0
    %12255 = vmatprep.subr.mxu0 0.0
    %12256 = vmatpush1.msra.mxu0 0.0
    %12257 = vmatprep.subr.mxu0 0.0
    %12258 = vmatpush1.msra.mxu0 0.0
    %12259 = vmatprep.subr.mxu0 0.0
    %12260 = vmatpush1.msra.mxu0 0.0
    %12261 = vmatprep.subr.mxu0 0.0
    %12262 = vmatpush1.msra.mxu0 0.0
    %12263 = vmatprep.subr.mxu0 0.0
    %12264 = vmatpush1.msra.mxu0 0.0
    %12265 = vmatprep.subr.mxu0 0.0
    %12266 = vmatpush1.msra.mxu0 0.0
    %12267 = vmatprep.subr.mxu0 0.0
    %12268 = vmatpush1.msra.mxu0 0.0
    %12269 = vmatprep.subr.mxu0 0.0
    %12270 = vmatpush1.msra.mxu0 0.0
    %12271 = vmatprep.subr.mxu0 0.0
    %12272 = vmatpush1.msra.mxu0 0.0
    %12273 = vmatprep.subr.mxu0 0.0
    %12274 = vmatpush1.msra.mxu0 0.0
    %12275 = vmatprep.subr.mxu0 0.0
    %12276 = vmatpush1.msra.mxu0 0.0
    %12277 = vmatprep.subr.mxu0 0.0
    %12278 = vmatpush1.msra.mxu0 0.0
    %12279 = vmatprep.subr.mxu0 0.0
    %12280 = vmatpush1.msra.mxu0 0.0
    %12281 = vmatprep.subr.mxu0 0.0
    %12282 = vmatpush1.msra.mxu0 0.0
    %12283 = vmatprep.subr.mxu0 0.0
    %12284 = vmatpush1.msra.mxu0 0.0
    %12285 = vmatprep.subr.mxu0 0.0
    %12286 = vmatpush1.msra.mxu0 0.0
    %12287 = vmatprep.subr.mxu0 0.0
    %12288 = vmatpush1.msra.mxu0 0.0
    %12289 = vmatprep.mubr.f32.mxu0 0.0
    %12290 = vmatmul.mubr.f32.gmra.mrb[0].mxu0 %v12219
    %v12291 = vpop.f32.mrb[0].mxu0
    %v12292 = vadd.f32 %v12215, %v12291
    %v12293 = vpop.f32.mrb[0].mxu0
    %12294 = vdwg.mxu0
    %v12295 = vld [vmem:[%s15] sm:$0xff]
    %v12296 = vld [vmem:[%s15 + $0x8] sm:$0x3]
    %v12297 = vld [vmem:[%s16] sm:$0x1]
    %v12299 = vlaneseq
    %v12300 = vshrl.u32 %v12299, 7
    %v12301 = vsub.s32 0, %v12300
    %v12302 = vrot.slane %v12297, %v12301
    %vm12304 = vcmask 80896
    %v12306 = vsel %vm12304, %v12292, 0
    %vm12308 = vcmask 1041408
    %v12310 = vsel %vm12308, %v12296, 0
    %12312 = vmatprep.subr.mxu0 0.0
    %12313 = vmatpush1.msra.mxu0 %v12295
    %12314 = vmatprep.subr.mxu0 0.0
    %12315 = vmatpush1.msra.mxu0 %v12310
    %12316 = vmatprep.subr.mxu0 0.0
    %12317 = vmatpush1.msra.mxu0 0.0
    %12318 = vmatprep.subr.mxu0 0.0
    %12319 = vmatpush1.msra.mxu0 0.0
    %12320 = vmatprep.subr.mxu0 0.0
    %12321 = vmatpush1.msra.mxu0 0.0
    %12322 = vmatprep.subr.mxu0 0.0
    %12323 = vmatpush1.msra.mxu0 0.0
    %12324 = vmatprep.subr.mxu0 0.0
    %12325 = vmatpush1.msra.mxu0 0.0
    %12326 = vmatprep.subr.mxu0 0.0
    %12327 = vmatpush1.msra.mxu0 0.0
    %12328 = vmatprep.subr.mxu0 0.0
    %12329 = vmatpush1.msra.mxu0 0.0
    %12330 = vmatprep.subr.mxu0 0.0
    %12331 = vmatpush1.msra.mxu0 0.0
    %12332 = vmatprep.subr.mxu0 0.0
    %12333 = vmatpush1.msra.mxu0 0.0
    %12334 = vmatprep.subr.mxu0 0.0
    %12335 = vmatpush1.msra.mxu0 0.0
    %12336 = vmatprep.subr.mxu0 0.0
    %12337 = vmatpush1.msra.mxu0 0.0
    %12338 = vmatprep.subr.mxu0 0.0
    %12339 = vmatpush1.msra.mxu0 0.0
    %12340 = vmatprep.subr.mxu0 0.0
    %12341 = vmatpush1.msra.mxu0 0.0
    %12342 = vmatprep.subr.mxu0 0.0
    %12343 = vmatpush1.msra.mxu0 0.0
    %12344 = vmatprep.subr.mxu0 0.0
    %12345 = vmatpush1.msra.mxu0 0.0
    %12346 = vmatprep.subr.mxu0 0.0
    %12347 = vmatpush1.msra.mxu0 0.0
    %12348 = vmatprep.subr.mxu0 0.0
    %12349 = vmatpush1.msra.mxu0 0.0
    %12350 = vmatprep.subr.mxu0 0.0
    %12351 = vmatpush1.msra.mxu0 0.0
    %12352 = vmatprep.subr.mxu0 0.0
    %12353 = vmatpush1.msra.mxu0 0.0
    %12354 = vmatprep.subr.mxu0 0.0
    %12355 = vmatpush1.msra.mxu0 0.0
    %12356 = vmatprep.subr.mxu0 0.0
    %12357 = vmatpush1.msra.mxu0 0.0
    %12358 = vmatprep.subr.mxu0 0.0
    %12359 = vmatpush1.msra.mxu0 0.0
    %12360 = vmatprep.subr.mxu0 0.0
    %12361 = vmatpush1.msra.mxu0 0.0
    %12362 = vmatprep.subr.mxu0 0.0
    %12363 = vmatpush1.msra.mxu0 0.0
    %12364 = vmatprep.subr.mxu0 0.0
    %12365 = vmatpush1.msra.mxu0 0.0
    %12366 = vmatprep.subr.mxu0 0.0
    %12367 = vmatpush1.msra.mxu0 0.0
    %12368 = vmatprep.subr.mxu0 0.0
    %12369 = vmatpush1.msra.mxu0 0.0
    %12370 = vmatprep.subr.mxu0 0.0
    %12371 = vmatpush1.msra.mxu0 0.0
    %12372 = vmatprep.subr.mxu0 0.0
    %12373 = vmatpush1.msra.mxu0 0.0
    %12374 = vmatprep.subr.mxu0 0.0
    %12375 = vmatpush1.msra.mxu0 0.0
    %12376 = vmatprep.mubr.f32.mxu0 0.0
    %12377 = vmatmul.mubr.f32.gmra.mrb[0].mxu0 %v12306
    %v12378 = vpop.f32.mrb[0].mxu0
    %v12379 = vadd.f32 %v12302, %v12378
    %v12380 = vpop.f32.mrb[0].mxu0
    %12381 = vdwg.mxu0
    %vm12382 = vcmask 9216
    %12383 = vst.msk [vmem:[#allocation6] sm:$0x3] %vm12382, %v12379
    // Predicated region
    $region70: #{my_net_forward.1} parent=1 // pred_check
      _
    $region71: #{my_net_forward.1} parent=1 // pred_check_branch
      %12385 = sbr.rel (0) target = $region73
    $region72: #{my_net_forward.1} parent=1 // pred_region
      %s12387 = ssub.s32 32, 32
      %12388 = vsyncadd [#allocation7], %s12387
      %s12390 = sshll.u32 [#allocation6], 4
      %s12391 = int_to_ptr.vmem [resolvable:$true] %s12390
      %12393 = dma.vmem_to_hbm [thread:$0]  %s12391, 32, %s17, [#allocation7]
    $region73: #{my_net_forward.1} parent=1 // pred_fallthru
      _
    // Predicated region
    $region74: #{my_net_forward.1} parent=1 // pred_check
      _
    $region75: #{my_net_forward.1} parent=1 // pred_check_branch
      %12395 = sbr.rel (0) target = $region77
    $region76: #{my_net_forward.1} parent=1 // pred_region
      %12396 = dma.done [#allocation7], 32
    $region77: #{my_net_forward.1} parent=1 // pred_fallthru
      _
    %12397 = vsyncpa [#allocation7], 1

</llo_original>
